<compile_context>
chip_gen: v7x
topology: tpu7x:2x2x1
jax: 0.10.0
libtpu: 0.0.40
codegen_flags: <defaults>
</compile_context>

<pallas_src>
import functools

import jax
import jax.numpy as jnp
from jax.experimental import pallas as pl
from jax.experimental.pallas import tpu as pltpu

LANE = 128


def _round_up(n, m):
    return ((n + m - 1) // m) * m


@functools.lru_cache(maxsize=1)
def _vmem_limit_bytes():
    """Generation-aware scoped-VMEM limit: ~3/4 of physical VMEM.

    v5e/v6e (128 MiB) -> ~96 MiB; v7x (64 MiB) -> ~48 MiB."""
    cap = 64 * 1024 * 1024  # conservative default (v7x physical)
    try:
        info = pltpu.get_tpu_info()
        cap = int(getattr(info, "vmem_capacity_bytes", cap)) or cap
    except Exception:
        pass
    return int(cap * 3 // 4)


# ------------------------------ conv kernel ----------------------------------

def _conv3x3_kernel(x_ref, w_ref, b_ref, o_ref, xpad_ref, *, fuse_pool):
    """3x3 conv (stride 1, pad 1) + bias + ReLU (+ optional fused 2x2 maxpool).

    x_ref    : (1, H, W, Cin)      bf16 input image
    w_ref    : (9, Cin, Ct)        bf16 per-tap weights
    b_ref    : (1, Ct)             f32 bias
    o_ref    : (1, Ho, Wo, Ct)     bf16 output block
    xpad_ref : (H+2, W+2, Cin)     bf16 scratch -- 1-pixel halo, persists across
                                   the (sequential) Cout-block axis.
    """
    _, H, W, Cin = x_ref.shape
    Ct = o_ref.shape[-1]

    # Build the halo once per image (x block index is identical across the co
    # axis, which is "arbitrary"/sequential); zero only the 4 border strips.
    @pl.when(pl.program_id(1) == 0)
    def _():
        zrow = jnp.zeros((1, W + 2, Cin), xpad_ref.dtype)
        zcol = jnp.zeros((H + 2, 1, Cin), xpad_ref.dtype)
        xpad_ref[pl.ds(0, 1), :, :] = zrow
        xpad_ref[pl.ds(H + 1, 1), :, :] = zrow
        xpad_ref[:, pl.ds(0, 1), :] = zcol
        xpad_ref[:, pl.ds(W + 1, 1), :] = zcol
        xpad_ref[pl.ds(1, H), pl.ds(1, W), :] = x_ref[0]

    # 9 per-tap MXU dots (K = Cin) accumulated in f32 -- no im2col blow-up.
    acc = None
    for dy in range(3):
        for dx in range(3):
            patch = xpad_ref[pl.ds(dy, H), pl.ds(dx, W), :].reshape(H * W, Cin)
            part = jnp.dot(patch, w_ref[dy * 3 + dx],
                           preferred_element_type=jnp.float32)
            acc = part if acc is None else acc + part

    y = jnp.maximum(acc + b_ref[...], 0.0)          # bias + ReLU
    y3d = y.reshape(H, W, Ct)

    if fuse_pool:
        Ho, Wo = H // 2, W // 2
        pooled = jnp.max(y3d.reshape(Ho, 2, Wo, 2, Ct), axis=(1, 3))
        o_ref[...] = pooled.reshape(1, Ho, Wo, Ct).astype(o_ref.dtype)
    else:
        o_ref[...] = y3d.reshape(1, H, W, Ct).astype(o_ref.dtype)


def conv3x3_relu(x, w, b, *, fuse_pool):
    N, H, W, Cin = x.shape
    nine, Cin_w, Cout_p = w.shape
    assert nine == 9 and Cin_w == Cin and Cout_p % LANE == 0
    # 256-wide output tiles fill the v6e/v7x 2x256^2 MXU; 128 otherwise.
    tile_cout = 256 if Cout_p % 256 == 0 else LANE
    if fuse_pool:
        assert H % 2 == 0 and W % 2 == 0
    Ho, Wo = (H // 2, W // 2) if fuse_pool else (H, W)
    n_co = Cout_p // tile_cout

    flops = 2 * N * H * W * 9 * Cin * Cout_p
    bytes_accessed = int(x.size * x.dtype.itemsize            # x fetched once per image
                         + w.size * w.dtype.itemsize * N      # weights re-streamed per image
                         + b.size * 4 * N
                         + N * Ho * Wo * Cout_p * 2)

    return pl.pallas_call(
        functools.partial(_conv3x3_kernel, fuse_pool=fuse_pool),
        out_shape=jax.ShapeDtypeStruct((N, Ho, Wo, Cout_p), jnp.bfloat16),
        grid_spec=pltpu.PrefetchScalarGridSpec(
            num_scalar_prefetch=0,
            grid=(N, n_co),
            in_specs=[
                pl.BlockSpec((1, H, W, Cin), lambda n, co: (n, 0, 0, 0)),
                pl.BlockSpec((9, Cin, tile_cout), lambda n, co: (0, 0, co)),
                pl.BlockSpec((1, tile_cout), lambda n, co: (0, co)),
            ],
            out_specs=pl.BlockSpec((1, Ho, Wo, tile_cout),
                                   lambda n, co: (n, 0, 0, co)),
            scratch_shapes=[pltpu.VMEM((H + 2, W + 2, Cin), jnp.bfloat16)],
        ),
        compiler_params=pltpu.CompilerParams(
            # halo scratch is reused across the co axis -> co must stay sequential.
            dimension_semantics=("parallel", "arbitrary"),
            vmem_limit_bytes=_vmem_limit_bytes()),
        cost_estimate=pl.CostEstimate(flops=flops, transcendentals=0,
                                      bytes_accessed=bytes_accessed),
    )(x, w, b)


# --------------------------- standalone maxpool -------------------------------
# Only used for an 'M' that does NOT directly follow a conv (not hit by typical
# VGG configs -- pooling is otherwise fused into the conv epilogue above).

def maxpool2x2(x):
    N, H, W, C = x.shape
    assert H % 2 == 0 and W % 2 == 0 and C % LANE == 0
    Ho, Wo = H // 2, W // 2
    tc = 256 if C % 256 == 0 else LANE

    def kernel(x_ref, o_ref):
        xv = x_ref[0]                                        # (H, W, tc)
        pooled = jnp.max(xv.reshape(Ho, 2, Wo, 2, tc), axis=(1, 3))
        o_ref[...] = pooled.reshape(1, Ho, Wo, tc).astype(o_ref.dtype)

    return pl.pallas_call(
        kernel,
        out_shape=jax.ShapeDtypeStruct((N, Ho, Wo, C), x.dtype),
        grid_spec=pltpu.PrefetchScalarGridSpec(
            num_scalar_prefetch=0,
            grid=(N, C // tc),
            in_specs=[pl.BlockSpec((1, H, W, tc), lambda n, c: (n, 0, 0, c))],
            out_specs=pl.BlockSpec((1, Ho, Wo, tc), lambda n, c: (n, 0, 0, c)),
        ),
        compiler_params=pltpu.CompilerParams(
            dimension_semantics=("parallel", "parallel"),
            vmem_limit_bytes=_vmem_limit_bytes()),
    )(x)


# ------------------------------ linear kernel ---------------------------------

def _linear_kernel(x_ref, w_ref, b_ref, o_ref, acc_ref, *, apply_relu):
    """y = x @ W + b (W stored as (in, out) = torch weight.T), optional ReLU.
    Grid = (N-blocks, K-blocks); f32 accumulator lives in VMEM across K steps."""
    @pl.when(pl.program_id(1) == 0)
    def _():
        acc_ref[...] = jnp.zeros_like(acc_ref)

    acc_ref[...] += jnp.dot(x_ref[...], w_ref[...],
                            preferred_element_type=jnp.float32)

    @pl.when(pl.program_id(1) == pl.num_programs(1) - 1)
    def _():
        y = acc_ref[...] + b_ref[...]
        if apply_relu:
            y = jnp.maximum(y, 0.0)
        o_ref[...] = y.astype(o_ref.dtype)


def _pick_tile(dim, candidates):
    for c in candidates:
        if dim % c == 0:
            return c
    return dim


def linear(x, w, b, *, relu, out_dtype):
    B, K = x.shape
    Kw, Nf = w.shape
    assert K == Kw and K % LANE == 0 and Nf % LANE == 0
    # Large, lane-dense tiles: weight blocks ~1-4 MiB bf16 when shapes allow,
    # so the (weight-bandwidth-bound) FC layers stream near the HBM roofline.
    tn = _pick_tile(Nf, (512, 256, 128))
    tk = _pick_tile(K, (2048, 1024, 512, 256, 128))
    n_k = K // tk

    def _w_index(j, k):
        return (k, j)

    if n_k >= 3:
        try:
            w_spec = pl.BlockSpec((tk, tn), _w_index, pipeline_mode=pl.Buffered(3))
        except TypeError:  # pipeline_mode unavailable on this JAX version
            w_spec = pl.BlockSpec((tk, tn), _w_index)
    else:
        w_spec = pl.BlockSpec((tk, tn), _w_index)

    flops = 2 * B * K * Nf
    bytes_accessed = int(B * K * 2 * (Nf // tn) + K * Nf * 2 + Nf * 4
                         + B * Nf * jnp.dtype(out_dtype).itemsize)

    return pl.pallas_call(
        functools.partial(_linear_kernel, apply_relu=relu),
        out_shape=jax.ShapeDtypeStruct((B, Nf), out_dtype),
        grid_spec=pltpu.PrefetchScalarGridSpec(
            num_scalar_prefetch=0,
            grid=(Nf // tn, n_k),
            in_specs=[
                pl.BlockSpec((B, tk), lambda j, k: (0, k)),
                w_spec,
                pl.BlockSpec((1, tn), lambda j, k: (0, j)),
            ],
            out_specs=pl.BlockSpec((B, tn), lambda j, k: (0, j)),
            scratch_shapes=[pltpu.VMEM((B, tn), jnp.float32)],
        ),
        compiler_params=pltpu.CompilerParams(
            dimension_semantics=("parallel", "arbitrary"),
            vmem_limit_bytes=_vmem_limit_bytes()),
        cost_estimate=pl.CostEstimate(flops=flops, transcendentals=0,
                                      bytes_accessed=bytes_accessed),
    )(x, w, b)


# --------------------------- parameter construction ---------------------------

def init_vgg_params(key, config, num_classes, image_size, hidden):
    """Deterministic synthetic parameters mirroring the torch module's shapes.

    Conv weights are stored per-tap as (9, Cin_in, Cout_pad) bf16.  The first
    conv keeps the raw Cin=3 (no lane padding -> no wasted MXU K-work / weight
    DMA); later layers' Cin equals the previous layer's padded Cout, and padded
    rows/cols are zero so semantics are unchanged.  Linear weights are
    (in, out) = torch weight.T in bf16; W1's rows are permuted from torch's
    (C,H,W)-flatten order to NHWC order (and zero-padded for the padded
    channels) once, at init."""
    assert hidden % LANE == 0
    keys = iter(jax.random.split(key, 64))

    conv_w, conv_b = [], []
    in_real, in_p = 3, 3   # first conv consumes the raw 3-channel image
    for v in config:
        if v == 'M':
            continue
        cout_p = _round_up(v, LANE)
        w = jax.random.normal(next(keys), (3, 3, in_real, v), jnp.float32) * 0.05
        w = jnp.pad(w, ((0, 0), (0, 0), (0, in_p - in_real), (0, cout_p - v)))
        conv_w.append(w.reshape(9, in_p, cout_p).astype(jnp.bfloat16))
        b = jax.random.normal(next(keys), (v,), jnp.float32) * 0.01
        conv_b.append(jnp.pad(b, (0, cout_p - v)).reshape(1, cout_p))
        in_real, in_p = v, cout_p

    # Classifier sizing exactly as in the torch module.
    feature_channels, max_pools = 0, 0
    for v in reversed(config):
        if v == 'M':
            max_pools += 1
        elif feature_channels <= 0:
            feature_channels = v
    hw = image_size // (2 ** max_pools)
    flat_real = feature_channels * hw * hw
    c_pad = _round_up(feature_channels, LANE)
    nc_pad = _round_up(num_classes, LANE)

    def lin(k, din, dout):
        return jax.random.normal(k, (din, dout), jnp.float32) * 0.01

    # W1: generate in torch (C,H,W)-flatten row order, then fold the NHWC flatten
    # order and the channel padding into it (removes a per-forward transpose).
    w1 = lin(next(keys), flat_real, hidden).reshape(feature_channels, hw, hw, hidden)
    w1 = jnp.transpose(w1, (1, 2, 0, 3))
    w1 = jnp.pad(w1, ((0, 0), (0, 0), (0, c_pad - feature_channels), (0, 0)))
    w1 = w1.reshape(hw * hw * c_pad, hidden)

    w2 = lin(next(keys), hidden, hidden)
    w3 = jnp.pad(lin(next(keys), hidden, num_classes),
                 ((0, 0), (0, nc_pad - num_classes)))

    fc_w = [w1.astype(jnp.bfloat16), w2.astype(jnp.bfloat16), w3.astype(jnp.bfloat16)]
    fc_b = [
        (jax.random.normal(next(keys), (hidden,), jnp.float32) * 0.01).reshape(1, hidden),
        (jax.random.normal(next(keys), (hidden,), jnp.float32) * 0.01).reshape(1, hidden),
        jnp.pad(jax.random.normal(next(keys), (num_classes,), jnp.float32) * 0.01,
                (0, nc_pad - num_classes)).reshape(1, nc_pad),
    ]
    return {"conv_w": conv_w, "conv_b": conv_b, "fc_w": fc_w, "fc_b": fc_b}


# ---------------------------------- forward -----------------------------------

def make_vgg_forward(config, num_classes):
    """config / num_classes are static (closure) so the jitted params pytree
    contains only arrays."""

    @jax.jit
    def forward(params, x_nchw):
        x = jnp.transpose(x_nchw, (0, 2, 3, 1)).astype(jnp.bfloat16)  # NCHW -> NHWC

        ci, i = 0, 0
        while i < len(config):
            if config[i] == 'M':
                x = maxpool2x2(x)
                i += 1
            else:
                fuse = i + 1 < len(config) and config[i + 1] == 'M'
                x = conv3x3_relu(x, params["conv_w"][ci], params["conv_b"][ci],
                                 fuse_pool=fuse)
                ci += 1
                i += 2 if fuse else 1

        # torch's x.view(N, -1) (C,H,W order) is folded into W1's rows at init,
        # so flatten directly from NHWC -- no feature-map transpose per forward.
        x = x.reshape(x.shape[0], -1)

        w1, w2, w3 = params["fc_w"]
        b1, b2, b3 = params["fc_b"]
        x = linear(x, w1, b1, relu=True, out_dtype=jnp.bfloat16)   # Dropout: identity (eval)
        x = linear(x, w2, b2, relu=True, out_dtype=jnp.bfloat16)   # Dropout: identity (eval)
        x = linear(x, w3, b3, relu=False, out_dtype=jnp.float32)
        return x[:, :num_classes]                                  # drop padded class cols

    return forward


# ------------------------------------ main -------------------------------------

if __name__ == "__main__":
    # Small VGG-style config: [4, 'M', 8, 'M'] -> 2 conv blocks, 2 maxpools.
    CONFIG = [4, 'M', 8, 'M']
    NUM_CLASSES = 10
    IMAGE_SIZE = 16      # stands in for 224 in the classifier sizing formula
    HIDDEN = 128         # stands in for 4096 (multiple of 128 keeps lanes dense)
    BATCH = 2

    key = jax.random.PRNGKey(0)
    pkey, xkey = jax.random.split(key)
    params = init_vgg_params(pkey, CONFIG, NUM_CLASSES, IMAGE_SIZE, HIDDEN)
    forward = make_vgg_forward(CONFIG, NUM_CLASSES)

    x = jax.random.normal(xkey, (BATCH, 3, IMAGE_SIZE, IMAGE_SIZE), jnp.float32)

    out = jax.block_until_ready(forward(params, x))
    assert out.shape == (BATCH, NUM_CLASSES), out.shape
    print("KERNEL_OK")
</pallas_src>

<mosaic_0001>
module attributes {stable_mosaic.version = 11 : i64} {
  func.func @_conv3x3_kernel(%arg0: i32, %arg1: i32, %arg2: memref<1x8x8x128xbf16, #tpu.memory_space<vmem>>, %arg3: memref<9x128x128xbf16, #tpu.memory_space<vmem>>, %arg4: memref<1x128xf32, #tpu.memory_space<vmem>>, %arg5: memref<1x4x4x128xbf16, #tpu.memory_space<vmem>>, %arg6: memref<10x10x128xbf16, #tpu.memory_space<vmem>>) attributes {dimension_semantics = [#tpu.dimension_semantics<parallel>, #tpu.dimension_semantics<arbitrary>], iteration_bounds = array<i64: 2, 1>, scalar_prefetch = 0 : i64, scratch_operands = 1 : i64, tpu.core_type = #tpu.core_type<tc>, window_params = [{transform_indices = @transform_0, window_bounds = array<i64: 1, 8, 8, 128>}, {transform_indices = @transform_1, window_bounds = array<i64: 9, 128, 128>}, {transform_indices = @transform_2, window_bounds = array<i64: 1, 128>}, {transform_indices = @transform_3, window_bounds = array<i64: 1, 4, 4, 128>}]} {
    %c0_i32 = arith.constant 0 : i32
    %0 = arith.cmpi eq, %arg1, %c0_i32 : i32
    %1 = arith.extui %0 : i1 to i32
    %c0_i32_0 = arith.constant 0 : i32
    %2 = arith.cmpi ne, %1, %c0_i32_0 : i32
    scf.if %2 {
      %cst_62 = arith.constant 0.000000e+00 : bf16
      %67 = vector.broadcast %cst_62 : bf16 to vector<1x10x128xbf16>
      %cst_63 = arith.constant 0.000000e+00 : bf16
      %68 = vector.broadcast %cst_63 : bf16 to vector<10x1x128xbf16>
      %c0_64 = arith.constant 0 : index
      %c0_65 = arith.constant 0 : index
      %c0_66 = arith.constant 0 : index
      %69 = vector.load %arg6[%c0_64, %c0_65, %c0_66] : memref<10x10x128xbf16, #tpu.memory_space<vmem>>, vector<1x10x128xbf16>
      tpu.vector_store %arg6[%c0_64, %c0_65, %c0_66], %67 {strides = array<i32>} : memref<10x10x128xbf16, #tpu.memory_space<vmem>>, vector<1x10x128xbf16>,
      %c9 = arith.constant 9 : index
      %c0_67 = arith.constant 0 : index
      %c0_68 = arith.constant 0 : index
      %70 = vector.load %arg6[%c9, %c0_67, %c0_68] : memref<10x10x128xbf16, #tpu.memory_space<vmem>>, vector<1x10x128xbf16>
      tpu.vector_store %arg6[%c9, %c0_67, %c0_68], %67 {strides = array<i32>} : memref<10x10x128xbf16, #tpu.memory_space<vmem>>, vector<1x10x128xbf16>,
      %c0_69 = arith.constant 0 : index
      %c0_70 = arith.constant 0 : index
      %c0_71 = arith.constant 0 : index
      %71 = vector.load %arg6[%c0_69, %c0_70, %c0_71] : memref<10x10x128xbf16, #tpu.memory_space<vmem>>, vector<10x1x128xbf16>
      tpu.vector_store %arg6[%c0_69, %c0_70, %c0_71], %68 {strides = array<i32>} : memref<10x10x128xbf16, #tpu.memory_space<vmem>>, vector<10x1x128xbf16>,
      %c0_72 = arith.constant 0 : index
      %c9_73 = arith.constant 9 : index
      %c0_74 = arith.constant 0 : index
      %72 = vector.load %arg6[%c0_72, %c9_73, %c0_74] : memref<10x10x128xbf16, #tpu.memory_space<vmem>>, vector<10x1x128xbf16>
      tpu.vector_store %arg6[%c0_72, %c9_73, %c0_74], %68 {strides = array<i32>} : memref<10x10x128xbf16, #tpu.memory_space<vmem>>, vector<10x1x128xbf16>,
      %c0_75 = arith.constant 0 : index
      %c0_76 = arith.constant 0 : index
      %c0_77 = arith.constant 0 : index
      %c0_78 = arith.constant 0 : index
      %73 = vector.load %arg2[%c0_75, %c0_76, %c0_77, %c0_78] : memref<1x8x8x128xbf16, #tpu.memory_space<vmem>>, vector<1x8x8x128xbf16>
      %74 = vector.shape_cast %73 : vector<1x8x8x128xbf16> to vector<8x8x128xbf16>
      %c1_79 = arith.constant 1 : index
      %c1_80 = arith.constant 1 : index
      %c0_81 = arith.constant 0 : index
      %75 = vector.load %arg6[%c1_79, %c1_80, %c0_81] : memref<10x10x128xbf16, #tpu.memory_space<vmem>>, vector<8x8x128xbf16>
      tpu.vector_store %arg6[%c1_79, %c1_80, %c0_81], %74 {strides = array<i32>} : memref<10x10x128xbf16, #tpu.memory_space<vmem>>, vector<8x8x128xbf16>,
    } else {
    }
    %c0 = arith.constant 0 : index
    %c0_1 = arith.constant 0 : index
    %c0_2 = arith.constant 0 : index
    %3 = vector.load %arg6[%c0, %c0_1, %c0_2] : memref<10x10x128xbf16, #tpu.memory_space<vmem>>, vector<8x8x128xbf16>
    %4 = vector.shape_cast %3 : vector<8x8x128xbf16> to vector<64x128xbf16>
    %c0_3 = arith.constant 0 : index
    %c0_4 = arith.constant 0 : index
    %c0_5 = arith.constant 0 : index
    %5 = vector.load %arg3[%c0_3, %c0_4, %c0_5] : memref<9x128x128xbf16, #tpu.memory_space<vmem>>, vector<1x128x128xbf16>
    %6 = vector.shape_cast %5 : vector<1x128x128xbf16> to vector<128x128xbf16>
    %cst = arith.constant dense<0.000000e+00> : vector<64x128xf32>
    %7 = tpu.matmul %4, %6, %cst {dimension_numbers = #tpu.dot_dimension_numbers<[1], [0], [0], [1], [0, 0, 1, 1], [], []>} : vector<64x128xbf16>, vector<128x128xbf16>, vector<64x128xf32> -> vector<64x128xf32>
    %c0_6 = arith.constant 0 : index
    %c1 = arith.constant 1 : index
    %c0_7 = arith.constant 0 : index
    %8 = vector.load %arg6[%c0_6, %c1, %c0_7] : memref<10x10x128xbf16, #tpu.memory_space<vmem>>, vector<8x8x128xbf16>
    %9 = vector.shape_cast %8 : vector<8x8x128xbf16> to vector<64x128xbf16>
    %c1_8 = arith.constant 1 : index
    %c0_9 = arith.constant 0 : index
    %c0_10 = arith.constant 0 : index
    %10 = vector.load %arg3[%c1_8, %c0_9, %c0_10] : memref<9x128x128xbf16, #tpu.memory_space<vmem>>, vector<1x128x128xbf16>
    %11 = vector.shape_cast %10 : vector<1x128x128xbf16> to vector<128x128xbf16>
    %cst_11 = arith.constant dense<0.000000e+00> : vector<64x128xf32>
    %12 = tpu.matmul %9, %11, %cst_11 {dimension_numbers = #tpu.dot_dimension_numbers<[1], [0], [0], [1], [0, 0, 1, 1], [], []>} : vector<64x128xbf16>, vector<128x128xbf16>, vector<64x128xf32> -> vector<64x128xf32>
    %13 = arith.addf %7, %12 : vector<64x128xf32>
    %c0_12 = arith.constant 0 : index
    %c2 = arith.constant 2 : index
    %c0_13 = arith.constant 0 : index
    %14 = vector.load %arg6[%c0_12, %c2, %c0_13] : memref<10x10x128xbf16, #tpu.memory_space<vmem>>, vector<8x8x128xbf16>
    %15 = vector.shape_cast %14 : vector<8x8x128xbf16> to vector<64x128xbf16>
    %c2_14 = arith.constant 2 : index
    %c0_15 = arith.constant 0 : index
    %c0_16 = arith.constant 0 : index
    %16 = vector.load %arg3[%c2_14, %c0_15, %c0_16] : memref<9x128x128xbf16, #tpu.memory_space<vmem>>, vector<1x128x128xbf16>
    %17 = vector.shape_cast %16 : vector<1x128x128xbf16> to vector<128x128xbf16>
    %cst_17 = arith.constant dense<0.000000e+00> : vector<64x128xf32>
    %18 = tpu.matmul %15, %17, %cst_17 {dimension_numbers = #tpu.dot_dimension_numbers<[1], [0], [0], [1], [0, 0, 1, 1], [], []>} : vector<64x128xbf16>, vector<128x128xbf16>, vector<64x128xf32> -> vector<64x128xf32>
    %19 = arith.addf %13, %18 : vector<64x128xf32>
    %c1_18 = arith.constant 1 : index
    %c0_19 = arith.constant 0 : index
    %c0_20 = arith.constant 0 : index
    %20 = vector.load %arg6[%c1_18, %c0_19, %c0_20] : memref<10x10x128xbf16, #tpu.memory_space<vmem>>, vector<8x8x128xbf16>
    %21 = vector.shape_cast %20 : vector<8x8x128xbf16> to vector<64x128xbf16>
    %c3 = arith.constant 3 : index
    %c0_21 = arith.constant 0 : index
    %c0_22 = arith.constant 0 : index
    %22 = vector.load %arg3[%c3, %c0_21, %c0_22] : memref<9x128x128xbf16, #tpu.memory_space<vmem>>, vector<1x128x128xbf16>
    %23 = vector.shape_cast %22 : vector<1x128x128xbf16> to vector<128x128xbf16>
    %cst_23 = arith.constant dense<0.000000e+00> : vector<64x128xf32>
    %24 = tpu.matmul %21, %23, %cst_23 {dimension_numbers = #tpu.dot_dimension_numbers<[1], [0], [0], [1], [0, 0, 1, 1], [], []>} : vector<64x128xbf16>, vector<128x128xbf16>, vector<64x128xf32> -> vector<64x128xf32>
    %25 = arith.addf %19, %24 : vector<64x128xf32>
    %c1_24 = arith.constant 1 : index
    %c1_25 = arith.constant 1 : index
    %c0_26 = arith.constant 0 : index
    %26 = vector.load %arg6[%c1_24, %c1_25, %c0_26] : memref<10x10x128xbf16, #tpu.memory_space<vmem>>, vector<8x8x128xbf16>
    %27 = vector.shape_cast %26 : vector<8x8x128xbf16> to vector<64x128xbf16>
    %c4 = arith.constant 4 : index
    %c0_27 = arith.constant 0 : index
    %c0_28 = arith.constant 0 : index
    %28 = vector.load %arg3[%c4, %c0_27, %c0_28] : memref<9x128x128xbf16, #tpu.memory_space<vmem>>, vector<1x128x128xbf16>
    %29 = vector.shape_cast %28 : vector<1x128x128xbf16> to vector<128x128xbf16>
    %cst_29 = arith.constant dense<0.000000e+00> : vector<64x128xf32>
    %30 = tpu.matmul %27, %29, %cst_29 {dimension_numbers = #tpu.dot_dimension_numbers<[1], [0], [0], [1], [0, 0, 1, 1], [], []>} : vector<64x128xbf16>, vector<128x128xbf16>, vector<64x128xf32> -> vector<64x128xf32>
    %31 = arith.addf %25, %30 : vector<64x128xf32>
    %c1_30 = arith.constant 1 : index
    %c2_31 = arith.constant 2 : index
    %c0_32 = arith.constant 0 : index
    %32 = vector.load %arg6[%c1_30, %c2_31, %c0_32] : memref<10x10x128xbf16, #tpu.memory_space<vmem>>, vector<8x8x128xbf16>
    %33 = vector.shape_cast %32 : vector<8x8x128xbf16> to vector<64x128xbf16>
    %c5 = arith.constant 5 : index
    %c0_33 = arith.constant 0 : index
    %c0_34 = arith.constant 0 : index
    %34 = vector.load %arg3[%c5, %c0_33, %c0_34] : memref<9x128x128xbf16, #tpu.memory_space<vmem>>, vector<1x128x128xbf16>
    %35 = vector.shape_cast %34 : vector<1x128x128xbf16> to vector<128x128xbf16>
    %cst_35 = arith.constant dense<0.000000e+00> : vector<64x128xf32>
    %36 = tpu.matmul %33, %35, %cst_35 {dimension_numbers = #tpu.dot_dimension_numbers<[1], [0], [0], [1], [0, 0, 1, 1], [], []>} : vector<64x128xbf16>, vector<128x128xbf16>, vector<64x128xf32> -> vector<64x128xf32>
    %37 = arith.addf %31, %36 : vector<64x128xf32>
    %c2_36 = arith.constant 2 : index
    %c0_37 = arith.constant 0 : index
    %c0_38 = arith.constant 0 : index
    %38 = vector.load %arg6[%c2_36, %c0_37, %c0_38] : memref<10x10x128xbf16, #tpu.memory_space<vmem>>, vector<8x8x128xbf16>
    %39 = vector.shape_cast %38 : vector<8x8x128xbf16> to vector<64x128xbf16>
    %c6 = arith.constant 6 : index
    %c0_39 = arith.constant 0 : index
    %c0_40 = arith.constant 0 : index
    %40 = vector.load %arg3[%c6, %c0_39, %c0_40] : memref<9x128x128xbf16, #tpu.memory_space<vmem>>, vector<1x128x128xbf16>
    %41 = vector.shape_cast %40 : vector<1x128x128xbf16> to vector<128x128xbf16>
    %cst_41 = arith.constant dense<0.000000e+00> : vector<64x128xf32>
    %42 = tpu.matmul %39, %41, %cst_41 {dimension_numbers = #tpu.dot_dimension_numbers<[1], [0], [0], [1], [0, 0, 1, 1], [], []>} : vector<64x128xbf16>, vector<128x128xbf16>, vector<64x128xf32> -> vector<64x128xf32>
    %43 = arith.addf %37, %42 : vector<64x128xf32>
    %c2_42 = arith.constant 2 : index
    %c1_43 = arith.constant 1 : index
    %c0_44 = arith.constant 0 : index
    %44 = vector.load %arg6[%c2_42, %c1_43, %c0_44] : memref<10x10x128xbf16, #tpu.memory_space<vmem>>, vector<8x8x128xbf16>
    %45 = vector.shape_cast %44 : vector<8x8x128xbf16> to vector<64x128xbf16>
    %c7 = arith.constant 7 : index
    %c0_45 = arith.constant 0 : index
    %c0_46 = arith.constant 0 : index
    %46 = vector.load %arg3[%c7, %c0_45, %c0_46] : memref<9x128x128xbf16, #tpu.memory_space<vmem>>, vector<1x128x128xbf16>
    %47 = vector.shape_cast %46 : vector<1x128x128xbf16> to vector<128x128xbf16>
    %cst_47 = arith.constant dense<0.000000e+00> : vector<64x128xf32>
    %48 = tpu.matmul %45, %47, %cst_47 {dimension_numbers = #tpu.dot_dimension_numbers<[1], [0], [0], [1], [0, 0, 1, 1], [], []>} : vector<64x128xbf16>, vector<128x128xbf16>, vector<64x128xf32> -> vector<64x128xf32>
    %49 = arith.addf %43, %48 : vector<64x128xf32>
    %c2_48 = arith.constant 2 : index
    %c2_49 = arith.constant 2 : index
    %c0_50 = arith.constant 0 : index
    %50 = vector.load %arg6[%c2_48, %c2_49, %c0_50] : memref<10x10x128xbf16, #tpu.memory_space<vmem>>, vector<8x8x128xbf16>
    %51 = vector.shape_cast %50 : vector<8x8x128xbf16> to vector<64x128xbf16>
    %c8 = arith.constant 8 : index
    %c0_51 = arith.constant 0 : index
    %c0_52 = arith.constant 0 : index
    %52 = vector.load %arg3[%c8, %c0_51, %c0_52] : memref<9x128x128xbf16, #tpu.memory_space<vmem>>, vector<1x128x128xbf16>
    %53 = vector.shape_cast %52 : vector<1x128x128xbf16> to vector<128x128xbf16>
    %cst_53 = arith.constant dense<0.000000e+00> : vector<64x128xf32>
    %54 = tpu.matmul %51, %53, %cst_53 {dimension_numbers = #tpu.dot_dimension_numbers<[1], [0], [0], [1], [0, 0, 1, 1], [], []>} : vector<64x128xbf16>, vector<128x128xbf16>, vector<64x128xf32> -> vector<64x128xf32>
    %55 = arith.addf %49, %54 : vector<64x128xf32>
    %c0_54 = arith.constant 0 : index
    %c0_55 = arith.constant 0 : index
    %56 = vector.load %arg4[%c0_54, %c0_55] : memref<1x128xf32, #tpu.memory_space<vmem>>, vector<1x128xf32>
    %57 = vector.broadcast %56 : vector<1x128xf32> to vector<64x128xf32>
    %58 = arith.addf %55, %57 : vector<64x128xf32>
    %cst_56 = arith.constant 0.000000e+00 : f32
    %59 = vector.broadcast %cst_56 : f32 to vector<64x128xf32>
    %60 = arith.maximumf %58, %59 : vector<64x128xf32>
    %61 = vector.shape_cast %60 : vector<64x128xf32> to vector<8x8x128xf32>
    %62 = vector.shape_cast %61 : vector<8x8x128xf32> to vector<4x2x4x2x128xf32>
    %cst_57 = arith.constant dense<0xFF800000> : vector<4x4x128xf32>
    %63 = vector.multi_reduction <maximumf>, %62, %cst_57 [1, 3] : vector<4x2x4x2x128xf32> to vector<4x4x128xf32>
    %64 = vector.shape_cast %63 : vector<4x4x128xf32> to vector<1x4x4x128xf32>
    %65 = arith.truncf %64 : vector<1x4x4x128xf32> to vector<1x4x4x128xbf16>
    %c0_58 = arith.constant 0 : index
    %c0_59 = arith.constant 0 : index
    %c0_60 = arith.constant 0 : index
    %c0_61 = arith.constant 0 : index
    %66 = vector.load %arg5[%c0_58, %c0_59, %c0_60, %c0_61] : memref<1x4x4x128xbf16, #tpu.memory_space<vmem>>, vector<1x4x4x128xbf16>
    tpu.vector_store %arg5[%c0_58, %c0_59, %c0_60, %c0_61], %65 {strides = array<i32>} : memref<1x4x4x128xbf16, #tpu.memory_space<vmem>>, vector<1x4x4x128xbf16>,
    return
  }
  func.func @transform_0(%arg0: i32, %arg1: i32) -> (i32, i32, i32, i32) {
    %c0_i32 = arith.constant 0 : i32
    %c0_i32_0 = arith.constant 0 : i32
    %c0_i32_1 = arith.constant 0 : i32
    %c0_i32_2 = arith.constant 0 : i32
    return %arg0, %c0_i32, %c0_i32_0, %c0_i32_1 : i32, i32, i32, i32
  }
  func.func @transform_1(%arg0: i32, %arg1: i32) -> (i32, i32, i32) {
    %c0_i32 = arith.constant 0 : i32
    %c0_i32_0 = arith.constant 0 : i32
    %c0_i32_1 = arith.constant 0 : i32
    return %c0_i32, %c0_i32_0, %arg1 : i32, i32, i32
  }
  func.func @transform_2(%arg0: i32, %arg1: i32) -> (i32, i32) {
    %c0_i32 = arith.constant 0 : i32
    %c0_i32_0 = arith.constant 0 : i32
    return %c0_i32, %arg1 : i32, i32
  }
  func.func @transform_3(%arg0: i32, %arg1: i32) -> (i32, i32, i32, i32) {
    %c0_i32 = arith.constant 0 : i32
    %c0_i32_0 = arith.constant 0 : i32
    %c0_i32_1 = arith.constant 0 : i32
    return %arg0, %c0_i32, %c0_i32_0, %arg1 : i32, i32, i32, i32
  }
}

module attributes {stable_mosaic.version = 11 : i64} {
  func.func @_conv3x3_kernel(%arg0: i32, %arg1: i32, %arg2: memref<1x16x16x3xbf16, #tpu.memory_space<vmem>>, %arg3: memref<9x3x128xbf16, #tpu.memory_space<vmem>>, %arg4: memref<1x128xf32, #tpu.memory_space<vmem>>, %arg5: memref<1x8x8x128xbf16, #tpu.memory_space<vmem>>, %arg6: memref<18x18x3xbf16, #tpu.memory_space<vmem>>) attributes {dimension_semantics = [#tpu.dimension_semantics<parallel>, #tpu.dimension_semantics<arbitrary>], iteration_bounds = array<i64: 2, 1>, scalar_prefetch = 0 : i64, scratch_operands = 1 : i64, tpu.core_type = #tpu.core_type<tc>, window_params = [{transform_indices = @transform_0, window_bounds = array<i64: 1, 16, 16, 3>}, {transform_indices = @transform_1, window_bounds = array<i64: 9, 3, 128>}, {transform_indices = @transform_2, window_bounds = array<i64: 1, 128>}, {transform_indices = @transform_3, window_bounds = array<i64: 1, 8, 8, 128>}]} {
    %c0_i32 = arith.constant 0 : i32
    %0 = arith.cmpi eq, %arg1, %c0_i32 : i32
    %1 = arith.extui %0 : i1 to i32
    %c0_i32_0 = arith.constant 0 : i32
    %2 = arith.cmpi ne, %1, %c0_i32_0 : i32
    scf.if %2 {
      %cst_62 = arith.constant 0.000000e+00 : bf16
      %67 = vector.broadcast %cst_62 : bf16 to vector<1x18x3xbf16>
      %cst_63 = arith.constant 0.000000e+00 : bf16
      %68 = vector.broadcast %cst_63 : bf16 to vector<18x1x3xbf16>
      %c0_64 = arith.constant 0 : index
      %c0_65 = arith.constant 0 : index
      %c0_66 = arith.constant 0 : index
      %69 = vector.load %arg6[%c0_64, %c0_65, %c0_66] : memref<18x18x3xbf16, #tpu.memory_space<vmem>>, vector<1x18x3xbf16>
      tpu.vector_store %arg6[%c0_64, %c0_65, %c0_66], %67 {strides = array<i32>} : memref<18x18x3xbf16, #tpu.memory_space<vmem>>, vector<1x18x3xbf16>,
      %c17 = arith.constant 17 : index
      %c0_67 = arith.constant 0 : index
      %c0_68 = arith.constant 0 : index
      %70 = vector.load %arg6[%c17, %c0_67, %c0_68] : memref<18x18x3xbf16, #tpu.memory_space<vmem>>, vector<1x18x3xbf16>
      tpu.vector_store %arg6[%c17, %c0_67, %c0_68], %67 {strides = array<i32>} : memref<18x18x3xbf16, #tpu.memory_space<vmem>>, vector<1x18x3xbf16>,
      %c0_69 = arith.constant 0 : index
      %c0_70 = arith.constant 0 : index
      %c0_71 = arith.constant 0 : index
      %71 = vector.load %arg6[%c0_69, %c0_70, %c0_71] : memref<18x18x3xbf16, #tpu.memory_space<vmem>>, vector<18x1x3xbf16>
      tpu.vector_store %arg6[%c0_69, %c0_70, %c0_71], %68 {strides = array<i32>} : memref<18x18x3xbf16, #tpu.memory_space<vmem>>, vector<18x1x3xbf16>,
      %c0_72 = arith.constant 0 : index
      %c17_73 = arith.constant 17 : index
      %c0_74 = arith.constant 0 : index
      %72 = vector.load %arg6[%c0_72, %c17_73, %c0_74] : memref<18x18x3xbf16, #tpu.memory_space<vmem>>, vector<18x1x3xbf16>
      tpu.vector_store %arg6[%c0_72, %c17_73, %c0_74], %68 {strides = array<i32>} : memref<18x18x3xbf16, #tpu.memory_space<vmem>>, vector<18x1x3xbf16>,
      %c0_75 = arith.constant 0 : index
      %c0_76 = arith.constant 0 : index
      %c0_77 = arith.constant 0 : index
      %c0_78 = arith.constant 0 : index
      %73 = vector.load %arg2[%c0_75, %c0_76, %c0_77, %c0_78] : memref<1x16x16x3xbf16, #tpu.memory_space<vmem>>, vector<1x16x16x3xbf16>
      %74 = vector.shape_cast %73 : vector<1x16x16x3xbf16> to vector<16x16x3xbf16>
      %c1_79 = arith.constant 1 : index
      %c1_80 = arith.constant 1 : index
      %c0_81 = arith.constant 0 : index
      %75 = vector.load %arg6[%c1_79, %c1_80, %c0_81] : memref<18x18x3xbf16, #tpu.memory_space<vmem>>, vector<16x16x3xbf16>
      tpu.vector_store %arg6[%c1_79, %c1_80, %c0_81], %74 {strides = array<i32>} : memref<18x18x3xbf16, #tpu.memory_space<vmem>>, vector<16x16x3xbf16>,
    } else {
    }
    %c0 = arith.constant 0 : index
    %c0_1 = arith.constant 0 : index
    %c0_2 = arith.constant 0 : index
    %3 = vector.load %arg6[%c0, %c0_1, %c0_2] : memref<18x18x3xbf16, #tpu.memory_space<vmem>>, vector<16x16x3xbf16>
    %4 = vector.shape_cast %3 : vector<16x16x3xbf16> to vector<256x3xbf16>
    %c0_3 = arith.constant 0 : index
    %c0_4 = arith.constant 0 : index
    %c0_5 = arith.constant 0 : index
    %5 = vector.load %arg3[%c0_3, %c0_4, %c0_5] : memref<9x3x128xbf16, #tpu.memory_space<vmem>>, vector<1x3x128xbf16>
    %6 = vector.shape_cast %5 : vector<1x3x128xbf16> to vector<3x128xbf16>
    %cst = arith.constant dense<0.000000e+00> : vector<256x128xf32>
    %7 = tpu.matmul %4, %6, %cst {dimension_numbers = #tpu.dot_dimension_numbers<[1], [0], [0], [1], [0, 0, 1, 1], [], []>} : vector<256x3xbf16>, vector<3x128xbf16>, vector<256x128xf32> -> vector<256x128xf32>
    %c0_6 = arith.constant 0 : index
    %c1 = arith.constant 1 : index
    %c0_7 = arith.constant 0 : index
    %8 = vector.load %arg6[%c0_6, %c1, %c0_7] : memref<18x18x3xbf16, #tpu.memory_space<vmem>>, vector<16x16x3xbf16>
    %9 = vector.shape_cast %8 : vector<16x16x3xbf16> to vector<256x3xbf16>
    %c1_8 = arith.constant 1 : index
    %c0_9 = arith.constant 0 : index
    %c0_10 = arith.constant 0 : index
    %10 = vector.load %arg3[%c1_8, %c0_9, %c0_10] : memref<9x3x128xbf16, #tpu.memory_space<vmem>>, vector<1x3x128xbf16>
    %11 = vector.shape_cast %10 : vector<1x3x128xbf16> to vector<3x128xbf16>
    %cst_11 = arith.constant dense<0.000000e+00> : vector<256x128xf32>
    %12 = tpu.matmul %9, %11, %cst_11 {dimension_numbers = #tpu.dot_dimension_numbers<[1], [0], [0], [1], [0, 0, 1, 1], [], []>} : vector<256x3xbf16>, vector<3x128xbf16>, vector<256x128xf32> -> vector<256x128xf32>
    %13 = arith.addf %7, %12 : vector<256x128xf32>
    %c0_12 = arith.constant 0 : index
    %c2 = arith.constant 2 : index
    %c0_13 = arith.constant 0 : index
    %14 = vector.load %arg6[%c0_12, %c2, %c0_13] : memref<18x18x3xbf16, #tpu.memory_space<vmem>>, vector<16x16x3xbf16>
    %15 = vector.shape_cast %14 : vector<16x16x3xbf16> to vector<256x3xbf16>
    %c2_14 = arith.constant 2 : index
    %c0_15 = arith.constant 0 : index
    %c0_16 = arith.constant 0 : index
    %16 = vector.load %arg3[%c2_14, %c0_15, %c0_16] : memref<9x3x128xbf16, #tpu.memory_space<vmem>>, vector<1x3x128xbf16>
    %17 = vector.shape_cast %16 : vector<1x3x128xbf16> to vector<3x128xbf16>
    %cst_17 = arith.constant dense<0.000000e+00> : vector<256x128xf32>
    %18 = tpu.matmul %15, %17, %cst_17 {dimension_numbers = #tpu.dot_dimension_numbers<[1], [0], [0], [1], [0, 0, 1, 1], [], []>} : vector<256x3xbf16>, vector<3x128xbf16>, vector<256x128xf32> -> vector<256x128xf32>
    %19 = arith.addf %13, %18 : vector<256x128xf32>
    %c1_18 = arith.constant 1 : index
    %c0_19 = arith.constant 0 : index
    %c0_20 = arith.constant 0 : index
    %20 = vector.load %arg6[%c1_18, %c0_19, %c0_20] : memref<18x18x3xbf16, #tpu.memory_space<vmem>>, vector<16x16x3xbf16>
    %21 = vector.shape_cast %20 : vector<16x16x3xbf16> to vector<256x3xbf16>
    %c3 = arith.constant 3 : index
    %c0_21 = arith.constant 0 : index
    %c0_22 = arith.constant 0 : index
    %22 = vector.load %arg3[%c3, %c0_21, %c0_22] : memref<9x3x128xbf16, #tpu.memory_space<vmem>>, vector<1x3x128xbf16>
    %23 = vector.shape_cast %22 : vector<1x3x128xbf16> to vector<3x128xbf16>
    %cst_23 = arith.constant dense<0.000000e+00> : vector<256x128xf32>
    %24 = tpu.matmul %21, %23, %cst_23 {dimension_numbers = #tpu.dot_dimension_numbers<[1], [0], [0], [1], [0, 0, 1, 1], [], []>} : vector<256x3xbf16>, vector<3x128xbf16>, vector<256x128xf32> -> vector<256x128xf32>
    %25 = arith.addf %19, %24 : vector<256x128xf32>
    %c1_24 = arith.constant 1 : index
    %c1_25 = arith.constant 1 : index
    %c0_26 = arith.constant 0 : index
    %26 = vector.load %arg6[%c1_24, %c1_25, %c0_26] : memref<18x18x3xbf16, #tpu.memory_space<vmem>>, vector<16x16x3xbf16>
    %27 = vector.shape_cast %26 : vector<16x16x3xbf16> to vector<256x3xbf16>
    %c4 = arith.constant 4 : index
    %c0_27 = arith.constant 0 : index
    %c0_28 = arith.constant 0 : index
    %28 = vector.load %arg3[%c4, %c0_27, %c0_28] : memref<9x3x128xbf16, #tpu.memory_space<vmem>>, vector<1x3x128xbf16>
    %29 = vector.shape_cast %28 : vector<1x3x128xbf16> to vector<3x128xbf16>
    %cst_29 = arith.constant dense<0.000000e+00> : vector<256x128xf32>
    %30 = tpu.matmul %27, %29, %cst_29 {dimension_numbers = #tpu.dot_dimension_numbers<[1], [0], [0], [1], [0, 0, 1, 1], [], []>} : vector<256x3xbf16>, vector<3x128xbf16>, vector<256x128xf32> -> vector<256x128xf32>
    %31 = arith.addf %25, %30 : vector<256x128xf32>
    %c1_30 = arith.constant 1 : index
    %c2_31 = arith.constant 2 : index
    %c0_32 = arith.constant 0 : index
    %32 = vector.load %arg6[%c1_30, %c2_31, %c0_32] : memref<18x18x3xbf16, #tpu.memory_space<vmem>>, vector<16x16x3xbf16>
    %33 = vector.shape_cast %32 : vector<16x16x3xbf16> to vector<256x3xbf16>
    %c5 = arith.constant 5 : index
    %c0_33 = arith.constant 0 : index
    %c0_34 = arith.constant 0 : index
    %34 = vector.load %arg3[%c5, %c0_33, %c0_34] : memref<9x3x128xbf16, #tpu.memory_space<vmem>>, vector<1x3x128xbf16>
    %35 = vector.shape_cast %34 : vector<1x3x128xbf16> to vector<3x128xbf16>
    %cst_35 = arith.constant dense<0.000000e+00> : vector<256x128xf32>
    %36 = tpu.matmul %33, %35, %cst_35 {dimension_numbers = #tpu.dot_dimension_numbers<[1], [0], [0], [1], [0, 0, 1, 1], [], []>} : vector<256x3xbf16>, vector<3x128xbf16>, vector<256x128xf32> -> vector<256x128xf32>
    %37 = arith.addf %31, %36 : vector<256x128xf32>
    %c2_36 = arith.constant 2 : index
    %c0_37 = arith.constant 0 : index
    %c0_38 = arith.constant 0 : index
    %38 = vector.load %arg6[%c2_36, %c0_37, %c0_38] : memref<18x18x3xbf16, #tpu.memory_space<vmem>>, vector<16x16x3xbf16>
    %39 = vector.shape_cast %38 : vector<16x16x3xbf16> to vector<256x3xbf16>
    %c6 = arith.constant 6 : index
    %c0_39 = arith.constant 0 : index
    %c0_40 = arith.constant 0 : index
    %40 = vector.load %arg3[%c6, %c0_39, %c0_40] : memref<9x3x128xbf16, #tpu.memory_space<vmem>>, vector<1x3x128xbf16>
    %41 = vector.shape_cast %40 : vector<1x3x128xbf16> to vector<3x128xbf16>
    %cst_41 = arith.constant dense<0.000000e+00> : vector<256x128xf32>
    %42 = tpu.matmul %39, %41, %cst_41 {dimension_numbers = #tpu.dot_dimension_numbers<[1], [0], [0], [1], [0, 0, 1, 1], [], []>} : vector<256x3xbf16>, vector<3x128xbf16>, vector<256x128xf32> -> vector<256x128xf32>
    %43 = arith.addf %37, %42 : vector<256x128xf32>
    %c2_42 = arith.constant 2 : index
    %c1_43 = arith.constant 1 : index
    %c0_44 = arith.constant 0 : index
    %44 = vector.load %arg6[%c2_42, %c1_43, %c0_44] : memref<18x18x3xbf16, #tpu.memory_space<vmem>>, vector<16x16x3xbf16>
    %45 = vector.shape_cast %44 : vector<16x16x3xbf16> to vector<256x3xbf16>
    %c7 = arith.constant 7 : index
    %c0_45 = arith.constant 0 : index
    %c0_46 = arith.constant 0 : index
    %46 = vector.load %arg3[%c7, %c0_45, %c0_46] : memref<9x3x128xbf16, #tpu.memory_space<vmem>>, vector<1x3x128xbf16>
    %47 = vector.shape_cast %46 : vector<1x3x128xbf16> to vector<3x128xbf16>
    %cst_47 = arith.constant dense<0.000000e+00> : vector<256x128xf32>
    %48 = tpu.matmul %45, %47, %cst_47 {dimension_numbers = #tpu.dot_dimension_numbers<[1], [0], [0], [1], [0, 0, 1, 1], [], []>} : vector<256x3xbf16>, vector<3x128xbf16>, vector<256x128xf32> -> vector<256x128xf32>
    %49 = arith.addf %43, %48 : vector<256x128xf32>
    %c2_48 = arith.constant 2 : index
    %c2_49 = arith.constant 2 : index
    %c0_50 = arith.constant 0 : index
    %50 = vector.load %arg6[%c2_48, %c2_49, %c0_50] : memref<18x18x3xbf16, #tpu.memory_space<vmem>>, vector<16x16x3xbf16>
    %51 = vector.shape_cast %50 : vector<16x16x3xbf16> to vector<256x3xbf16>
    %c8 = arith.constant 8 : index
    %c0_51 = arith.constant 0 : index
    %c0_52 = arith.constant 0 : index
    %52 = vector.load %arg3[%c8, %c0_51, %c0_52] : memref<9x3x128xbf16, #tpu.memory_space<vmem>>, vector<1x3x128xbf16>
    %53 = vector.shape_cast %52 : vector<1x3x128xbf16> to vector<3x128xbf16>
    %cst_53 = arith.constant dense<0.000000e+00> : vector<256x128xf32>
    %54 = tpu.matmul %51, %53, %cst_53 {dimension_numbers = #tpu.dot_dimension_numbers<[1], [0], [0], [1], [0, 0, 1, 1], [], []>} : vector<256x3xbf16>, vector<3x128xbf16>, vector<256x128xf32> -> vector<256x128xf32>
    %55 = arith.addf %49, %54 : vector<256x128xf32>
    %c0_54 = arith.constant 0 : index
    %c0_55 = arith.constant 0 : index
    %56 = vector.load %arg4[%c0_54, %c0_55] : memref<1x128xf32, #tpu.memory_space<vmem>>, vector<1x128xf32>
    %57 = vector.broadcast %56 : vector<1x128xf32> to vector<256x128xf32>
    %58 = arith.addf %55, %57 : vector<256x128xf32>
    %cst_56 = arith.constant 0.000000e+00 : f32
    %59 = vector.broadcast %cst_56 : f32 to vector<256x128xf32>
    %60 = arith.maximumf %58, %59 : vector<256x128xf32>
    %61 = vector.shape_cast %60 : vector<256x128xf32> to vector<16x16x128xf32>
    %62 = vector.shape_cast %61 : vector<16x16x128xf32> to vector<8x2x8x2x128xf32>
    %cst_57 = arith.constant dense<0xFF800000> : vector<8x8x128xf32>
    %63 = vector.multi_reduction <maximumf>, %62, %cst_57 [1, 3] : vector<8x2x8x2x128xf32> to vector<8x8x128xf32>
    %64 = vector.shape_cast %63 : vector<8x8x128xf32> to vector<1x8x8x128xf32>
    %65 = arith.truncf %64 : vector<1x8x8x128xf32> to vector<1x8x8x128xbf16>
    %c0_58 = arith.constant 0 : index
    %c0_59 = arith.constant 0 : index
    %c0_60 = arith.constant 0 : index
    %c0_61 = arith.constant 0 : index
    %66 = vector.load %arg5[%c0_58, %c0_59, %c0_60, %c0_61] : memref<1x8x8x128xbf16, #tpu.memory_space<vmem>>, vector<1x8x8x128xbf16>
    tpu.vector_store %arg5[%c0_58, %c0_59, %c0_60, %c0_61], %65 {strides = array<i32>} : memref<1x8x8x128xbf16, #tpu.memory_space<vmem>>, vector<1x8x8x128xbf16>,
    return
  }
  func.func @transform_0(%arg0: i32, %arg1: i32) -> (i32, i32, i32, i32) {
    %c0_i32 = arith.constant 0 : i32
    %c0_i32_0 = arith.constant 0 : i32
    %c0_i32_1 = arith.constant 0 : i32
    %c0_i32_2 = arith.constant 0 : i32
    return %arg0, %c0_i32, %c0_i32_0, %c0_i32_1 : i32, i32, i32, i32
  }
  func.func @transform_1(%arg0: i32, %arg1: i32) -> (i32, i32, i32) {
    %c0_i32 = arith.constant 0 : i32
    %c0_i32_0 = arith.constant 0 : i32
    %c0_i32_1 = arith.constant 0 : i32
    return %c0_i32, %c0_i32_0, %arg1 : i32, i32, i32
  }
  func.func @transform_2(%arg0: i32, %arg1: i32) -> (i32, i32) {
    %c0_i32 = arith.constant 0 : i32
    %c0_i32_0 = arith.constant 0 : i32
    return %c0_i32, %arg1 : i32, i32
  }
  func.func @transform_3(%arg0: i32, %arg1: i32) -> (i32, i32, i32, i32) {
    %c0_i32 = arith.constant 0 : i32
    %c0_i32_0 = arith.constant 0 : i32
    %c0_i32_1 = arith.constant 0 : i32
    return %arg0, %c0_i32, %c0_i32_0, %arg1 : i32, i32, i32, i32
  }
}

module attributes {stable_mosaic.version = 11 : i64} {
  func.func @_linear_kernel(%arg0: i32, %arg1: i32, %arg2: memref<2x2048xbf16, #tpu.memory_space<vmem>>, %arg3: memref<2048x128xbf16, #tpu.memory_space<vmem>>, %arg4: memref<1x128xf32, #tpu.memory_space<vmem>>, %arg5: memref<2x128xbf16, #tpu.memory_space<vmem>>, %arg6: memref<2x128xf32, #tpu.memory_space<vmem>>) attributes {dimension_semantics = [#tpu.dimension_semantics<parallel>, #tpu.dimension_semantics<arbitrary>], iteration_bounds = array<i64: 1, 1>, scalar_prefetch = 0 : i64, scratch_operands = 1 : i64, tpu.core_type = #tpu.core_type<tc>, window_params = [{transform_indices = @transform_0, window_bounds = array<i64: 2, 2048>}, {transform_indices = @transform_1, window_bounds = array<i64: 2048, 128>}, {transform_indices = @transform_2, window_bounds = array<i64: 1, 128>}, {transform_indices = @transform_3, window_bounds = array<i64: 2, 128>}]} {
    %c0_i32 = arith.constant 0 : i32
    %0 = arith.cmpi eq, %arg1, %c0_i32 : i32
    %1 = arith.extui %0 : i1 to i32
    %c0_i32_0 = arith.constant 0 : i32
    %2 = arith.cmpi ne, %1, %c0_i32_0 : i32
    scf.if %2 {
      %cst_10 = arith.constant 0.000000e+00 : f32
      %12 = vector.broadcast %cst_10 : f32 to vector<2x128xf32>
      %c0_11 = arith.constant 0 : index
      %c0_12 = arith.constant 0 : index
      %13 = vector.load %arg6[%c0_11, %c0_12] : memref<2x128xf32, #tpu.memory_space<vmem>>, vector<2x128xf32>
      tpu.vector_store %arg6[%c0_11, %c0_12], %12 {strides = array<i32>} : memref<2x128xf32, #tpu.memory_space<vmem>>, vector<2x128xf32>,
    } else {
    }
    %c0 = arith.constant 0 : index
    %c0_1 = arith.constant 0 : index
    %3 = vector.load %arg6[%c0, %c0_1] : memref<2x128xf32, #tpu.memory_space<vmem>>, vector<2x128xf32>
    %c0_2 = arith.constant 0 : index
    %c0_3 = arith.constant 0 : index
    %4 = vector.load %arg2[%c0_2, %c0_3] : memref<2x2048xbf16, #tpu.memory_space<vmem>>, vector<2x2048xbf16>
    %c0_4 = arith.constant 0 : index
    %c0_5 = arith.constant 0 : index
    %5 = vector.load %arg3[%c0_4, %c0_5] : memref<2048x128xbf16, #tpu.memory_space<vmem>>, vector<2048x128xbf16>
    %cst = arith.constant dense<0.000000e+00> : vector<2x128xf32>
    %6 = tpu.matmul %4, %5, %cst {dimension_numbers = #tpu.dot_dimension_numbers<[1], [0], [0], [1], [0, 0, 1, 1], [], []>} : vector<2x2048xbf16>, vector<2048x128xbf16>, vector<2x128xf32> -> vector<2x128xf32>
    %7 = arith.addf %3, %6 : vector<2x128xf32>
    %c0_6 = arith.constant 0 : index
    %c0_7 = arith.constant 0 : index
    %8 = vector.load %arg6[%c0_6, %c0_7] : memref<2x128xf32, #tpu.memory_space<vmem>>, vector<2x128xf32>
    tpu.vector_store %arg6[%c0_6, %c0_7], %7 {strides = array<i32>} : memref<2x128xf32, #tpu.memory_space<vmem>>, vector<2x128xf32>,
    %c0_i32_8 = arith.constant 0 : i32
    %9 = arith.cmpi eq, %arg1, %c0_i32_8 : i32
    %10 = arith.extui %9 : i1 to i32
    %c0_i32_9 = arith.constant 0 : i32
    %11 = arith.cmpi ne, %10, %c0_i32_9 : i32
    scf.if %11 {
      %c0_10 = arith.constant 0 : index
      %c0_11 = arith.constant 0 : index
      %12 = vector.load %arg6[%c0_10, %c0_11] : memref<2x128xf32, #tpu.memory_space<vmem>>, vector<2x128xf32>
      %c0_12 = arith.constant 0 : index
      %c0_13 = arith.constant 0 : index
      %13 = vector.load %arg4[%c0_12, %c0_13] : memref<1x128xf32, #tpu.memory_space<vmem>>, vector<1x128xf32>
      %14 = vector.broadcast %13 : vector<1x128xf32> to vector<2x128xf32>
      %15 = arith.addf %12, %14 : vector<2x128xf32>
      %cst_14 = arith.constant 0.000000e+00 : f32
      %16 = vector.broadcast %cst_14 : f32 to vector<2x128xf32>
      %17 = arith.maximumf %15, %16 : vector<2x128xf32>
      %18 = arith.truncf %17 : vector<2x128xf32> to vector<2x128xbf16>
      %c0_15 = arith.constant 0 : index
      %c0_16 = arith.constant 0 : index
      %19 = vector.load %arg5[%c0_15, %c0_16] : memref<2x128xbf16, #tpu.memory_space<vmem>>, vector<2x128xbf16>
      tpu.vector_store %arg5[%c0_15, %c0_16], %18 {strides = array<i32>} : memref<2x128xbf16, #tpu.memory_space<vmem>>, vector<2x128xbf16>,
    } else {
    }
    return
  }
  func.func @transform_0(%arg0: i32, %arg1: i32) -> (i32, i32) {
    %c0_i32 = arith.constant 0 : i32
    %c0_i32_0 = arith.constant 0 : i32
    return %c0_i32, %arg1 : i32, i32
  }
  func.func @transform_1(%arg0: i32, %arg1: i32) -> (i32, i32) {
    %c0_i32 = arith.constant 0 : i32
    return %arg1, %arg0 : i32, i32
  }
  func.func @transform_2(%arg0: i32, %arg1: i32) -> (i32, i32) {
    %c0_i32 = arith.constant 0 : i32
    %c0_i32_0 = arith.constant 0 : i32
    return %c0_i32, %arg0 : i32, i32
  }
  func.func @transform_3(%arg0: i32, %arg1: i32) -> (i32, i32) {
    %c0_i32 = arith.constant 0 : i32
    %c0_i32_0 = arith.constant 0 : i32
    return %c0_i32, %arg0 : i32, i32
  }
}

module attributes {stable_mosaic.version = 11 : i64} {
  func.func @_linear_kernel(%arg0: i32, %arg1: i32, %arg2: memref<2x128xbf16, #tpu.memory_space<vmem>>, %arg3: memref<128x128xbf16, #tpu.memory_space<vmem>>, %arg4: memref<1x128xf32, #tpu.memory_space<vmem>>, %arg5: memref<2x128xbf16, #tpu.memory_space<vmem>>, %arg6: memref<2x128xf32, #tpu.memory_space<vmem>>) attributes {dimension_semantics = [#tpu.dimension_semantics<parallel>, #tpu.dimension_semantics<arbitrary>], iteration_bounds = array<i64: 1, 1>, scalar_prefetch = 0 : i64, scratch_operands = 1 : i64, tpu.core_type = #tpu.core_type<tc>, window_params = [{transform_indices = @transform_0, window_bounds = array<i64: 2, 128>}, {transform_indices = @transform_1, window_bounds = array<i64: 128, 128>}, {transform_indices = @transform_2, window_bounds = array<i64: 1, 128>}, {transform_indices = @transform_3, window_bounds = array<i64: 2, 128>}]} {
    %c0_i32 = arith.constant 0 : i32
    %0 = arith.cmpi eq, %arg1, %c0_i32 : i32
    %1 = arith.extui %0 : i1 to i32
    %c0_i32_0 = arith.constant 0 : i32
    %2 = arith.cmpi ne, %1, %c0_i32_0 : i32
    scf.if %2 {
      %cst_10 = arith.constant 0.000000e+00 : f32
      %12 = vector.broadcast %cst_10 : f32 to vector<2x128xf32>
      %c0_11 = arith.constant 0 : index
      %c0_12 = arith.constant 0 : index
      %13 = vector.load %arg6[%c0_11, %c0_12] : memref<2x128xf32, #tpu.memory_space<vmem>>, vector<2x128xf32>
      tpu.vector_store %arg6[%c0_11, %c0_12], %12 {strides = array<i32>} : memref<2x128xf32, #tpu.memory_space<vmem>>, vector<2x128xf32>,
    } else {
    }
    %c0 = arith.constant 0 : index
    %c0_1 = arith.constant 0 : index
    %3 = vector.load %arg6[%c0, %c0_1] : memref<2x128xf32, #tpu.memory_space<vmem>>, vector<2x128xf32>
    %c0_2 = arith.constant 0 : index
    %c0_3 = arith.constant 0 : index
    %4 = vector.load %arg2[%c0_2, %c0_3] : memref<2x128xbf16, #tpu.memory_space<vmem>>, vector<2x128xbf16>
    %c0_4 = arith.constant 0 : index
    %c0_5 = arith.constant 0 : index
    %5 = vector.load %arg3[%c0_4, %c0_5] : memref<128x128xbf16, #tpu.memory_space<vmem>>, vector<128x128xbf16>
    %cst = arith.constant dense<0.000000e+00> : vector<2x128xf32>
    %6 = tpu.matmul %4, %5, %cst {dimension_numbers = #tpu.dot_dimension_numbers<[1], [0], [0], [1], [0, 0, 1, 1], [], []>} : vector<2x128xbf16>, vector<128x128xbf16>, vector<2x128xf32> -> vector<2x128xf32>
    %7 = arith.addf %3, %6 : vector<2x128xf32>
    %c0_6 = arith.constant 0 : index
    %c0_7 = arith.constant 0 : index
    %8 = vector.load %arg6[%c0_6, %c0_7] : memref<2x128xf32, #tpu.memory_space<vmem>>, vector<2x128xf32>
    tpu.vector_store %arg6[%c0_6, %c0_7], %7 {strides = array<i32>} : memref<2x128xf32, #tpu.memory_space<vmem>>, vector<2x128xf32>,
    %c0_i32_8 = arith.constant 0 : i32
    %9 = arith.cmpi eq, %arg1, %c0_i32_8 : i32
    %10 = arith.extui %9 : i1 to i32
    %c0_i32_9 = arith.constant 0 : i32
    %11 = arith.cmpi ne, %10, %c0_i32_9 : i32
    scf.if %11 {
      %c0_10 = arith.constant 0 : index
      %c0_11 = arith.constant 0 : index
      %12 = vector.load %arg6[%c0_10, %c0_11] : memref<2x128xf32, #tpu.memory_space<vmem>>, vector<2x128xf32>
      %c0_12 = arith.constant 0 : index
      %c0_13 = arith.constant 0 : index
      %13 = vector.load %arg4[%c0_12, %c0_13] : memref<1x128xf32, #tpu.memory_space<vmem>>, vector<1x128xf32>
      %14 = vector.broadcast %13 : vector<1x128xf32> to vector<2x128xf32>
      %15 = arith.addf %12, %14 : vector<2x128xf32>
      %cst_14 = arith.constant 0.000000e+00 : f32
      %16 = vector.broadcast %cst_14 : f32 to vector<2x128xf32>
      %17 = arith.maximumf %15, %16 : vector<2x128xf32>
      %18 = arith.truncf %17 : vector<2x128xf32> to vector<2x128xbf16>
      %c0_15 = arith.constant 0 : index
      %c0_16 = arith.constant 0 : index
      %19 = vector.load %arg5[%c0_15, %c0_16] : memref<2x128xbf16, #tpu.memory_space<vmem>>, vector<2x128xbf16>
      tpu.vector_store %arg5[%c0_15, %c0_16], %18 {strides = array<i32>} : memref<2x128xbf16, #tpu.memory_space<vmem>>, vector<2x128xbf16>,
    } else {
    }
    return
  }
  func.func @transform_0(%arg0: i32, %arg1: i32) -> (i32, i32) {
    %c0_i32 = arith.constant 0 : i32
    %c0_i32_0 = arith.constant 0 : i32
    return %c0_i32, %arg1 : i32, i32
  }
  func.func @transform_1(%arg0: i32, %arg1: i32) -> (i32, i32) {
    %c0_i32 = arith.constant 0 : i32
    return %arg1, %arg0 : i32, i32
  }
  func.func @transform_2(%arg0: i32, %arg1: i32) -> (i32, i32) {
    %c0_i32 = arith.constant 0 : i32
    %c0_i32_0 = arith.constant 0 : i32
    return %c0_i32, %arg0 : i32, i32
  }
  func.func @transform_3(%arg0: i32, %arg1: i32) -> (i32, i32) {
    %c0_i32 = arith.constant 0 : i32
    %c0_i32_0 = arith.constant 0 : i32
    return %c0_i32, %arg0 : i32, i32
  }
}

module attributes {stable_mosaic.version = 11 : i64} {
  func.func @_linear_kernel(%arg0: i32, %arg1: i32, %arg2: memref<2x128xbf16, #tpu.memory_space<vmem>>, %arg3: memref<128x128xbf16, #tpu.memory_space<vmem>>, %arg4: memref<1x128xf32, #tpu.memory_space<vmem>>, %arg5: memref<2x128xf32, #tpu.memory_space<vmem>>, %arg6: memref<2x128xf32, #tpu.memory_space<vmem>>) attributes {dimension_semantics = [#tpu.dimension_semantics<parallel>, #tpu.dimension_semantics<arbitrary>], iteration_bounds = array<i64: 1, 1>, scalar_prefetch = 0 : i64, scratch_operands = 1 : i64, tpu.core_type = #tpu.core_type<tc>, window_params = [{transform_indices = @transform_0, window_bounds = array<i64: 2, 128>}, {transform_indices = @transform_1, window_bounds = array<i64: 128, 128>}, {transform_indices = @transform_2, window_bounds = array<i64: 1, 128>}, {transform_indices = @transform_3, window_bounds = array<i64: 2, 128>}]} {
    %c0_i32 = arith.constant 0 : i32
    %0 = arith.cmpi eq, %arg1, %c0_i32 : i32
    %1 = arith.extui %0 : i1 to i32
    %c0_i32_0 = arith.constant 0 : i32
    %2 = arith.cmpi ne, %1, %c0_i32_0 : i32
    scf.if %2 {
      %cst_10 = arith.constant 0.000000e+00 : f32
      %12 = vector.broadcast %cst_10 : f32 to vector<2x128xf32>
      %c0_11 = arith.constant 0 : index
      %c0_12 = arith.constant 0 : index
      %13 = vector.load %arg6[%c0_11, %c0_12] : memref<2x128xf32, #tpu.memory_space<vmem>>, vector<2x128xf32>
      tpu.vector_store %arg6[%c0_11, %c0_12], %12 {strides = array<i32>} : memref<2x128xf32, #tpu.memory_space<vmem>>, vector<2x128xf32>,
    } else {
    }
    %c0 = arith.constant 0 : index
    %c0_1 = arith.constant 0 : index
    %3 = vector.load %arg6[%c0, %c0_1] : memref<2x128xf32, #tpu.memory_space<vmem>>, vector<2x128xf32>
    %c0_2 = arith.constant 0 : index
    %c0_3 = arith.constant 0 : index
    %4 = vector.load %arg2[%c0_2, %c0_3] : memref<2x128xbf16, #tpu.memory_space<vmem>>, vector<2x128xbf16>
    %c0_4 = arith.constant 0 : index
    %c0_5 = arith.constant 0 : index
    %5 = vector.load %arg3[%c0_4, %c0_5] : memref<128x128xbf16, #tpu.memory_space<vmem>>, vector<128x128xbf16>
    %cst = arith.constant dense<0.000000e+00> : vector<2x128xf32>
    %6 = tpu.matmul %4, %5, %cst {dimension_numbers = #tpu.dot_dimension_numbers<[1], [0], [0], [1], [0, 0, 1, 1], [], []>} : vector<2x128xbf16>, vector<128x128xbf16>, vector<2x128xf32> -> vector<2x128xf32>
    %7 = arith.addf %3, %6 : vector<2x128xf32>
    %c0_6 = arith.constant 0 : index
    %c0_7 = arith.constant 0 : index
    %8 = vector.load %arg6[%c0_6, %c0_7] : memref<2x128xf32, #tpu.memory_space<vmem>>, vector<2x128xf32>
    tpu.vector_store %arg6[%c0_6, %c0_7], %7 {strides = array<i32>} : memref<2x128xf32, #tpu.memory_space<vmem>>, vector<2x128xf32>,
    %c0_i32_8 = arith.constant 0 : i32
    %9 = arith.cmpi eq, %arg1, %c0_i32_8 : i32
    %10 = arith.extui %9 : i1 to i32
    %c0_i32_9 = arith.constant 0 : i32
    %11 = arith.cmpi ne, %10, %c0_i32_9 : i32
    scf.if %11 {
      %c0_10 = arith.constant 0 : index
      %c0_11 = arith.constant 0 : index
      %12 = vector.load %arg6[%c0_10, %c0_11] : memref<2x128xf32, #tpu.memory_space<vmem>>, vector<2x128xf32>
      %c0_12 = arith.constant 0 : index
      %c0_13 = arith.constant 0 : index
      %13 = vector.load %arg4[%c0_12, %c0_13] : memref<1x128xf32, #tpu.memory_space<vmem>>, vector<1x128xf32>
      %14 = vector.broadcast %13 : vector<1x128xf32> to vector<2x128xf32>
      %15 = arith.addf %12, %14 : vector<2x128xf32>
      %c0_14 = arith.constant 0 : index
      %c0_15 = arith.constant 0 : index
      %16 = vector.load %arg5[%c0_14, %c0_15] : memref<2x128xf32, #tpu.memory_space<vmem>>, vector<2x128xf32>
      tpu.vector_store %arg5[%c0_14, %c0_15], %15 {strides = array<i32>} : memref<2x128xf32, #tpu.memory_space<vmem>>, vector<2x128xf32>,
    } else {
    }
    return
  }
  func.func @transform_0(%arg0: i32, %arg1: i32) -> (i32, i32) {
    %c0_i32 = arith.constant 0 : i32
    %c0_i32_0 = arith.constant 0 : i32
    return %c0_i32, %arg1 : i32, i32
  }
  func.func @transform_1(%arg0: i32, %arg1: i32) -> (i32, i32) {
    %c0_i32 = arith.constant 0 : i32
    return %arg1, %arg0 : i32, i32
  }
  func.func @transform_2(%arg0: i32, %arg1: i32) -> (i32, i32) {
    %c0_i32 = arith.constant 0 : i32
    %c0_i32_0 = arith.constant 0 : i32
    return %c0_i32, %arg0 : i32, i32
  }
  func.func @transform_3(%arg0: i32, %arg1: i32) -> (i32, i32) {
    %c0_i32 = arith.constant 0 : i32
    %c0_i32_0 = arith.constant 0 : i32
    return %c0_i32, %arg0 : i32, i32
  }
}

</mosaic_0001>

<llo_original>
// kernel: forward.8
$region0: #{forward.8}
  #allocation0 [shape = 'u32[]', space=smem, size = 0x4, offset = 0x4, fixed_abs, tag = 'smem constant byte address 0x4 - core index']
  #allocation1 [shape = 'u32[144,128]{1,0:T(1,128)}', space=vmem, size = 0x12000, scoped, tag = 'internal scratch']
  #allocation2 [shape = 'f32[2,128]{1,0:T(2,128)}', space=vmem, size = 0x400, scoped, tag = 'scratch operand']
  %s0 = inlined_call_operand.vmem [shape: bf16[2,128], index: 0, kind: input, shape index: {}]
  %s1 = inlined_call_operand.vmem [shape: bf16[128,128], index: 1, kind: input, shape index: {}]
  %s2 = inlined_call_operand.vmem [shape: f32[1,128], index: 2, kind: input, shape index: {}]
  %s3 = inlined_call_operand.vmem [shape: bf16[2,128], index: 3, kind: output, shape index: {}]
  %s4 = sld [smem:[#allocation0]]
  $region30: #{forward.8} parent=0
    _
  %s6 = ssub.s32 1, %s4
  %s7 = scalar_select 0, %s6, %s4
  // Predicated region
  $region2: #{forward.8} parent=0 // pred_check
    _
  $region3: #{forward.8} parent=0 // pred_check_branch
    %9 = sbr.rel (0) target = $region5
  $region4: #{forward.8} parent=0 // pred_region
    _
  $region5: #{forward.8} parent=0 // pred_fallthru
    _
  // Predicated region
  $region6: #{forward.8} parent=0 // pred_check
    _
  $region7: #{forward.8} parent=0 // pred_check_branch
    %11 = sbr.rel (0) target = $region9
  $region8: #{forward.8} parent=0 // pred_region
    _
  $region9: #{forward.8} parent=0 // pred_fallthru
    _
  // Predicated region
  $region10: #{forward.8} parent=0 // pred_check
    _
  $region11: #{forward.8} parent=0 // pred_check_branch
    %13 = sbr.rel (0) target = $region13
  $region12: #{forward.8} parent=0 // pred_region
    _
  $region13: #{forward.8} parent=0 // pred_fallthru
    _
  %p15 = scmp.eq.s32.totalorder 0, 0
  // Predicated region
  $region14: #{forward.8} parent=0 // pred_check
    %p16 = pneg %p15
  $region15: #{forward.8} parent=0 // pred_check_branch
    %18 = sbr.rel (%p16) target = $region17
  $region16: #{forward.8} parent=0 // pred_region
    %19 = vst [vmem:[#allocation2] sm:$0x3] 0.0
  $region17: #{forward.8} parent=0 // pred_fallthru
    _
  %v20 = vld [vmem:[#allocation2] sm:$0x3]
  %v21 = vld [vmem:[%s0] sm:$0x1]
  %v22 = vld [vmem:[%s1] sm:$0xf]
  %v23 = vld [vmem:[%s1 + $0x4] sm:$0xf]
  %v24 = vld [vmem:[%s1 + $0x8] sm:$0xf]
  %v25 = vld [vmem:[%s1 + $0xc] sm:$0xf]
  %v26 = vld [vmem:[%s1 + $0x10] sm:$0xf]
  %v27 = vld [vmem:[%s1 + $0x14] sm:$0xf]
  %v28 = vld [vmem:[%s1 + $0x18] sm:$0xf]
  %v29 = vld [vmem:[%s1 + $0x1c] sm:$0xf]
  %v30 = vld [vmem:[%s1 + $0x20] sm:$0xf]
  %v31 = vld [vmem:[%s1 + $0x24] sm:$0xf]
  %v32 = vld [vmem:[%s1 + $0x28] sm:$0xf]
  %v33 = vld [vmem:[%s1 + $0x2c] sm:$0xf]
  %v34 = vld [vmem:[%s1 + $0x30] sm:$0xf]
  %v35 = vld [vmem:[%s1 + $0x34] sm:$0xf]
  %v36 = vld [vmem:[%s1 + $0x38] sm:$0xf]
  %v37 = vld [vmem:[%s1 + $0x3c] sm:$0xf]
  %v54 = vunpack.c.l.b16 %v22
  %v55 = vunpack.c.l.b16 %v23
  %v56 = vunpack.c.l.b16 %v24
  %v57 = vunpack.c.l.b16 %v25
  %v58 = vunpack.c.l.b16 %v26
  %v59 = vunpack.c.l.b16 %v27
  %v60 = vunpack.c.l.b16 %v28
  %v61 = vunpack.c.l.b16 %v29
  %v62 = vunpack.c.l.b16 %v30
  %v63 = vunpack.c.l.b16 %v31
  %v64 = vunpack.c.l.b16 %v32
  %v65 = vunpack.c.l.b16 %v33
  %v66 = vunpack.c.l.b16 %v34
  %v67 = vunpack.c.l.b16 %v35
  %v68 = vunpack.c.l.b16 %v36
  %v69 = vunpack.c.l.b16 %v37
  %v70 = vpack.c.b16 %v55, %v54
  %v71 = vpack.c.b16 %v57, %v56
  %v72 = vpack.c.b16 %v59, %v58
  %v73 = vpack.c.b16 %v61, %v60
  %v74 = vpack.c.b16 %v63, %v62
  %v75 = vpack.c.b16 %v65, %v64
  %v76 = vpack.c.b16 %v67, %v66
  %v77 = vpack.c.b16 %v69, %v68
  %86 = vmatprep.subr.bf16.mxu0 0
  %87 = vmatpush1.bf16.msra.mxu0 %v70
  %88 = vmatprep.subr.bf16.mxu0 0
  %89 = vmatpush1.bf16.msra.mxu0 %v71
  %90 = vmatprep.subr.bf16.mxu0 0
  %91 = vmatpush1.bf16.msra.mxu0 %v72
  %92 = vmatprep.subr.bf16.mxu0 0
  %93 = vmatpush1.bf16.msra.mxu0 %v73
  %94 = vmatprep.subr.bf16.mxu0 0
  %95 = vmatpush1.bf16.msra.mxu0 %v74
  %96 = vmatprep.subr.bf16.mxu0 0
  %97 = vmatpush1.bf16.msra.mxu0 %v75
  %98 = vmatprep.subr.bf16.mxu0 0
  %99 = vmatpush1.bf16.msra.mxu0 %v76
  %100 = vmatprep.subr.bf16.mxu0 0
  %101 = vmatpush1.bf16.msra.mxu0 %v77
  %102 = vmatprep.subr.bf16.mxu0 0
  %103 = vmatpush1.bf16.msra.mxu0 0
  %104 = vmatprep.subr.bf16.mxu0 0
  %105 = vmatpush1.bf16.msra.mxu0 0
  %106 = vmatprep.subr.bf16.mxu0 0
  %107 = vmatpush1.bf16.msra.mxu0 0
  %108 = vmatprep.subr.bf16.mxu0 0
  %109 = vmatpush1.bf16.msra.mxu0 0
  %110 = vmatprep.subr.bf16.mxu0 0
  %111 = vmatpush1.bf16.msra.mxu0 0
  %112 = vmatprep.subr.bf16.mxu0 0
  %113 = vmatpush1.bf16.msra.mxu0 0
  %114 = vmatprep.subr.bf16.mxu0 0
  %115 = vmatpush1.bf16.msra.mxu0 0
  %116 = vmatprep.subr.bf16.mxu0 0
  %117 = vmatpush1.bf16.msra.mxu0 0
  %118 = vmatprep.mubr.bf16.mxu0 0
  %119 = vmatmul.mubr.bf16.gmra.mrb[0].mxu0 %v21
  %v120 = vpop.f32.mrb[0].mxu0
  %v121 = vadd.f32 0.0, %v120
  %v122 = vpop.f32.mrb[0].mxu0
  %v123 = vpop.f32.mrb[0].mxu0
  %v124 = vpop.f32.mrb[0].mxu0
  %125 = vdwg.mxu0
  %v126 = vadd.f32 %v20, %v121
  %127 = vst [vmem:[#allocation2] sm:$0x3] %v126
  // Predicated region
  $region18: #{forward.8} parent=0 // pred_check
    %p128 = pneg %p15
  $region19: #{forward.8} parent=0 // pred_check_branch
    %130 = sbr.rel (%p128) target = $region21
  $region20: #{forward.8} parent=0 // pred_region
    %v131 = vld [vmem:[#allocation2] sm:$0x3]
    %v132 = vld [vmem:[%s2] sm:$0x1]
    %v134 = vlaneseq
    %v135 = vshrl.u32 %v134, 7
    %v136 = vsub.s32 0, %v135
    %v137 = vrot.slane %v132, %v136
    %v139 = vadd.f32 %v131, %v137
    %v140 = vmax.f32 %v139, 0.0
    %v141 = vpack.c.bf16 %v140, %v140
    %142 = vst [vmem:[%s3] sm:$0x1] %v141
  $region21: #{forward.8} parent=0 // pred_fallthru
    _
  // Predicated region
  $region22: #{forward.8} parent=0 // pred_check
    _
  $region23: #{forward.8} parent=0 // pred_check_branch
    %144 = sbr.rel (0) target = $region25
  $region24: #{forward.8} parent=0 // pred_region
    _
  $region25: #{forward.8} parent=0 // pred_fallthru
    _
  // Predicated region
  $region26: #{forward.8} parent=0 // pred_check
    _
  $region27: #{forward.8} parent=0 // pred_check_branch
    %146 = sbr.rel (0) target = $region29
  $region28: #{forward.8} parent=0 // pred_region
    _
  $region29: #{forward.8} parent=0 // pred_fallthru
    _

// kernel: forward.7
$region0: #{forward.7}
  #allocation0 [shape = 'u32[]', space=smem, size = 0x4, offset = 0x4, fixed_abs, tag = 'smem constant byte address 0x4 - core index']
  #allocation1 [shape = 'u32[144,128]{1,0:T(1,128)}', space=vmem, size = 0x12000, scoped, tag = 'internal scratch']
  #allocation2 [shape = 'f32[2,128]{1,0:T(2,128)}', space=vmem, size = 0x400, scoped, tag = 'scratch operand']
  %s0 = inlined_call_operand.vmem [shape: bf16[2,2048], index: 0, kind: input, shape index: {}]
  %s1 = inlined_call_operand.vmem [shape: bf16[2048,128], index: 1, kind: input, shape index: {}]
  %s2 = inlined_call_operand.vmem [shape: f32[1,128], index: 2, kind: input, shape index: {}]
  %s3 = inlined_call_operand.vmem [shape: bf16[2,128], index: 3, kind: output, shape index: {}]
  %s4 = sld [smem:[#allocation0]]
  $region30: #{forward.7} parent=0
    _
  %s6 = ssub.s32 1, %s4
  %s7 = scalar_select 0, %s6, %s4
  // Predicated region
  $region2: #{forward.7} parent=0 // pred_check
    _
  $region3: #{forward.7} parent=0 // pred_check_branch
    %9 = sbr.rel (0) target = $region5
  $region4: #{forward.7} parent=0 // pred_region
    _
  $region5: #{forward.7} parent=0 // pred_fallthru
    _
  // Predicated region
  $region6: #{forward.7} parent=0 // pred_check
    _
  $region7: #{forward.7} parent=0 // pred_check_branch
    %11 = sbr.rel (0) target = $region9
  $region8: #{forward.7} parent=0 // pred_region
    _
  $region9: #{forward.7} parent=0 // pred_fallthru
    _
  // Predicated region
  $region10: #{forward.7} parent=0 // pred_check
    _
  $region11: #{forward.7} parent=0 // pred_check_branch
    %13 = sbr.rel (0) target = $region13
  $region12: #{forward.7} parent=0 // pred_region
    _
  $region13: #{forward.7} parent=0 // pred_fallthru
    _
  %p15 = scmp.eq.s32.totalorder 0, 0
  // Predicated region
  $region14: #{forward.7} parent=0 // pred_check
    %p16 = pneg %p15
  $region15: #{forward.7} parent=0 // pred_check_branch
    %18 = sbr.rel (%p16) target = $region17
  $region16: #{forward.7} parent=0 // pred_region
    %19 = vst [vmem:[#allocation2] sm:$0x3] 0.0
  $region17: #{forward.7} parent=0 // pred_fallthru
    _
  %v20 = vld [vmem:[#allocation2] sm:$0x3]
  %v21 = vld [vmem:[%s0] sm:$0xff]
  %v22 = vld [vmem:[%s0 + $0x8] sm:$0xff]
  %v23 = vld [vmem:[%s1] sm:$0xf]
  %v24 = vld [vmem:[%s1 + $0x4] sm:$0xf]
  %v25 = vld [vmem:[%s1 + $0x8] sm:$0xf]
  %v26 = vld [vmem:[%s1 + $0xc] sm:$0xf]
  %v27 = vld [vmem:[%s1 + $0x10] sm:$0xf]
  %v28 = vld [vmem:[%s1 + $0x14] sm:$0xf]
  %v29 = vld [vmem:[%s1 + $0x18] sm:$0xf]
  %v30 = vld [vmem:[%s1 + $0x1c] sm:$0xf]
  %v31 = vld [vmem:[%s1 + $0x20] sm:$0xf]
  %v32 = vld [vmem:[%s1 + $0x24] sm:$0xf]
  %v33 = vld [vmem:[%s1 + $0x28] sm:$0xf]
  %v34 = vld [vmem:[%s1 + $0x2c] sm:$0xf]
  %v35 = vld [vmem:[%s1 + $0x30] sm:$0xf]
  %v36 = vld [vmem:[%s1 + $0x34] sm:$0xf]
  %v37 = vld [vmem:[%s1 + $0x38] sm:$0xf]
  %v38 = vld [vmem:[%s1 + $0x3c] sm:$0xf]
  %v39 = vld [vmem:[%s1 + $0x40] sm:$0xf]
  %v40 = vld [vmem:[%s1 + $0x44] sm:$0xf]
  %v41 = vld [vmem:[%s1 + $0x48] sm:$0xf]
  %v42 = vld [vmem:[%s1 + $0x4c] sm:$0xf]
  %v43 = vld [vmem:[%s1 + $0x50] sm:$0xf]
  %v44 = vld [vmem:[%s1 + $0x54] sm:$0xf]
  %v45 = vld [vmem:[%s1 + $0x58] sm:$0xf]
  %v46 = vld [vmem:[%s1 + $0x5c] sm:$0xf]
  %v47 = vld [vmem:[%s1 + $0x60] sm:$0xf]
  %v48 = vld [vmem:[%s1 + $0x64] sm:$0xf]
  %v49 = vld [vmem:[%s1 + $0x68] sm:$0xf]
  %v50 = vld [vmem:[%s1 + $0x6c] sm:$0xf]
  %v51 = vld [vmem:[%s1 + $0x70] sm:$0xf]
  %v52 = vld [vmem:[%s1 + $0x74] sm:$0xf]
  %v53 = vld [vmem:[%s1 + $0x78] sm:$0xf]
  %v54 = vld [vmem:[%s1 + $0x7c] sm:$0xf]
  %v55 = vld [vmem:[%s1 + $0x80] sm:$0xf]
  %v56 = vld [vmem:[%s1 + $0x84] sm:$0xf]
  %v57 = vld [vmem:[%s1 + $0x88] sm:$0xf]
  %v58 = vld [vmem:[%s1 + $0x8c] sm:$0xf]
  %v59 = vld [vmem:[%s1 + $0x90] sm:$0xf]
  %v60 = vld [vmem:[%s1 + $0x94] sm:$0xf]
  %v61 = vld [vmem:[%s1 + $0x98] sm:$0xf]
  %v62 = vld [vmem:[%s1 + $0x9c] sm:$0xf]
  %v63 = vld [vmem:[%s1 + $0xa0] sm:$0xf]
  %v64 = vld [vmem:[%s1 + $0xa4] sm:$0xf]
  %v65 = vld [vmem:[%s1 + $0xa8] sm:$0xf]
  %v66 = vld [vmem:[%s1 + $0xac] sm:$0xf]
  %v67 = vld [vmem:[%s1 + $0xb0] sm:$0xf]
  %v68 = vld [vmem:[%s1 + $0xb4] sm:$0xf]
  %v69 = vld [vmem:[%s1 + $0xb8] sm:$0xf]
  %v70 = vld [vmem:[%s1 + $0xbc] sm:$0xf]
  %v71 = vld [vmem:[%s1 + $0xc0] sm:$0xf]
  %v72 = vld [vmem:[%s1 + $0xc4] sm:$0xf]
  %v73 = vld [vmem:[%s1 + $0xc8] sm:$0xf]
  %v74 = vld [vmem:[%s1 + $0xcc] sm:$0xf]
  %v75 = vld [vmem:[%s1 + $0xd0] sm:$0xf]
  %v76 = vld [vmem:[%s1 + $0xd4] sm:$0xf]
  %v77 = vld [vmem:[%s1 + $0xd8] sm:$0xf]
  %v78 = vld [vmem:[%s1 + $0xdc] sm:$0xf]
  %v79 = vld [vmem:[%s1 + $0xe0] sm:$0xf]
  %v80 = vld [vmem:[%s1 + $0xe4] sm:$0xf]
  %v81 = vld [vmem:[%s1 + $0xe8] sm:$0xf]
  %v82 = vld [vmem:[%s1 + $0xec] sm:$0xf]
  %v83 = vld [vmem:[%s1 + $0xf0] sm:$0xf]
  %v84 = vld [vmem:[%s1 + $0xf4] sm:$0xf]
  %v85 = vld [vmem:[%s1 + $0xf8] sm:$0xf]
  %v86 = vld [vmem:[%s1 + $0xfc] sm:$0xf]
  %v87 = vld [vmem:[%s1 + $0x100] sm:$0xf]
  %v88 = vld [vmem:[%s1 + $0x104] sm:$0xf]
  %v89 = vld [vmem:[%s1 + $0x108] sm:$0xf]
  %v90 = vld [vmem:[%s1 + $0x10c] sm:$0xf]
  %v91 = vld [vmem:[%s1 + $0x110] sm:$0xf]
  %v92 = vld [vmem:[%s1 + $0x114] sm:$0xf]
  %v93 = vld [vmem:[%s1 + $0x118] sm:$0xf]
  %v94 = vld [vmem:[%s1 + $0x11c] sm:$0xf]
  %v95 = vld [vmem:[%s1 + $0x120] sm:$0xf]
  %v96 = vld [vmem:[%s1 + $0x124] sm:$0xf]
  %v97 = vld [vmem:[%s1 + $0x128] sm:$0xf]
  %v98 = vld [vmem:[%s1 + $0x12c] sm:$0xf]
  %v99 = vld [vmem:[%s1 + $0x130] sm:$0xf]
  %v100 = vld [vmem:[%s1 + $0x134] sm:$0xf]
  %v101 = vld [vmem:[%s1 + $0x138] sm:$0xf]
  %v102 = vld [vmem:[%s1 + $0x13c] sm:$0xf]
  %v103 = vld [vmem:[%s1 + $0x140] sm:$0xf]
  %v104 = vld [vmem:[%s1 + $0x144] sm:$0xf]
  %v105 = vld [vmem:[%s1 + $0x148] sm:$0xf]
  %v106 = vld [vmem:[%s1 + $0x14c] sm:$0xf]
  %v107 = vld [vmem:[%s1 + $0x150] sm:$0xf]
  %v108 = vld [vmem:[%s1 + $0x154] sm:$0xf]
  %v109 = vld [vmem:[%s1 + $0x158] sm:$0xf]
  %v110 = vld [vmem:[%s1 + $0x15c] sm:$0xf]
  %v111 = vld [vmem:[%s1 + $0x160] sm:$0xf]
  %v112 = vld [vmem:[%s1 + $0x164] sm:$0xf]
  %v113 = vld [vmem:[%s1 + $0x168] sm:$0xf]
  %v114 = vld [vmem:[%s1 + $0x16c] sm:$0xf]
  %v115 = vld [vmem:[%s1 + $0x170] sm:$0xf]
  %v116 = vld [vmem:[%s1 + $0x174] sm:$0xf]
  %v117 = vld [vmem:[%s1 + $0x178] sm:$0xf]
  %v118 = vld [vmem:[%s1 + $0x17c] sm:$0xf]
  %v119 = vld [vmem:[%s1 + $0x180] sm:$0xf]
  %v120 = vld [vmem:[%s1 + $0x184] sm:$0xf]
  %v121 = vld [vmem:[%s1 + $0x188] sm:$0xf]
  %v122 = vld [vmem:[%s1 + $0x18c] sm:$0xf]
  %v123 = vld [vmem:[%s1 + $0x190] sm:$0xf]
  %v124 = vld [vmem:[%s1 + $0x194] sm:$0xf]
  %v125 = vld [vmem:[%s1 + $0x198] sm:$0xf]
  %v126 = vld [vmem:[%s1 + $0x19c] sm:$0xf]
  %v127 = vld [vmem:[%s1 + $0x1a0] sm:$0xf]
  %v128 = vld [vmem:[%s1 + $0x1a4] sm:$0xf]
  %v129 = vld [vmem:[%s1 + $0x1a8] sm:$0xf]
  %v130 = vld [vmem:[%s1 + $0x1ac] sm:$0xf]
  %v131 = vld [vmem:[%s1 + $0x1b0] sm:$0xf]
  %v132 = vld [vmem:[%s1 + $0x1b4] sm:$0xf]
  %v133 = vld [vmem:[%s1 + $0x1b8] sm:$0xf]
  %v134 = vld [vmem:[%s1 + $0x1bc] sm:$0xf]
  %v135 = vld [vmem:[%s1 + $0x1c0] sm:$0xf]
  %v136 = vld [vmem:[%s1 + $0x1c4] sm:$0xf]
  %v137 = vld [vmem:[%s1 + $0x1c8] sm:$0xf]
  %v138 = vld [vmem:[%s1 + $0x1cc] sm:$0xf]
  %v139 = vld [vmem:[%s1 + $0x1d0] sm:$0xf]
  %v140 = vld [vmem:[%s1 + $0x1d4] sm:$0xf]
  %v141 = vld [vmem:[%s1 + $0x1d8] sm:$0xf]
  %v142 = vld [vmem:[%s1 + $0x1dc] sm:$0xf]
  %v143 = vld [vmem:[%s1 + $0x1e0] sm:$0xf]
  %v144 = vld [vmem:[%s1 + $0x1e4] sm:$0xf]
  %v145 = vld [vmem:[%s1 + $0x1e8] sm:$0xf]
  %v146 = vld [vmem:[%s1 + $0x1ec] sm:$0xf]
  %v147 = vld [vmem:[%s1 + $0x1f0] sm:$0xf]
  %v148 = vld [vmem:[%s1 + $0x1f4] sm:$0xf]
  %v149 = vld [vmem:[%s1 + $0x1f8] sm:$0xf]
  %v150 = vld [vmem:[%s1 + $0x1fc] sm:$0xf]
  %v151 = vld [vmem:[%s1 + $0x200] sm:$0xf]
  %v152 = vld [vmem:[%s1 + $0x204] sm:$0xf]
  %v153 = vld [vmem:[%s1 + $0x208] sm:$0xf]
  %v154 = vld [vmem:[%s1 + $0x20c] sm:$0xf]
  %v155 = vld [vmem:[%s1 + $0x210] sm:$0xf]
  %v156 = vld [vmem:[%s1 + $0x214] sm:$0xf]
  %v157 = vld [vmem:[%s1 + $0x218] sm:$0xf]
  %v158 = vld [vmem:[%s1 + $0x21c] sm:$0xf]
  %v159 = vld [vmem:[%s1 + $0x220] sm:$0xf]
  %v160 = vld [vmem:[%s1 + $0x224] sm:$0xf]
  %v161 = vld [vmem:[%s1 + $0x228] sm:$0xf]
  %v162 = vld [vmem:[%s1 + $0x22c] sm:$0xf]
  %v163 = vld [vmem:[%s1 + $0x230] sm:$0xf]
  %v164 = vld [vmem:[%s1 + $0x234] sm:$0xf]
  %v165 = vld [vmem:[%s1 + $0x238] sm:$0xf]
  %v166 = vld [vmem:[%s1 + $0x23c] sm:$0xf]
  %v167 = vld [vmem:[%s1 + $0x240] sm:$0xf]
  %v168 = vld [vmem:[%s1 + $0x244] sm:$0xf]
  %v169 = vld [vmem:[%s1 + $0x248] sm:$0xf]
  %v170 = vld [vmem:[%s1 + $0x24c] sm:$0xf]
  %v171 = vld [vmem:[%s1 + $0x250] sm:$0xf]
  %v172 = vld [vmem:[%s1 + $0x254] sm:$0xf]
  %v173 = vld [vmem:[%s1 + $0x258] sm:$0xf]
  %v174 = vld [vmem:[%s1 + $0x25c] sm:$0xf]
  %v175 = vld [vmem:[%s1 + $0x260] sm:$0xf]
  %v176 = vld [vmem:[%s1 + $0x264] sm:$0xf]
  %v177 = vld [vmem:[%s1 + $0x268] sm:$0xf]
  %v178 = vld [vmem:[%s1 + $0x26c] sm:$0xf]
  %v179 = vld [vmem:[%s1 + $0x270] sm:$0xf]
  %v180 = vld [vmem:[%s1 + $0x274] sm:$0xf]
  %v181 = vld [vmem:[%s1 + $0x278] sm:$0xf]
  %v182 = vld [vmem:[%s1 + $0x27c] sm:$0xf]
  %v183 = vld [vmem:[%s1 + $0x280] sm:$0xf]
  %v184 = vld [vmem:[%s1 + $0x284] sm:$0xf]
  %v185 = vld [vmem:[%s1 + $0x288] sm:$0xf]
  %v186 = vld [vmem:[%s1 + $0x28c] sm:$0xf]
  %v187 = vld [vmem:[%s1 + $0x290] sm:$0xf]
  %v188 = vld [vmem:[%s1 + $0x294] sm:$0xf]
  %v189 = vld [vmem:[%s1 + $0x298] sm:$0xf]
  %v190 = vld [vmem:[%s1 + $0x29c] sm:$0xf]
  %v191 = vld [vmem:[%s1 + $0x2a0] sm:$0xf]
  %v192 = vld [vmem:[%s1 + $0x2a4] sm:$0xf]
  %v193 = vld [vmem:[%s1 + $0x2a8] sm:$0xf]
  %v194 = vld [vmem:[%s1 + $0x2ac] sm:$0xf]
  %v195 = vld [vmem:[%s1 + $0x2b0] sm:$0xf]
  %v196 = vld [vmem:[%s1 + $0x2b4] sm:$0xf]
  %v197 = vld [vmem:[%s1 + $0x2b8] sm:$0xf]
  %v198 = vld [vmem:[%s1 + $0x2bc] sm:$0xf]
  %v199 = vld [vmem:[%s1 + $0x2c0] sm:$0xf]
  %v200 = vld [vmem:[%s1 + $0x2c4] sm:$0xf]
  %v201 = vld [vmem:[%s1 + $0x2c8] sm:$0xf]
  %v202 = vld [vmem:[%s1 + $0x2cc] sm:$0xf]
  %v203 = vld [vmem:[%s1 + $0x2d0] sm:$0xf]
  %v204 = vld [vmem:[%s1 + $0x2d4] sm:$0xf]
  %v205 = vld [vmem:[%s1 + $0x2d8] sm:$0xf]
  %v206 = vld [vmem:[%s1 + $0x2dc] sm:$0xf]
  %v207 = vld [vmem:[%s1 + $0x2e0] sm:$0xf]
  %v208 = vld [vmem:[%s1 + $0x2e4] sm:$0xf]
  %v209 = vld [vmem:[%s1 + $0x2e8] sm:$0xf]
  %v210 = vld [vmem:[%s1 + $0x2ec] sm:$0xf]
  %v211 = vld [vmem:[%s1 + $0x2f0] sm:$0xf]
  %v212 = vld [vmem:[%s1 + $0x2f4] sm:$0xf]
  %v213 = vld [vmem:[%s1 + $0x2f8] sm:$0xf]
  %v214 = vld [vmem:[%s1 + $0x2fc] sm:$0xf]
  %v215 = vld [vmem:[%s1 + $0x300] sm:$0xf]
  %v216 = vld [vmem:[%s1 + $0x304] sm:$0xf]
  %v217 = vld [vmem:[%s1 + $0x308] sm:$0xf]
  %v218 = vld [vmem:[%s1 + $0x30c] sm:$0xf]
  %v219 = vld [vmem:[%s1 + $0x310] sm:$0xf]
  %v220 = vld [vmem:[%s1 + $0x314] sm:$0xf]
  %v221 = vld [vmem:[%s1 + $0x318] sm:$0xf]
  %v222 = vld [vmem:[%s1 + $0x31c] sm:$0xf]
  %v223 = vld [vmem:[%s1 + $0x320] sm:$0xf]
  %v224 = vld [vmem:[%s1 + $0x324] sm:$0xf]
  %v225 = vld [vmem:[%s1 + $0x328] sm:$0xf]
  %v226 = vld [vmem:[%s1 + $0x32c] sm:$0xf]
  %v227 = vld [vmem:[%s1 + $0x330] sm:$0xf]
  %v228 = vld [vmem:[%s1 + $0x334] sm:$0xf]
  %v229 = vld [vmem:[%s1 + $0x338] sm:$0xf]
  %v230 = vld [vmem:[%s1 + $0x33c] sm:$0xf]
  %v231 = vld [vmem:[%s1 + $0x340] sm:$0xf]
  %v232 = vld [vmem:[%s1 + $0x344] sm:$0xf]
  %v233 = vld [vmem:[%s1 + $0x348] sm:$0xf]
  %v234 = vld [vmem:[%s1 + $0x34c] sm:$0xf]
  %v235 = vld [vmem:[%s1 + $0x350] sm:$0xf]
  %v236 = vld [vmem:[%s1 + $0x354] sm:$0xf]
  %v237 = vld [vmem:[%s1 + $0x358] sm:$0xf]
  %v238 = vld [vmem:[%s1 + $0x35c] sm:$0xf]
  %v239 = vld [vmem:[%s1 + $0x360] sm:$0xf]
  %v240 = vld [vmem:[%s1 + $0x364] sm:$0xf]
  %v241 = vld [vmem:[%s1 + $0x368] sm:$0xf]
  %v242 = vld [vmem:[%s1 + $0x36c] sm:$0xf]
  %v243 = vld [vmem:[%s1 + $0x370] sm:$0xf]
  %v244 = vld [vmem:[%s1 + $0x374] sm:$0xf]
  %v245 = vld [vmem:[%s1 + $0x378] sm:$0xf]
  %v246 = vld [vmem:[%s1 + $0x37c] sm:$0xf]
  %v247 = vld [vmem:[%s1 + $0x380] sm:$0xf]
  %v248 = vld [vmem:[%s1 + $0x384] sm:$0xf]
  %v249 = vld [vmem:[%s1 + $0x388] sm:$0xf]
  %v250 = vld [vmem:[%s1 + $0x38c] sm:$0xf]
  %v251 = vld [vmem:[%s1 + $0x390] sm:$0xf]
  %v252 = vld [vmem:[%s1 + $0x394] sm:$0xf]
  %v253 = vld [vmem:[%s1 + $0x398] sm:$0xf]
  %v254 = vld [vmem:[%s1 + $0x39c] sm:$0xf]
  %v255 = vld [vmem:[%s1 + $0x3a0] sm:$0xf]
  %v256 = vld [vmem:[%s1 + $0x3a4] sm:$0xf]
  %v257 = vld [vmem:[%s1 + $0x3a8] sm:$0xf]
  %v258 = vld [vmem:[%s1 + $0x3ac] sm:$0xf]
  %v259 = vld [vmem:[%s1 + $0x3b0] sm:$0xf]
  %v260 = vld [vmem:[%s1 + $0x3b4] sm:$0xf]
  %v261 = vld [vmem:[%s1 + $0x3b8] sm:$0xf]
  %v262 = vld [vmem:[%s1 + $0x3bc] sm:$0xf]
  %v263 = vld [vmem:[%s1 + $0x3c0] sm:$0xf]
  %v264 = vld [vmem:[%s1 + $0x3c4] sm:$0xf]
  %v265 = vld [vmem:[%s1 + $0x3c8] sm:$0xf]
  %v266 = vld [vmem:[%s1 + $0x3cc] sm:$0xf]
  %v267 = vld [vmem:[%s1 + $0x3d0] sm:$0xf]
  %v268 = vld [vmem:[%s1 + $0x3d4] sm:$0xf]
  %v269 = vld [vmem:[%s1 + $0x3d8] sm:$0xf]
  %v270 = vld [vmem:[%s1 + $0x3dc] sm:$0xf]
  %v271 = vld [vmem:[%s1 + $0x3e0] sm:$0xf]
  %v272 = vld [vmem:[%s1 + $0x3e4] sm:$0xf]
  %v273 = vld [vmem:[%s1 + $0x3e8] sm:$0xf]
  %v274 = vld [vmem:[%s1 + $0x3ec] sm:$0xf]
  %v275 = vld [vmem:[%s1 + $0x3f0] sm:$0xf]
  %v276 = vld [vmem:[%s1 + $0x3f4] sm:$0xf]
  %v277 = vld [vmem:[%s1 + $0x3f8] sm:$0xf]
  %v278 = vld [vmem:[%s1 + $0x3fc] sm:$0xf]
  %v281 = vcombine.high %v21, %v21
  %v283 = vunpack.c.l.s4 1966171168
  %v284 = vunpack.c.0.s8 %v283
  %v285 = vlaneseq
  %v286 = vshrl.u32 %v285, 7
  %v287 = vsub.s32 %v284, %v286
  %v288 = vrot.slane %v21, %v287
  %v290 = vunpack.c.l.s4 1966171168
  %v291 = vunpack.c.0.s8 %v290
  %v292 = vlaneseq
  %v293 = vshrl.u32 %v292, 7
  %v294 = vsub.s32 %v291, %v293
  %v295 = vrot.slane %v281, %v294
  %v296 = vcombine.high %v288, %v288
  %v297 = vcombine.high %v295, %v295
  %v299 = vunpack.c.l.s4 1966171168
  %v300 = vunpack.c.0.s8 %v299
  %v301 = vlaneseq
  %v302 = vshrl.u32 %v301, 7
  %v303 = vsub.s32 %v300, %v302
  %v304 = vrot.slane %v288, %v303
  %v306 = vunpack.c.l.s4 1966171168
  %v307 = vunpack.c.0.s8 %v306
  %v308 = vlaneseq
  %v309 = vshrl.u32 %v308, 7
  %v310 = vsub.s32 %v307, %v309
  %v311 = vrot.slane %v295, %v310
  %v313 = vunpack.c.l.s4 1966171168
  %v314 = vunpack.c.0.s8 %v313
  %v315 = vlaneseq
  %v316 = vshrl.u32 %v315, 7
  %v317 = vsub.s32 %v314, %v316
  %v318 = vrot.slane %v296, %v317
  %v320 = vunpack.c.l.s4 1966171168
  %v321 = vunpack.c.0.s8 %v320
  %v322 = vlaneseq
  %v323 = vshrl.u32 %v322, 7
  %v324 = vsub.s32 %v321, %v323
  %v325 = vrot.slane %v297, %v324
  %v326 = vcombine.high %v304, %v304
  %v327 = vcombine.high %v311, %v311
  %v328 = vcombine.high %v318, %v318
  %v329 = vcombine.high %v325, %v325
  %v330 = vcombine.high %v22, %v22
  %v332 = vunpack.c.l.s4 1966171168
  %v333 = vunpack.c.0.s8 %v332
  %v334 = vlaneseq
  %v335 = vshrl.u32 %v334, 7
  %v336 = vsub.s32 %v333, %v335
  %v337 = vrot.slane %v22, %v336
  %v339 = vunpack.c.l.s4 1966171168
  %v340 = vunpack.c.0.s8 %v339
  %v341 = vlaneseq
  %v342 = vshrl.u32 %v341, 7
  %v343 = vsub.s32 %v340, %v342
  %v344 = vrot.slane %v330, %v343
  %v345 = vcombine.high %v337, %v337
  %v346 = vcombine.high %v344, %v344
  %v348 = vunpack.c.l.s4 1966171168
  %v349 = vunpack.c.0.s8 %v348
  %v350 = vlaneseq
  %v351 = vshrl.u32 %v350, 7
  %v352 = vsub.s32 %v349, %v351
  %v353 = vrot.slane %v337, %v352
  %v355 = vunpack.c.l.s4 1966171168
  %v356 = vunpack.c.0.s8 %v355
  %v357 = vlaneseq
  %v358 = vshrl.u32 %v357, 7
  %v359 = vsub.s32 %v356, %v358
  %v360 = vrot.slane %v344, %v359
  %v362 = vunpack.c.l.s4 1966171168
  %v363 = vunpack.c.0.s8 %v362
  %v364 = vlaneseq
  %v365 = vshrl.u32 %v364, 7
  %v366 = vsub.s32 %v363, %v365
  %v367 = vrot.slane %v345, %v366
  %v369 = vunpack.c.l.s4 1966171168
  %v370 = vunpack.c.0.s8 %v369
  %v371 = vlaneseq
  %v372 = vshrl.u32 %v371, 7
  %v373 = vsub.s32 %v370, %v372
  %v374 = vrot.slane %v346, %v373
  %v375 = vcombine.high %v353, %v353
  %v376 = vcombine.high %v360, %v360
  %v377 = vcombine.high %v367, %v367
  %v378 = vcombine.high %v374, %v374
  %v651 = vunpack.c.l.b16 %v23
  %v652 = vunpack.c.l.b16 %v24
  %v653 = vunpack.c.l.b16 %v25
  %v654 = vunpack.c.l.b16 %v26
  %v655 = vunpack.c.l.b16 %v27
  %v656 = vunpack.c.l.b16 %v28
  %v657 = vunpack.c.l.b16 %v29
  %v658 = vunpack.c.l.b16 %v30
  %v659 = vunpack.c.l.b16 %v31
  %v660 = vunpack.c.l.b16 %v32
  %v661 = vunpack.c.l.b16 %v33
  %v662 = vunpack.c.l.b16 %v34
  %v663 = vunpack.c.l.b16 %v35
  %v664 = vunpack.c.l.b16 %v36
  %v665 = vunpack.c.l.b16 %v37
  %v666 = vunpack.c.l.b16 %v38
  %v667 = vunpack.c.l.b16 %v39
  %v668 = vunpack.c.l.b16 %v40
  %v669 = vunpack.c.l.b16 %v41
  %v670 = vunpack.c.l.b16 %v42
  %v671 = vunpack.c.l.b16 %v43
  %v672 = vunpack.c.l.b16 %v44
  %v673 = vunpack.c.l.b16 %v45
  %v674 = vunpack.c.l.b16 %v46
  %v675 = vunpack.c.l.b16 %v47
  %v676 = vunpack.c.l.b16 %v48
  %v677 = vunpack.c.l.b16 %v49
  %v678 = vunpack.c.l.b16 %v50
  %v679 = vunpack.c.l.b16 %v51
  %v680 = vunpack.c.l.b16 %v52
  %v681 = vunpack.c.l.b16 %v53
  %v682 = vunpack.c.l.b16 %v54
  %v683 = vunpack.c.l.b16 %v55
  %v684 = vunpack.c.l.b16 %v56
  %v685 = vunpack.c.l.b16 %v57
  %v686 = vunpack.c.l.b16 %v58
  %v687 = vunpack.c.l.b16 %v59
  %v688 = vunpack.c.l.b16 %v60
  %v689 = vunpack.c.l.b16 %v61
  %v690 = vunpack.c.l.b16 %v62
  %v691 = vunpack.c.l.b16 %v63
  %v692 = vunpack.c.l.b16 %v64
  %v693 = vunpack.c.l.b16 %v65
  %v694 = vunpack.c.l.b16 %v66
  %v695 = vunpack.c.l.b16 %v67
  %v696 = vunpack.c.l.b16 %v68
  %v697 = vunpack.c.l.b16 %v69
  %v698 = vunpack.c.l.b16 %v70
  %v699 = vunpack.c.l.b16 %v71
  %v700 = vunpack.c.l.b16 %v72
  %v701 = vunpack.c.l.b16 %v73
  %v702 = vunpack.c.l.b16 %v74
  %v703 = vunpack.c.l.b16 %v75
  %v704 = vunpack.c.l.b16 %v76
  %v705 = vunpack.c.l.b16 %v77
  %v706 = vunpack.c.l.b16 %v78
  %v707 = vunpack.c.l.b16 %v79
  %v708 = vunpack.c.l.b16 %v80
  %v709 = vunpack.c.l.b16 %v81
  %v710 = vunpack.c.l.b16 %v82
  %v711 = vunpack.c.l.b16 %v83
  %v712 = vunpack.c.l.b16 %v84
  %v713 = vunpack.c.l.b16 %v85
  %v714 = vunpack.c.l.b16 %v86
  %v715 = vunpack.c.l.b16 %v87
  %v716 = vunpack.c.l.b16 %v88
  %v717 = vunpack.c.l.b16 %v89
  %v718 = vunpack.c.l.b16 %v90
  %v719 = vunpack.c.l.b16 %v91
  %v720 = vunpack.c.l.b16 %v92
  %v721 = vunpack.c.l.b16 %v93
  %v722 = vunpack.c.l.b16 %v94
  %v723 = vunpack.c.l.b16 %v95
  %v724 = vunpack.c.l.b16 %v96
  %v725 = vunpack.c.l.b16 %v97
  %v726 = vunpack.c.l.b16 %v98
  %v727 = vunpack.c.l.b16 %v99
  %v728 = vunpack.c.l.b16 %v100
  %v729 = vunpack.c.l.b16 %v101
  %v730 = vunpack.c.l.b16 %v102
  %v731 = vunpack.c.l.b16 %v103
  %v732 = vunpack.c.l.b16 %v104
  %v733 = vunpack.c.l.b16 %v105
  %v734 = vunpack.c.l.b16 %v106
  %v735 = vunpack.c.l.b16 %v107
  %v736 = vunpack.c.l.b16 %v108
  %v737 = vunpack.c.l.b16 %v109
  %v738 = vunpack.c.l.b16 %v110
  %v739 = vunpack.c.l.b16 %v111
  %v740 = vunpack.c.l.b16 %v112
  %v741 = vunpack.c.l.b16 %v113
  %v742 = vunpack.c.l.b16 %v114
  %v743 = vunpack.c.l.b16 %v115
  %v744 = vunpack.c.l.b16 %v116
  %v745 = vunpack.c.l.b16 %v117
  %v746 = vunpack.c.l.b16 %v118
  %v747 = vunpack.c.l.b16 %v119
  %v748 = vunpack.c.l.b16 %v120
  %v749 = vunpack.c.l.b16 %v121
  %v750 = vunpack.c.l.b16 %v122
  %v751 = vunpack.c.l.b16 %v123
  %v752 = vunpack.c.l.b16 %v124
  %v753 = vunpack.c.l.b16 %v125
  %v754 = vunpack.c.l.b16 %v126
  %v755 = vunpack.c.l.b16 %v127
  %v756 = vunpack.c.l.b16 %v128
  %v757 = vunpack.c.l.b16 %v129
  %v758 = vunpack.c.l.b16 %v130
  %v759 = vunpack.c.l.b16 %v131
  %v760 = vunpack.c.l.b16 %v132
  %v761 = vunpack.c.l.b16 %v133
  %v762 = vunpack.c.l.b16 %v134
  %v763 = vunpack.c.l.b16 %v135
  %v764 = vunpack.c.l.b16 %v136
  %v765 = vunpack.c.l.b16 %v137
  %v766 = vunpack.c.l.b16 %v138
  %v767 = vunpack.c.l.b16 %v139
  %v768 = vunpack.c.l.b16 %v140
  %v769 = vunpack.c.l.b16 %v141
  %v770 = vunpack.c.l.b16 %v142
  %v771 = vunpack.c.l.b16 %v143
  %v772 = vunpack.c.l.b16 %v144
  %v773 = vunpack.c.l.b16 %v145
  %v774 = vunpack.c.l.b16 %v146
  %v775 = vunpack.c.l.b16 %v147
  %v776 = vunpack.c.l.b16 %v148
  %v777 = vunpack.c.l.b16 %v149
  %v778 = vunpack.c.l.b16 %v150
  %v779 = vunpack.c.l.b16 %v151
  %v780 = vunpack.c.l.b16 %v152
  %v781 = vunpack.c.l.b16 %v153
  %v782 = vunpack.c.l.b16 %v154
  %v783 = vunpack.c.l.b16 %v155
  %v784 = vunpack.c.l.b16 %v156
  %v785 = vunpack.c.l.b16 %v157
  %v786 = vunpack.c.l.b16 %v158
  %v787 = vunpack.c.l.b16 %v159
  %v788 = vunpack.c.l.b16 %v160
  %v789 = vunpack.c.l.b16 %v161
  %v790 = vunpack.c.l.b16 %v162
  %v791 = vunpack.c.l.b16 %v163
  %v792 = vunpack.c.l.b16 %v164
  %v793 = vunpack.c.l.b16 %v165
  %v794 = vunpack.c.l.b16 %v166
  %v795 = vunpack.c.l.b16 %v167
  %v796 = vunpack.c.l.b16 %v168
  %v797 = vunpack.c.l.b16 %v169
  %v798 = vunpack.c.l.b16 %v170
  %v799 = vunpack.c.l.b16 %v171
  %v800 = vunpack.c.l.b16 %v172
  %v801 = vunpack.c.l.b16 %v173
  %v802 = vunpack.c.l.b16 %v174
  %v803 = vunpack.c.l.b16 %v175
  %v804 = vunpack.c.l.b16 %v176
  %v805 = vunpack.c.l.b16 %v177
  %v806 = vunpack.c.l.b16 %v178
  %v807 = vunpack.c.l.b16 %v179
  %v808 = vunpack.c.l.b16 %v180
  %v809 = vunpack.c.l.b16 %v181
  %v810 = vunpack.c.l.b16 %v182
  %v811 = vunpack.c.l.b16 %v183
  %v812 = vunpack.c.l.b16 %v184
  %v813 = vunpack.c.l.b16 %v185
  %v814 = vunpack.c.l.b16 %v186
  %v815 = vunpack.c.l.b16 %v187
  %v816 = vunpack.c.l.b16 %v188
  %v817 = vunpack.c.l.b16 %v189
  %v818 = vunpack.c.l.b16 %v190
  %v819 = vunpack.c.l.b16 %v191
  %v820 = vunpack.c.l.b16 %v192
  %v821 = vunpack.c.l.b16 %v193
  %v822 = vunpack.c.l.b16 %v194
  %v823 = vunpack.c.l.b16 %v195
  %v824 = vunpack.c.l.b16 %v196
  %v825 = vunpack.c.l.b16 %v197
  %v826 = vunpack.c.l.b16 %v198
  %v827 = vunpack.c.l.b16 %v199
  %v828 = vunpack.c.l.b16 %v200
  %v829 = vunpack.c.l.b16 %v201
  %v830 = vunpack.c.l.b16 %v202
  %v831 = vunpack.c.l.b16 %v203
  %v832 = vunpack.c.l.b16 %v204
  %v833 = vunpack.c.l.b16 %v205
  %v834 = vunpack.c.l.b16 %v206
  %v835 = vunpack.c.l.b16 %v207
  %v836 = vunpack.c.l.b16 %v208
  %v837 = vunpack.c.l.b16 %v209
  %v838 = vunpack.c.l.b16 %v210
  %v839 = vunpack.c.l.b16 %v211
  %v840 = vunpack.c.l.b16 %v212
  %v841 = vunpack.c.l.b16 %v213
  %v842 = vunpack.c.l.b16 %v214
  %v843 = vunpack.c.l.b16 %v215
  %v844 = vunpack.c.l.b16 %v216
  %v845 = vunpack.c.l.b16 %v217
  %v846 = vunpack.c.l.b16 %v218
  %v847 = vunpack.c.l.b16 %v219
  %v848 = vunpack.c.l.b16 %v220
  %v849 = vunpack.c.l.b16 %v221
  %v850 = vunpack.c.l.b16 %v222
  %v851 = vunpack.c.l.b16 %v223
  %v852 = vunpack.c.l.b16 %v224
  %v853 = vunpack.c.l.b16 %v225
  %v854 = vunpack.c.l.b16 %v226
  %v855 = vunpack.c.l.b16 %v227
  %v856 = vunpack.c.l.b16 %v228
  %v857 = vunpack.c.l.b16 %v229
  %v858 = vunpack.c.l.b16 %v230
  %v859 = vunpack.c.l.b16 %v231
  %v860 = vunpack.c.l.b16 %v232
  %v861 = vunpack.c.l.b16 %v233
  %v862 = vunpack.c.l.b16 %v234
  %v863 = vunpack.c.l.b16 %v235
  %v864 = vunpack.c.l.b16 %v236
  %v865 = vunpack.c.l.b16 %v237
  %v866 = vunpack.c.l.b16 %v238
  %v867 = vunpack.c.l.b16 %v239
  %v868 = vunpack.c.l.b16 %v240
  %v869 = vunpack.c.l.b16 %v241
  %v870 = vunpack.c.l.b16 %v242
  %v871 = vunpack.c.l.b16 %v243
  %v872 = vunpack.c.l.b16 %v244
  %v873 = vunpack.c.l.b16 %v245
  %v874 = vunpack.c.l.b16 %v246
  %v875 = vunpack.c.l.b16 %v247
  %v876 = vunpack.c.l.b16 %v248
  %v877 = vunpack.c.l.b16 %v249
  %v878 = vunpack.c.l.b16 %v250
  %v879 = vunpack.c.l.b16 %v251
  %v880 = vunpack.c.l.b16 %v252
  %v881 = vunpack.c.l.b16 %v253
  %v882 = vunpack.c.l.b16 %v254
  %v883 = vunpack.c.l.b16 %v255
  %v884 = vunpack.c.l.b16 %v256
  %v885 = vunpack.c.l.b16 %v257
  %v886 = vunpack.c.l.b16 %v258
  %v887 = vunpack.c.l.b16 %v259
  %v888 = vunpack.c.l.b16 %v260
  %v889 = vunpack.c.l.b16 %v261
  %v890 = vunpack.c.l.b16 %v262
  %v891 = vunpack.c.l.b16 %v263
  %v892 = vunpack.c.l.b16 %v264
  %v893 = vunpack.c.l.b16 %v265
  %v894 = vunpack.c.l.b16 %v266
  %v895 = vunpack.c.l.b16 %v267
  %v896 = vunpack.c.l.b16 %v268
  %v897 = vunpack.c.l.b16 %v269
  %v898 = vunpack.c.l.b16 %v270
  %v899 = vunpack.c.l.b16 %v271
  %v900 = vunpack.c.l.b16 %v272
  %v901 = vunpack.c.l.b16 %v273
  %v902 = vunpack.c.l.b16 %v274
  %v903 = vunpack.c.l.b16 %v275
  %v904 = vunpack.c.l.b16 %v276
  %v905 = vunpack.c.l.b16 %v277
  %v906 = vunpack.c.l.b16 %v278
  %v907 = vpack.c.b16 %v652, %v651
  %v908 = vpack.c.b16 %v654, %v653
  %v909 = vpack.c.b16 %v656, %v655
  %v910 = vpack.c.b16 %v658, %v657
  %v911 = vpack.c.b16 %v660, %v659
  %v912 = vpack.c.b16 %v662, %v661
  %v913 = vpack.c.b16 %v664, %v663
  %v914 = vpack.c.b16 %v666, %v665
  %v915 = vpack.c.b16 %v668, %v667
  %v916 = vpack.c.b16 %v670, %v669
  %v917 = vpack.c.b16 %v672, %v671
  %v918 = vpack.c.b16 %v674, %v673
  %v919 = vpack.c.b16 %v676, %v675
  %v920 = vpack.c.b16 %v678, %v677
  %v921 = vpack.c.b16 %v680, %v679
  %v922 = vpack.c.b16 %v682, %v681
  %v923 = vpack.c.b16 %v684, %v683
  %v924 = vpack.c.b16 %v686, %v685
  %v925 = vpack.c.b16 %v688, %v687
  %v926 = vpack.c.b16 %v690, %v689
  %v927 = vpack.c.b16 %v692, %v691
  %v928 = vpack.c.b16 %v694, %v693
  %v929 = vpack.c.b16 %v696, %v695
  %v930 = vpack.c.b16 %v698, %v697
  %v931 = vpack.c.b16 %v700, %v699
  %v932 = vpack.c.b16 %v702, %v701
  %v933 = vpack.c.b16 %v704, %v703
  %v934 = vpack.c.b16 %v706, %v705
  %v935 = vpack.c.b16 %v708, %v707
  %v936 = vpack.c.b16 %v710, %v709
  %v937 = vpack.c.b16 %v712, %v711
  %v938 = vpack.c.b16 %v714, %v713
  %v939 = vpack.c.b16 %v716, %v715
  %v940 = vpack.c.b16 %v718, %v717
  %v941 = vpack.c.b16 %v720, %v719
  %v942 = vpack.c.b16 %v722, %v721
  %v943 = vpack.c.b16 %v724, %v723
  %v944 = vpack.c.b16 %v726, %v725
  %v945 = vpack.c.b16 %v728, %v727
  %v946 = vpack.c.b16 %v730, %v729
  %v947 = vpack.c.b16 %v732, %v731
  %v948 = vpack.c.b16 %v734, %v733
  %v949 = vpack.c.b16 %v736, %v735
  %v950 = vpack.c.b16 %v738, %v737
  %v951 = vpack.c.b16 %v740, %v739
  %v952 = vpack.c.b16 %v742, %v741
  %v953 = vpack.c.b16 %v744, %v743
  %v954 = vpack.c.b16 %v746, %v745
  %v955 = vpack.c.b16 %v748, %v747
  %v956 = vpack.c.b16 %v750, %v749
  %v957 = vpack.c.b16 %v752, %v751
  %v958 = vpack.c.b16 %v754, %v753
  %v959 = vpack.c.b16 %v756, %v755
  %v960 = vpack.c.b16 %v758, %v757
  %v961 = vpack.c.b16 %v760, %v759
  %v962 = vpack.c.b16 %v762, %v761
  %v963 = vpack.c.b16 %v764, %v763
  %v964 = vpack.c.b16 %v766, %v765
  %v965 = vpack.c.b16 %v768, %v767
  %v966 = vpack.c.b16 %v770, %v769
  %v967 = vpack.c.b16 %v772, %v771
  %v968 = vpack.c.b16 %v774, %v773
  %v969 = vpack.c.b16 %v776, %v775
  %v970 = vpack.c.b16 %v778, %v777
  %v971 = vpack.c.b16 %v780, %v779
  %v972 = vpack.c.b16 %v782, %v781
  %v973 = vpack.c.b16 %v784, %v783
  %v974 = vpack.c.b16 %v786, %v785
  %v975 = vpack.c.b16 %v788, %v787
  %v976 = vpack.c.b16 %v790, %v789
  %v977 = vpack.c.b16 %v792, %v791
  %v978 = vpack.c.b16 %v794, %v793
  %v979 = vpack.c.b16 %v796, %v795
  %v980 = vpack.c.b16 %v798, %v797
  %v981 = vpack.c.b16 %v800, %v799
  %v982 = vpack.c.b16 %v802, %v801
  %v983 = vpack.c.b16 %v804, %v803
  %v984 = vpack.c.b16 %v806, %v805
  %v985 = vpack.c.b16 %v808, %v807
  %v986 = vpack.c.b16 %v810, %v809
  %v987 = vpack.c.b16 %v812, %v811
  %v988 = vpack.c.b16 %v814, %v813
  %v989 = vpack.c.b16 %v816, %v815
  %v990 = vpack.c.b16 %v818, %v817
  %v991 = vpack.c.b16 %v820, %v819
  %v992 = vpack.c.b16 %v822, %v821
  %v993 = vpack.c.b16 %v824, %v823
  %v994 = vpack.c.b16 %v826, %v825
  %v995 = vpack.c.b16 %v828, %v827
  %v996 = vpack.c.b16 %v830, %v829
  %v997 = vpack.c.b16 %v832, %v831
  %v998 = vpack.c.b16 %v834, %v833
  %v999 = vpack.c.b16 %v836, %v835
  %v1000 = vpack.c.b16 %v838, %v837
  %v1001 = vpack.c.b16 %v840, %v839
  %v1002 = vpack.c.b16 %v842, %v841
  %v1003 = vpack.c.b16 %v844, %v843
  %v1004 = vpack.c.b16 %v846, %v845
  %v1005 = vpack.c.b16 %v848, %v847
  %v1006 = vpack.c.b16 %v850, %v849
  %v1007 = vpack.c.b16 %v852, %v851
  %v1008 = vpack.c.b16 %v854, %v853
  %v1009 = vpack.c.b16 %v856, %v855
  %v1010 = vpack.c.b16 %v858, %v857
  %v1011 = vpack.c.b16 %v860, %v859
  %v1012 = vpack.c.b16 %v862, %v861
  %v1013 = vpack.c.b16 %v864, %v863
  %v1014 = vpack.c.b16 %v866, %v865
  %v1015 = vpack.c.b16 %v868, %v867
  %v1016 = vpack.c.b16 %v870, %v869
  %v1017 = vpack.c.b16 %v872, %v871
  %v1018 = vpack.c.b16 %v874, %v873
  %v1019 = vpack.c.b16 %v876, %v875
  %v1020 = vpack.c.b16 %v878, %v877
  %v1021 = vpack.c.b16 %v880, %v879
  %v1022 = vpack.c.b16 %v882, %v881
  %v1023 = vpack.c.b16 %v884, %v883
  %v1024 = vpack.c.b16 %v886, %v885
  %v1025 = vpack.c.b16 %v888, %v887
  %v1026 = vpack.c.b16 %v890, %v889
  %v1027 = vpack.c.b16 %v892, %v891
  %v1028 = vpack.c.b16 %v894, %v893
  %v1029 = vpack.c.b16 %v896, %v895
  %v1030 = vpack.c.b16 %v898, %v897
  %v1031 = vpack.c.b16 %v900, %v899
  %v1032 = vpack.c.b16 %v902, %v901
  %v1033 = vpack.c.b16 %v904, %v903
  %v1034 = vpack.c.b16 %v906, %v905
  %1163 = vmatprep.subr.bf16.mxu0 0
  %1164 = vmatpush1.bf16.msra.mxu0 %v907
  %1165 = vmatprep.subr.bf16.mxu0 0
  %1166 = vmatpush1.bf16.msra.mxu0 %v908
  %1167 = vmatprep.subr.bf16.mxu0 0
  %1168 = vmatpush1.bf16.msra.mxu0 %v909
  %1169 = vmatprep.subr.bf16.mxu0 0
  %1170 = vmatpush1.bf16.msra.mxu0 %v910
  %1171 = vmatprep.subr.bf16.mxu0 0
  %1172 = vmatpush1.bf16.msra.mxu0 %v911
  %1173 = vmatprep.subr.bf16.mxu0 0
  %1174 = vmatpush1.bf16.msra.mxu0 %v912
  %1175 = vmatprep.subr.bf16.mxu0 0
  %1176 = vmatpush1.bf16.msra.mxu0 %v913
  %1177 = vmatprep.subr.bf16.mxu0 0
  %1178 = vmatpush1.bf16.msra.mxu0 %v914
  %1179 = vmatprep.subr.bf16.mxu0 0
  %1180 = vmatpush1.bf16.msra.mxu0 %v915
  %1181 = vmatprep.subr.bf16.mxu0 0
  %1182 = vmatpush1.bf16.msra.mxu0 %v916
  %1183 = vmatprep.subr.bf16.mxu0 0
  %1184 = vmatpush1.bf16.msra.mxu0 %v917
  %1185 = vmatprep.subr.bf16.mxu0 0
  %1186 = vmatpush1.bf16.msra.mxu0 %v918
  %1187 = vmatprep.subr.bf16.mxu0 0
  %1188 = vmatpush1.bf16.msra.mxu0 %v919
  %1189 = vmatprep.subr.bf16.mxu0 0
  %1190 = vmatpush1.bf16.msra.mxu0 %v920
  %1191 = vmatprep.subr.bf16.mxu0 0
  %1192 = vmatpush1.bf16.msra.mxu0 %v921
  %1193 = vmatprep.subr.bf16.mxu0 0
  %1194 = vmatpush1.bf16.msra.mxu0 %v922
  %1195 = vmatprep.mubr.bf16.mxu0 %v318
  %1196 = vmatmul.mubr.bf16.gmra.mrb[0].mxu0 %v304
  %v1197 = vpop.f32.mrb[0].mxu0
  %v1198 = vadd.f32 0.0, %v1197
  %v1199 = vpop.f32.mrb[0].mxu0
  %v1200 = vpop.f32.mrb[0].mxu0
  %v1201 = vpop.f32.mrb[0].mxu0
  %1202 = vdwg.mxu0
  %1203 = vmatprep.subr.bf16.mxu0 0
  %1204 = vmatpush1.bf16.msra.mxu0 %v923
  %1205 = vmatprep.subr.bf16.mxu0 0
  %1206 = vmatpush1.bf16.msra.mxu0 %v924
  %1207 = vmatprep.subr.bf16.mxu0 0
  %1208 = vmatpush1.bf16.msra.mxu0 %v925
  %1209 = vmatprep.subr.bf16.mxu0 0
  %1210 = vmatpush1.bf16.msra.mxu0 %v926
  %1211 = vmatprep.subr.bf16.mxu0 0
  %1212 = vmatpush1.bf16.msra.mxu0 %v927
  %1213 = vmatprep.subr.bf16.mxu0 0
  %1214 = vmatpush1.bf16.msra.mxu0 %v928
  %1215 = vmatprep.subr.bf16.mxu0 0
  %1216 = vmatpush1.bf16.msra.mxu0 %v929
  %1217 = vmatprep.subr.bf16.mxu0 0
  %1218 = vmatpush1.bf16.msra.mxu0 %v930
  %1219 = vmatprep.subr.bf16.mxu0 0
  %1220 = vmatpush1.bf16.msra.mxu0 %v931
  %1221 = vmatprep.subr.bf16.mxu0 0
  %1222 = vmatpush1.bf16.msra.mxu0 %v932
  %1223 = vmatprep.subr.bf16.mxu0 0
  %1224 = vmatpush1.bf16.msra.mxu0 %v933
  %1225 = vmatprep.subr.bf16.mxu0 0
  %1226 = vmatpush1.bf16.msra.mxu0 %v934
  %1227 = vmatprep.subr.bf16.mxu0 0
  %1228 = vmatpush1.bf16.msra.mxu0 %v935
  %1229 = vmatprep.subr.bf16.mxu0 0
  %1230 = vmatpush1.bf16.msra.mxu0 %v936
  %1231 = vmatprep.subr.bf16.mxu0 0
  %1232 = vmatpush1.bf16.msra.mxu0 %v937
  %1233 = vmatprep.subr.bf16.mxu0 0
  %1234 = vmatpush1.bf16.msra.mxu0 %v938
  %1235 = vmatprep.mubr.bf16.mxu0 %v328
  %1236 = vmatmul.mubr.bf16.gmra.mrb[0].mxu0 %v326
  %v1237 = vpop.f32.mrb[0].mxu0
  %v1238 = vadd.f32 %v1198, %v1237
  %v1239 = vpop.f32.mrb[0].mxu0
  %v1240 = vpop.f32.mrb[0].mxu0
  %v1241 = vpop.f32.mrb[0].mxu0
  %1242 = vdwg.mxu0
  %1243 = vmatprep.subr.bf16.mxu0 0
  %1244 = vmatpush1.bf16.msra.mxu0 %v939
  %1245 = vmatprep.subr.bf16.mxu0 0
  %1246 = vmatpush1.bf16.msra.mxu0 %v940
  %1247 = vmatprep.subr.bf16.mxu0 0
  %1248 = vmatpush1.bf16.msra.mxu0 %v941
  %1249 = vmatprep.subr.bf16.mxu0 0
  %1250 = vmatpush1.bf16.msra.mxu0 %v942
  %1251 = vmatprep.subr.bf16.mxu0 0
  %1252 = vmatpush1.bf16.msra.mxu0 %v943
  %1253 = vmatprep.subr.bf16.mxu0 0
  %1254 = vmatpush1.bf16.msra.mxu0 %v944
  %1255 = vmatprep.subr.bf16.mxu0 0
  %1256 = vmatpush1.bf16.msra.mxu0 %v945
  %1257 = vmatprep.subr.bf16.mxu0 0
  %1258 = vmatpush1.bf16.msra.mxu0 %v946
  %1259 = vmatprep.subr.bf16.mxu0 0
  %1260 = vmatpush1.bf16.msra.mxu0 %v947
  %1261 = vmatprep.subr.bf16.mxu0 0
  %1262 = vmatpush1.bf16.msra.mxu0 %v948
  %1263 = vmatprep.subr.bf16.mxu0 0
  %1264 = vmatpush1.bf16.msra.mxu0 %v949
  %1265 = vmatprep.subr.bf16.mxu0 0
  %1266 = vmatpush1.bf16.msra.mxu0 %v950
  %1267 = vmatprep.subr.bf16.mxu0 0
  %1268 = vmatpush1.bf16.msra.mxu0 %v951
  %1269 = vmatprep.subr.bf16.mxu0 0
  %1270 = vmatpush1.bf16.msra.mxu0 %v952
  %1271 = vmatprep.subr.bf16.mxu0 0
  %1272 = vmatpush1.bf16.msra.mxu0 %v953
  %1273 = vmatprep.subr.bf16.mxu0 0
  %1274 = vmatpush1.bf16.msra.mxu0 %v954
  %1275 = vmatprep.mubr.bf16.mxu0 %v325
  %1276 = vmatmul.mubr.bf16.gmra.mrb[0].mxu0 %v311
  %v1277 = vpop.f32.mrb[0].mxu0
  %v1278 = vadd.f32 %v1238, %v1277
  %v1279 = vpop.f32.mrb[0].mxu0
  %v1280 = vpop.f32.mrb[0].mxu0
  %v1281 = vpop.f32.mrb[0].mxu0
  %1282 = vdwg.mxu0
  %1283 = vmatprep.subr.bf16.mxu0 0
  %1284 = vmatpush1.bf16.msra.mxu0 %v955
  %1285 = vmatprep.subr.bf16.mxu0 0
  %1286 = vmatpush1.bf16.msra.mxu0 %v956
  %1287 = vmatprep.subr.bf16.mxu0 0
  %1288 = vmatpush1.bf16.msra.mxu0 %v957
  %1289 = vmatprep.subr.bf16.mxu0 0
  %1290 = vmatpush1.bf16.msra.mxu0 %v958
  %1291 = vmatprep.subr.bf16.mxu0 0
  %1292 = vmatpush1.bf16.msra.mxu0 %v959
  %1293 = vmatprep.subr.bf16.mxu0 0
  %1294 = vmatpush1.bf16.msra.mxu0 %v960
  %1295 = vmatprep.subr.bf16.mxu0 0
  %1296 = vmatpush1.bf16.msra.mxu0 %v961
  %1297 = vmatprep.subr.bf16.mxu0 0
  %1298 = vmatpush1.bf16.msra.mxu0 %v962
  %1299 = vmatprep.subr.bf16.mxu0 0
  %1300 = vmatpush1.bf16.msra.mxu0 %v963
  %1301 = vmatprep.subr.bf16.mxu0 0
  %1302 = vmatpush1.bf16.msra.mxu0 %v964
  %1303 = vmatprep.subr.bf16.mxu0 0
  %1304 = vmatpush1.bf16.msra.mxu0 %v965
  %1305 = vmatprep.subr.bf16.mxu0 0
  %1306 = vmatpush1.bf16.msra.mxu0 %v966
  %1307 = vmatprep.subr.bf16.mxu0 0
  %1308 = vmatpush1.bf16.msra.mxu0 %v967
  %1309 = vmatprep.subr.bf16.mxu0 0
  %1310 = vmatpush1.bf16.msra.mxu0 %v968
  %1311 = vmatprep.subr.bf16.mxu0 0
  %1312 = vmatpush1.bf16.msra.mxu0 %v969
  %1313 = vmatprep.subr.bf16.mxu0 0
  %1314 = vmatpush1.bf16.msra.mxu0 %v970
  %1315 = vmatprep.mubr.bf16.mxu0 %v329
  %1316 = vmatmul.mubr.bf16.gmra.mrb[0].mxu0 %v327
  %v1317 = vpop.f32.mrb[0].mxu0
  %v1318 = vadd.f32 %v1278, %v1317
  %v1319 = vpop.f32.mrb[0].mxu0
  %v1320 = vpop.f32.mrb[0].mxu0
  %v1321 = vpop.f32.mrb[0].mxu0
  %1322 = vdwg.mxu0
  %1323 = vmatprep.subr.bf16.mxu0 0
  %1324 = vmatpush1.bf16.msra.mxu0 %v971
  %1325 = vmatprep.subr.bf16.mxu0 0
  %1326 = vmatpush1.bf16.msra.mxu0 %v972
  %1327 = vmatprep.subr.bf16.mxu0 0
  %1328 = vmatpush1.bf16.msra.mxu0 %v973
  %1329 = vmatprep.subr.bf16.mxu0 0
  %1330 = vmatpush1.bf16.msra.mxu0 %v974
  %1331 = vmatprep.subr.bf16.mxu0 0
  %1332 = vmatpush1.bf16.msra.mxu0 %v975
  %1333 = vmatprep.subr.bf16.mxu0 0
  %1334 = vmatpush1.bf16.msra.mxu0 %v976
  %1335 = vmatprep.subr.bf16.mxu0 0
  %1336 = vmatpush1.bf16.msra.mxu0 %v977
  %1337 = vmatprep.subr.bf16.mxu0 0
  %1338 = vmatpush1.bf16.msra.mxu0 %v978
  %1339 = vmatprep.subr.bf16.mxu0 0
  %1340 = vmatpush1.bf16.msra.mxu0 %v979
  %1341 = vmatprep.subr.bf16.mxu0 0
  %1342 = vmatpush1.bf16.msra.mxu0 %v980
  %1343 = vmatprep.subr.bf16.mxu0 0
  %1344 = vmatpush1.bf16.msra.mxu0 %v981
  %1345 = vmatprep.subr.bf16.mxu0 0
  %1346 = vmatpush1.bf16.msra.mxu0 %v982
  %1347 = vmatprep.subr.bf16.mxu0 0
  %1348 = vmatpush1.bf16.msra.mxu0 %v983
  %1349 = vmatprep.subr.bf16.mxu0 0
  %1350 = vmatpush1.bf16.msra.mxu0 %v984
  %1351 = vmatprep.subr.bf16.mxu0 0
  %1352 = vmatpush1.bf16.msra.mxu0 %v985
  %1353 = vmatprep.subr.bf16.mxu0 0
  %1354 = vmatpush1.bf16.msra.mxu0 %v986
  %1355 = vmatprep.mubr.bf16.mxu0 %v367
  %1356 = vmatmul.mubr.bf16.gmra.mrb[0].mxu0 %v353
  %v1357 = vpop.f32.mrb[0].mxu0
  %v1358 = vadd.f32 %v1318, %v1357
  %v1359 = vpop.f32.mrb[0].mxu0
  %v1360 = vpop.f32.mrb[0].mxu0
  %v1361 = vpop.f32.mrb[0].mxu0
  %1362 = vdwg.mxu0
  %1363 = vmatprep.subr.bf16.mxu0 0
  %1364 = vmatpush1.bf16.msra.mxu0 %v987
  %1365 = vmatprep.subr.bf16.mxu0 0
  %1366 = vmatpush1.bf16.msra.mxu0 %v988
  %1367 = vmatprep.subr.bf16.mxu0 0
  %1368 = vmatpush1.bf16.msra.mxu0 %v989
  %1369 = vmatprep.subr.bf16.mxu0 0
  %1370 = vmatpush1.bf16.msra.mxu0 %v990
  %1371 = vmatprep.subr.bf16.mxu0 0
  %1372 = vmatpush1.bf16.msra.mxu0 %v991
  %1373 = vmatprep.subr.bf16.mxu0 0
  %1374 = vmatpush1.bf16.msra.mxu0 %v992
  %1375 = vmatprep.subr.bf16.mxu0 0
  %1376 = vmatpush1.bf16.msra.mxu0 %v993
  %1377 = vmatprep.subr.bf16.mxu0 0
  %1378 = vmatpush1.bf16.msra.mxu0 %v994
  %1379 = vmatprep.subr.bf16.mxu0 0
  %1380 = vmatpush1.bf16.msra.mxu0 %v995
  %1381 = vmatprep.subr.bf16.mxu0 0
  %1382 = vmatpush1.bf16.msra.mxu0 %v996
  %1383 = vmatprep.subr.bf16.mxu0 0
  %1384 = vmatpush1.bf16.msra.mxu0 %v997
  %1385 = vmatprep.subr.bf16.mxu0 0
  %1386 = vmatpush1.bf16.msra.mxu0 %v998
  %1387 = vmatprep.subr.bf16.mxu0 0
  %1388 = vmatpush1.bf16.msra.mxu0 %v999
  %1389 = vmatprep.subr.bf16.mxu0 0
  %1390 = vmatpush1.bf16.msra.mxu0 %v1000
  %1391 = vmatprep.subr.bf16.mxu0 0
  %1392 = vmatpush1.bf16.msra.mxu0 %v1001
  %1393 = vmatprep.subr.bf16.mxu0 0
  %1394 = vmatpush1.bf16.msra.mxu0 %v1002
  %1395 = vmatprep.mubr.bf16.mxu0 %v377
  %1396 = vmatmul.mubr.bf16.gmra.mrb[0].mxu0 %v375
  %v1397 = vpop.f32.mrb[0].mxu0
  %v1398 = vadd.f32 %v1358, %v1397
  %v1399 = vpop.f32.mrb[0].mxu0
  %v1400 = vpop.f32.mrb[0].mxu0
  %v1401 = vpop.f32.mrb[0].mxu0
  %1402 = vdwg.mxu0
  %1403 = vmatprep.subr.bf16.mxu0 0
  %1404 = vmatpush1.bf16.msra.mxu0 %v1003
  %1405 = vmatprep.subr.bf16.mxu0 0
  %1406 = vmatpush1.bf16.msra.mxu0 %v1004
  %1407 = vmatprep.subr.bf16.mxu0 0
  %1408 = vmatpush1.bf16.msra.mxu0 %v1005
  %1409 = vmatprep.subr.bf16.mxu0 0
  %1410 = vmatpush1.bf16.msra.mxu0 %v1006
  %1411 = vmatprep.subr.bf16.mxu0 0
  %1412 = vmatpush1.bf16.msra.mxu0 %v1007
  %1413 = vmatprep.subr.bf16.mxu0 0
  %1414 = vmatpush1.bf16.msra.mxu0 %v1008
  %1415 = vmatprep.subr.bf16.mxu0 0
  %1416 = vmatpush1.bf16.msra.mxu0 %v1009
  %1417 = vmatprep.subr.bf16.mxu0 0
  %1418 = vmatpush1.bf16.msra.mxu0 %v1010
  %1419 = vmatprep.subr.bf16.mxu0 0
  %1420 = vmatpush1.bf16.msra.mxu0 %v1011
  %1421 = vmatprep.subr.bf16.mxu0 0
  %1422 = vmatpush1.bf16.msra.mxu0 %v1012
  %1423 = vmatprep.subr.bf16.mxu0 0
  %1424 = vmatpush1.bf16.msra.mxu0 %v1013
  %1425 = vmatprep.subr.bf16.mxu0 0
  %1426 = vmatpush1.bf16.msra.mxu0 %v1014
  %1427 = vmatprep.subr.bf16.mxu0 0
  %1428 = vmatpush1.bf16.msra.mxu0 %v1015
  %1429 = vmatprep.subr.bf16.mxu0 0
  %1430 = vmatpush1.bf16.msra.mxu0 %v1016
  %1431 = vmatprep.subr.bf16.mxu0 0
  %1432 = vmatpush1.bf16.msra.mxu0 %v1017
  %1433 = vmatprep.subr.bf16.mxu0 0
  %1434 = vmatpush1.bf16.msra.mxu0 %v1018
  %1435 = vmatprep.mubr.bf16.mxu0 %v374
  %1436 = vmatmul.mubr.bf16.gmra.mrb[0].mxu0 %v360
  %v1437 = vpop.f32.mrb[0].mxu0
  %v1438 = vadd.f32 %v1398, %v1437
  %v1439 = vpop.f32.mrb[0].mxu0
  %v1440 = vpop.f32.mrb[0].mxu0
  %v1441 = vpop.f32.mrb[0].mxu0
  %1442 = vdwg.mxu0
  %1443 = vmatprep.subr.bf16.mxu0 0
  %1444 = vmatpush1.bf16.msra.mxu0 %v1019
  %1445 = vmatprep.subr.bf16.mxu0 0
  %1446 = vmatpush1.bf16.msra.mxu0 %v1020
  %1447 = vmatprep.subr.bf16.mxu0 0
  %1448 = vmatpush1.bf16.msra.mxu0 %v1021
  %1449 = vmatprep.subr.bf16.mxu0 0
  %1450 = vmatpush1.bf16.msra.mxu0 %v1022
  %1451 = vmatprep.subr.bf16.mxu0 0
  %1452 = vmatpush1.bf16.msra.mxu0 %v1023
  %1453 = vmatprep.subr.bf16.mxu0 0
  %1454 = vmatpush1.bf16.msra.mxu0 %v1024
  %1455 = vmatprep.subr.bf16.mxu0 0
  %1456 = vmatpush1.bf16.msra.mxu0 %v1025
  %1457 = vmatprep.subr.bf16.mxu0 0
  %1458 = vmatpush1.bf16.msra.mxu0 %v1026
  %1459 = vmatprep.subr.bf16.mxu0 0
  %1460 = vmatpush1.bf16.msra.mxu0 %v1027
  %1461 = vmatprep.subr.bf16.mxu0 0
  %1462 = vmatpush1.bf16.msra.mxu0 %v1028
  %1463 = vmatprep.subr.bf16.mxu0 0
  %1464 = vmatpush1.bf16.msra.mxu0 %v1029
  %1465 = vmatprep.subr.bf16.mxu0 0
  %1466 = vmatpush1.bf16.msra.mxu0 %v1030
  %1467 = vmatprep.subr.bf16.mxu0 0
  %1468 = vmatpush1.bf16.msra.mxu0 %v1031
  %1469 = vmatprep.subr.bf16.mxu0 0
  %1470 = vmatpush1.bf16.msra.mxu0 %v1032
  %1471 = vmatprep.subr.bf16.mxu0 0
  %1472 = vmatpush1.bf16.msra.mxu0 %v1033
  %1473 = vmatprep.subr.bf16.mxu0 0
  %1474 = vmatpush1.bf16.msra.mxu0 %v1034
  %1475 = vmatprep.mubr.bf16.mxu0 %v378
  %1476 = vmatmul.mubr.bf16.gmra.mrb[0].mxu0 %v376
  %v1477 = vpop.f32.mrb[0].mxu0
  %v1478 = vadd.f32 %v1438, %v1477
  %v1479 = vpop.f32.mrb[0].mxu0
  %v1480 = vpop.f32.mrb[0].mxu0
  %v1481 = vpop.f32.mrb[0].mxu0
  %1482 = vdwg.mxu0
  %v1483 = vadd.f32 %v20, %v1478
  %1484 = vst [vmem:[#allocation2] sm:$0x3] %v1483
  // Predicated region
  $region18: #{forward.7} parent=0 // pred_check
    %p1485 = pneg %p15
  $region19: #{forward.7} parent=0 // pred_check_branch
    %1487 = sbr.rel (%p1485) target = $region21
  $region20: #{forward.7} parent=0 // pred_region
    %v1488 = vld [vmem:[#allocation2] sm:$0x3]
    %v1489 = vld [vmem:[%s2] sm:$0x1]
    %v1491 = vlaneseq
    %v1492 = vshrl.u32 %v1491, 7
    %v1493 = vsub.s32 0, %v1492
    %v1494 = vrot.slane %v1489, %v1493
    %v1496 = vadd.f32 %v1488, %v1494
    %v1497 = vmax.f32 %v1496, 0.0
    %v1498 = vpack.c.bf16 %v1497, %v1497
    %1499 = vst [vmem:[%s3] sm:$0x1] %v1498
  $region21: #{forward.7} parent=0 // pred_fallthru
    _
  // Predicated region
  $region22: #{forward.7} parent=0 // pred_check
    _
  $region23: #{forward.7} parent=0 // pred_check_branch
    %1501 = sbr.rel (0) target = $region25
  $region24: #{forward.7} parent=0 // pred_region
    _
  $region25: #{forward.7} parent=0 // pred_fallthru
    _
  // Predicated region
  $region26: #{forward.7} parent=0 // pred_check
    _
  $region27: #{forward.7} parent=0 // pred_check_branch
    %1503 = sbr.rel (0) target = $region29
  $region28: #{forward.7} parent=0 // pred_region
    _
  $region29: #{forward.7} parent=0 // pred_fallthru
    _

// kernel: forward.9
$region0: #{forward.9}
  #allocation0 [shape = 'u32[]', space=smem, size = 0x4, offset = 0x4, fixed_abs, tag = 'smem constant byte address 0x4 - core index']
  #allocation1 [shape = 'u32[144,128]{1,0:T(1,128)}', space=vmem, size = 0x12000, scoped, tag = 'internal scratch']
  #allocation2 [shape = 'f32[2,128]{1,0:T(2,128)}', space=vmem, size = 0x400, scoped, tag = 'scratch operand']
  %s0 = inlined_call_operand.vmem [shape: bf16[2,128], index: 0, kind: input, shape index: {}]
  %s1 = inlined_call_operand.vmem [shape: bf16[128,128], index: 1, kind: input, shape index: {}]
  %s2 = inlined_call_operand.vmem [shape: f32[1,128], index: 2, kind: input, shape index: {}]
  %s3 = inlined_call_operand.hbm [shape: f32[2,128], index: 3, kind: output, shape index: {}]
  %s4 = sld [smem:[#allocation0]]
  $region30: #{forward.9} parent=0
    _
  %s6 = ssub.s32 1, %s4
  %s7 = scalar_select 0, %s6, %s4
  $region1: #{forward.9} parent=0
    #allocation3 [shape = 'u8[1024]{0}', space=vmem, size = 0x400, scoped, tag = 'output window, operand 0, single buffered']
    #allocation4 [shape = 's32[1]{0}', space=sflag, size = 0x4, scoped, tag = 'scoped memory for forward.9']
    %8 = vsyncpa [#allocation4], 0
    // Predicated region
    $region2: #{forward.9} parent=1 // pred_check
      _
    $region3: #{forward.9} parent=1 // pred_check_branch
      %10 = sbr.rel (0) target = $region5
    $region4: #{forward.9} parent=1 // pred_region
      _
    $region5: #{forward.9} parent=1 // pred_fallthru
      _
    // Predicated region
    $region6: #{forward.9} parent=1 // pred_check
      _
    $region7: #{forward.9} parent=1 // pred_check_branch
      %12 = sbr.rel (0) target = $region9
    $region8: #{forward.9} parent=1 // pred_region
      _
    $region9: #{forward.9} parent=1 // pred_fallthru
      _
    // Predicated region
    $region10: #{forward.9} parent=1 // pred_check
      _
    $region11: #{forward.9} parent=1 // pred_check_branch
      %14 = sbr.rel (0) target = $region13
    $region12: #{forward.9} parent=1 // pred_region
      _
    $region13: #{forward.9} parent=1 // pred_fallthru
      _
    %p16 = scmp.eq.s32.totalorder 0, 0
    // Predicated region
    $region14: #{forward.9} parent=1 // pred_check
      %p17 = pneg %p16
    $region15: #{forward.9} parent=1 // pred_check_branch
      %19 = sbr.rel (%p17) target = $region17
    $region16: #{forward.9} parent=1 // pred_region
      %20 = vst [vmem:[#allocation2] sm:$0x3] 0.0
    $region17: #{forward.9} parent=1 // pred_fallthru
      _
    %v21 = vld [vmem:[#allocation2] sm:$0x3]
    %v22 = vld [vmem:[%s0] sm:$0x1]
    %v23 = vld [vmem:[%s1] sm:$0xf]
    %v24 = vld [vmem:[%s1 + $0x4] sm:$0xf]
    %v25 = vld [vmem:[%s1 + $0x8] sm:$0xf]
    %v26 = vld [vmem:[%s1 + $0xc] sm:$0xf]
    %v27 = vld [vmem:[%s1 + $0x10] sm:$0xf]
    %v28 = vld [vmem:[%s1 + $0x14] sm:$0xf]
    %v29 = vld [vmem:[%s1 + $0x18] sm:$0xf]
    %v30 = vld [vmem:[%s1 + $0x1c] sm:$0xf]
    %v31 = vld [vmem:[%s1 + $0x20] sm:$0xf]
    %v32 = vld [vmem:[%s1 + $0x24] sm:$0xf]
    %v33 = vld [vmem:[%s1 + $0x28] sm:$0xf]
    %v34 = vld [vmem:[%s1 + $0x2c] sm:$0xf]
    %v35 = vld [vmem:[%s1 + $0x30] sm:$0xf]
    %v36 = vld [vmem:[%s1 + $0x34] sm:$0xf]
    %v37 = vld [vmem:[%s1 + $0x38] sm:$0xf]
    %v38 = vld [vmem:[%s1 + $0x3c] sm:$0xf]
    %v55 = vunpack.c.l.b16 %v23
    %v56 = vunpack.c.l.b16 %v24
    %v57 = vunpack.c.l.b16 %v25
    %v58 = vunpack.c.l.b16 %v26
    %v59 = vunpack.c.l.b16 %v27
    %v60 = vunpack.c.l.b16 %v28
    %v61 = vunpack.c.l.b16 %v29
    %v62 = vunpack.c.l.b16 %v30
    %v63 = vunpack.c.l.b16 %v31
    %v64 = vunpack.c.l.b16 %v32
    %v65 = vunpack.c.l.b16 %v33
    %v66 = vunpack.c.l.b16 %v34
    %v67 = vunpack.c.l.b16 %v35
    %v68 = vunpack.c.l.b16 %v36
    %v69 = vunpack.c.l.b16 %v37
    %v70 = vunpack.c.l.b16 %v38
    %v71 = vpack.c.b16 %v56, %v55
    %v72 = vpack.c.b16 %v58, %v57
    %v73 = vpack.c.b16 %v60, %v59
    %v74 = vpack.c.b16 %v62, %v61
    %v75 = vpack.c.b16 %v64, %v63
    %v76 = vpack.c.b16 %v66, %v65
    %v77 = vpack.c.b16 %v68, %v67
    %v78 = vpack.c.b16 %v70, %v69
    %87 = vmatprep.subr.bf16.mxu0 0
    %88 = vmatpush1.bf16.msra.mxu0 %v71
    %89 = vmatprep.subr.bf16.mxu0 0
    %90 = vmatpush1.bf16.msra.mxu0 %v72
    %91 = vmatprep.subr.bf16.mxu0 0
    %92 = vmatpush1.bf16.msra.mxu0 %v73
    %93 = vmatprep.subr.bf16.mxu0 0
    %94 = vmatpush1.bf16.msra.mxu0 %v74
    %95 = vmatprep.subr.bf16.mxu0 0
    %96 = vmatpush1.bf16.msra.mxu0 %v75
    %97 = vmatprep.subr.bf16.mxu0 0
    %98 = vmatpush1.bf16.msra.mxu0 %v76
    %99 = vmatprep.subr.bf16.mxu0 0
    %100 = vmatpush1.bf16.msra.mxu0 %v77
    %101 = vmatprep.subr.bf16.mxu0 0
    %102 = vmatpush1.bf16.msra.mxu0 %v78
    %103 = vmatprep.subr.bf16.mxu0 0
    %104 = vmatpush1.bf16.msra.mxu0 0
    %105 = vmatprep.subr.bf16.mxu0 0
    %106 = vmatpush1.bf16.msra.mxu0 0
    %107 = vmatprep.subr.bf16.mxu0 0
    %108 = vmatpush1.bf16.msra.mxu0 0
    %109 = vmatprep.subr.bf16.mxu0 0
    %110 = vmatpush1.bf16.msra.mxu0 0
    %111 = vmatprep.subr.bf16.mxu0 0
    %112 = vmatpush1.bf16.msra.mxu0 0
    %113 = vmatprep.subr.bf16.mxu0 0
    %114 = vmatpush1.bf16.msra.mxu0 0
    %115 = vmatprep.subr.bf16.mxu0 0
    %116 = vmatpush1.bf16.msra.mxu0 0
    %117 = vmatprep.subr.bf16.mxu0 0
    %118 = vmatpush1.bf16.msra.mxu0 0
    %119 = vmatprep.mubr.bf16.mxu0 0
    %120 = vmatmul.mubr.bf16.gmra.mrb[0].mxu0 %v22
    %v121 = vpop.f32.mrb[0].mxu0
    %v122 = vadd.f32 0.0, %v121
    %v123 = vpop.f32.mrb[0].mxu0
    %v124 = vpop.f32.mrb[0].mxu0
    %v125 = vpop.f32.mrb[0].mxu0
    %126 = vdwg.mxu0
    %v127 = vadd.f32 %v21, %v122
    %128 = vst [vmem:[#allocation2] sm:$0x3] %v127
    // Predicated region
    $region18: #{forward.9} parent=1 // pred_check
      %p129 = pneg %p16
    $region19: #{forward.9} parent=1 // pred_check_branch
      %131 = sbr.rel (%p129) target = $region21
    $region20: #{forward.9} parent=1 // pred_region
      %v132 = vld [vmem:[#allocation2] sm:$0x3]
      %v133 = vld [vmem:[%s2] sm:$0x1]
      %v135 = vlaneseq
      %v136 = vshrl.u32 %v135, 7
      %v137 = vsub.s32 0, %v136
      %v138 = vrot.slane %v133, %v137
      %v140 = vadd.f32 %v132, %v138
      %141 = vst [vmem:[#allocation3] sm:$0x3] %v140
    $region21: #{forward.9} parent=1 // pred_fallthru
      _
    // Predicated region
    $region22: #{forward.9} parent=1 // pred_check
      _
    $region23: #{forward.9} parent=1 // pred_check_branch
      %143 = sbr.rel (0) target = $region25
    $region24: #{forward.9} parent=1 // pred_region
      %s145 = ssub.s32 32, 32
      %146 = vsyncadd [#allocation4], %s145
      %s148 = sshll.u32 [#allocation3], 4
      %s149 = int_to_ptr.vmem [resolvable:$true] %s148
      %151 = dma.vmem_to_hbm [thread:$0]  %s149, 32, %s3, [#allocation4]
    $region25: #{forward.9} parent=1 // pred_fallthru
      _
    // Predicated region
    $region26: #{forward.9} parent=1 // pred_check
      _
    $region27: #{forward.9} parent=1 // pred_check_branch
      %153 = sbr.rel (0) target = $region29
    $region28: #{forward.9} parent=1 // pred_region
      %154 = dma.done [#allocation4], 32
    $region29: #{forward.9} parent=1 // pred_fallthru
      _
    %155 = vsyncpa [#allocation4], 1

// kernel: forward.6
$region0: #{forward.6}
  #allocation0 [shape = 'u32[]', space=smem, size = 0x4, offset = 0x4, fixed_abs, tag = 'smem constant byte address 0x4 - core index']
  #allocation1 [shape = 'u32[144,128]{1,0:T(1,128)}', space=vmem, size = 0x12000, scoped, tag = 'internal scratch']
  #allocation2 [shape = 'bf16[10,10,128]{2,1,0:T(8,128)(2,1)}', space=vmem, size = 0xa000, scoped, tag = 'scratch operand']
  %s0 = inlined_call_operand.vmem [shape: bf16[2,8,8,128], index: 0, kind: input, shape index: {}]
  %s1 = inlined_call_operand.hbm [shape: bf16[9,128,128], index: 1, kind: input, shape index: {}]
  %s2 = inlined_call_operand.hbm [shape: f32[1,128], index: 2, kind: input, shape index: {}]
  %s3 = inlined_call_operand.vmem [shape: bf16[2,4,4,128], index: 3, kind: output, shape index: {}]
  %s4 = sld [smem:[#allocation0]]
  $region57: #{forward.6} parent=0
    _
  %s6 = ssub.s32 1, %s4
  %s7 = scalar_select 0, %s6, %s4
  $region1: #{forward.6} parent=0
    #allocation3 [shape = 'u8[294912]{0}', space=vmem, size = 0x48000, scoped, tag = 'input window, operand 1, single buffered']
    #allocation4 [shape = 's32[2]{0}', space=sflag, size = 0x8, scoped, tag = 'scoped memory for forward.6']
    #allocation5 [shape = 'u8[512]{0}', space=vmem, size = 0x400, scoped, tag = 'input window, operand 2, single buffered']
    #allocation6 [shape = 's32[1]{0}', space=sflag, size = 0x4, scoped, tag = 'scoped memory for forward.6']
    %8 = vsyncpa [#allocation4], 0
    %9 = vsyncpa [#allocation6], 0
    loop: start=0, step=1, limit=4
    $region2: #{forward.6} parent=1 // loop_pre_header
      _
    $region3: #{forward.6} parent=1 // loop_header
      %s11 = sphi 0, %s15
      %p12 = scmp.ge.s32.totalorder %s11, 4
      %s18 = sphi 0, %s30
      %s19 = sphi 0, %s26
      %s20 = sphi 0, %s18
      %s21 = sphi 0, %s19
      %s22 = sphi 0, %s20
      %s23 = sphi 0, %s21
      %s33 = sphi 0, %s35
      %s36 = sphi 0, %s33
      %s37 = sphi 0, %s36
      %s53 = sphi 0, %s37
      %s59 = sphi 0, %s61
      %s62 = sphi 0, %s59
      %s63 = sphi 0, %s62
      %s79 = sphi 0, %s63
      %s85 = sphi 0, %s87
      %s88 = sphi 0, %s85
      %s89 = sphi 0, %s88
      %s105 = sphi 0, %s89
      %s113 = sphi 0, %s115
      %s116 = sphi 0, %s113
      %s117 = sphi 0, %s116
      %s133 = sphi 0, %s117
    $region4: #{forward.6} parent=1 // loop_header_branch
      %14 = sbr.rel (%p12) target = $region8
    $region5: #{forward.6} parent=1 // loop_body
      %s16 = ssub.s32 %s11, 1
      %s17 = ssub.s32 %s11, 2
      %s24 = sadd.s32 1, %s19
      %p25 = scmp.ge.s32.totalorder %s24, 1
      %s26 = scalar_select %p25, 0, %s24
      %s27 = sadd.s32 1, %s18
      %s28 = scalar_select %p25, %s27, %s18
      %p29 = scmp.ge.s32.totalorder %s28, 2
      %s30 = scalar_select %p29, 0, %s28
      %s31 = ssub.s32 %s18, %s30
      %p32 = scmp.eq.s32.totalorder %s31, 0
      %s34 = sadd.s32 %s33, 1
      %s35 = scalar_select %p32, %s33, %s34
      %p38 = pneg %p32
      %p39 = scmp.eq.s32.totalorder %s11, 1
      %p40 = por %p38, %p39
      %p41 = scmp.ne.s32.totalorder %s33, %s36
      %p42 = scmp.eq.s32.totalorder %s11, 0
      %p43 = por %p41, %p42
      %p44 = scmp.ne.s32.totalorder %s33, %s36
      %p45 = scmp.eq.s32.totalorder %s16, 1
      %p46 = por %p44, %p45
      %p47 = scmp.ne.s32.totalorder %s36, %s37
      %p48 = scmp.eq.s32.totalorder %s16, 0
      %p49 = por %p47, %p48
      %p50 = scmp.ne.s32.totalorder %s36, %s37
      %p51 = scmp.eq.s32.totalorder %s17, 1
      %p52 = por %p50, %p51
      %p54 = scmp.ne.s32.totalorder %s37, %s53
      %p55 = scmp.eq.s32.totalorder %s17, 0
      %p56 = por %p54, %p55
      %s57 = ssub.s32 %s19, %s26
      %p58 = scmp.eq.s32.totalorder %s57, 0
      %s60 = sadd.s32 %s59, 1
      %s61 = scalar_select %p58, %s59, %s60
      %p64 = pneg %p58
      %p65 = scmp.eq.s32.totalorder %s11, 1
      %p66 = por %p64, %p65
      %p67 = scmp.ne.s32.totalorder %s59, %s62
      %p68 = scmp.eq.s32.totalorder %s11, 0
      %p69 = por %p67, %p68
      %p70 = scmp.ne.s32.totalorder %s59, %s62
      %p71 = scmp.eq.s32.totalorder %s16, 1
      %p72 = por %p70, %p71
      %p73 = scmp.ne.s32.totalorder %s62, %s63
      %p74 = scmp.eq.s32.totalorder %s16, 0
      %p75 = por %p73, %p74
      %p76 = scmp.ne.s32.totalorder %s62, %s63
      %p77 = scmp.eq.s32.totalorder %s17, 1
      %p78 = por %p76, %p77
      %p80 = scmp.ne.s32.totalorder %s63, %s79
      %p81 = scmp.eq.s32.totalorder %s17, 0
      %p82 = por %p80, %p81
      %s83 = ssub.s32 %s19, %s26
      %p84 = scmp.eq.s32.totalorder %s83, 0
      %s86 = sadd.s32 %s85, 1
      %s87 = scalar_select %p84, %s85, %s86
      %p90 = pneg %p84
      %p91 = scmp.eq.s32.totalorder %s11, 1
      %p92 = por %p90, %p91
      %p93 = scmp.ne.s32.totalorder %s85, %s88
      %p94 = scmp.eq.s32.totalorder %s11, 0
      %p95 = por %p93, %p94
      %p96 = scmp.ne.s32.totalorder %s85, %s88
      %p97 = scmp.eq.s32.totalorder %s16, 1
      %p98 = por %p96, %p97
      %p99 = scmp.ne.s32.totalorder %s88, %s89
      %p100 = scmp.eq.s32.totalorder %s16, 0
      %p101 = por %p99, %p100
      %p102 = scmp.ne.s32.totalorder %s88, %s89
      %p103 = scmp.eq.s32.totalorder %s17, 1
      %p104 = por %p102, %p103
      %p106 = scmp.ne.s32.totalorder %s89, %s105
      %p107 = scmp.eq.s32.totalorder %s17, 0
      %p108 = por %p106, %p107
      %s109 = ssub.s32 %s18, %s30
      %s110 = ssub.s32 %s19, %s26
      %s111 = sor.u32 %s109, %s110
      %p112 = scmp.eq.s32.totalorder %s111, 0
      %s114 = sadd.s32 %s113, 1
      %s115 = scalar_select %p112, %s113, %s114
      %p118 = pneg %p112
      %p119 = scmp.eq.s32.totalorder %s11, 1
      %p120 = por %p118, %p119
      %p121 = scmp.ne.s32.totalorder %s113, %s116
      %p122 = scmp.eq.s32.totalorder %s11, 0
      %p123 = por %p121, %p122
      %p124 = scmp.ne.s32.totalorder %s113, %s116
      %p125 = scmp.eq.s32.totalorder %s16, 1
      %p126 = por %p124, %p125
      %p127 = scmp.ne.s32.totalorder %s116, %s117
      %p128 = scmp.eq.s32.totalorder %s16, 0
      %p129 = por %p127, %p128
      %p130 = scmp.ne.s32.totalorder %s116, %s117
      %p131 = scmp.eq.s32.totalorder %s17, 1
      %p132 = por %p130, %p131
      %p134 = scmp.ne.s32.totalorder %s117, %s133
      %p135 = scmp.eq.s32.totalorder %s17, 0
      %p136 = por %p134, %p135
      %p137 = scmp.le.s32.totalorder 1, %s11
      %p138 = scmp.lt.s32.totalorder %s11, 3
      %p139 = pnand %p137, %p138
      %p140 = pneg %p139
      // Predicated region
      $region9: #{forward.6} parent=5 // pred_check
        _
      $region10: #{forward.6} parent=5 // pred_check_branch
        %142 = sbr.rel (%p139) target = $region12
      $region11: #{forward.6} parent=5 // pred_region
        %s143 = ssub.s32 %s11, 1
        // Predicated region
        $region13: #{forward.6} parent=11 // pred_check
          %p144 = pneg %p75
        $region14: #{forward.6} parent=11 // pred_check_branch
          %146 = sbr.rel (%p144) target = $region16
        $region15: #{forward.6} parent=11 // pred_region
          %s148 = ssub.s32 9216, 9216
          %149 = vsyncadd [#allocation4], %s148
          %s150 = smul.addr %s21, 64
          %s151 = scalar_lea.hbm %s1, %s150
          %s152 = sshll.u32 [#allocation3], 4
          %s153 = int_to_ptr.vmem [resolvable:$true] %s152
          %158 = dma.hbm_to_vmem [thread:$0]  %s151, 9216, %s153, [#allocation4], 64, 64, 4
        $region16: #{forward.6} parent=11 // pred_fallthru
          _
        // Predicated region
        $region17: #{forward.6} parent=11 // pred_check
          %p159 = pneg %p101
        $region18: #{forward.6} parent=11 // pred_check_branch
          %161 = sbr.rel (%p159) target = $region20
        $region19: #{forward.6} parent=11 // pred_region
          %s163 = ssub.s32 16, 16
          %164 = vsyncadd [#allocation6], %s163
          %s165 = smul.addr %s21, 16
          %s166 = scalar_lea.hbm %s2, %s165
          %s168 = sshll.u32 [#allocation5], 4
          %s169 = int_to_ptr.vmem [resolvable:$true] %s168
          %171 = dma.hbm_to_vmem [thread:$0]  %s166, 16, %s169, [#allocation6]
        $region20: #{forward.6} parent=11 // pred_fallthru
          _
      $region12: #{forward.6} parent=5 // pred_fallthru
        _
      %p172 = scmp.lt.s32.totalorder %s11, 2
      // Predicated region
      $region21: #{forward.6} parent=5 // pred_check
        %p173 = pneg %p172
      $region22: #{forward.6} parent=5 // pred_check_branch
        %175 = sbr.rel (%p173) target = $region24
      $region23: #{forward.6} parent=5 // pred_region
        // Predicated region
        $region25: #{forward.6} parent=23 // pred_check
          %p176 = pneg %p43
        $region26: #{forward.6} parent=23 // pred_check_branch
          %178 = sbr.rel (%p176) target = $region28
        $region27: #{forward.6} parent=23 // pred_region
          %p179 = scmp.lt.s32.totalorder %s18, 1
          %s180 = scalar_select %p179, %s18, 1
          %s181 = smul.addr %s180, 8
          %s182 = smul.addr %s181, 4
          %s183 = scalar_lea.vmem %s0, %s182
        $region28: #{forward.6} parent=23 // pred_fallthru
          _
      $region24: #{forward.6} parent=5 // pred_fallthru
        _
      %p184 = scmp.le.s32.totalorder 1, %s11
      %p185 = scmp.lt.s32.totalorder %s11, 3
      %p186 = pnand %p184, %p185
      %p187 = pneg %p186
      // Predicated region
      $region29: #{forward.6} parent=5 // pred_check
        _
      $region30: #{forward.6} parent=5 // pred_check_branch
        %189 = sbr.rel (%p186) target = $region32
      $region31: #{forward.6} parent=5 // pred_region
        %s190 = ssub.s32 %s11, 1
        // Predicated region
        $region33: #{forward.6} parent=31 // pred_check
          %p191 = pneg %p75
        $region34: #{forward.6} parent=31 // pred_check_branch
          %193 = sbr.rel (%p191) target = $region36
        $region35: #{forward.6} parent=31 // pred_region
          %194 = dma.done [#allocation4], 9216
        $region36: #{forward.6} parent=31 // pred_fallthru
          _
        // Predicated region
        $region37: #{forward.6} parent=31 // pred_check
          %p195 = pneg %p101
        $region38: #{forward.6} parent=31 // pred_check_branch
          %197 = sbr.rel (%p195) target = $region40
        $region39: #{forward.6} parent=31 // pred_region
          %198 = dma.done [#allocation6], 16
        $region40: #{forward.6} parent=31 // pred_fallthru
          _
        %p199 = scmp.lt.s32.totalorder %s20, 1
        %s200 = scalar_select %p199, %s20, 1
        %s201 = smul.addr %s200, 8
        %s202 = smul.addr %s201, 4
        %s203 = scalar_lea.vmem %s0, %s202
        %p204 = pneg %p49
        %p205 = pneg %p46
        %p206 = pneg %p75
        %p207 = pneg %p72
        %p208 = pneg %p101
        %p209 = pneg %p98
        %p210 = pneg %p129
        %p211 = pneg %p126
        %p212 = scmp.lt.s32.totalorder %s20, 1
        %s213 = scalar_select %p212, %s20, 1
        %p214 = scmp.lt.s32.totalorder %s21, 0
        %s215 = scalar_select %p214, %s21, 0
        %s216 = smul.addr %s213, 4
        %s217 = sadd.s32 %s215, %s216
        %s218 = smul.addr %s217, 2
        %s219 = scalar_lea.vmem %s3, %s218
        %p220 = scmp.lt.s32.totalorder %s20, 1
        %s221 = scalar_select %p220, %s20, 1
        %s222 = smul.addr %s221, 8
        %s223 = smul.addr %s222, 4
        %s224 = scalar_lea.vmem %s0, %s223
        %p225 = scmp.lt.s32.totalorder %s20, 1
        %s226 = scalar_select %p225, %s20, 1
        %p227 = scmp.lt.s32.totalorder %s21, 0
        %s228 = scalar_select %p227, %s21, 0
        %s229 = smul.addr %s226, 4
        %s230 = sadd.s32 %s228, %s229
        %s231 = smul.addr %s230, 2
        %s232 = scalar_lea.vmem %s3, %s231
        %p234 = scmp.eq.s32.totalorder %s21, 0
        // Predicated region
        $region41: #{forward.6} parent=31 // pred_check
          %p235 = pneg %p234
        $region42: #{forward.6} parent=31 // pred_check_branch
          %237 = sbr.rel (%p235) target = $region44
        $region43: #{forward.6} parent=31 // pred_region
          %238 = vst [vmem:[#allocation2] sm:$0xf] 0
          %239 = vst [vmem:[#allocation2 + $0x4] sm:$0x1] 0
          %s240 = scalar_lea.vmem [#allocation2], 72
          %241 = vst [vmem:[%s240] sm:$0xf] 0
          %242 = vst [vmem:[%s240 + $0x4] sm:$0x1] 0
          %vm243 = vcmask 1040384
          %vm244 = vsmask.f32 256
          %vm245 = vmand %vm243, %vm244
          %v246 = vld [vmem:[#allocation2] sm:$0x1]
          %v247 = vsel %vm245, 0, %v246
          %248 = vst [vmem:[#allocation2] sm:$0x1] %v247
          %v249 = vld [vmem:[#allocation2 + $0x8] sm:$0x1]
          %v250 = vsel %vm245, 0, %v249
          %251 = vst [vmem:[#allocation2 + $0x8] sm:$0x1] %v250
          %v252 = vld [vmem:[#allocation2 + $0x10] sm:$0x1]
          %v253 = vsel %vm245, 0, %v252
          %254 = vst [vmem:[#allocation2 + $0x10] sm:$0x1] %v253
          %v255 = vld [vmem:[#allocation2 + $0x18] sm:$0x1]
          %v256 = vsel %vm245, 0, %v255
          %257 = vst [vmem:[#allocation2 + $0x18] sm:$0x1] %v256
          %v258 = vld [vmem:[#allocation2 + $0x20] sm:$0x1]
          %v259 = vsel %vm245, 0, %v258
          %260 = vst [vmem:[#allocation2 + $0x20] sm:$0x1] %v259
          %v261 = vld [vmem:[#allocation2 + $0x28] sm:$0x1]
          %v262 = vsel %vm245, 0, %v261
          %263 = vst [vmem:[#allocation2 + $0x28] sm:$0x1] %v262
          %v264 = vld [vmem:[#allocation2 + $0x30] sm:$0x1]
          %v265 = vsel %vm245, 0, %v264
          %266 = vst [vmem:[#allocation2 + $0x30] sm:$0x1] %v265
          %v267 = vld [vmem:[#allocation2 + $0x38] sm:$0x1]
          %v268 = vsel %vm245, 0, %v267
          %269 = vst [vmem:[#allocation2 + $0x38] sm:$0x1] %v268
          %v270 = vld [vmem:[#allocation2 + $0x40] sm:$0x1]
          %v271 = vsel %vm245, 0, %v270
          %272 = vst [vmem:[#allocation2 + $0x40] sm:$0x1] %v271
          %v273 = vld [vmem:[#allocation2 + $0x48] sm:$0x1]
          %v274 = vsel %vm245, 0, %v273
          %275 = vst [vmem:[#allocation2 + $0x48] sm:$0x1] %v274
          %vm276 = vsmask.f32 7938
          %vm277 = vmand %vm243, %vm276
          %v278 = vld [vmem:[#allocation2 + $0x4] sm:$0x1]
          %v279 = vsel %vm277, 0, %v278
          %280 = vst [vmem:[#allocation2 + $0x4] sm:$0x1] %v279
          %v281 = vld [vmem:[#allocation2 + $0xc] sm:$0x1]
          %v282 = vsel %vm277, 0, %v281
          %283 = vst [vmem:[#allocation2 + $0xc] sm:$0x1] %v282
          %v284 = vld [vmem:[#allocation2 + $0x14] sm:$0x1]
          %v285 = vsel %vm277, 0, %v284
          %286 = vst [vmem:[#allocation2 + $0x14] sm:$0x1] %v285
          %v287 = vld [vmem:[#allocation2 + $0x1c] sm:$0x1]
          %v288 = vsel %vm277, 0, %v287
          %289 = vst [vmem:[#allocation2 + $0x1c] sm:$0x1] %v288
          %v290 = vld [vmem:[#allocation2 + $0x24] sm:$0x1]
          %v291 = vsel %vm277, 0, %v290
          %292 = vst [vmem:[#allocation2 + $0x24] sm:$0x1] %v291
          %v293 = vld [vmem:[#allocation2 + $0x2c] sm:$0x1]
          %v294 = vsel %vm277, 0, %v293
          %295 = vst [vmem:[#allocation2 + $0x2c] sm:$0x1] %v294
          %v296 = vld [vmem:[#allocation2 + $0x34] sm:$0x1]
          %v297 = vsel %vm277, 0, %v296
          %298 = vst [vmem:[#allocation2 + $0x34] sm:$0x1] %v297
          %v299 = vld [vmem:[#allocation2 + $0x3c] sm:$0x1]
          %v300 = vsel %vm277, 0, %v299
          %301 = vst [vmem:[#allocation2 + $0x3c] sm:$0x1] %v300
          %v302 = vld [vmem:[#allocation2 + $0x44] sm:$0x1]
          %v303 = vsel %vm277, 0, %v302
          %304 = vst [vmem:[#allocation2 + $0x44] sm:$0x1] %v303
          %v305 = vld [vmem:[#allocation2 + $0x4c] sm:$0x1]
          %v306 = vsel %vm277, 0, %v305
          %307 = vst [vmem:[#allocation2 + $0x4c] sm:$0x1] %v306
          %v308 = vld [vmem:[%s224] sm:$0xf]
          %v309 = vld [vmem:[%s224 + $0x4] sm:$0xf]
          %v310 = vld [vmem:[%s224 + $0x8] sm:$0xf]
          %v311 = vld [vmem:[%s224 + $0xc] sm:$0xf]
          %v312 = vld [vmem:[%s224 + $0x10] sm:$0xf]
          %v313 = vld [vmem:[%s224 + $0x14] sm:$0xf]
          %v314 = vld [vmem:[%s224 + $0x18] sm:$0xf]
          %v315 = vld [vmem:[%s224 + $0x1c] sm:$0xf]
          %v317 = vshrl.u32 %v308, 16
          %v319 = vrot.slane %v317, 7
          %v320 = vshll.u32 %v308, 16
          %v322 = vor.u32 %v319, %v320
          %v323 = vrot.slane %v319, 4
          %v325 = vshrl.u32 %v309, 16
          %v327 = vrot.slane %v325, 7
          %v328 = vshll.u32 %v309, 16
          %v330 = vor.u32 %v327, %v328
          %v331 = vrot.slane %v327, 4
          %v333 = vshrl.u32 %v310, 16
          %v335 = vrot.slane %v333, 7
          %v336 = vshll.u32 %v310, 16
          %v338 = vor.u32 %v335, %v336
          %v339 = vrot.slane %v335, 4
          %v341 = vshrl.u32 %v311, 16
          %v343 = vrot.slane %v341, 7
          %v344 = vshll.u32 %v311, 16
          %v346 = vor.u32 %v343, %v344
          %v347 = vrot.slane %v343, 4
          %v349 = vshrl.u32 %v312, 16
          %v351 = vrot.slane %v349, 7
          %v352 = vshll.u32 %v312, 16
          %v354 = vor.u32 %v351, %v352
          %v355 = vrot.slane %v351, 4
          %v357 = vshrl.u32 %v313, 16
          %v359 = vrot.slane %v357, 7
          %v360 = vshll.u32 %v313, 16
          %v362 = vor.u32 %v359, %v360
          %v363 = vrot.slane %v359, 4
          %v365 = vshrl.u32 %v314, 16
          %v367 = vrot.slane %v365, 7
          %v368 = vshll.u32 %v314, 16
          %v370 = vor.u32 %v367, %v368
          %v371 = vrot.slane %v367, 4
          %v373 = vshrl.u32 %v315, 16
          %v375 = vrot.slane %v373, 7
          %v376 = vshll.u32 %v315, 16
          %v378 = vor.u32 %v375, %v376
          %v379 = vrot.slane %v375, 4
          %s396 = scalar_lea.vmem [#allocation2], 8
          %vm397 = vcmask 1043456
          %vm398 = vmand %vm397, %vm276
          %v399 = vld [vmem:[%s396] sm:$0xf]
          %v400 = vsel %vm398, %v322, %v399
          %401 = vst [vmem:[%s396] sm:$0xf] %v400
          %v402 = vld [vmem:[%s396 + $0x4] sm:$0x1]
          %v403 = vsel %vm245, %v323, %v402
          %404 = vst [vmem:[%s396 + $0x4] sm:$0x1] %v403
          %v405 = vld [vmem:[%s396 + $0x8] sm:$0xf]
          %v406 = vsel %vm398, %v330, %v405
          %407 = vst [vmem:[%s396 + $0x8] sm:$0xf] %v406
          %v408 = vld [vmem:[%s396 + $0xc] sm:$0x1]
          %v409 = vsel %vm245, %v331, %v408
          %410 = vst [vmem:[%s396 + $0xc] sm:$0x1] %v409
          %v411 = vld [vmem:[%s396 + $0x10] sm:$0xf]
          %v412 = vsel %vm398, %v338, %v411
          %413 = vst [vmem:[%s396 + $0x10] sm:$0xf] %v412
          %v414 = vld [vmem:[%s396 + $0x14] sm:$0x1]
          %v415 = vsel %vm245, %v339, %v414
          %416 = vst [vmem:[%s396 + $0x14] sm:$0x1] %v415
          %v417 = vld [vmem:[%s396 + $0x18] sm:$0xf]
          %v418 = vsel %vm398, %v346, %v417
          %419 = vst [vmem:[%s396 + $0x18] sm:$0xf] %v418
          %v420 = vld [vmem:[%s396 + $0x1c] sm:$0x1]
          %v421 = vsel %vm245, %v347, %v420
          %422 = vst [vmem:[%s396 + $0x1c] sm:$0x1] %v421
          %v423 = vld [vmem:[%s396 + $0x20] sm:$0xf]
          %v424 = vsel %vm398, %v354, %v423
          %425 = vst [vmem:[%s396 + $0x20] sm:$0xf] %v424
          %v426 = vld [vmem:[%s396 + $0x24] sm:$0x1]
          %v427 = vsel %vm245, %v355, %v426
          %428 = vst [vmem:[%s396 + $0x24] sm:$0x1] %v427
          %v429 = vld [vmem:[%s396 + $0x28] sm:$0xf]
          %v430 = vsel %vm398, %v362, %v429
          %431 = vst [vmem:[%s396 + $0x28] sm:$0xf] %v430
          %v432 = vld [vmem:[%s396 + $0x2c] sm:$0x1]
          %v433 = vsel %vm245, %v363, %v432
          %434 = vst [vmem:[%s396 + $0x2c] sm:$0x1] %v433
          %v435 = vld [vmem:[%s396 + $0x30] sm:$0xf]
          %v436 = vsel %vm398, %v370, %v435
          %437 = vst [vmem:[%s396 + $0x30] sm:$0xf] %v436
          %v438 = vld [vmem:[%s396 + $0x34] sm:$0x1]
          %v439 = vsel %vm245, %v371, %v438
          %440 = vst [vmem:[%s396 + $0x34] sm:$0x1] %v439
          %v441 = vld [vmem:[%s396 + $0x38] sm:$0xf]
          %v442 = vsel %vm398, %v378, %v441
          %443 = vst [vmem:[%s396 + $0x38] sm:$0xf] %v442
          %v444 = vld [vmem:[%s396 + $0x3c] sm:$0x1]
          %v445 = vsel %vm245, %v379, %v444
          %446 = vst [vmem:[%s396 + $0x3c] sm:$0x1] %v445
        $region44: #{forward.6} parent=31 // pred_fallthru
          _
        %v447 = vld [vmem:[#allocation2] sm:$0xf]
        %v448 = vld [vmem:[#allocation2 + $0x8] sm:$0xf]
        %v449 = vld [vmem:[#allocation2 + $0x10] sm:$0xf]
        %v450 = vld [vmem:[#allocation2 + $0x18] sm:$0xf]
        %v451 = vld [vmem:[#allocation2 + $0x20] sm:$0xf]
        %v452 = vld [vmem:[#allocation2 + $0x28] sm:$0xf]
        %v453 = vld [vmem:[#allocation2 + $0x30] sm:$0xf]
        %v454 = vld [vmem:[#allocation2 + $0x38] sm:$0xf]
        %v455 = vld [vmem:[#allocation3] sm:$0xf]
        %v456 = vld [vmem:[#allocation3 + $0x4] sm:$0xf]
        %v457 = vld [vmem:[#allocation3 + $0x8] sm:$0xf]
        %v458 = vld [vmem:[#allocation3 + $0xc] sm:$0xf]
        %v459 = vld [vmem:[#allocation3 + $0x10] sm:$0xf]
        %v460 = vld [vmem:[#allocation3 + $0x14] sm:$0xf]
        %v461 = vld [vmem:[#allocation3 + $0x18] sm:$0xf]
        %v462 = vld [vmem:[#allocation3 + $0x1c] sm:$0xf]
        %v463 = vld [vmem:[#allocation3 + $0x20] sm:$0xf]
        %v464 = vld [vmem:[#allocation3 + $0x24] sm:$0xf]
        %v465 = vld [vmem:[#allocation3 + $0x28] sm:$0xf]
        %v466 = vld [vmem:[#allocation3 + $0x2c] sm:$0xf]
        %v467 = vld [vmem:[#allocation3 + $0x30] sm:$0xf]
        %v468 = vld [vmem:[#allocation3 + $0x34] sm:$0xf]
        %v469 = vld [vmem:[#allocation3 + $0x38] sm:$0xf]
        %v470 = vld [vmem:[#allocation3 + $0x3c] sm:$0xf]
        %v471 = vld [vmem:[#allocation2 + $0x4] sm:$0x1]
        %v472 = vld [vmem:[#allocation2 + $0xc] sm:$0x1]
        %v473 = vld [vmem:[#allocation2 + $0x14] sm:$0x1]
        %v474 = vld [vmem:[#allocation2 + $0x1c] sm:$0x1]
        %v475 = vld [vmem:[#allocation2 + $0x24] sm:$0x1]
        %v476 = vld [vmem:[#allocation2 + $0x2c] sm:$0x1]
        %v477 = vld [vmem:[#allocation2 + $0x34] sm:$0x1]
        %v478 = vld [vmem:[#allocation2 + $0x3c] sm:$0x1]
        %vm479 = vsmask.f32 3328
        %vm480 = vsmask.f32 7440
        %vm481 = vmor %vm479, %vm480
        %v483 = vshrl.u32 %v447, 16
        %v485 = vrot.slane %v483, 4
        %v486 = vshll.u32 %v447, 16
        %v488 = vrot.slane %v486, 5
        %v489 = vor.u32 %v485, %v488
        %v490 = vrot.slane %v489, 4
        %v492 = vshll.u32 %v471, 16
        %v494 = vrot.slane %v492, 5
        %v495 = vsel %vm481, %v490, %v494
        %v497 = vshrl.u32 %v448, 16
        %v499 = vrot.slane %v497, 4
        %v500 = vshll.u32 %v448, 16
        %v502 = vrot.slane %v500, 5
        %v503 = vor.u32 %v499, %v502
        %v504 = vrot.slane %v503, 4
        %v506 = vshll.u32 %v472, 16
        %v508 = vrot.slane %v506, 5
        %v509 = vsel %vm481, %v504, %v508
        %v511 = vshrl.u32 %v449, 16
        %v513 = vrot.slane %v511, 4
        %v514 = vshll.u32 %v449, 16
        %v516 = vrot.slane %v514, 5
        %v517 = vor.u32 %v513, %v516
        %v518 = vrot.slane %v517, 4
        %v520 = vshll.u32 %v473, 16
        %v522 = vrot.slane %v520, 5
        %v523 = vsel %vm481, %v518, %v522
        %v525 = vshrl.u32 %v450, 16
        %v527 = vrot.slane %v525, 4
        %v528 = vshll.u32 %v450, 16
        %v530 = vrot.slane %v528, 5
        %v531 = vor.u32 %v527, %v530
        %v532 = vrot.slane %v531, 4
        %v534 = vshll.u32 %v474, 16
        %v536 = vrot.slane %v534, 5
        %v537 = vsel %vm481, %v532, %v536
        %v539 = vshrl.u32 %v451, 16
        %v541 = vrot.slane %v539, 4
        %v542 = vshll.u32 %v451, 16
        %v544 = vrot.slane %v542, 5
        %v545 = vor.u32 %v541, %v544
        %v546 = vrot.slane %v545, 4
        %v548 = vshll.u32 %v475, 16
        %v550 = vrot.slane %v548, 5
        %v551 = vsel %vm481, %v546, %v550
        %v553 = vshrl.u32 %v452, 16
        %v555 = vrot.slane %v553, 4
        %v556 = vshll.u32 %v452, 16
        %v558 = vrot.slane %v556, 5
        %v559 = vor.u32 %v555, %v558
        %v560 = vrot.slane %v559, 4
        %v562 = vshll.u32 %v476, 16
        %v564 = vrot.slane %v562, 5
        %v565 = vsel %vm481, %v560, %v564
        %v567 = vshrl.u32 %v453, 16
        %v569 = vrot.slane %v567, 4
        %v570 = vshll.u32 %v453, 16
        %v572 = vrot.slane %v570, 5
        %v573 = vor.u32 %v569, %v572
        %v574 = vrot.slane %v573, 4
        %v576 = vshll.u32 %v477, 16
        %v578 = vrot.slane %v576, 5
        %v579 = vsel %vm481, %v574, %v578
        %v581 = vshrl.u32 %v454, 16
        %v583 = vrot.slane %v581, 4
        %v584 = vshll.u32 %v454, 16
        %v586 = vrot.slane %v584, 5
        %v587 = vor.u32 %v583, %v586
        %v588 = vrot.slane %v587, 4
        %v590 = vshll.u32 %v478, 16
        %v592 = vrot.slane %v590, 5
        %v593 = vsel %vm481, %v588, %v592
        %s594 = scalar_lea.vmem [#allocation3], 64
        %v595 = vld [vmem:[%s594] sm:$0xf]
        %v596 = vld [vmem:[%s594 + $0x4] sm:$0xf]
        %v597 = vld [vmem:[%s594 + $0x8] sm:$0xf]
        %v598 = vld [vmem:[%s594 + $0xc] sm:$0xf]
        %v599 = vld [vmem:[%s594 + $0x10] sm:$0xf]
        %v600 = vld [vmem:[%s594 + $0x14] sm:$0xf]
        %v601 = vld [vmem:[%s594 + $0x18] sm:$0xf]
        %v602 = vld [vmem:[%s594 + $0x1c] sm:$0xf]
        %v603 = vld [vmem:[%s594 + $0x20] sm:$0xf]
        %v604 = vld [vmem:[%s594 + $0x24] sm:$0xf]
        %v605 = vld [vmem:[%s594 + $0x28] sm:$0xf]
        %v606 = vld [vmem:[%s594 + $0x2c] sm:$0xf]
        %v607 = vld [vmem:[%s594 + $0x30] sm:$0xf]
        %v608 = vld [vmem:[%s594 + $0x34] sm:$0xf]
        %v609 = vld [vmem:[%s594 + $0x38] sm:$0xf]
        %v610 = vld [vmem:[%s594 + $0x3c] sm:$0xf]
        %v611 = vunpack.c.l.b16 %v495
        %v612 = vunpack.c.l.b16 %v509
        %v613 = vunpack.c.l.b16 %v523
        %v614 = vunpack.c.l.b16 %v537
        %v615 = vunpack.c.l.b16 %v551
        %v616 = vunpack.c.l.b16 %v565
        %v617 = vunpack.c.l.b16 %v579
        %v618 = vunpack.c.l.b16 %v593
        %v619 = vpack.c.b16 %v612, %v611
        %v620 = vpack.c.b16 %v614, %v613
        %v621 = vpack.c.b16 %v616, %v615
        %v622 = vpack.c.b16 %v618, %v617
        %v643 = vunpack.c.l.b16 %v595
        %v644 = vunpack.c.l.b16 %v596
        %v645 = vunpack.c.l.b16 %v597
        %v646 = vunpack.c.l.b16 %v598
        %v647 = vunpack.c.l.b16 %v599
        %v648 = vunpack.c.l.b16 %v600
        %v649 = vunpack.c.l.b16 %v601
        %v650 = vunpack.c.l.b16 %v602
        %v651 = vunpack.c.l.b16 %v603
        %v652 = vunpack.c.l.b16 %v604
        %v653 = vunpack.c.l.b16 %v605
        %v654 = vunpack.c.l.b16 %v606
        %v655 = vunpack.c.l.b16 %v607
        %v656 = vunpack.c.l.b16 %v608
        %v657 = vunpack.c.l.b16 %v609
        %v658 = vunpack.c.l.b16 %v610
        %v659 = vpack.c.b16 %v644, %v643
        %v660 = vpack.c.b16 %v646, %v645
        %v661 = vpack.c.b16 %v648, %v647
        %v662 = vpack.c.b16 %v650, %v649
        %v663 = vpack.c.b16 %v652, %v651
        %v664 = vpack.c.b16 %v654, %v653
        %v665 = vpack.c.b16 %v656, %v655
        %v666 = vpack.c.b16 %v658, %v657
        %675 = vmatprep.subr.bf16.mxu0 0
        %676 = vmatpush1.bf16.msra.mxu0 %v659
        %677 = vmatprep.subr.bf16.mxu0 0
        %678 = vmatpush1.bf16.msra.mxu0 %v660
        %679 = vmatprep.subr.bf16.mxu0 0
        %680 = vmatpush1.bf16.msra.mxu0 %v661
        %681 = vmatprep.subr.bf16.mxu0 0
        %682 = vmatpush1.bf16.msra.mxu0 %v662
        %683 = vmatprep.subr.bf16.mxu0 0
        %684 = vmatpush1.bf16.msra.mxu0 %v663
        %685 = vmatprep.subr.bf16.mxu0 0
        %686 = vmatpush1.bf16.msra.mxu0 %v664
        %687 = vmatprep.subr.bf16.mxu0 0
        %688 = vmatpush1.bf16.msra.mxu0 %v665
        %689 = vmatprep.subr.bf16.mxu0 0
        %690 = vmatpush1.bf16.msra.mxu0 %v666
        %691 = vmatprep.subr.bf16.mxu0 0
        %692 = vmatpush1.bf16.msra.mxu0 0
        %693 = vmatprep.subr.bf16.mxu0 0
        %694 = vmatpush1.bf16.msra.mxu0 0
        %695 = vmatprep.subr.bf16.mxu0 0
        %696 = vmatpush1.bf16.msra.mxu0 0
        %697 = vmatprep.subr.bf16.mxu0 0
        %698 = vmatpush1.bf16.msra.mxu0 0
        %699 = vmatprep.subr.bf16.mxu0 0
        %700 = vmatpush1.bf16.msra.mxu0 0
        %701 = vmatprep.subr.bf16.mxu0 0
        %702 = vmatpush1.bf16.msra.mxu0 0
        %703 = vmatprep.subr.bf16.mxu0 0
        %704 = vmatpush1.bf16.msra.mxu0 0
        %705 = vmatprep.subr.bf16.mxu0 0
        %706 = vmatpush1.bf16.msra.mxu0 0
        %707 = vmatprep.mubr.bf16.mxu0 0
        %708 = vmatmul.mubr.bf16.gmra.mrb[0].mxu0 %v619
        %v709 = vpop.f32.mrb[0].mxu0
        %v710 = vadd.f32 0.0, %v709
        %v711 = vpop.f32.mrb[0].mxu0
        %v712 = vpop.f32.mrb[0].mxu0
        %v713 = vadd.f32 0.0, %v712
        %v714 = vpop.f32.mrb[0].mxu0
        %715 = vmatprep.mubr.bf16.mxu0 0
        %716 = vmatmul.mubr.bf16.gmra.mrb[0].mxu0 %v620
        %v717 = vpop.f32.mrb[0].mxu0
        %v718 = vadd.f32 0.0, %v717
        %v719 = vpop.f32.mrb[0].mxu0
        %v720 = vpop.f32.mrb[0].mxu0
        %v721 = vadd.f32 0.0, %v720
        %v722 = vpop.f32.mrb[0].mxu0
        %723 = vmatprep.mubr.bf16.mxu0 0
        %724 = vmatmul.mubr.bf16.gmra.mrb[0].mxu0 %v621
        %v725 = vpop.f32.mrb[0].mxu0
        %v726 = vadd.f32 0.0, %v725
        %v727 = vpop.f32.mrb[0].mxu0
        %v728 = vpop.f32.mrb[0].mxu0
        %v729 = vadd.f32 0.0, %v728
        %v730 = vpop.f32.mrb[0].mxu0
        %731 = vmatprep.mubr.bf16.mxu0 0
        %732 = vmatmul.mubr.bf16.gmra.mrb[0].mxu0 %v622
        %v733 = vpop.f32.mrb[0].mxu0
        %v734 = vadd.f32 0.0, %v733
        %v735 = vpop.f32.mrb[0].mxu0
        %v736 = vpop.f32.mrb[0].mxu0
        %v737 = vadd.f32 0.0, %v736
        %v738 = vpop.f32.mrb[0].mxu0
        %739 = vdwg.mxu0
        %v748 = vunpack.c.l.b16 %v447
        %v749 = vunpack.c.l.b16 %v448
        %v750 = vunpack.c.l.b16 %v449
        %v751 = vunpack.c.l.b16 %v450
        %v752 = vunpack.c.l.b16 %v451
        %v753 = vunpack.c.l.b16 %v452
        %v754 = vunpack.c.l.b16 %v453
        %v755 = vunpack.c.l.b16 %v454
        %v756 = vpack.c.b16 %v749, %v748
        %v757 = vpack.c.b16 %v751, %v750
        %v758 = vpack.c.b16 %v753, %v752
        %v759 = vpack.c.b16 %v755, %v754
        %v780 = vunpack.c.l.b16 %v455
        %v781 = vunpack.c.l.b16 %v456
        %v782 = vunpack.c.l.b16 %v457
        %v783 = vunpack.c.l.b16 %v458
        %v784 = vunpack.c.l.b16 %v459
        %v785 = vunpack.c.l.b16 %v460
        %v786 = vunpack.c.l.b16 %v461
        %v787 = vunpack.c.l.b16 %v462
        %v788 = vunpack.c.l.b16 %v463
        %v789 = vunpack.c.l.b16 %v464
        %v790 = vunpack.c.l.b16 %v465
        %v791 = vunpack.c.l.b16 %v466
        %v792 = vunpack.c.l.b16 %v467
        %v793 = vunpack.c.l.b16 %v468
        %v794 = vunpack.c.l.b16 %v469
        %v795 = vunpack.c.l.b16 %v470
        %v796 = vpack.c.b16 %v781, %v780
        %v797 = vpack.c.b16 %v783, %v782
        %v798 = vpack.c.b16 %v785, %v784
        %v799 = vpack.c.b16 %v787, %v786
        %v800 = vpack.c.b16 %v789, %v788
        %v801 = vpack.c.b16 %v791, %v790
        %v802 = vpack.c.b16 %v793, %v792
        %v803 = vpack.c.b16 %v795, %v794
        %812 = vmatprep.subr.bf16.mxu0 0
        %813 = vmatpush1.bf16.msra.mxu0 %v796
        %814 = vmatprep.subr.bf16.mxu0 0
        %815 = vmatpush1.bf16.msra.mxu0 %v797
        %816 = vmatprep.subr.bf16.mxu0 0
        %817 = vmatpush1.bf16.msra.mxu0 %v798
        %818 = vmatprep.subr.bf16.mxu0 0
        %819 = vmatpush1.bf16.msra.mxu0 %v799
        %820 = vmatprep.subr.bf16.mxu0 0
        %821 = vmatpush1.bf16.msra.mxu0 %v800
        %822 = vmatprep.subr.bf16.mxu0 0
        %823 = vmatpush1.bf16.msra.mxu0 %v801
        %824 = vmatprep.subr.bf16.mxu0 0
        %825 = vmatpush1.bf16.msra.mxu0 %v802
        %826 = vmatprep.subr.bf16.mxu0 0
        %827 = vmatpush1.bf16.msra.mxu0 %v803
        %828 = vmatprep.subr.bf16.mxu0 0
        %829 = vmatpush1.bf16.msra.mxu0 0
        %830 = vmatprep.subr.bf16.mxu0 0
        %831 = vmatpush1.bf16.msra.mxu0 0
        %832 = vmatprep.subr.bf16.mxu0 0
        %833 = vmatpush1.bf16.msra.mxu0 0
        %834 = vmatprep.subr.bf16.mxu0 0
        %835 = vmatpush1.bf16.msra.mxu0 0
        %836 = vmatprep.subr.bf16.mxu0 0
        %837 = vmatpush1.bf16.msra.mxu0 0
        %838 = vmatprep.subr.bf16.mxu0 0
        %839 = vmatpush1.bf16.msra.mxu0 0
        %840 = vmatprep.subr.bf16.mxu0 0
        %841 = vmatpush1.bf16.msra.mxu0 0
        %842 = vmatprep.subr.bf16.mxu0 0
        %843 = vmatpush1.bf16.msra.mxu0 0
        %844 = vmatprep.mubr.bf16.mxu0 0
        %845 = vmatmul.mubr.bf16.gmra.mrb[0].mxu0 %v756
        %v846 = vpop.f32.mrb[0].mxu0
        %v847 = vadd.f32 %v710, %v846
        %v848 = vpop.f32.mrb[0].mxu0
        %v849 = vpop.f32.mrb[0].mxu0
        %v850 = vadd.f32 %v713, %v849
        %v851 = vpop.f32.mrb[0].mxu0
        %852 = vmatprep.mubr.bf16.mxu0 0
        %853 = vmatmul.mubr.bf16.gmra.mrb[0].mxu0 %v757
        %v854 = vpop.f32.mrb[0].mxu0
        %v855 = vadd.f32 %v718, %v854
        %v856 = vpop.f32.mrb[0].mxu0
        %v857 = vpop.f32.mrb[0].mxu0
        %v858 = vadd.f32 %v721, %v857
        %v859 = vpop.f32.mrb[0].mxu0
        %860 = vmatprep.mubr.bf16.mxu0 0
        %861 = vmatmul.mubr.bf16.gmra.mrb[0].mxu0 %v758
        %v862 = vpop.f32.mrb[0].mxu0
        %v863 = vadd.f32 %v726, %v862
        %v864 = vpop.f32.mrb[0].mxu0
        %v865 = vpop.f32.mrb[0].mxu0
        %v866 = vadd.f32 %v729, %v865
        %v867 = vpop.f32.mrb[0].mxu0
        %868 = vmatprep.mubr.bf16.mxu0 0
        %869 = vmatmul.mubr.bf16.gmra.mrb[0].mxu0 %v759
        %v870 = vpop.f32.mrb[0].mxu0
        %v871 = vadd.f32 %v734, %v870
        %v872 = vpop.f32.mrb[0].mxu0
        %v873 = vpop.f32.mrb[0].mxu0
        %v874 = vadd.f32 %v737, %v873
        %v875 = vpop.f32.mrb[0].mxu0
        %876 = vdwg.mxu0
        %v877 = vld [vmem:[#allocation2] sm:$0xe]
        %v878 = vld [vmem:[#allocation2 + $0x8] sm:$0xe]
        %v879 = vld [vmem:[#allocation2 + $0x10] sm:$0xe]
        %v880 = vld [vmem:[#allocation2 + $0x18] sm:$0xe]
        %v881 = vld [vmem:[#allocation2 + $0x20] sm:$0xe]
        %v882 = vld [vmem:[#allocation2 + $0x28] sm:$0xe]
        %v883 = vld [vmem:[#allocation2 + $0x30] sm:$0xe]
        %v884 = vld [vmem:[#allocation2 + $0x38] sm:$0xe]
        %vm901 = vcmask 1042432
        %vm902 = vcmask 1046532
        %vm903 = vmor %vm901, %vm902
        %v904 = vrot.slane %v877, 5
        %v905 = vrot.slane %v904, 4
        %v906 = vrot.slane %v471, 5
        %v907 = vsel %vm903, %v905, %v906
        %v908 = vrot.slane %v878, 5
        %v909 = vrot.slane %v908, 4
        %v910 = vrot.slane %v472, 5
        %v911 = vsel %vm903, %v909, %v910
        %v912 = vrot.slane %v879, 5
        %v913 = vrot.slane %v912, 4
        %v914 = vrot.slane %v473, 5
        %v915 = vsel %vm903, %v913, %v914
        %v916 = vrot.slane %v880, 5
        %v917 = vrot.slane %v916, 4
        %v918 = vrot.slane %v474, 5
        %v919 = vsel %vm903, %v917, %v918
        %v920 = vrot.slane %v881, 5
        %v921 = vrot.slane %v920, 4
        %v922 = vrot.slane %v475, 5
        %v923 = vsel %vm903, %v921, %v922
        %v924 = vrot.slane %v882, 5
        %v925 = vrot.slane %v924, 4
        %v926 = vrot.slane %v476, 5
        %v927 = vsel %vm903, %v925, %v926
        %v928 = vrot.slane %v883, 5
        %v929 = vrot.slane %v928, 4
        %v930 = vrot.slane %v477, 5
        %v931 = vsel %vm903, %v929, %v930
        %v932 = vrot.slane %v884, 5
        %v933 = vrot.slane %v932, 4
        %v934 = vrot.slane %v478, 5
        %v935 = vsel %vm903, %v933, %v934
        %s936 = scalar_lea.vmem [#allocation3], 128
        %v937 = vld [vmem:[%s936] sm:$0xf]
        %v938 = vld [vmem:[%s936 + $0x4] sm:$0xf]
        %v939 = vld [vmem:[%s936 + $0x8] sm:$0xf]
        %v940 = vld [vmem:[%s936 + $0xc] sm:$0xf]
        %v941 = vld [vmem:[%s936 + $0x10] sm:$0xf]
        %v942 = vld [vmem:[%s936 + $0x14] sm:$0xf]
        %v943 = vld [vmem:[%s936 + $0x18] sm:$0xf]
        %v944 = vld [vmem:[%s936 + $0x1c] sm:$0xf]
        %v945 = vld [vmem:[%s936 + $0x20] sm:$0xf]
        %v946 = vld [vmem:[%s936 + $0x24] sm:$0xf]
        %v947 = vld [vmem:[%s936 + $0x28] sm:$0xf]
        %v948 = vld [vmem:[%s936 + $0x2c] sm:$0xf]
        %v949 = vld [vmem:[%s936 + $0x30] sm:$0xf]
        %v950 = vld [vmem:[%s936 + $0x34] sm:$0xf]
        %v951 = vld [vmem:[%s936 + $0x38] sm:$0xf]
        %v952 = vld [vmem:[%s936 + $0x3c] sm:$0xf]
        %v953 = vunpack.c.l.b16 %v907
        %v954 = vunpack.c.l.b16 %v911
        %v955 = vunpack.c.l.b16 %v915
        %v956 = vunpack.c.l.b16 %v919
        %v957 = vunpack.c.l.b16 %v923
        %v958 = vunpack.c.l.b16 %v927
        %v959 = vunpack.c.l.b16 %v931
        %v960 = vunpack.c.l.b16 %v935
        %v961 = vpack.c.b16 %v954, %v953
        %v962 = vpack.c.b16 %v956, %v955
        %v963 = vpack.c.b16 %v958, %v957
        %v964 = vpack.c.b16 %v960, %v959
        %v985 = vunpack.c.l.b16 %v937
        %v986 = vunpack.c.l.b16 %v938
        %v987 = vunpack.c.l.b16 %v939
        %v988 = vunpack.c.l.b16 %v940
        %v989 = vunpack.c.l.b16 %v941
        %v990 = vunpack.c.l.b16 %v942
        %v991 = vunpack.c.l.b16 %v943
        %v992 = vunpack.c.l.b16 %v944
        %v993 = vunpack.c.l.b16 %v945
        %v994 = vunpack.c.l.b16 %v946
        %v995 = vunpack.c.l.b16 %v947
        %v996 = vunpack.c.l.b16 %v948
        %v997 = vunpack.c.l.b16 %v949
        %v998 = vunpack.c.l.b16 %v950
        %v999 = vunpack.c.l.b16 %v951
        %v1000 = vunpack.c.l.b16 %v952
        %v1001 = vpack.c.b16 %v986, %v985
        %v1002 = vpack.c.b16 %v988, %v987
        %v1003 = vpack.c.b16 %v990, %v989
        %v1004 = vpack.c.b16 %v992, %v991
        %v1005 = vpack.c.b16 %v994, %v993
        %v1006 = vpack.c.b16 %v996, %v995
        %v1007 = vpack.c.b16 %v998, %v997
        %v1008 = vpack.c.b16 %v1000, %v999
        %1017 = vmatprep.subr.bf16.mxu0 0
        %1018 = vmatpush1.bf16.msra.mxu0 %v1001
        %1019 = vmatprep.subr.bf16.mxu0 0
        %1020 = vmatpush1.bf16.msra.mxu0 %v1002
        %1021 = vmatprep.subr.bf16.mxu0 0
        %1022 = vmatpush1.bf16.msra.mxu0 %v1003
        %1023 = vmatprep.subr.bf16.mxu0 0
        %1024 = vmatpush1.bf16.msra.mxu0 %v1004
        %1025 = vmatprep.subr.bf16.mxu0 0
        %1026 = vmatpush1.bf16.msra.mxu0 %v1005
        %1027 = vmatprep.subr.bf16.mxu0 0
        %1028 = vmatpush1.bf16.msra.mxu0 %v1006
        %1029 = vmatprep.subr.bf16.mxu0 0
        %1030 = vmatpush1.bf16.msra.mxu0 %v1007
        %1031 = vmatprep.subr.bf16.mxu0 0
        %1032 = vmatpush1.bf16.msra.mxu0 %v1008
        %1033 = vmatprep.subr.bf16.mxu0 0
        %1034 = vmatpush1.bf16.msra.mxu0 0
        %1035 = vmatprep.subr.bf16.mxu0 0
        %1036 = vmatpush1.bf16.msra.mxu0 0
        %1037 = vmatprep.subr.bf16.mxu0 0
        %1038 = vmatpush1.bf16.msra.mxu0 0
        %1039 = vmatprep.subr.bf16.mxu0 0
        %1040 = vmatpush1.bf16.msra.mxu0 0
        %1041 = vmatprep.subr.bf16.mxu0 0
        %1042 = vmatpush1.bf16.msra.mxu0 0
        %1043 = vmatprep.subr.bf16.mxu0 0
        %1044 = vmatpush1.bf16.msra.mxu0 0
        %1045 = vmatprep.subr.bf16.mxu0 0
        %1046 = vmatpush1.bf16.msra.mxu0 0
        %1047 = vmatprep.subr.bf16.mxu0 0
        %1048 = vmatpush1.bf16.msra.mxu0 0
        %1049 = vmatprep.mubr.bf16.mxu0 0
        %1050 = vmatmul.mubr.bf16.gmra.mrb[0].mxu0 %v961
        %v1051 = vpop.f32.mrb[0].mxu0
        %v1052 = vadd.f32 0.0, %v1051
        %v1053 = vpop.f32.mrb[0].mxu0
        %v1054 = vpop.f32.mrb[0].mxu0
        %v1055 = vadd.f32 0.0, %v1054
        %v1056 = vpop.f32.mrb[0].mxu0
        %1057 = vmatprep.mubr.bf16.mxu0 0
        %1058 = vmatmul.mubr.bf16.gmra.mrb[0].mxu0 %v962
        %v1059 = vpop.f32.mrb[0].mxu0
        %v1060 = vadd.f32 0.0, %v1059
        %v1061 = vpop.f32.mrb[0].mxu0
        %v1062 = vpop.f32.mrb[0].mxu0
        %v1063 = vadd.f32 0.0, %v1062
        %v1064 = vpop.f32.mrb[0].mxu0
        %1065 = vmatprep.mubr.bf16.mxu0 0
        %1066 = vmatmul.mubr.bf16.gmra.mrb[0].mxu0 %v963
        %v1067 = vpop.f32.mrb[0].mxu0
        %v1068 = vadd.f32 0.0, %v1067
        %v1069 = vpop.f32.mrb[0].mxu0
        %v1070 = vpop.f32.mrb[0].mxu0
        %v1071 = vadd.f32 0.0, %v1070
        %v1072 = vpop.f32.mrb[0].mxu0
        %1073 = vmatprep.mubr.bf16.mxu0 0
        %1074 = vmatmul.mubr.bf16.gmra.mrb[0].mxu0 %v964
        %v1075 = vpop.f32.mrb[0].mxu0
        %v1076 = vadd.f32 0.0, %v1075
        %v1077 = vpop.f32.mrb[0].mxu0
        %v1078 = vpop.f32.mrb[0].mxu0
        %v1079 = vadd.f32 0.0, %v1078
        %v1080 = vpop.f32.mrb[0].mxu0
        %1081 = vdwg.mxu0
        %v1082 = vadd.f32 %v847, %v1052
        %v1083 = vadd.f32 %v850, %v1055
        %v1084 = vadd.f32 %v855, %v1060
        %v1085 = vadd.f32 %v858, %v1063
        %v1086 = vadd.f32 %v863, %v1068
        %v1087 = vadd.f32 %v866, %v1071
        %v1088 = vadd.f32 %v871, %v1076
        %v1089 = vadd.f32 %v874, %v1079
        %s1090 = scalar_lea.vmem [#allocation2], 8
        %v1091 = vld [vmem:[%s1090] sm:$0xf]
        %v1092 = vld [vmem:[%s1090 + $0x8] sm:$0xf]
        %v1093 = vld [vmem:[%s1090 + $0x10] sm:$0xf]
        %v1094 = vld [vmem:[%s1090 + $0x18] sm:$0xf]
        %v1095 = vld [vmem:[%s1090 + $0x20] sm:$0xf]
        %v1096 = vld [vmem:[%s1090 + $0x28] sm:$0xf]
        %v1097 = vld [vmem:[%s1090 + $0x30] sm:$0xf]
        %v1098 = vld [vmem:[%s1090 + $0x38] sm:$0xf]
        %s1099 = scalar_lea.vmem [#allocation3], 192
        %v1100 = vld [vmem:[%s1099] sm:$0xf]
        %v1101 = vld [vmem:[%s1099 + $0x4] sm:$0xf]
        %v1102 = vld [vmem:[%s1099 + $0x8] sm:$0xf]
        %v1103 = vld [vmem:[%s1099 + $0xc] sm:$0xf]
        %v1104 = vld [vmem:[%s1099 + $0x10] sm:$0xf]
        %v1105 = vld [vmem:[%s1099 + $0x14] sm:$0xf]
        %v1106 = vld [vmem:[%s1099 + $0x18] sm:$0xf]
        %v1107 = vld [vmem:[%s1099 + $0x1c] sm:$0xf]
        %v1108 = vld [vmem:[%s1099 + $0x20] sm:$0xf]
        %v1109 = vld [vmem:[%s1099 + $0x24] sm:$0xf]
        %v1110 = vld [vmem:[%s1099 + $0x28] sm:$0xf]
        %v1111 = vld [vmem:[%s1099 + $0x2c] sm:$0xf]
        %v1112 = vld [vmem:[%s1099 + $0x30] sm:$0xf]
        %v1113 = vld [vmem:[%s1099 + $0x34] sm:$0xf]
        %v1114 = vld [vmem:[%s1099 + $0x38] sm:$0xf]
        %v1115 = vld [vmem:[%s1099 + $0x3c] sm:$0xf]
        %v1124 = vunpack.c.l.b16 %v1091
        %v1125 = vunpack.c.l.b16 %v1092
        %v1126 = vunpack.c.l.b16 %v1093
        %v1127 = vunpack.c.l.b16 %v1094
        %v1128 = vunpack.c.l.b16 %v1095
        %v1129 = vunpack.c.l.b16 %v1096
        %v1130 = vunpack.c.l.b16 %v1097
        %v1131 = vunpack.c.l.b16 %v1098
        %v1132 = vpack.c.b16 %v1125, %v1124
        %v1133 = vpack.c.b16 %v1127, %v1126
        %v1134 = vpack.c.b16 %v1129, %v1128
        %v1135 = vpack.c.b16 %v1131, %v1130
        %v1156 = vunpack.c.l.b16 %v1100
        %v1157 = vunpack.c.l.b16 %v1101
        %v1158 = vunpack.c.l.b16 %v1102
        %v1159 = vunpack.c.l.b16 %v1103
        %v1160 = vunpack.c.l.b16 %v1104
        %v1161 = vunpack.c.l.b16 %v1105
        %v1162 = vunpack.c.l.b16 %v1106
        %v1163 = vunpack.c.l.b16 %v1107
        %v1164 = vunpack.c.l.b16 %v1108
        %v1165 = vunpack.c.l.b16 %v1109
        %v1166 = vunpack.c.l.b16 %v1110
        %v1167 = vunpack.c.l.b16 %v1111
        %v1168 = vunpack.c.l.b16 %v1112
        %v1169 = vunpack.c.l.b16 %v1113
        %v1170 = vunpack.c.l.b16 %v1114
        %v1171 = vunpack.c.l.b16 %v1115
        %v1172 = vpack.c.b16 %v1157, %v1156
        %v1173 = vpack.c.b16 %v1159, %v1158
        %v1174 = vpack.c.b16 %v1161, %v1160
        %v1175 = vpack.c.b16 %v1163, %v1162
        %v1176 = vpack.c.b16 %v1165, %v1164
        %v1177 = vpack.c.b16 %v1167, %v1166
        %v1178 = vpack.c.b16 %v1169, %v1168
        %v1179 = vpack.c.b16 %v1171, %v1170
        %1188 = vmatprep.subr.bf16.mxu0 0
        %1189 = vmatpush1.bf16.msra.mxu0 %v1172
        %1190 = vmatprep.subr.bf16.mxu0 0
        %1191 = vmatpush1.bf16.msra.mxu0 %v1173
        %1192 = vmatprep.subr.bf16.mxu0 0
        %1193 = vmatpush1.bf16.msra.mxu0 %v1174
        %1194 = vmatprep.subr.bf16.mxu0 0
        %1195 = vmatpush1.bf16.msra.mxu0 %v1175
        %1196 = vmatprep.subr.bf16.mxu0 0
        %1197 = vmatpush1.bf16.msra.mxu0 %v1176
        %1198 = vmatprep.subr.bf16.mxu0 0
        %1199 = vmatpush1.bf16.msra.mxu0 %v1177
        %1200 = vmatprep.subr.bf16.mxu0 0
        %1201 = vmatpush1.bf16.msra.mxu0 %v1178
        %1202 = vmatprep.subr.bf16.mxu0 0
        %1203 = vmatpush1.bf16.msra.mxu0 %v1179
        %1204 = vmatprep.subr.bf16.mxu0 0
        %1205 = vmatpush1.bf16.msra.mxu0 0
        %1206 = vmatprep.subr.bf16.mxu0 0
        %1207 = vmatpush1.bf16.msra.mxu0 0
        %1208 = vmatprep.subr.bf16.mxu0 0
        %1209 = vmatpush1.bf16.msra.mxu0 0
        %1210 = vmatprep.subr.bf16.mxu0 0
        %1211 = vmatpush1.bf16.msra.mxu0 0
        %1212 = vmatprep.subr.bf16.mxu0 0
        %1213 = vmatpush1.bf16.msra.mxu0 0
        %1214 = vmatprep.subr.bf16.mxu0 0
        %1215 = vmatpush1.bf16.msra.mxu0 0
        %1216 = vmatprep.subr.bf16.mxu0 0
        %1217 = vmatpush1.bf16.msra.mxu0 0
        %1218 = vmatprep.subr.bf16.mxu0 0
        %1219 = vmatpush1.bf16.msra.mxu0 0
        %1220 = vmatprep.mubr.bf16.mxu0 0
        %1221 = vmatmul.mubr.bf16.gmra.mrb[0].mxu0 %v1132
        %v1222 = vpop.f32.mrb[0].mxu0
        %v1223 = vadd.f32 0.0, %v1222
        %v1224 = vpop.f32.mrb[0].mxu0
        %v1225 = vpop.f32.mrb[0].mxu0
        %v1226 = vadd.f32 0.0, %v1225
        %v1227 = vpop.f32.mrb[0].mxu0
        %1228 = vmatprep.mubr.bf16.mxu0 0
        %1229 = vmatmul.mubr.bf16.gmra.mrb[0].mxu0 %v1133
        %v1230 = vpop.f32.mrb[0].mxu0
        %v1231 = vadd.f32 0.0, %v1230
        %v1232 = vpop.f32.mrb[0].mxu0
        %v1233 = vpop.f32.mrb[0].mxu0
        %v1234 = vadd.f32 0.0, %v1233
        %v1235 = vpop.f32.mrb[0].mxu0
        %1236 = vmatprep.mubr.bf16.mxu0 0
        %1237 = vmatmul.mubr.bf16.gmra.mrb[0].mxu0 %v1134
        %v1238 = vpop.f32.mrb[0].mxu0
        %v1239 = vadd.f32 0.0, %v1238
        %v1240 = vpop.f32.mrb[0].mxu0
        %v1241 = vpop.f32.mrb[0].mxu0
        %v1242 = vadd.f32 0.0, %v1241
        %v1243 = vpop.f32.mrb[0].mxu0
        %1244 = vmatprep.mubr.bf16.mxu0 0
        %1245 = vmatmul.mubr.bf16.gmra.mrb[0].mxu0 %v1135
        %v1246 = vpop.f32.mrb[0].mxu0
        %v1247 = vadd.f32 0.0, %v1246
        %v1248 = vpop.f32.mrb[0].mxu0
        %v1249 = vpop.f32.mrb[0].mxu0
        %v1250 = vadd.f32 0.0, %v1249
        %v1251 = vpop.f32.mrb[0].mxu0
        %1252 = vdwg.mxu0
        %v1253 = vadd.f32 %v1082, %v1223
        %v1254 = vadd.f32 %v1083, %v1226
        %v1255 = vadd.f32 %v1084, %v1231
        %v1256 = vadd.f32 %v1085, %v1234
        %v1257 = vadd.f32 %v1086, %v1239
        %v1258 = vadd.f32 %v1087, %v1242
        %v1259 = vadd.f32 %v1088, %v1247
        %v1260 = vadd.f32 %v1089, %v1250
        %v1261 = vld [vmem:[%s1090] sm:$0xf]
        %v1262 = vld [vmem:[%s1090 + $0x4] sm:$0x1]
        %v1263 = vld [vmem:[%s1090 + $0x8] sm:$0xf]
        %v1264 = vld [vmem:[%s1090 + $0xc] sm:$0x1]
        %v1265 = vld [vmem:[%s1090 + $0x10] sm:$0xf]
        %v1266 = vld [vmem:[%s1090 + $0x14] sm:$0x1]
        %v1267 = vld [vmem:[%s1090 + $0x18] sm:$0xf]
        %v1268 = vld [vmem:[%s1090 + $0x1c] sm:$0x1]
        %v1269 = vld [vmem:[%s1090 + $0x20] sm:$0xf]
        %v1270 = vld [vmem:[%s1090 + $0x24] sm:$0x1]
        %v1271 = vld [vmem:[%s1090 + $0x28] sm:$0xf]
        %v1272 = vld [vmem:[%s1090 + $0x2c] sm:$0x1]
        %v1273 = vld [vmem:[%s1090 + $0x30] sm:$0xf]
        %v1274 = vld [vmem:[%s1090 + $0x34] sm:$0x1]
        %v1275 = vld [vmem:[%s1090 + $0x38] sm:$0xf]
        %v1276 = vld [vmem:[%s1090 + $0x3c] sm:$0x1]
        %v1278 = vshrl.u32 %v1261, 16
        %v1280 = vrot.slane %v1278, 4
        %v1281 = vshll.u32 %v1261, 16
        %v1283 = vrot.slane %v1281, 5
        %v1284 = vor.u32 %v1280, %v1283
        %v1285 = vrot.slane %v1284, 4
        %v1287 = vshll.u32 %v1262, 16
        %v1289 = vrot.slane %v1287, 5
        %v1290 = vsel %vm481, %v1285, %v1289
        %v1292 = vshrl.u32 %v1263, 16
        %v1294 = vrot.slane %v1292, 4
        %v1295 = vshll.u32 %v1263, 16
        %v1297 = vrot.slane %v1295, 5
        %v1298 = vor.u32 %v1294, %v1297
        %v1299 = vrot.slane %v1298, 4
        %v1301 = vshll.u32 %v1264, 16
        %v1303 = vrot.slane %v1301, 5
        %v1304 = vsel %vm481, %v1299, %v1303
        %v1306 = vshrl.u32 %v1265, 16
        %v1308 = vrot.slane %v1306, 4
        %v1309 = vshll.u32 %v1265, 16
        %v1311 = vrot.slane %v1309, 5
        %v1312 = vor.u32 %v1308, %v1311
        %v1313 = vrot.slane %v1312, 4
        %v1315 = vshll.u32 %v1266, 16
        %v1317 = vrot.slane %v1315, 5
        %v1318 = vsel %vm481, %v1313, %v1317
        %v1320 = vshrl.u32 %v1267, 16
        %v1322 = vrot.slane %v1320, 4
        %v1323 = vshll.u32 %v1267, 16
        %v1325 = vrot.slane %v1323, 5
        %v1326 = vor.u32 %v1322, %v1325
        %v1327 = vrot.slane %v1326, 4
        %v1329 = vshll.u32 %v1268, 16
        %v1331 = vrot.slane %v1329, 5
        %v1332 = vsel %vm481, %v1327, %v1331
        %v1334 = vshrl.u32 %v1269, 16
        %v1336 = vrot.slane %v1334, 4
        %v1337 = vshll.u32 %v1269, 16
        %v1339 = vrot.slane %v1337, 5
        %v1340 = vor.u32 %v1336, %v1339
        %v1341 = vrot.slane %v1340, 4
        %v1343 = vshll.u32 %v1270, 16
        %v1345 = vrot.slane %v1343, 5
        %v1346 = vsel %vm481, %v1341, %v1345
        %v1348 = vshrl.u32 %v1271, 16
        %v1350 = vrot.slane %v1348, 4
        %v1351 = vshll.u32 %v1271, 16
        %v1353 = vrot.slane %v1351, 5
        %v1354 = vor.u32 %v1350, %v1353
        %v1355 = vrot.slane %v1354, 4
        %v1357 = vshll.u32 %v1272, 16
        %v1359 = vrot.slane %v1357, 5
        %v1360 = vsel %vm481, %v1355, %v1359
        %v1362 = vshrl.u32 %v1273, 16
        %v1364 = vrot.slane %v1362, 4
        %v1365 = vshll.u32 %v1273, 16
        %v1367 = vrot.slane %v1365, 5
        %v1368 = vor.u32 %v1364, %v1367
        %v1369 = vrot.slane %v1368, 4
        %v1371 = vshll.u32 %v1274, 16
        %v1373 = vrot.slane %v1371, 5
        %v1374 = vsel %vm481, %v1369, %v1373
        %v1376 = vshrl.u32 %v1275, 16
        %v1378 = vrot.slane %v1376, 4
        %v1379 = vshll.u32 %v1275, 16
        %v1381 = vrot.slane %v1379, 5
        %v1382 = vor.u32 %v1378, %v1381
        %v1383 = vrot.slane %v1382, 4
        %v1385 = vshll.u32 %v1276, 16
        %v1387 = vrot.slane %v1385, 5
        %v1388 = vsel %vm481, %v1383, %v1387
        %s1389 = scalar_lea.vmem [#allocation3], 256
        %v1390 = vld [vmem:[%s1389] sm:$0xf]
        %v1391 = vld [vmem:[%s1389 + $0x4] sm:$0xf]
        %v1392 = vld [vmem:[%s1389 + $0x8] sm:$0xf]
        %v1393 = vld [vmem:[%s1389 + $0xc] sm:$0xf]
        %v1394 = vld [vmem:[%s1389 + $0x10] sm:$0xf]
        %v1395 = vld [vmem:[%s1389 + $0x14] sm:$0xf]
        %v1396 = vld [vmem:[%s1389 + $0x18] sm:$0xf]
        %v1397 = vld [vmem:[%s1389 + $0x1c] sm:$0xf]
        %v1398 = vld [vmem:[%s1389 + $0x20] sm:$0xf]
        %v1399 = vld [vmem:[%s1389 + $0x24] sm:$0xf]
        %v1400 = vld [vmem:[%s1389 + $0x28] sm:$0xf]
        %v1401 = vld [vmem:[%s1389 + $0x2c] sm:$0xf]
        %v1402 = vld [vmem:[%s1389 + $0x30] sm:$0xf]
        %v1403 = vld [vmem:[%s1389 + $0x34] sm:$0xf]
        %v1404 = vld [vmem:[%s1389 + $0x38] sm:$0xf]
        %v1405 = vld [vmem:[%s1389 + $0x3c] sm:$0xf]
        %v1406 = vunpack.c.l.b16 %v1290
        %v1407 = vunpack.c.l.b16 %v1304
        %v1408 = vunpack.c.l.b16 %v1318
        %v1409 = vunpack.c.l.b16 %v1332
        %v1410 = vunpack.c.l.b16 %v1346
        %v1411 = vunpack.c.l.b16 %v1360
        %v1412 = vunpack.c.l.b16 %v1374
        %v1413 = vunpack.c.l.b16 %v1388
        %v1414 = vpack.c.b16 %v1407, %v1406
        %v1415 = vpack.c.b16 %v1409, %v1408
        %v1416 = vpack.c.b16 %v1411, %v1410
        %v1417 = vpack.c.b16 %v1413, %v1412
        %v1438 = vunpack.c.l.b16 %v1390
        %v1439 = vunpack.c.l.b16 %v1391
        %v1440 = vunpack.c.l.b16 %v1392
        %v1441 = vunpack.c.l.b16 %v1393
        %v1442 = vunpack.c.l.b16 %v1394
        %v1443 = vunpack.c.l.b16 %v1395
        %v1444 = vunpack.c.l.b16 %v1396
        %v1445 = vunpack.c.l.b16 %v1397
        %v1446 = vunpack.c.l.b16 %v1398
        %v1447 = vunpack.c.l.b16 %v1399
        %v1448 = vunpack.c.l.b16 %v1400
        %v1449 = vunpack.c.l.b16 %v1401
        %v1450 = vunpack.c.l.b16 %v1402
        %v1451 = vunpack.c.l.b16 %v1403
        %v1452 = vunpack.c.l.b16 %v1404
        %v1453 = vunpack.c.l.b16 %v1405
        %v1454 = vpack.c.b16 %v1439, %v1438
        %v1455 = vpack.c.b16 %v1441, %v1440
        %v1456 = vpack.c.b16 %v1443, %v1442
        %v1457 = vpack.c.b16 %v1445, %v1444
        %v1458 = vpack.c.b16 %v1447, %v1446
        %v1459 = vpack.c.b16 %v1449, %v1448
        %v1460 = vpack.c.b16 %v1451, %v1450
        %v1461 = vpack.c.b16 %v1453, %v1452
        %1470 = vmatprep.subr.bf16.mxu0 0
        %1471 = vmatpush1.bf16.msra.mxu0 %v1454
        %1472 = vmatprep.subr.bf16.mxu0 0
        %1473 = vmatpush1.bf16.msra.mxu0 %v1455
        %1474 = vmatprep.subr.bf16.mxu0 0
        %1475 = vmatpush1.bf16.msra.mxu0 %v1456
        %1476 = vmatprep.subr.bf16.mxu0 0
        %1477 = vmatpush1.bf16.msra.mxu0 %v1457
        %1478 = vmatprep.subr.bf16.mxu0 0
        %1479 = vmatpush1.bf16.msra.mxu0 %v1458
        %1480 = vmatprep.subr.bf16.mxu0 0
        %1481 = vmatpush1.bf16.msra.mxu0 %v1459
        %1482 = vmatprep.subr.bf16.mxu0 0
        %1483 = vmatpush1.bf16.msra.mxu0 %v1460
        %1484 = vmatprep.subr.bf16.mxu0 0
        %1485 = vmatpush1.bf16.msra.mxu0 %v1461
        %1486 = vmatprep.subr.bf16.mxu0 0
        %1487 = vmatpush1.bf16.msra.mxu0 0
        %1488 = vmatprep.subr.bf16.mxu0 0
        %1489 = vmatpush1.bf16.msra.mxu0 0
        %1490 = vmatprep.subr.bf16.mxu0 0
        %1491 = vmatpush1.bf16.msra.mxu0 0
        %1492 = vmatprep.subr.bf16.mxu0 0
        %1493 = vmatpush1.bf16.msra.mxu0 0
        %1494 = vmatprep.subr.bf16.mxu0 0
        %1495 = vmatpush1.bf16.msra.mxu0 0
        %1496 = vmatprep.subr.bf16.mxu0 0
        %1497 = vmatpush1.bf16.msra.mxu0 0
        %1498 = vmatprep.subr.bf16.mxu0 0
        %1499 = vmatpush1.bf16.msra.mxu0 0
        %1500 = vmatprep.subr.bf16.mxu0 0
        %1501 = vmatpush1.bf16.msra.mxu0 0
        %1502 = vmatprep.mubr.bf16.mxu0 0
        %1503 = vmatmul.mubr.bf16.gmra.mrb[0].mxu0 %v1414
        %v1504 = vpop.f32.mrb[0].mxu0
        %v1505 = vadd.f32 0.0, %v1504
        %v1506 = vpop.f32.mrb[0].mxu0
        %v1507 = vpop.f32.mrb[0].mxu0
        %v1508 = vadd.f32 0.0, %v1507
        %v1509 = vpop.f32.mrb[0].mxu0
        %1510 = vmatprep.mubr.bf16.mxu0 0
        %1511 = vmatmul.mubr.bf16.gmra.mrb[0].mxu0 %v1415
        %v1512 = vpop.f32.mrb[0].mxu0
        %v1513 = vadd.f32 0.0, %v1512
        %v1514 = vpop.f32.mrb[0].mxu0
        %v1515 = vpop.f32.mrb[0].mxu0
        %v1516 = vadd.f32 0.0, %v1515
        %v1517 = vpop.f32.mrb[0].mxu0
        %1518 = vmatprep.mubr.bf16.mxu0 0
        %1519 = vmatmul.mubr.bf16.gmra.mrb[0].mxu0 %v1416
        %v1520 = vpop.f32.mrb[0].mxu0
        %v1521 = vadd.f32 0.0, %v1520
        %v1522 = vpop.f32.mrb[0].mxu0
        %v1523 = vpop.f32.mrb[0].mxu0
        %v1524 = vadd.f32 0.0, %v1523
        %v1525 = vpop.f32.mrb[0].mxu0
        %1526 = vmatprep.mubr.bf16.mxu0 0
        %1527 = vmatmul.mubr.bf16.gmra.mrb[0].mxu0 %v1417
        %v1528 = vpop.f32.mrb[0].mxu0
        %v1529 = vadd.f32 0.0, %v1528
        %v1530 = vpop.f32.mrb[0].mxu0
        %v1531 = vpop.f32.mrb[0].mxu0
        %v1532 = vadd.f32 0.0, %v1531
        %v1533 = vpop.f32.mrb[0].mxu0
        %1534 = vdwg.mxu0
        %v1535 = vadd.f32 %v1253, %v1505
        %v1536 = vadd.f32 %v1254, %v1508
        %v1537 = vadd.f32 %v1255, %v1513
        %v1538 = vadd.f32 %v1256, %v1516
        %v1539 = vadd.f32 %v1257, %v1521
        %v1540 = vadd.f32 %v1258, %v1524
        %v1541 = vadd.f32 %v1259, %v1529
        %v1542 = vadd.f32 %v1260, %v1532
        %v1543 = vld [vmem:[%s1090] sm:$0xe]
        %v1544 = vld [vmem:[%s1090 + $0x8] sm:$0xe]
        %v1545 = vld [vmem:[%s1090 + $0x10] sm:$0xe]
        %v1546 = vld [vmem:[%s1090 + $0x18] sm:$0xe]
        %v1547 = vld [vmem:[%s1090 + $0x20] sm:$0xe]
        %v1548 = vld [vmem:[%s1090 + $0x28] sm:$0xe]
        %v1549 = vld [vmem:[%s1090 + $0x30] sm:$0xe]
        %v1550 = vld [vmem:[%s1090 + $0x38] sm:$0xe]
        %v1567 = vrot.slane %v1543, 5
        %v1568 = vrot.slane %v1567, 4
        %v1569 = vrot.slane %v1262, 5
        %v1570 = vsel %vm903, %v1568, %v1569
        %v1571 = vrot.slane %v1544, 5
        %v1572 = vrot.slane %v1571, 4
        %v1573 = vrot.slane %v1264, 5
        %v1574 = vsel %vm903, %v1572, %v1573
        %v1575 = vrot.slane %v1545, 5
        %v1576 = vrot.slane %v1575, 4
        %v1577 = vrot.slane %v1266, 5
        %v1578 = vsel %vm903, %v1576, %v1577
        %v1579 = vrot.slane %v1546, 5
        %v1580 = vrot.slane %v1579, 4
        %v1581 = vrot.slane %v1268, 5
        %v1582 = vsel %vm903, %v1580, %v1581
        %v1583 = vrot.slane %v1547, 5
        %v1584 = vrot.slane %v1583, 4
        %v1585 = vrot.slane %v1270, 5
        %v1586 = vsel %vm903, %v1584, %v1585
        %v1587 = vrot.slane %v1548, 5
        %v1588 = vrot.slane %v1587, 4
        %v1589 = vrot.slane %v1272, 5
        %v1590 = vsel %vm903, %v1588, %v1589
        %v1591 = vrot.slane %v1549, 5
        %v1592 = vrot.slane %v1591, 4
        %v1593 = vrot.slane %v1274, 5
        %v1594 = vsel %vm903, %v1592, %v1593
        %v1595 = vrot.slane %v1550, 5
        %v1596 = vrot.slane %v1595, 4
        %v1597 = vrot.slane %v1276, 5
        %v1598 = vsel %vm903, %v1596, %v1597
        %s1599 = scalar_lea.vmem [#allocation3], 320
        %v1600 = vld [vmem:[%s1599] sm:$0xf]
        %v1601 = vld [vmem:[%s1599 + $0x4] sm:$0xf]
        %v1602 = vld [vmem:[%s1599 + $0x8] sm:$0xf]
        %v1603 = vld [vmem:[%s1599 + $0xc] sm:$0xf]
        %v1604 = vld [vmem:[%s1599 + $0x10] sm:$0xf]
        %v1605 = vld [vmem:[%s1599 + $0x14] sm:$0xf]
        %v1606 = vld [vmem:[%s1599 + $0x18] sm:$0xf]
        %v1607 = vld [vmem:[%s1599 + $0x1c] sm:$0xf]
        %v1608 = vld [vmem:[%s1599 + $0x20] sm:$0xf]
        %v1609 = vld [vmem:[%s1599 + $0x24] sm:$0xf]
        %v1610 = vld [vmem:[%s1599 + $0x28] sm:$0xf]
        %v1611 = vld [vmem:[%s1599 + $0x2c] sm:$0xf]
        %v1612 = vld [vmem:[%s1599 + $0x30] sm:$0xf]
        %v1613 = vld [vmem:[%s1599 + $0x34] sm:$0xf]
        %v1614 = vld [vmem:[%s1599 + $0x38] sm:$0xf]
        %v1615 = vld [vmem:[%s1599 + $0x3c] sm:$0xf]
        %v1616 = vunpack.c.l.b16 %v1570
        %v1617 = vunpack.c.l.b16 %v1574
        %v1618 = vunpack.c.l.b16 %v1578
        %v1619 = vunpack.c.l.b16 %v1582
        %v1620 = vunpack.c.l.b16 %v1586
        %v1621 = vunpack.c.l.b16 %v1590
        %v1622 = vunpack.c.l.b16 %v1594
        %v1623 = vunpack.c.l.b16 %v1598
        %v1624 = vpack.c.b16 %v1617, %v1616
        %v1625 = vpack.c.b16 %v1619, %v1618
        %v1626 = vpack.c.b16 %v1621, %v1620
        %v1627 = vpack.c.b16 %v1623, %v1622
        %v1648 = vunpack.c.l.b16 %v1600
        %v1649 = vunpack.c.l.b16 %v1601
        %v1650 = vunpack.c.l.b16 %v1602
        %v1651 = vunpack.c.l.b16 %v1603
        %v1652 = vunpack.c.l.b16 %v1604
        %v1653 = vunpack.c.l.b16 %v1605
        %v1654 = vunpack.c.l.b16 %v1606
        %v1655 = vunpack.c.l.b16 %v1607
        %v1656 = vunpack.c.l.b16 %v1608
        %v1657 = vunpack.c.l.b16 %v1609
        %v1658 = vunpack.c.l.b16 %v1610
        %v1659 = vunpack.c.l.b16 %v1611
        %v1660 = vunpack.c.l.b16 %v1612
        %v1661 = vunpack.c.l.b16 %v1613
        %v1662 = vunpack.c.l.b16 %v1614
        %v1663 = vunpack.c.l.b16 %v1615
        %v1664 = vpack.c.b16 %v1649, %v1648
        %v1665 = vpack.c.b16 %v1651, %v1650
        %v1666 = vpack.c.b16 %v1653, %v1652
        %v1667 = vpack.c.b16 %v1655, %v1654
        %v1668 = vpack.c.b16 %v1657, %v1656
        %v1669 = vpack.c.b16 %v1659, %v1658
        %v1670 = vpack.c.b16 %v1661, %v1660
        %v1671 = vpack.c.b16 %v1663, %v1662
        %1680 = vmatprep.subr.bf16.mxu0 0
        %1681 = vmatpush1.bf16.msra.mxu0 %v1664
        %1682 = vmatprep.subr.bf16.mxu0 0
        %1683 = vmatpush1.bf16.msra.mxu0 %v1665
        %1684 = vmatprep.subr.bf16.mxu0 0
        %1685 = vmatpush1.bf16.msra.mxu0 %v1666
        %1686 = vmatprep.subr.bf16.mxu0 0
        %1687 = vmatpush1.bf16.msra.mxu0 %v1667
        %1688 = vmatprep.subr.bf16.mxu0 0
        %1689 = vmatpush1.bf16.msra.mxu0 %v1668
        %1690 = vmatprep.subr.bf16.mxu0 0
        %1691 = vmatpush1.bf16.msra.mxu0 %v1669
        %1692 = vmatprep.subr.bf16.mxu0 0
        %1693 = vmatpush1.bf16.msra.mxu0 %v1670
        %1694 = vmatprep.subr.bf16.mxu0 0
        %1695 = vmatpush1.bf16.msra.mxu0 %v1671
        %1696 = vmatprep.subr.bf16.mxu0 0
        %1697 = vmatpush1.bf16.msra.mxu0 0
        %1698 = vmatprep.subr.bf16.mxu0 0
        %1699 = vmatpush1.bf16.msra.mxu0 0
        %1700 = vmatprep.subr.bf16.mxu0 0
        %1701 = vmatpush1.bf16.msra.mxu0 0
        %1702 = vmatprep.subr.bf16.mxu0 0
        %1703 = vmatpush1.bf16.msra.mxu0 0
        %1704 = vmatprep.subr.bf16.mxu0 0
        %1705 = vmatpush1.bf16.msra.mxu0 0
        %1706 = vmatprep.subr.bf16.mxu0 0
        %1707 = vmatpush1.bf16.msra.mxu0 0
        %1708 = vmatprep.subr.bf16.mxu0 0
        %1709 = vmatpush1.bf16.msra.mxu0 0
        %1710 = vmatprep.subr.bf16.mxu0 0
        %1711 = vmatpush1.bf16.msra.mxu0 0
        %1712 = vmatprep.mubr.bf16.mxu0 0
        %1713 = vmatmul.mubr.bf16.gmra.mrb[0].mxu0 %v1624
        %v1714 = vpop.f32.mrb[0].mxu0
        %v1715 = vadd.f32 0.0, %v1714
        %v1716 = vpop.f32.mrb[0].mxu0
        %v1717 = vpop.f32.mrb[0].mxu0
        %v1718 = vadd.f32 0.0, %v1717
        %v1719 = vpop.f32.mrb[0].mxu0
        %1720 = vmatprep.mubr.bf16.mxu0 0
        %1721 = vmatmul.mubr.bf16.gmra.mrb[0].mxu0 %v1625
        %v1722 = vpop.f32.mrb[0].mxu0
        %v1723 = vadd.f32 0.0, %v1722
        %v1724 = vpop.f32.mrb[0].mxu0
        %v1725 = vpop.f32.mrb[0].mxu0
        %v1726 = vadd.f32 0.0, %v1725
        %v1727 = vpop.f32.mrb[0].mxu0
        %1728 = vmatprep.mubr.bf16.mxu0 0
        %1729 = vmatmul.mubr.bf16.gmra.mrb[0].mxu0 %v1626
        %v1730 = vpop.f32.mrb[0].mxu0
        %v1731 = vadd.f32 0.0, %v1730
        %v1732 = vpop.f32.mrb[0].mxu0
        %v1733 = vpop.f32.mrb[0].mxu0
        %v1734 = vadd.f32 0.0, %v1733
        %v1735 = vpop.f32.mrb[0].mxu0
        %1736 = vmatprep.mubr.bf16.mxu0 0
        %1737 = vmatmul.mubr.bf16.gmra.mrb[0].mxu0 %v1627
        %v1738 = vpop.f32.mrb[0].mxu0
        %v1739 = vadd.f32 0.0, %v1738
        %v1740 = vpop.f32.mrb[0].mxu0
        %v1741 = vpop.f32.mrb[0].mxu0
        %v1742 = vadd.f32 0.0, %v1741
        %v1743 = vpop.f32.mrb[0].mxu0
        %1744 = vdwg.mxu0
        %v1745 = vadd.f32 %v1535, %v1715
        %v1746 = vadd.f32 %v1536, %v1718
        %v1747 = vadd.f32 %v1537, %v1723
        %v1748 = vadd.f32 %v1538, %v1726
        %v1749 = vadd.f32 %v1539, %v1731
        %v1750 = vadd.f32 %v1540, %v1734
        %v1751 = vadd.f32 %v1541, %v1739
        %v1752 = vadd.f32 %v1542, %v1742
        %s1753 = scalar_lea.vmem [#allocation2], 16
        %v1754 = vld [vmem:[%s1753] sm:$0xf]
        %v1755 = vld [vmem:[%s1753 + $0x8] sm:$0xf]
        %v1756 = vld [vmem:[%s1753 + $0x10] sm:$0xf]
        %v1757 = vld [vmem:[%s1753 + $0x18] sm:$0xf]
        %v1758 = vld [vmem:[%s1753 + $0x20] sm:$0xf]
        %v1759 = vld [vmem:[%s1753 + $0x28] sm:$0xf]
        %v1760 = vld [vmem:[%s1753 + $0x30] sm:$0xf]
        %v1761 = vld [vmem:[%s1753 + $0x38] sm:$0xf]
        %s1762 = scalar_lea.vmem [#allocation3], 384
        %v1763 = vld [vmem:[%s1762] sm:$0xf]
        %v1764 = vld [vmem:[%s1762 + $0x4] sm:$0xf]
        %v1765 = vld [vmem:[%s1762 + $0x8] sm:$0xf]
        %v1766 = vld [vmem:[%s1762 + $0xc] sm:$0xf]
        %v1767 = vld [vmem:[%s1762 + $0x10] sm:$0xf]
        %v1768 = vld [vmem:[%s1762 + $0x14] sm:$0xf]
        %v1769 = vld [vmem:[%s1762 + $0x18] sm:$0xf]
        %v1770 = vld [vmem:[%s1762 + $0x1c] sm:$0xf]
        %v1771 = vld [vmem:[%s1762 + $0x20] sm:$0xf]
        %v1772 = vld [vmem:[%s1762 + $0x24] sm:$0xf]
        %v1773 = vld [vmem:[%s1762 + $0x28] sm:$0xf]
        %v1774 = vld [vmem:[%s1762 + $0x2c] sm:$0xf]
        %v1775 = vld [vmem:[%s1762 + $0x30] sm:$0xf]
        %v1776 = vld [vmem:[%s1762 + $0x34] sm:$0xf]
        %v1777 = vld [vmem:[%s1762 + $0x38] sm:$0xf]
        %v1778 = vld [vmem:[%s1762 + $0x3c] sm:$0xf]
        %v1787 = vunpack.c.l.b16 %v1754
        %v1788 = vunpack.c.l.b16 %v1755
        %v1789 = vunpack.c.l.b16 %v1756
        %v1790 = vunpack.c.l.b16 %v1757
        %v1791 = vunpack.c.l.b16 %v1758
        %v1792 = vunpack.c.l.b16 %v1759
        %v1793 = vunpack.c.l.b16 %v1760
        %v1794 = vunpack.c.l.b16 %v1761
        %v1795 = vpack.c.b16 %v1788, %v1787
        %v1796 = vpack.c.b16 %v1790, %v1789
        %v1797 = vpack.c.b16 %v1792, %v1791
        %v1798 = vpack.c.b16 %v1794, %v1793
        %v1819 = vunpack.c.l.b16 %v1763
        %v1820 = vunpack.c.l.b16 %v1764
        %v1821 = vunpack.c.l.b16 %v1765
        %v1822 = vunpack.c.l.b16 %v1766
        %v1823 = vunpack.c.l.b16 %v1767
        %v1824 = vunpack.c.l.b16 %v1768
        %v1825 = vunpack.c.l.b16 %v1769
        %v1826 = vunpack.c.l.b16 %v1770
        %v1827 = vunpack.c.l.b16 %v1771
        %v1828 = vunpack.c.l.b16 %v1772
        %v1829 = vunpack.c.l.b16 %v1773
        %v1830 = vunpack.c.l.b16 %v1774
        %v1831 = vunpack.c.l.b16 %v1775
        %v1832 = vunpack.c.l.b16 %v1776
        %v1833 = vunpack.c.l.b16 %v1777
        %v1834 = vunpack.c.l.b16 %v1778
        %v1835 = vpack.c.b16 %v1820, %v1819
        %v1836 = vpack.c.b16 %v1822, %v1821
        %v1837 = vpack.c.b16 %v1824, %v1823
        %v1838 = vpack.c.b16 %v1826, %v1825
        %v1839 = vpack.c.b16 %v1828, %v1827
        %v1840 = vpack.c.b16 %v1830, %v1829
        %v1841 = vpack.c.b16 %v1832, %v1831
        %v1842 = vpack.c.b16 %v1834, %v1833
        %1851 = vmatprep.subr.bf16.mxu0 0
        %1852 = vmatpush1.bf16.msra.mxu0 %v1835
        %1853 = vmatprep.subr.bf16.mxu0 0
        %1854 = vmatpush1.bf16.msra.mxu0 %v1836
        %1855 = vmatprep.subr.bf16.mxu0 0
        %1856 = vmatpush1.bf16.msra.mxu0 %v1837
        %1857 = vmatprep.subr.bf16.mxu0 0
        %1858 = vmatpush1.bf16.msra.mxu0 %v1838
        %1859 = vmatprep.subr.bf16.mxu0 0
        %1860 = vmatpush1.bf16.msra.mxu0 %v1839
        %1861 = vmatprep.subr.bf16.mxu0 0
        %1862 = vmatpush1.bf16.msra.mxu0 %v1840
        %1863 = vmatprep.subr.bf16.mxu0 0
        %1864 = vmatpush1.bf16.msra.mxu0 %v1841
        %1865 = vmatprep.subr.bf16.mxu0 0
        %1866 = vmatpush1.bf16.msra.mxu0 %v1842
        %1867 = vmatprep.subr.bf16.mxu0 0
        %1868 = vmatpush1.bf16.msra.mxu0 0
        %1869 = vmatprep.subr.bf16.mxu0 0
        %1870 = vmatpush1.bf16.msra.mxu0 0
        %1871 = vmatprep.subr.bf16.mxu0 0
        %1872 = vmatpush1.bf16.msra.mxu0 0
        %1873 = vmatprep.subr.bf16.mxu0 0
        %1874 = vmatpush1.bf16.msra.mxu0 0
        %1875 = vmatprep.subr.bf16.mxu0 0
        %1876 = vmatpush1.bf16.msra.mxu0 0
        %1877 = vmatprep.subr.bf16.mxu0 0
        %1878 = vmatpush1.bf16.msra.mxu0 0
        %1879 = vmatprep.subr.bf16.mxu0 0
        %1880 = vmatpush1.bf16.msra.mxu0 0
        %1881 = vmatprep.subr.bf16.mxu0 0
        %1882 = vmatpush1.bf16.msra.mxu0 0
        %1883 = vmatprep.mubr.bf16.mxu0 0
        %1884 = vmatmul.mubr.bf16.gmra.mrb[0].mxu0 %v1795
        %v1885 = vpop.f32.mrb[0].mxu0
        %v1886 = vadd.f32 0.0, %v1885
        %v1887 = vpop.f32.mrb[0].mxu0
        %v1888 = vpop.f32.mrb[0].mxu0
        %v1889 = vadd.f32 0.0, %v1888
        %v1890 = vpop.f32.mrb[0].mxu0
        %1891 = vmatprep.mubr.bf16.mxu0 0
        %1892 = vmatmul.mubr.bf16.gmra.mrb[0].mxu0 %v1796
        %v1893 = vpop.f32.mrb[0].mxu0
        %v1894 = vadd.f32 0.0, %v1893
        %v1895 = vpop.f32.mrb[0].mxu0
        %v1896 = vpop.f32.mrb[0].mxu0
        %v1897 = vadd.f32 0.0, %v1896
        %v1898 = vpop.f32.mrb[0].mxu0
        %1899 = vmatprep.mubr.bf16.mxu0 0
        %1900 = vmatmul.mubr.bf16.gmra.mrb[0].mxu0 %v1797
        %v1901 = vpop.f32.mrb[0].mxu0
        %v1902 = vadd.f32 0.0, %v1901
        %v1903 = vpop.f32.mrb[0].mxu0
        %v1904 = vpop.f32.mrb[0].mxu0
        %v1905 = vadd.f32 0.0, %v1904
        %v1906 = vpop.f32.mrb[0].mxu0
        %1907 = vmatprep.mubr.bf16.mxu0 0
        %1908 = vmatmul.mubr.bf16.gmra.mrb[0].mxu0 %v1798
        %v1909 = vpop.f32.mrb[0].mxu0
        %v1910 = vadd.f32 0.0, %v1909
        %v1911 = vpop.f32.mrb[0].mxu0
        %v1912 = vpop.f32.mrb[0].mxu0
        %v1913 = vadd.f32 0.0, %v1912
        %v1914 = vpop.f32.mrb[0].mxu0
        %1915 = vdwg.mxu0
        %v1916 = vadd.f32 %v1745, %v1886
        %v1917 = vadd.f32 %v1746, %v1889
        %v1918 = vadd.f32 %v1747, %v1894
        %v1919 = vadd.f32 %v1748, %v1897
        %v1920 = vadd.f32 %v1749, %v1902
        %v1921 = vadd.f32 %v1750, %v1905
        %v1922 = vadd.f32 %v1751, %v1910
        %v1923 = vadd.f32 %v1752, %v1913
        %v1924 = vld [vmem:[%s1753] sm:$0xf]
        %v1925 = vld [vmem:[%s1753 + $0x4] sm:$0x1]
        %v1926 = vld [vmem:[%s1753 + $0x8] sm:$0xf]
        %v1927 = vld [vmem:[%s1753 + $0xc] sm:$0x1]
        %v1928 = vld [vmem:[%s1753 + $0x10] sm:$0xf]
        %v1929 = vld [vmem:[%s1753 + $0x14] sm:$0x1]
        %v1930 = vld [vmem:[%s1753 + $0x18] sm:$0xf]
        %v1931 = vld [vmem:[%s1753 + $0x1c] sm:$0x1]
        %v1932 = vld [vmem:[%s1753 + $0x20] sm:$0xf]
        %v1933 = vld [vmem:[%s1753 + $0x24] sm:$0x1]
        %v1934 = vld [vmem:[%s1753 + $0x28] sm:$0xf]
        %v1935 = vld [vmem:[%s1753 + $0x2c] sm:$0x1]
        %v1936 = vld [vmem:[%s1753 + $0x30] sm:$0xf]
        %v1937 = vld [vmem:[%s1753 + $0x34] sm:$0x1]
        %v1938 = vld [vmem:[%s1753 + $0x38] sm:$0xf]
        %v1939 = vld [vmem:[%s1753 + $0x3c] sm:$0x1]
        %v1941 = vshrl.u32 %v1924, 16
        %v1943 = vrot.slane %v1941, 4
        %v1944 = vshll.u32 %v1924, 16
        %v1946 = vrot.slane %v1944, 5
        %v1947 = vor.u32 %v1943, %v1946
        %v1948 = vrot.slane %v1947, 4
        %v1950 = vshll.u32 %v1925, 16
        %v1952 = vrot.slane %v1950, 5
        %v1953 = vsel %vm481, %v1948, %v1952
        %v1955 = vshrl.u32 %v1926, 16
        %v1957 = vrot.slane %v1955, 4
        %v1958 = vshll.u32 %v1926, 16
        %v1960 = vrot.slane %v1958, 5
        %v1961 = vor.u32 %v1957, %v1960
        %v1962 = vrot.slane %v1961, 4
        %v1964 = vshll.u32 %v1927, 16
        %v1966 = vrot.slane %v1964, 5
        %v1967 = vsel %vm481, %v1962, %v1966
        %v1969 = vshrl.u32 %v1928, 16
        %v1971 = vrot.slane %v1969, 4
        %v1972 = vshll.u32 %v1928, 16
        %v1974 = vrot.slane %v1972, 5
        %v1975 = vor.u32 %v1971, %v1974
        %v1976 = vrot.slane %v1975, 4
        %v1978 = vshll.u32 %v1929, 16
        %v1980 = vrot.slane %v1978, 5
        %v1981 = vsel %vm481, %v1976, %v1980
        %v1983 = vshrl.u32 %v1930, 16
        %v1985 = vrot.slane %v1983, 4
        %v1986 = vshll.u32 %v1930, 16
        %v1988 = vrot.slane %v1986, 5
        %v1989 = vor.u32 %v1985, %v1988
        %v1990 = vrot.slane %v1989, 4
        %v1992 = vshll.u32 %v1931, 16
        %v1994 = vrot.slane %v1992, 5
        %v1995 = vsel %vm481, %v1990, %v1994
        %v1997 = vshrl.u32 %v1932, 16
        %v1999 = vrot.slane %v1997, 4
        %v2000 = vshll.u32 %v1932, 16
        %v2002 = vrot.slane %v2000, 5
        %v2003 = vor.u32 %v1999, %v2002
        %v2004 = vrot.slane %v2003, 4
        %v2006 = vshll.u32 %v1933, 16
        %v2008 = vrot.slane %v2006, 5
        %v2009 = vsel %vm481, %v2004, %v2008
        %v2011 = vshrl.u32 %v1934, 16
        %v2013 = vrot.slane %v2011, 4
        %v2014 = vshll.u32 %v1934, 16
        %v2016 = vrot.slane %v2014, 5
        %v2017 = vor.u32 %v2013, %v2016
        %v2018 = vrot.slane %v2017, 4
        %v2020 = vshll.u32 %v1935, 16
        %v2022 = vrot.slane %v2020, 5
        %v2023 = vsel %vm481, %v2018, %v2022
        %v2025 = vshrl.u32 %v1936, 16
        %v2027 = vrot.slane %v2025, 4
        %v2028 = vshll.u32 %v1936, 16
        %v2030 = vrot.slane %v2028, 5
        %v2031 = vor.u32 %v2027, %v2030
        %v2032 = vrot.slane %v2031, 4
        %v2034 = vshll.u32 %v1937, 16
        %v2036 = vrot.slane %v2034, 5
        %v2037 = vsel %vm481, %v2032, %v2036
        %v2039 = vshrl.u32 %v1938, 16
        %v2041 = vrot.slane %v2039, 4
        %v2042 = vshll.u32 %v1938, 16
        %v2044 = vrot.slane %v2042, 5
        %v2045 = vor.u32 %v2041, %v2044
        %v2046 = vrot.slane %v2045, 4
        %v2048 = vshll.u32 %v1939, 16
        %v2050 = vrot.slane %v2048, 5
        %v2051 = vsel %vm481, %v2046, %v2050
        %s2052 = scalar_lea.vmem [#allocation3], 448
        %v2053 = vld [vmem:[%s2052] sm:$0xf]
        %v2054 = vld [vmem:[%s2052 + $0x4] sm:$0xf]
        %v2055 = vld [vmem:[%s2052 + $0x8] sm:$0xf]
        %v2056 = vld [vmem:[%s2052 + $0xc] sm:$0xf]
        %v2057 = vld [vmem:[%s2052 + $0x10] sm:$0xf]
        %v2058 = vld [vmem:[%s2052 + $0x14] sm:$0xf]
        %v2059 = vld [vmem:[%s2052 + $0x18] sm:$0xf]
        %v2060 = vld [vmem:[%s2052 + $0x1c] sm:$0xf]
        %v2061 = vld [vmem:[%s2052 + $0x20] sm:$0xf]
        %v2062 = vld [vmem:[%s2052 + $0x24] sm:$0xf]
        %v2063 = vld [vmem:[%s2052 + $0x28] sm:$0xf]
        %v2064 = vld [vmem:[%s2052 + $0x2c] sm:$0xf]
        %v2065 = vld [vmem:[%s2052 + $0x30] sm:$0xf]
        %v2066 = vld [vmem:[%s2052 + $0x34] sm:$0xf]
        %v2067 = vld [vmem:[%s2052 + $0x38] sm:$0xf]
        %v2068 = vld [vmem:[%s2052 + $0x3c] sm:$0xf]
        %v2069 = vunpack.c.l.b16 %v1953
        %v2070 = vunpack.c.l.b16 %v1967
        %v2071 = vunpack.c.l.b16 %v1981
        %v2072 = vunpack.c.l.b16 %v1995
        %v2073 = vunpack.c.l.b16 %v2009
        %v2074 = vunpack.c.l.b16 %v2023
        %v2075 = vunpack.c.l.b16 %v2037
        %v2076 = vunpack.c.l.b16 %v2051
        %v2077 = vpack.c.b16 %v2070, %v2069
        %v2078 = vpack.c.b16 %v2072, %v2071
        %v2079 = vpack.c.b16 %v2074, %v2073
        %v2080 = vpack.c.b16 %v2076, %v2075
        %v2101 = vunpack.c.l.b16 %v2053
        %v2102 = vunpack.c.l.b16 %v2054
        %v2103 = vunpack.c.l.b16 %v2055
        %v2104 = vunpack.c.l.b16 %v2056
        %v2105 = vunpack.c.l.b16 %v2057
        %v2106 = vunpack.c.l.b16 %v2058
        %v2107 = vunpack.c.l.b16 %v2059
        %v2108 = vunpack.c.l.b16 %v2060
        %v2109 = vunpack.c.l.b16 %v2061
        %v2110 = vunpack.c.l.b16 %v2062
        %v2111 = vunpack.c.l.b16 %v2063
        %v2112 = vunpack.c.l.b16 %v2064
        %v2113 = vunpack.c.l.b16 %v2065
        %v2114 = vunpack.c.l.b16 %v2066
        %v2115 = vunpack.c.l.b16 %v2067
        %v2116 = vunpack.c.l.b16 %v2068
        %v2117 = vpack.c.b16 %v2102, %v2101
        %v2118 = vpack.c.b16 %v2104, %v2103
        %v2119 = vpack.c.b16 %v2106, %v2105
        %v2120 = vpack.c.b16 %v2108, %v2107
        %v2121 = vpack.c.b16 %v2110, %v2109
        %v2122 = vpack.c.b16 %v2112, %v2111
        %v2123 = vpack.c.b16 %v2114, %v2113
        %v2124 = vpack.c.b16 %v2116, %v2115
        %2133 = vmatprep.subr.bf16.mxu0 0
        %2134 = vmatpush1.bf16.msra.mxu0 %v2117
        %2135 = vmatprep.subr.bf16.mxu0 0
        %2136 = vmatpush1.bf16.msra.mxu0 %v2118
        %2137 = vmatprep.subr.bf16.mxu0 0
        %2138 = vmatpush1.bf16.msra.mxu0 %v2119
        %2139 = vmatprep.subr.bf16.mxu0 0
        %2140 = vmatpush1.bf16.msra.mxu0 %v2120
        %2141 = vmatprep.subr.bf16.mxu0 0
        %2142 = vmatpush1.bf16.msra.mxu0 %v2121
        %2143 = vmatprep.subr.bf16.mxu0 0
        %2144 = vmatpush1.bf16.msra.mxu0 %v2122
        %2145 = vmatprep.subr.bf16.mxu0 0
        %2146 = vmatpush1.bf16.msra.mxu0 %v2123
        %2147 = vmatprep.subr.bf16.mxu0 0
        %2148 = vmatpush1.bf16.msra.mxu0 %v2124
        %2149 = vmatprep.subr.bf16.mxu0 0
        %2150 = vmatpush1.bf16.msra.mxu0 0
        %2151 = vmatprep.subr.bf16.mxu0 0
        %2152 = vmatpush1.bf16.msra.mxu0 0
        %2153 = vmatprep.subr.bf16.mxu0 0
        %2154 = vmatpush1.bf16.msra.mxu0 0
        %2155 = vmatprep.subr.bf16.mxu0 0
        %2156 = vmatpush1.bf16.msra.mxu0 0
        %2157 = vmatprep.subr.bf16.mxu0 0
        %2158 = vmatpush1.bf16.msra.mxu0 0
        %2159 = vmatprep.subr.bf16.mxu0 0
        %2160 = vmatpush1.bf16.msra.mxu0 0
        %2161 = vmatprep.subr.bf16.mxu0 0
        %2162 = vmatpush1.bf16.msra.mxu0 0
        %2163 = vmatprep.subr.bf16.mxu0 0
        %2164 = vmatpush1.bf16.msra.mxu0 0
        %2165 = vmatprep.mubr.bf16.mxu0 0
        %2166 = vmatmul.mubr.bf16.gmra.mrb[0].mxu0 %v2077
        %v2167 = vpop.f32.mrb[0].mxu0
        %v2168 = vadd.f32 0.0, %v2167
        %v2169 = vpop.f32.mrb[0].mxu0
        %v2170 = vpop.f32.mrb[0].mxu0
        %v2171 = vadd.f32 0.0, %v2170
        %v2172 = vpop.f32.mrb[0].mxu0
        %2173 = vmatprep.mubr.bf16.mxu0 0
        %2174 = vmatmul.mubr.bf16.gmra.mrb[0].mxu0 %v2078
        %v2175 = vpop.f32.mrb[0].mxu0
        %v2176 = vadd.f32 0.0, %v2175
        %v2177 = vpop.f32.mrb[0].mxu0
        %v2178 = vpop.f32.mrb[0].mxu0
        %v2179 = vadd.f32 0.0, %v2178
        %v2180 = vpop.f32.mrb[0].mxu0
        %2181 = vmatprep.mubr.bf16.mxu0 0
        %2182 = vmatmul.mubr.bf16.gmra.mrb[0].mxu0 %v2079
        %v2183 = vpop.f32.mrb[0].mxu0
        %v2184 = vadd.f32 0.0, %v2183
        %v2185 = vpop.f32.mrb[0].mxu0
        %v2186 = vpop.f32.mrb[0].mxu0
        %v2187 = vadd.f32 0.0, %v2186
        %v2188 = vpop.f32.mrb[0].mxu0
        %2189 = vmatprep.mubr.bf16.mxu0 0
        %2190 = vmatmul.mubr.bf16.gmra.mrb[0].mxu0 %v2080
        %v2191 = vpop.f32.mrb[0].mxu0
        %v2192 = vadd.f32 0.0, %v2191
        %v2193 = vpop.f32.mrb[0].mxu0
        %v2194 = vpop.f32.mrb[0].mxu0
        %v2195 = vadd.f32 0.0, %v2194
        %v2196 = vpop.f32.mrb[0].mxu0
        %2197 = vdwg.mxu0
        %v2198 = vadd.f32 %v1916, %v2168
        %v2199 = vadd.f32 %v1917, %v2171
        %v2200 = vadd.f32 %v1918, %v2176
        %v2201 = vadd.f32 %v1919, %v2179
        %v2202 = vadd.f32 %v1920, %v2184
        %v2203 = vadd.f32 %v1921, %v2187
        %v2204 = vadd.f32 %v1922, %v2192
        %v2205 = vadd.f32 %v1923, %v2195
        %v2206 = vld [vmem:[%s1753] sm:$0xe]
        %v2207 = vld [vmem:[%s1753 + $0x8] sm:$0xe]
        %v2208 = vld [vmem:[%s1753 + $0x10] sm:$0xe]
        %v2209 = vld [vmem:[%s1753 + $0x18] sm:$0xe]
        %v2210 = vld [vmem:[%s1753 + $0x20] sm:$0xe]
        %v2211 = vld [vmem:[%s1753 + $0x28] sm:$0xe]
        %v2212 = vld [vmem:[%s1753 + $0x30] sm:$0xe]
        %v2213 = vld [vmem:[%s1753 + $0x38] sm:$0xe]
        %v2230 = vrot.slane %v2206, 5
        %v2231 = vrot.slane %v2230, 4
        %v2232 = vrot.slane %v1925, 5
        %v2233 = vsel %vm903, %v2231, %v2232
        %v2234 = vrot.slane %v2207, 5
        %v2235 = vrot.slane %v2234, 4
        %v2236 = vrot.slane %v1927, 5
        %v2237 = vsel %vm903, %v2235, %v2236
        %v2238 = vrot.slane %v2208, 5
        %v2239 = vrot.slane %v2238, 4
        %v2240 = vrot.slane %v1929, 5
        %v2241 = vsel %vm903, %v2239, %v2240
        %v2242 = vrot.slane %v2209, 5
        %v2243 = vrot.slane %v2242, 4
        %v2244 = vrot.slane %v1931, 5
        %v2245 = vsel %vm903, %v2243, %v2244
        %v2246 = vrot.slane %v2210, 5
        %v2247 = vrot.slane %v2246, 4
        %v2248 = vrot.slane %v1933, 5
        %v2249 = vsel %vm903, %v2247, %v2248
        %v2250 = vrot.slane %v2211, 5
        %v2251 = vrot.slane %v2250, 4
        %v2252 = vrot.slane %v1935, 5
        %v2253 = vsel %vm903, %v2251, %v2252
        %v2254 = vrot.slane %v2212, 5
        %v2255 = vrot.slane %v2254, 4
        %v2256 = vrot.slane %v1937, 5
        %v2257 = vsel %vm903, %v2255, %v2256
        %v2258 = vrot.slane %v2213, 5
        %v2259 = vrot.slane %v2258, 4
        %v2260 = vrot.slane %v1939, 5
        %v2261 = vsel %vm903, %v2259, %v2260
        %s2262 = scalar_lea.vmem [#allocation3], 512
        %v2263 = vld [vmem:[%s2262] sm:$0xf]
        %v2264 = vld [vmem:[%s2262 + $0x4] sm:$0xf]
        %v2265 = vld [vmem:[%s2262 + $0x8] sm:$0xf]
        %v2266 = vld [vmem:[%s2262 + $0xc] sm:$0xf]
        %v2267 = vld [vmem:[%s2262 + $0x10] sm:$0xf]
        %v2268 = vld [vmem:[%s2262 + $0x14] sm:$0xf]
        %v2269 = vld [vmem:[%s2262 + $0x18] sm:$0xf]
        %v2270 = vld [vmem:[%s2262 + $0x1c] sm:$0xf]
        %v2271 = vld [vmem:[%s2262 + $0x20] sm:$0xf]
        %v2272 = vld [vmem:[%s2262 + $0x24] sm:$0xf]
        %v2273 = vld [vmem:[%s2262 + $0x28] sm:$0xf]
        %v2274 = vld [vmem:[%s2262 + $0x2c] sm:$0xf]
        %v2275 = vld [vmem:[%s2262 + $0x30] sm:$0xf]
        %v2276 = vld [vmem:[%s2262 + $0x34] sm:$0xf]
        %v2277 = vld [vmem:[%s2262 + $0x38] sm:$0xf]
        %v2278 = vld [vmem:[%s2262 + $0x3c] sm:$0xf]
        %v2279 = vunpack.c.l.b16 %v2233
        %v2280 = vunpack.c.l.b16 %v2237
        %v2281 = vunpack.c.l.b16 %v2241
        %v2282 = vunpack.c.l.b16 %v2245
        %v2283 = vunpack.c.l.b16 %v2249
        %v2284 = vunpack.c.l.b16 %v2253
        %v2285 = vunpack.c.l.b16 %v2257
        %v2286 = vunpack.c.l.b16 %v2261
        %v2287 = vpack.c.b16 %v2280, %v2279
        %v2288 = vpack.c.b16 %v2282, %v2281
        %v2289 = vpack.c.b16 %v2284, %v2283
        %v2290 = vpack.c.b16 %v2286, %v2285
        %v2311 = vunpack.c.l.b16 %v2263
        %v2312 = vunpack.c.l.b16 %v2264
        %v2313 = vunpack.c.l.b16 %v2265
        %v2314 = vunpack.c.l.b16 %v2266
        %v2315 = vunpack.c.l.b16 %v2267
        %v2316 = vunpack.c.l.b16 %v2268
        %v2317 = vunpack.c.l.b16 %v2269
        %v2318 = vunpack.c.l.b16 %v2270
        %v2319 = vunpack.c.l.b16 %v2271
        %v2320 = vunpack.c.l.b16 %v2272
        %v2321 = vunpack.c.l.b16 %v2273
        %v2322 = vunpack.c.l.b16 %v2274
        %v2323 = vunpack.c.l.b16 %v2275
        %v2324 = vunpack.c.l.b16 %v2276
        %v2325 = vunpack.c.l.b16 %v2277
        %v2326 = vunpack.c.l.b16 %v2278
        %v2327 = vpack.c.b16 %v2312, %v2311
        %v2328 = vpack.c.b16 %v2314, %v2313
        %v2329 = vpack.c.b16 %v2316, %v2315
        %v2330 = vpack.c.b16 %v2318, %v2317
        %v2331 = vpack.c.b16 %v2320, %v2319
        %v2332 = vpack.c.b16 %v2322, %v2321
        %v2333 = vpack.c.b16 %v2324, %v2323
        %v2334 = vpack.c.b16 %v2326, %v2325
        %2343 = vmatprep.subr.bf16.mxu0 0
        %2344 = vmatpush1.bf16.msra.mxu0 %v2327
        %2345 = vmatprep.subr.bf16.mxu0 0
        %2346 = vmatpush1.bf16.msra.mxu0 %v2328
        %2347 = vmatprep.subr.bf16.mxu0 0
        %2348 = vmatpush1.bf16.msra.mxu0 %v2329
        %2349 = vmatprep.subr.bf16.mxu0 0
        %2350 = vmatpush1.bf16.msra.mxu0 %v2330
        %2351 = vmatprep.subr.bf16.mxu0 0
        %2352 = vmatpush1.bf16.msra.mxu0 %v2331
        %2353 = vmatprep.subr.bf16.mxu0 0
        %2354 = vmatpush1.bf16.msra.mxu0 %v2332
        %2355 = vmatprep.subr.bf16.mxu0 0
        %2356 = vmatpush1.bf16.msra.mxu0 %v2333
        %2357 = vmatprep.subr.bf16.mxu0 0
        %2358 = vmatpush1.bf16.msra.mxu0 %v2334
        %2359 = vmatprep.subr.bf16.mxu0 0
        %2360 = vmatpush1.bf16.msra.mxu0 0
        %2361 = vmatprep.subr.bf16.mxu0 0
        %2362 = vmatpush1.bf16.msra.mxu0 0
        %2363 = vmatprep.subr.bf16.mxu0 0
        %2364 = vmatpush1.bf16.msra.mxu0 0
        %2365 = vmatprep.subr.bf16.mxu0 0
        %2366 = vmatpush1.bf16.msra.mxu0 0
        %2367 = vmatprep.subr.bf16.mxu0 0
        %2368 = vmatpush1.bf16.msra.mxu0 0
        %2369 = vmatprep.subr.bf16.mxu0 0
        %2370 = vmatpush1.bf16.msra.mxu0 0
        %2371 = vmatprep.subr.bf16.mxu0 0
        %2372 = vmatpush1.bf16.msra.mxu0 0
        %2373 = vmatprep.subr.bf16.mxu0 0
        %2374 = vmatpush1.bf16.msra.mxu0 0
        %2375 = vmatprep.mubr.bf16.mxu0 0
        %2376 = vmatmul.mubr.bf16.gmra.mrb[0].mxu0 %v2287
        %v2377 = vpop.f32.mrb[0].mxu0
        %v2378 = vadd.f32 0.0, %v2377
        %v2379 = vpop.f32.mrb[0].mxu0
        %v2380 = vpop.f32.mrb[0].mxu0
        %v2381 = vadd.f32 0.0, %v2380
        %v2382 = vpop.f32.mrb[0].mxu0
        %2383 = vmatprep.mubr.bf16.mxu0 0
        %2384 = vmatmul.mubr.bf16.gmra.mrb[0].mxu0 %v2288
        %v2385 = vpop.f32.mrb[0].mxu0
        %v2386 = vadd.f32 0.0, %v2385
        %v2387 = vpop.f32.mrb[0].mxu0
        %v2388 = vpop.f32.mrb[0].mxu0
        %v2389 = vadd.f32 0.0, %v2388
        %v2390 = vpop.f32.mrb[0].mxu0
        %2391 = vmatprep.mubr.bf16.mxu0 0
        %2392 = vmatmul.mubr.bf16.gmra.mrb[0].mxu0 %v2289
        %v2393 = vpop.f32.mrb[0].mxu0
        %v2394 = vadd.f32 0.0, %v2393
        %v2395 = vpop.f32.mrb[0].mxu0
        %v2396 = vpop.f32.mrb[0].mxu0
        %v2397 = vadd.f32 0.0, %v2396
        %v2398 = vpop.f32.mrb[0].mxu0
        %2399 = vmatprep.mubr.bf16.mxu0 0
        %2400 = vmatmul.mubr.bf16.gmra.mrb[0].mxu0 %v2290
        %v2401 = vpop.f32.mrb[0].mxu0
        %v2402 = vadd.f32 0.0, %v2401
        %v2403 = vpop.f32.mrb[0].mxu0
        %v2404 = vpop.f32.mrb[0].mxu0
        %v2405 = vadd.f32 0.0, %v2404
        %v2406 = vpop.f32.mrb[0].mxu0
        %2407 = vdwg.mxu0
        %v2408 = vadd.f32 %v2198, %v2378
        %v2409 = vadd.f32 %v2199, %v2381
        %v2410 = vadd.f32 %v2200, %v2386
        %v2411 = vadd.f32 %v2201, %v2389
        %v2412 = vadd.f32 %v2202, %v2394
        %v2413 = vadd.f32 %v2203, %v2397
        %v2414 = vadd.f32 %v2204, %v2402
        %v2415 = vadd.f32 %v2205, %v2405
        %v2416 = vld [vmem:[#allocation5] sm:$0x1]
        %v2418 = vlaneseq
        %v2419 = vshrl.u32 %v2418, 7
        %v2420 = vsub.s32 0, %v2419
        %v2421 = vrot.slane %v2416, %v2420
        %v2423 = vadd.f32 %v2408, %v2421
        %v2424 = vadd.f32 %v2409, %v2421
        %v2425 = vadd.f32 %v2410, %v2421
        %v2426 = vadd.f32 %v2411, %v2421
        %v2427 = vadd.f32 %v2412, %v2421
        %v2428 = vadd.f32 %v2413, %v2421
        %v2429 = vadd.f32 %v2414, %v2421
        %v2430 = vadd.f32 %v2415, %v2421
        %v2431 = vmax.f32 %v2423, 0.0
        %v2432 = vmax.f32 %v2424, 0.0
        %v2433 = vmax.f32 %v2425, 0.0
        %v2434 = vmax.f32 %v2426, 0.0
        %v2435 = vmax.f32 %v2427, 0.0
        %v2436 = vmax.f32 %v2428, 0.0
        %v2437 = vmax.f32 %v2429, 0.0
        %v2438 = vmax.f32 %v2430, 0.0
        %v2447 = vcombine.high %v2431, %v2431
        %v2449 = vunpack.c.l.s4 1983009808
        %v2450 = vunpack.c.0.s8 %v2449
        %v2451 = vlaneseq
        %v2452 = vshrl.u32 %v2451, 7
        %v2453 = vsub.s32 %v2450, %v2452
        %v2454 = vrot.slane %v2431, %v2453
        %v2456 = vunpack.c.l.s4 1983009808
        %v2457 = vunpack.c.0.s8 %v2456
        %v2458 = vlaneseq
        %v2459 = vshrl.u32 %v2458, 7
        %v2460 = vsub.s32 %v2457, %v2459
        %v2461 = vrot.slane %v2447, %v2460
        %v2462 = vcombine.high %v2454, %v2454
        %v2463 = vcombine.high %v2461, %v2461
        %v2464 = vcombine.high %v2432, %v2432
        %v2466 = vunpack.c.l.s4 1983009808
        %v2467 = vunpack.c.0.s8 %v2466
        %v2468 = vlaneseq
        %v2469 = vshrl.u32 %v2468, 7
        %v2470 = vsub.s32 %v2467, %v2469
        %v2471 = vrot.slane %v2432, %v2470
        %v2473 = vunpack.c.l.s4 1983009808
        %v2474 = vunpack.c.0.s8 %v2473
        %v2475 = vlaneseq
        %v2476 = vshrl.u32 %v2475, 7
        %v2477 = vsub.s32 %v2474, %v2476
        %v2478 = vrot.slane %v2464, %v2477
        %v2479 = vcombine.high %v2471, %v2471
        %v2480 = vcombine.high %v2478, %v2478
        %v2481 = vcombine.high %v2433, %v2433
        %v2483 = vunpack.c.l.s4 1983009808
        %v2484 = vunpack.c.0.s8 %v2483
        %v2485 = vlaneseq
        %v2486 = vshrl.u32 %v2485, 7
        %v2487 = vsub.s32 %v2484, %v2486
        %v2488 = vrot.slane %v2433, %v2487
        %v2490 = vunpack.c.l.s4 1983009808
        %v2491 = vunpack.c.0.s8 %v2490
        %v2492 = vlaneseq
        %v2493 = vshrl.u32 %v2492, 7
        %v2494 = vsub.s32 %v2491, %v2493
        %v2495 = vrot.slane %v2481, %v2494
        %v2496 = vcombine.high %v2488, %v2488
        %v2497 = vcombine.high %v2495, %v2495
        %v2498 = vcombine.high %v2434, %v2434
        %v2500 = vunpack.c.l.s4 1983009808
        %v2501 = vunpack.c.0.s8 %v2500
        %v2502 = vlaneseq
        %v2503 = vshrl.u32 %v2502, 7
        %v2504 = vsub.s32 %v2501, %v2503
        %v2505 = vrot.slane %v2434, %v2504
        %v2507 = vunpack.c.l.s4 1983009808
        %v2508 = vunpack.c.0.s8 %v2507
        %v2509 = vlaneseq
        %v2510 = vshrl.u32 %v2509, 7
        %v2511 = vsub.s32 %v2508, %v2510
        %v2512 = vrot.slane %v2498, %v2511
        %v2513 = vcombine.high %v2505, %v2505
        %v2514 = vcombine.high %v2512, %v2512
        %v2515 = vcombine.high %v2435, %v2435
        %v2517 = vunpack.c.l.s4 1983009808
        %v2518 = vunpack.c.0.s8 %v2517
        %v2519 = vlaneseq
        %v2520 = vshrl.u32 %v2519, 7
        %v2521 = vsub.s32 %v2518, %v2520
        %v2522 = vrot.slane %v2435, %v2521
        %v2524 = vunpack.c.l.s4 1983009808
        %v2525 = vunpack.c.0.s8 %v2524
        %v2526 = vlaneseq
        %v2527 = vshrl.u32 %v2526, 7
        %v2528 = vsub.s32 %v2525, %v2527
        %v2529 = vrot.slane %v2515, %v2528
        %v2530 = vcombine.high %v2522, %v2522
        %v2531 = vcombine.high %v2529, %v2529
        %v2532 = vcombine.high %v2436, %v2436
        %v2534 = vunpack.c.l.s4 1983009808
        %v2535 = vunpack.c.0.s8 %v2534
        %v2536 = vlaneseq
        %v2537 = vshrl.u32 %v2536, 7
        %v2538 = vsub.s32 %v2535, %v2537
        %v2539 = vrot.slane %v2436, %v2538
        %v2541 = vunpack.c.l.s4 1983009808
        %v2542 = vunpack.c.0.s8 %v2541
        %v2543 = vlaneseq
        %v2544 = vshrl.u32 %v2543, 7
        %v2545 = vsub.s32 %v2542, %v2544
        %v2546 = vrot.slane %v2532, %v2545
        %v2547 = vcombine.high %v2539, %v2539
        %v2548 = vcombine.high %v2546, %v2546
        %v2549 = vcombine.high %v2437, %v2437
        %v2551 = vunpack.c.l.s4 1983009808
        %v2552 = vunpack.c.0.s8 %v2551
        %v2553 = vlaneseq
        %v2554 = vshrl.u32 %v2553, 7
        %v2555 = vsub.s32 %v2552, %v2554
        %v2556 = vrot.slane %v2437, %v2555
        %v2558 = vunpack.c.l.s4 1983009808
        %v2559 = vunpack.c.0.s8 %v2558
        %v2560 = vlaneseq
        %v2561 = vshrl.u32 %v2560, 7
        %v2562 = vsub.s32 %v2559, %v2561
        %v2563 = vrot.slane %v2549, %v2562
        %v2564 = vcombine.high %v2556, %v2556
        %v2565 = vcombine.high %v2563, %v2563
        %v2566 = vcombine.high %v2438, %v2438
        %v2568 = vunpack.c.l.s4 1983009808
        %v2569 = vunpack.c.0.s8 %v2568
        %v2570 = vlaneseq
        %v2571 = vshrl.u32 %v2570, 7
        %v2572 = vsub.s32 %v2569, %v2571
        %v2573 = vrot.slane %v2438, %v2572
        %v2575 = vunpack.c.l.s4 1983009808
        %v2576 = vunpack.c.0.s8 %v2575
        %v2577 = vlaneseq
        %v2578 = vshrl.u32 %v2577, 7
        %v2579 = vsub.s32 %v2576, %v2578
        %v2580 = vrot.slane %v2566, %v2579
        %v2581 = vcombine.high %v2573, %v2573
        %v2582 = vcombine.high %v2580, %v2580
        %vm2615 = vcmask 1041408
        %v2616 = vsel %vm2615, %v2454, -inf
        %v2617 = vsel %vm2615, %v2471, -inf
        %v2618 = vmax.f32 %v2616, %v2617
        %v2619 = vrot.slane %v2618, 4
        %v2620 = vmax.f32 %v2618, %v2619
        %v2621 = vrot.slane %v2620, 2
        %v2622 = vmax.f32 %v2620, %v2621
        %v2623 = vrot.slane %v2622, 1
        %v2624 = vmax.f32 %v2622, %v2623
        %v2625 = vsel %vm2615, %v2462, -inf
        %v2626 = vsel %vm2615, %v2479, -inf
        %v2627 = vmax.f32 %v2625, %v2626
        %v2628 = vrot.slane %v2627, 4
        %v2629 = vmax.f32 %v2627, %v2628
        %v2630 = vrot.slane %v2629, 2
        %v2631 = vmax.f32 %v2629, %v2630
        %v2632 = vrot.slane %v2631, 1
        %v2633 = vmax.f32 %v2631, %v2632
        %v2634 = vsel %vm2615, %v2461, -inf
        %v2635 = vsel %vm2615, %v2478, -inf
        %v2636 = vmax.f32 %v2634, %v2635
        %v2637 = vrot.slane %v2636, 4
        %v2638 = vmax.f32 %v2636, %v2637
        %v2639 = vrot.slane %v2638, 2
        %v2640 = vmax.f32 %v2638, %v2639
        %v2641 = vrot.slane %v2640, 1
        %v2642 = vmax.f32 %v2640, %v2641
        %v2643 = vsel %vm2615, %v2463, -inf
        %v2644 = vsel %vm2615, %v2480, -inf
        %v2645 = vmax.f32 %v2643, %v2644
        %v2646 = vrot.slane %v2645, 4
        %v2647 = vmax.f32 %v2645, %v2646
        %v2648 = vrot.slane %v2647, 2
        %v2649 = vmax.f32 %v2647, %v2648
        %v2650 = vrot.slane %v2649, 1
        %v2651 = vmax.f32 %v2649, %v2650
        %v2652 = vsel %vm2615, %v2488, -inf
        %v2653 = vsel %vm2615, %v2505, -inf
        %v2654 = vmax.f32 %v2652, %v2653
        %v2655 = vrot.slane %v2654, 4
        %v2656 = vmax.f32 %v2654, %v2655
        %v2657 = vrot.slane %v2656, 2
        %v2658 = vmax.f32 %v2656, %v2657
        %v2659 = vrot.slane %v2658, 1
        %v2660 = vmax.f32 %v2658, %v2659
        %v2661 = vsel %vm2615, %v2496, -inf
        %v2662 = vsel %vm2615, %v2513, -inf
        %v2663 = vmax.f32 %v2661, %v2662
        %v2664 = vrot.slane %v2663, 4
        %v2665 = vmax.f32 %v2663, %v2664
        %v2666 = vrot.slane %v2665, 2
        %v2667 = vmax.f32 %v2665, %v2666
        %v2668 = vrot.slane %v2667, 1
        %v2669 = vmax.f32 %v2667, %v2668
        %v2670 = vsel %vm2615, %v2495, -inf
        %v2671 = vsel %vm2615, %v2512, -inf
        %v2672 = vmax.f32 %v2670, %v2671
        %v2673 = vrot.slane %v2672, 4
        %v2674 = vmax.f32 %v2672, %v2673
        %v2675 = vrot.slane %v2674, 2
        %v2676 = vmax.f32 %v2674, %v2675
        %v2677 = vrot.slane %v2676, 1
        %v2678 = vmax.f32 %v2676, %v2677
        %v2679 = vsel %vm2615, %v2497, -inf
        %v2680 = vsel %vm2615, %v2514, -inf
        %v2681 = vmax.f32 %v2679, %v2680
        %v2682 = vrot.slane %v2681, 4
        %v2683 = vmax.f32 %v2681, %v2682
        %v2684 = vrot.slane %v2683, 2
        %v2685 = vmax.f32 %v2683, %v2684
        %v2686 = vrot.slane %v2685, 1
        %v2687 = vmax.f32 %v2685, %v2686
        %v2688 = vsel %vm2615, %v2522, -inf
        %v2689 = vsel %vm2615, %v2539, -inf
        %v2690 = vmax.f32 %v2688, %v2689
        %v2691 = vrot.slane %v2690, 4
        %v2692 = vmax.f32 %v2690, %v2691
        %v2693 = vrot.slane %v2692, 2
        %v2694 = vmax.f32 %v2692, %v2693
        %v2695 = vrot.slane %v2694, 1
        %v2696 = vmax.f32 %v2694, %v2695
        %v2697 = vsel %vm2615, %v2530, -inf
        %v2698 = vsel %vm2615, %v2547, -inf
        %v2699 = vmax.f32 %v2697, %v2698
        %v2700 = vrot.slane %v2699, 4
        %v2701 = vmax.f32 %v2699, %v2700
        %v2702 = vrot.slane %v2701, 2
        %v2703 = vmax.f32 %v2701, %v2702
        %v2704 = vrot.slane %v2703, 1
        %v2705 = vmax.f32 %v2703, %v2704
        %v2706 = vsel %vm2615, %v2529, -inf
        %v2707 = vsel %vm2615, %v2546, -inf
        %v2708 = vmax.f32 %v2706, %v2707
        %v2709 = vrot.slane %v2708, 4
        %v2710 = vmax.f32 %v2708, %v2709
        %v2711 = vrot.slane %v2710, 2
        %v2712 = vmax.f32 %v2710, %v2711
        %v2713 = vrot.slane %v2712, 1
        %v2714 = vmax.f32 %v2712, %v2713
        %v2715 = vsel %vm2615, %v2531, -inf
        %v2716 = vsel %vm2615, %v2548, -inf
        %v2717 = vmax.f32 %v2715, %v2716
        %v2718 = vrot.slane %v2717, 4
        %v2719 = vmax.f32 %v2717, %v2718
        %v2720 = vrot.slane %v2719, 2
        %v2721 = vmax.f32 %v2719, %v2720
        %v2722 = vrot.slane %v2721, 1
        %v2723 = vmax.f32 %v2721, %v2722
        %v2724 = vsel %vm2615, %v2556, -inf
        %v2725 = vsel %vm2615, %v2573, -inf
        %v2726 = vmax.f32 %v2724, %v2725
        %v2727 = vrot.slane %v2726, 4
        %v2728 = vmax.f32 %v2726, %v2727
        %v2729 = vrot.slane %v2728, 2
        %v2730 = vmax.f32 %v2728, %v2729
        %v2731 = vrot.slane %v2730, 1
        %v2732 = vmax.f32 %v2730, %v2731
        %v2733 = vsel %vm2615, %v2564, -inf
        %v2734 = vsel %vm2615, %v2581, -inf
        %v2735 = vmax.f32 %v2733, %v2734
        %v2736 = vrot.slane %v2735, 4
        %v2737 = vmax.f32 %v2735, %v2736
        %v2738 = vrot.slane %v2737, 2
        %v2739 = vmax.f32 %v2737, %v2738
        %v2740 = vrot.slane %v2739, 1
        %v2741 = vmax.f32 %v2739, %v2740
        %v2742 = vsel %vm2615, %v2563, -inf
        %v2743 = vsel %vm2615, %v2580, -inf
        %v2744 = vmax.f32 %v2742, %v2743
        %v2745 = vrot.slane %v2744, 4
        %v2746 = vmax.f32 %v2744, %v2745
        %v2747 = vrot.slane %v2746, 2
        %v2748 = vmax.f32 %v2746, %v2747
        %v2749 = vrot.slane %v2748, 1
        %v2750 = vmax.f32 %v2748, %v2749
        %v2751 = vsel %vm2615, %v2565, -inf
        %v2752 = vsel %vm2615, %v2582, -inf
        %v2753 = vmax.f32 %v2751, %v2752
        %v2754 = vrot.slane %v2753, 4
        %v2755 = vmax.f32 %v2753, %v2754
        %v2756 = vrot.slane %v2755, 2
        %v2757 = vmax.f32 %v2755, %v2756
        %v2758 = vrot.slane %v2757, 1
        %v2759 = vmax.f32 %v2757, %v2758
        %v2760 = vpack.c.bf16 %v2624, %v2624
        %v2761 = vpack.c.bf16 %v2633, %v2633
        %v2762 = vpack.c.bf16 %v2642, %v2642
        %v2763 = vpack.c.bf16 %v2651, %v2651
        %v2764 = vpack.c.bf16 %v2660, %v2660
        %v2765 = vpack.c.bf16 %v2669, %v2669
        %v2766 = vpack.c.bf16 %v2678, %v2678
        %v2767 = vpack.c.bf16 %v2687, %v2687
        %v2768 = vpack.c.bf16 %v2696, %v2696
        %v2769 = vpack.c.bf16 %v2705, %v2705
        %v2770 = vpack.c.bf16 %v2714, %v2714
        %v2771 = vpack.c.bf16 %v2723, %v2723
        %v2772 = vpack.c.bf16 %v2732, %v2732
        %v2773 = vpack.c.bf16 %v2741, %v2741
        %v2774 = vpack.c.bf16 %v2750, %v2750
        %v2775 = vpack.c.bf16 %v2759, %v2759
        %v2793 = vunpack.c.l.s4 1983009808
        %v2794 = vunpack.c.0.s8 %v2793
        %v2795 = vlaneseq
        %v2796 = vshrl.u32 %v2795, 7
        %v2797 = vsub.s32 %v2794, %v2796
        %v2798 = vrot.slane %v2760, %v2797
        %v2800 = vunpack.c.l.s4 1983009808
        %v2801 = vunpack.c.0.s8 %v2800
        %v2802 = vlaneseq
        %v2803 = vshrl.u32 %v2802, 7
        %v2804 = vsub.s32 %v2801, %v2803
        %v2805 = vrot.slane %v2761, %v2804
        %v2807 = vunpack.c.l.s4 1983009808
        %v2808 = vunpack.c.0.s8 %v2807
        %v2809 = vlaneseq
        %v2810 = vshrl.u32 %v2809, 7
        %v2811 = vsub.s32 %v2808, %v2810
        %v2812 = vrot.slane %v2762, %v2811
        %v2814 = vunpack.c.l.s4 1983009808
        %v2815 = vunpack.c.0.s8 %v2814
        %v2816 = vlaneseq
        %v2817 = vshrl.u32 %v2816, 7
        %v2818 = vsub.s32 %v2815, %v2817
        %v2819 = vrot.slane %v2763, %v2818
        %v2821 = vunpack.c.l.s4 1983009808
        %v2822 = vunpack.c.0.s8 %v2821
        %v2823 = vlaneseq
        %v2824 = vshrl.u32 %v2823, 7
        %v2825 = vsub.s32 %v2822, %v2824
        %v2826 = vrot.slane %v2764, %v2825
        %v2828 = vunpack.c.l.s4 1983009808
        %v2829 = vunpack.c.0.s8 %v2828
        %v2830 = vlaneseq
        %v2831 = vshrl.u32 %v2830, 7
        %v2832 = vsub.s32 %v2829, %v2831
        %v2833 = vrot.slane %v2765, %v2832
        %v2835 = vunpack.c.l.s4 1983009808
        %v2836 = vunpack.c.0.s8 %v2835
        %v2837 = vlaneseq
        %v2838 = vshrl.u32 %v2837, 7
        %v2839 = vsub.s32 %v2836, %v2838
        %v2840 = vrot.slane %v2766, %v2839
        %v2842 = vunpack.c.l.s4 1983009808
        %v2843 = vunpack.c.0.s8 %v2842
        %v2844 = vlaneseq
        %v2845 = vshrl.u32 %v2844, 7
        %v2846 = vsub.s32 %v2843, %v2845
        %v2847 = vrot.slane %v2767, %v2846
        %v2849 = vunpack.c.l.s4 1983009808
        %v2850 = vunpack.c.0.s8 %v2849
        %v2851 = vlaneseq
        %v2852 = vshrl.u32 %v2851, 7
        %v2853 = vsub.s32 %v2850, %v2852
        %v2854 = vrot.slane %v2768, %v2853
        %v2856 = vunpack.c.l.s4 1983009808
        %v2857 = vunpack.c.0.s8 %v2856
        %v2858 = vlaneseq
        %v2859 = vshrl.u32 %v2858, 7
        %v2860 = vsub.s32 %v2857, %v2859
        %v2861 = vrot.slane %v2769, %v2860
        %v2863 = vunpack.c.l.s4 1983009808
        %v2864 = vunpack.c.0.s8 %v2863
        %v2865 = vlaneseq
        %v2866 = vshrl.u32 %v2865, 7
        %v2867 = vsub.s32 %v2864, %v2866
        %v2868 = vrot.slane %v2770, %v2867
        %v2870 = vunpack.c.l.s4 1983009808
        %v2871 = vunpack.c.0.s8 %v2870
        %v2872 = vlaneseq
        %v2873 = vshrl.u32 %v2872, 7
        %v2874 = vsub.s32 %v2871, %v2873
        %v2875 = vrot.slane %v2771, %v2874
        %v2877 = vunpack.c.l.s4 1983009808
        %v2878 = vunpack.c.0.s8 %v2877
        %v2879 = vlaneseq
        %v2880 = vshrl.u32 %v2879, 7
        %v2881 = vsub.s32 %v2878, %v2880
        %v2882 = vrot.slane %v2772, %v2881
        %v2884 = vunpack.c.l.s4 1983009808
        %v2885 = vunpack.c.0.s8 %v2884
        %v2886 = vlaneseq
        %v2887 = vshrl.u32 %v2886, 7
        %v2888 = vsub.s32 %v2885, %v2887
        %v2889 = vrot.slane %v2773, %v2888
        %v2891 = vunpack.c.l.s4 1983009808
        %v2892 = vunpack.c.0.s8 %v2891
        %v2893 = vlaneseq
        %v2894 = vshrl.u32 %v2893, 7
        %v2895 = vsub.s32 %v2892, %v2894
        %v2896 = vrot.slane %v2774, %v2895
        %v2898 = vunpack.c.l.s4 1983009808
        %v2899 = vunpack.c.0.s8 %v2898
        %v2900 = vlaneseq
        %v2901 = vshrl.u32 %v2900, 7
        %v2902 = vsub.s32 %v2899, %v2901
        %v2903 = vrot.slane %v2775, %v2902
        %v2905 = vunpack.c.l.s4 1983009808
        %v2906 = vunpack.c.0.s8 %v2905
        %v2907 = vlaneseq
        %v2908 = vshrl.u32 %v2907, 7
        %v2909 = vsub.s32 %v2906, %v2908
        %v2910 = vrot.slane %v2798, %v2909
        %v2912 = vunpack.c.l.s4 1983009808
        %v2913 = vunpack.c.0.s8 %v2912
        %v2914 = vlaneseq
        %v2915 = vshrl.u32 %v2914, 7
        %v2916 = vsub.s32 %v2913, %v2915
        %v2917 = vrot.slane %v2805, %v2916
        %v2919 = vunpack.c.l.s4 1983009808
        %v2920 = vunpack.c.0.s8 %v2919
        %v2921 = vlaneseq
        %v2922 = vshrl.u32 %v2921, 7
        %v2923 = vsub.s32 %v2920, %v2922
        %v2924 = vrot.slane %v2812, %v2923
        %v2926 = vunpack.c.l.s4 1983009808
        %v2927 = vunpack.c.0.s8 %v2926
        %v2928 = vlaneseq
        %v2929 = vshrl.u32 %v2928, 7
        %v2930 = vsub.s32 %v2927, %v2929
        %v2931 = vrot.slane %v2819, %v2930
        %v2933 = vunpack.c.l.s4 1983009808
        %v2934 = vunpack.c.0.s8 %v2933
        %v2935 = vlaneseq
        %v2936 = vshrl.u32 %v2935, 7
        %v2937 = vsub.s32 %v2934, %v2936
        %v2938 = vrot.slane %v2826, %v2937
        %v2940 = vunpack.c.l.s4 1983009808
        %v2941 = vunpack.c.0.s8 %v2940
        %v2942 = vlaneseq
        %v2943 = vshrl.u32 %v2942, 7
        %v2944 = vsub.s32 %v2941, %v2943
        %v2945 = vrot.slane %v2833, %v2944
        %v2947 = vunpack.c.l.s4 1983009808
        %v2948 = vunpack.c.0.s8 %v2947
        %v2949 = vlaneseq
        %v2950 = vshrl.u32 %v2949, 7
        %v2951 = vsub.s32 %v2948, %v2950
        %v2952 = vrot.slane %v2840, %v2951
        %v2954 = vunpack.c.l.s4 1983009808
        %v2955 = vunpack.c.0.s8 %v2954
        %v2956 = vlaneseq
        %v2957 = vshrl.u32 %v2956, 7
        %v2958 = vsub.s32 %v2955, %v2957
        %v2959 = vrot.slane %v2847, %v2958
        %v2961 = vunpack.c.l.s4 1983009808
        %v2962 = vunpack.c.0.s8 %v2961
        %v2963 = vlaneseq
        %v2964 = vshrl.u32 %v2963, 7
        %v2965 = vsub.s32 %v2962, %v2964
        %v2966 = vrot.slane %v2854, %v2965
        %v2968 = vunpack.c.l.s4 1983009808
        %v2969 = vunpack.c.0.s8 %v2968
        %v2970 = vlaneseq
        %v2971 = vshrl.u32 %v2970, 7
        %v2972 = vsub.s32 %v2969, %v2971
        %v2973 = vrot.slane %v2861, %v2972
        %v2975 = vunpack.c.l.s4 1983009808
        %v2976 = vunpack.c.0.s8 %v2975
        %v2977 = vlaneseq
        %v2978 = vshrl.u32 %v2977, 7
        %v2979 = vsub.s32 %v2976, %v2978
        %v2980 = vrot.slane %v2868, %v2979
        %v2982 = vunpack.c.l.s4 1983009808
        %v2983 = vunpack.c.0.s8 %v2982
        %v2984 = vlaneseq
        %v2985 = vshrl.u32 %v2984, 7
        %v2986 = vsub.s32 %v2983, %v2985
        %v2987 = vrot.slane %v2875, %v2986
        %v2989 = vunpack.c.l.s4 1983009808
        %v2990 = vunpack.c.0.s8 %v2989
        %v2991 = vlaneseq
        %v2992 = vshrl.u32 %v2991, 7
        %v2993 = vsub.s32 %v2990, %v2992
        %v2994 = vrot.slane %v2882, %v2993
        %v2996 = vunpack.c.l.s4 1983009808
        %v2997 = vunpack.c.0.s8 %v2996
        %v2998 = vlaneseq
        %v2999 = vshrl.u32 %v2998, 7
        %v3000 = vsub.s32 %v2997, %v2999
        %v3001 = vrot.slane %v2889, %v3000
        %v3003 = vunpack.c.l.s4 1983009808
        %v3004 = vunpack.c.0.s8 %v3003
        %v3005 = vlaneseq
        %v3006 = vshrl.u32 %v3005, 7
        %v3007 = vsub.s32 %v3004, %v3006
        %v3008 = vrot.slane %v2896, %v3007
        %v3010 = vunpack.c.l.s4 1983009808
        %v3011 = vunpack.c.0.s8 %v3010
        %v3012 = vlaneseq
        %v3013 = vshrl.u32 %v3012, 7
        %v3014 = vsub.s32 %v3011, %v3013
        %v3015 = vrot.slane %v2903, %v3014
        %v3016 = vunpack.c.l.b16 %v2910
        %v3017 = vunpack.c.l.b16 %v2917
        %v3018 = vunpack.c.l.b16 %v2924
        %v3019 = vunpack.c.l.b16 %v2931
        %v3020 = vunpack.c.l.b16 %v2938
        %v3021 = vunpack.c.l.b16 %v2945
        %v3022 = vunpack.c.l.b16 %v2952
        %v3023 = vunpack.c.l.b16 %v2959
        %v3024 = vunpack.c.l.b16 %v2966
        %v3025 = vunpack.c.l.b16 %v2973
        %v3026 = vunpack.c.l.b16 %v2980
        %v3027 = vunpack.c.l.b16 %v2987
        %v3028 = vunpack.c.l.b16 %v2994
        %v3029 = vunpack.c.l.b16 %v3001
        %v3030 = vunpack.c.l.b16 %v3008
        %v3031 = vunpack.c.l.b16 %v3015
        %v3032 = vrot.slane %v3017, 7
        %vm3033 = vcmask 1041409
        %v3034 = vsel %vm3033, %v3032, %v3016
        %v3035 = vrot.slane %v3018, 6
        %vm3036 = vcmask 1042434
        %v3037 = vsel %vm3036, %v3035, %v3034
        %v3038 = vrot.slane %v3019, 5
        %vm3039 = vcmask 1043459
        %v3040 = vsel %vm3039, %v3038, %v3037
        %v3041 = vrot.slane %v3021, 7
        %v3042 = vsel %vm3033, %v3041, %v3020
        %v3043 = vrot.slane %v3022, 6
        %v3044 = vsel %vm3036, %v3043, %v3042
        %v3045 = vrot.slane %v3023, 5
        %v3046 = vsel %vm3039, %v3045, %v3044
        %v3047 = vrot.slane %v3025, 7
        %v3048 = vsel %vm3033, %v3047, %v3024
        %v3049 = vrot.slane %v3026, 6
        %v3050 = vsel %vm3036, %v3049, %v3048
        %v3051 = vrot.slane %v3027, 5
        %v3052 = vsel %vm3039, %v3051, %v3050
        %v3053 = vrot.slane %v3029, 7
        %v3054 = vsel %vm3033, %v3053, %v3028
        %v3055 = vrot.slane %v3030, 6
        %v3056 = vsel %vm3036, %v3055, %v3054
        %v3057 = vrot.slane %v3031, 5
        %v3058 = vsel %vm3039, %v3057, %v3056
        %v3059 = vpack.c.b16 %v3040, %v3040
        %v3060 = vpack.c.b16 %v3046, %v3046
        %v3061 = vpack.c.b16 %v3052, %v3052
        %v3062 = vpack.c.b16 %v3058, %v3058
        %v3064 = vunpack.c.l.s4 1983009808
        %v3065 = vunpack.c.0.s8 %v3064
        %v3066 = vlaneseq
        %v3067 = vshrl.u32 %v3066, 7
        %v3068 = vsub.s32 %v3065, %v3067
        %v3069 = vrot.slane %v3059, %v3068
        %v3071 = vunpack.c.l.s4 1983009808
        %v3072 = vunpack.c.0.s8 %v3071
        %v3073 = vlaneseq
        %v3074 = vshrl.u32 %v3073, 7
        %v3075 = vsub.s32 %v3072, %v3074
        %v3076 = vrot.slane %v3060, %v3075
        %v3078 = vunpack.c.l.s4 1983009808
        %v3079 = vunpack.c.0.s8 %v3078
        %v3080 = vlaneseq
        %v3081 = vshrl.u32 %v3080, 7
        %v3082 = vsub.s32 %v3079, %v3081
        %v3083 = vrot.slane %v3061, %v3082
        %v3085 = vunpack.c.l.s4 1983009808
        %v3086 = vunpack.c.0.s8 %v3085
        %v3087 = vlaneseq
        %v3088 = vshrl.u32 %v3087, 7
        %v3089 = vsub.s32 %v3086, %v3088
        %v3090 = vrot.slane %v3062, %v3089
        %3095 = vst [vmem:[%s232] sm:$0x3] %v3069
        %3096 = vst [vmem:[%s232 + $0x2] sm:$0x3] %v3076
        %3097 = vst [vmem:[%s232 + $0x4] sm:$0x3] %v3083
        %3098 = vst [vmem:[%s232 + $0x6] sm:$0x3] %v3090
        %p3099 = scmp.lt.s32.totalorder %s20, 1
        %s3100 = scalar_select %p3099, %s20, 1
        %p3101 = scmp.lt.s32.totalorder %s21, 0
        %s3102 = scalar_select %p3101, %s21, 0
        %s3103 = smul.addr %s3100, 4
        %s3104 = sadd.s32 %s3102, %s3103
        %s3105 = smul.addr %s3104, 2
        %s3106 = scalar_lea.vmem %s3, %s3105
        // Predicated region
        $region45: #{forward.6} parent=31 // pred_check
          %p3107 = pneg %p126
        $region46: #{forward.6} parent=31 // pred_check_branch
          %3109 = sbr.rel (%p3107) target = $region48
        $region47: #{forward.6} parent=31 // pred_region
          _
        $region48: #{forward.6} parent=31 // pred_fallthru
          _
      $region32: #{forward.6} parent=5 // pred_fallthru
        _
      %p3110 = scmp.le.s32.totalorder 2, %s11
      // Predicated region
      $region49: #{forward.6} parent=5 // pred_check
        %p3111 = pneg %p3110
      $region50: #{forward.6} parent=5 // pred_check_branch
        %3113 = sbr.rel (%p3111) target = $region52
      $region51: #{forward.6} parent=5 // pred_region
        %s3114 = ssub.s32 %s11, 2
        // Predicated region
        $region53: #{forward.6} parent=51 // pred_check
          %p3115 = pneg %p132
        $region54: #{forward.6} parent=51 // pred_check_branch
          %3117 = sbr.rel (%p3115) target = $region56
        $region55: #{forward.6} parent=51 // pred_region
          %p3118 = scmp.lt.s32.totalorder %s22, 1
          %s3119 = scalar_select %p3118, %s22, 1
          %p3120 = scmp.lt.s32.totalorder %s23, 0
          %s3121 = scalar_select %p3120, %s23, 0
          %s3122 = smul.addr %s3119, 4
          %s3123 = sadd.s32 %s3121, %s3122
          %s3124 = smul.addr %s3123, 2
          %s3125 = scalar_lea.vmem %s3, %s3124
        $region56: #{forward.6} parent=51 // pred_fallthru
          _
      $region52: #{forward.6} parent=5 // pred_fallthru
        _
    $region6: #{forward.6} parent=1 // loop_footer
      %s15 = sadd.s32 1, %s11
    $region7: #{forward.6} parent=1 // loop_footer_branch
      %10 = sbr.rel target = $region3
    $region8: #{forward.6} parent=1 // loop_exit
      _
    %3126 = vsyncpa [#allocation4], 1
    %s3127 = scalar_lea.sflag [#allocation4], 1
    %3128 = vsyncpa %s3127, 1
    %3129 = vsyncpa [#allocation6], 1

// kernel: forward.5
$region0: #{forward.5}
  #allocation0 [shape = 'u32[]', space=smem, size = 0x4, offset = 0x4, fixed_abs, tag = 'smem constant byte address 0x4 - core index']
  #allocation1 [shape = 'u32[144,128]{1,0:T(1,128)}', space=vmem, size = 0x12000, scoped, tag = 'internal scratch']
  #allocation2 [shape = 'bf16[18,18,3]{2,1,0:T(8,128)(2,1)}', space=vmem, size = 0x1b000, scoped, tag = 'scratch operand']
  %s0 = inlined_call_operand.vmem [shape: bf16[2,16,16,3], index: 0, kind: input, shape index: {}]
  %s1 = inlined_call_operand.hbm [shape: bf16[9,3,128], index: 1, kind: input, shape index: {}]
  %s2 = inlined_call_operand.hbm [shape: f32[1,128], index: 2, kind: input, shape index: {}]
  %s3 = inlined_call_operand.vmem [shape: bf16[2,8,8,128], index: 3, kind: output, shape index: {}]
  %s4 = sld [smem:[#allocation0]]
  $region57: #{forward.5} parent=0
    _
  %s6 = ssub.s32 1, %s4
  %s7 = scalar_select 0, %s6, %s4
  $region1: #{forward.5} parent=0
    #allocation3 [shape = 'u8[9216]{0}', space=vmem, size = 0x2400, scoped, tag = 'input window, operand 1, single buffered']
    #allocation4 [shape = 's32[2]{0}', space=sflag, size = 0x8, scoped, tag = 'scoped memory for forward.5']
    #allocation5 [shape = 'u8[512]{0}', space=vmem, size = 0x400, scoped, tag = 'input window, operand 2, single buffered']
    #allocation6 [shape = 's32[1]{0}', space=sflag, size = 0x4, scoped, tag = 'scoped memory for forward.5']
    %8 = vsyncpa [#allocation4], 0
    %9 = vsyncpa [#allocation6], 0
    loop: start=0, step=1, limit=4
    $region2: #{forward.5} parent=1 // loop_pre_header
      _
    $region3: #{forward.5} parent=1 // loop_header
      %s11 = sphi 0, %s15
      %p12 = scmp.ge.s32.totalorder %s11, 4
      %s18 = sphi 0, %s30
      %s19 = sphi 0, %s26
      %s20 = sphi 0, %s18
      %s21 = sphi 0, %s19
      %s22 = sphi 0, %s20
      %s23 = sphi 0, %s21
      %s33 = sphi 0, %s35
      %s36 = sphi 0, %s33
      %s37 = sphi 0, %s36
      %s53 = sphi 0, %s37
      %s59 = sphi 0, %s61
      %s62 = sphi 0, %s59
      %s63 = sphi 0, %s62
      %s79 = sphi 0, %s63
      %s85 = sphi 0, %s87
      %s88 = sphi 0, %s85
      %s89 = sphi 0, %s88
      %s105 = sphi 0, %s89
      %s113 = sphi 0, %s115
      %s116 = sphi 0, %s113
      %s117 = sphi 0, %s116
      %s133 = sphi 0, %s117
    $region4: #{forward.5} parent=1 // loop_header_branch
      %14 = sbr.rel (%p12) target = $region8
    $region5: #{forward.5} parent=1 // loop_body
      %s16 = ssub.s32 %s11, 1
      %s17 = ssub.s32 %s11, 2
      %s24 = sadd.s32 1, %s19
      %p25 = scmp.ge.s32.totalorder %s24, 1
      %s26 = scalar_select %p25, 0, %s24
      %s27 = sadd.s32 1, %s18
      %s28 = scalar_select %p25, %s27, %s18
      %p29 = scmp.ge.s32.totalorder %s28, 2
      %s30 = scalar_select %p29, 0, %s28
      %s31 = ssub.s32 %s18, %s30
      %p32 = scmp.eq.s32.totalorder %s31, 0
      %s34 = sadd.s32 %s33, 1
      %s35 = scalar_select %p32, %s33, %s34
      %p38 = pneg %p32
      %p39 = scmp.eq.s32.totalorder %s11, 1
      %p40 = por %p38, %p39
      %p41 = scmp.ne.s32.totalorder %s33, %s36
      %p42 = scmp.eq.s32.totalorder %s11, 0
      %p43 = por %p41, %p42
      %p44 = scmp.ne.s32.totalorder %s33, %s36
      %p45 = scmp.eq.s32.totalorder %s16, 1
      %p46 = por %p44, %p45
      %p47 = scmp.ne.s32.totalorder %s36, %s37
      %p48 = scmp.eq.s32.totalorder %s16, 0
      %p49 = por %p47, %p48
      %p50 = scmp.ne.s32.totalorder %s36, %s37
      %p51 = scmp.eq.s32.totalorder %s17, 1
      %p52 = por %p50, %p51
      %p54 = scmp.ne.s32.totalorder %s37, %s53
      %p55 = scmp.eq.s32.totalorder %s17, 0
      %p56 = por %p54, %p55
      %s57 = ssub.s32 %s19, %s26
      %p58 = scmp.eq.s32.totalorder %s57, 0
      %s60 = sadd.s32 %s59, 1
      %s61 = scalar_select %p58, %s59, %s60
      %p64 = pneg %p58
      %p65 = scmp.eq.s32.totalorder %s11, 1
      %p66 = por %p64, %p65
      %p67 = scmp.ne.s32.totalorder %s59, %s62
      %p68 = scmp.eq.s32.totalorder %s11, 0
      %p69 = por %p67, %p68
      %p70 = scmp.ne.s32.totalorder %s59, %s62
      %p71 = scmp.eq.s32.totalorder %s16, 1
      %p72 = por %p70, %p71
      %p73 = scmp.ne.s32.totalorder %s62, %s63
      %p74 = scmp.eq.s32.totalorder %s16, 0
      %p75 = por %p73, %p74
      %p76 = scmp.ne.s32.totalorder %s62, %s63
      %p77 = scmp.eq.s32.totalorder %s17, 1
      %p78 = por %p76, %p77
      %p80 = scmp.ne.s32.totalorder %s63, %s79
      %p81 = scmp.eq.s32.totalorder %s17, 0
      %p82 = por %p80, %p81
      %s83 = ssub.s32 %s19, %s26
      %p84 = scmp.eq.s32.totalorder %s83, 0
      %s86 = sadd.s32 %s85, 1
      %s87 = scalar_select %p84, %s85, %s86
      %p90 = pneg %p84
      %p91 = scmp.eq.s32.totalorder %s11, 1
      %p92 = por %p90, %p91
      %p93 = scmp.ne.s32.totalorder %s85, %s88
      %p94 = scmp.eq.s32.totalorder %s11, 0
      %p95 = por %p93, %p94
      %p96 = scmp.ne.s32.totalorder %s85, %s88
      %p97 = scmp.eq.s32.totalorder %s16, 1
      %p98 = por %p96, %p97
      %p99 = scmp.ne.s32.totalorder %s88, %s89
      %p100 = scmp.eq.s32.totalorder %s16, 0
      %p101 = por %p99, %p100
      %p102 = scmp.ne.s32.totalorder %s88, %s89
      %p103 = scmp.eq.s32.totalorder %s17, 1
      %p104 = por %p102, %p103
      %p106 = scmp.ne.s32.totalorder %s89, %s105
      %p107 = scmp.eq.s32.totalorder %s17, 0
      %p108 = por %p106, %p107
      %s109 = ssub.s32 %s18, %s30
      %s110 = ssub.s32 %s19, %s26
      %s111 = sor.u32 %s109, %s110
      %p112 = scmp.eq.s32.totalorder %s111, 0
      %s114 = sadd.s32 %s113, 1
      %s115 = scalar_select %p112, %s113, %s114
      %p118 = pneg %p112
      %p119 = scmp.eq.s32.totalorder %s11, 1
      %p120 = por %p118, %p119
      %p121 = scmp.ne.s32.totalorder %s113, %s116
      %p122 = scmp.eq.s32.totalorder %s11, 0
      %p123 = por %p121, %p122
      %p124 = scmp.ne.s32.totalorder %s113, %s116
      %p125 = scmp.eq.s32.totalorder %s16, 1
      %p126 = por %p124, %p125
      %p127 = scmp.ne.s32.totalorder %s116, %s117
      %p128 = scmp.eq.s32.totalorder %s16, 0
      %p129 = por %p127, %p128
      %p130 = scmp.ne.s32.totalorder %s116, %s117
      %p131 = scmp.eq.s32.totalorder %s17, 1
      %p132 = por %p130, %p131
      %p134 = scmp.ne.s32.totalorder %s117, %s133
      %p135 = scmp.eq.s32.totalorder %s17, 0
      %p136 = por %p134, %p135
      %p137 = scmp.le.s32.totalorder 1, %s11
      %p138 = scmp.lt.s32.totalorder %s11, 3
      %p139 = pnand %p137, %p138
      %p140 = pneg %p139
      // Predicated region
      $region9: #{forward.5} parent=5 // pred_check
        _
      $region10: #{forward.5} parent=5 // pred_check_branch
        %142 = sbr.rel (%p139) target = $region12
      $region11: #{forward.5} parent=5 // pred_region
        %s143 = ssub.s32 %s11, 1
        // Predicated region
        $region13: #{forward.5} parent=11 // pred_check
          %p144 = pneg %p75
        $region14: #{forward.5} parent=11 // pred_check_branch
          %146 = sbr.rel (%p144) target = $region16
        $region15: #{forward.5} parent=11 // pred_region
          %s148 = ssub.s32 288, 288
          %149 = vsyncadd [#allocation4], %s148
          %s150 = smul.addr %s21, 32
          %s151 = scalar_lea.hbm %s1, %s150
          %s152 = sshll.u32 [#allocation3], 4
          %s153 = int_to_ptr.vmem [resolvable:$true] %s152
          %158 = dma.hbm_to_vmem [thread:$0]  %s151, 288, %s153, [#allocation4], 32, 32, 2
        $region16: #{forward.5} parent=11 // pred_fallthru
          _
        // Predicated region
        $region17: #{forward.5} parent=11 // pred_check
          %p159 = pneg %p101
        $region18: #{forward.5} parent=11 // pred_check_branch
          %161 = sbr.rel (%p159) target = $region20
        $region19: #{forward.5} parent=11 // pred_region
          %s163 = ssub.s32 16, 16
          %164 = vsyncadd [#allocation6], %s163
          %s165 = smul.addr %s21, 16
          %s166 = scalar_lea.hbm %s2, %s165
          %s168 = sshll.u32 [#allocation5], 4
          %s169 = int_to_ptr.vmem [resolvable:$true] %s168
          %171 = dma.hbm_to_vmem [thread:$0]  %s166, 16, %s169, [#allocation6]
        $region20: #{forward.5} parent=11 // pred_fallthru
          _
      $region12: #{forward.5} parent=5 // pred_fallthru
        _
      %p172 = scmp.lt.s32.totalorder %s11, 2
      // Predicated region
      $region21: #{forward.5} parent=5 // pred_check
        %p173 = pneg %p172
      $region22: #{forward.5} parent=5 // pred_check_branch
        %175 = sbr.rel (%p173) target = $region24
      $region23: #{forward.5} parent=5 // pred_region
        // Predicated region
        $region25: #{forward.5} parent=23 // pred_check
          %p176 = pneg %p43
        $region26: #{forward.5} parent=23 // pred_check_branch
          %178 = sbr.rel (%p176) target = $region28
        $region27: #{forward.5} parent=23 // pred_region
          %p179 = scmp.lt.s32.totalorder %s18, 1
          %s180 = scalar_select %p179, %s18, 1
          %s181 = smul.addr %s180, 32
          %s182 = smul.addr %s181, 4
          %s183 = scalar_lea.vmem %s0, %s182
        $region28: #{forward.5} parent=23 // pred_fallthru
          _
      $region24: #{forward.5} parent=5 // pred_fallthru
        _
      %p184 = scmp.le.s32.totalorder 1, %s11
      %p185 = scmp.lt.s32.totalorder %s11, 3
      %p186 = pnand %p184, %p185
      %p187 = pneg %p186
      // Predicated region
      $region29: #{forward.5} parent=5 // pred_check
        _
      $region30: #{forward.5} parent=5 // pred_check_branch
        %189 = sbr.rel (%p186) target = $region32
      $region31: #{forward.5} parent=5 // pred_region
        %s190 = ssub.s32 %s11, 1
        // Predicated region
        $region33: #{forward.5} parent=31 // pred_check
          %p191 = pneg %p75
        $region34: #{forward.5} parent=31 // pred_check_branch
          %193 = sbr.rel (%p191) target = $region36
        $region35: #{forward.5} parent=31 // pred_region
          %194 = dma.done [#allocation4], 288
        $region36: #{forward.5} parent=31 // pred_fallthru
          _
        // Predicated region
        $region37: #{forward.5} parent=31 // pred_check
          %p195 = pneg %p101
        $region38: #{forward.5} parent=31 // pred_check_branch
          %197 = sbr.rel (%p195) target = $region40
        $region39: #{forward.5} parent=31 // pred_region
          %198 = dma.done [#allocation6], 16
        $region40: #{forward.5} parent=31 // pred_fallthru
          _
        %p199 = scmp.lt.s32.totalorder %s20, 1
        %s200 = scalar_select %p199, %s20, 1
        %s201 = smul.addr %s200, 32
        %s202 = smul.addr %s201, 4
        %s203 = scalar_lea.vmem %s0, %s202
        %p204 = pneg %p49
        %p205 = pneg %p46
        %p206 = pneg %p75
        %p207 = pneg %p72
        %p208 = pneg %p101
        %p209 = pneg %p98
        %p210 = pneg %p129
        %p211 = pneg %p126
        %p212 = scmp.lt.s32.totalorder %s20, 1
        %s213 = scalar_select %p212, %s20, 1
        %p214 = scmp.lt.s32.totalorder %s21, 0
        %s215 = scalar_select %p214, %s21, 0
        %s216 = smul.addr %s213, 8
        %s217 = sadd.s32 %s215, %s216
        %s218 = smul.addr %s217, 4
        %s219 = scalar_lea.vmem %s3, %s218
        %p220 = scmp.lt.s32.totalorder %s20, 1
        %s221 = scalar_select %p220, %s20, 1
        %s222 = smul.addr %s221, 32
        %s223 = smul.addr %s222, 4
        %s224 = scalar_lea.vmem %s0, %s223
        %p225 = scmp.lt.s32.totalorder %s20, 1
        %s226 = scalar_select %p225, %s20, 1
        %p227 = scmp.lt.s32.totalorder %s21, 0
        %s228 = scalar_select %p227, %s21, 0
        %s229 = smul.addr %s226, 8
        %s230 = sadd.s32 %s228, %s229
        %s231 = smul.addr %s230, 4
        %s232 = scalar_lea.vmem %s3, %s231
        %p234 = scmp.eq.s32.totalorder %s21, 0
        // Predicated region
        $region41: #{forward.5} parent=31 // pred_check
          %p235 = pneg %p234
        $region42: #{forward.5} parent=31 // pred_check_branch
          %237 = sbr.rel (%p235) target = $region44
        $region43: #{forward.5} parent=31 // pred_region
          %vm238 = vcmask 19456
          %239 = vst.msk [vmem:[#allocation2] sm:$0xf] %vm238, 0
          %240 = vst.msk [vmem:[#allocation2 + $0x4] sm:$0xf] %vm238, 0
          %vm241 = vcmask 16384
          %242 = vst.msk [vmem:[#allocation2 + $0x8] sm:$0x1] %vm241, 0
          %s243 = scalar_lea.vmem [#allocation2], 204
          %244 = vst.msk [vmem:[%s243] sm:$0xf] %vm238, 0
          %245 = vst.msk [vmem:[%s243 + $0x4] sm:$0xf] %vm238, 0
          %246 = vst.msk [vmem:[%s243 + $0x8] sm:$0x1] %vm241, 0
          %vm247 = vcmask 16384
          %vm248 = vsmask.f32 256
          %vm249 = vmand %vm247, %vm248
          %v250 = vld [vmem:[#allocation2] sm:$0x1]
          %v251 = vsel %vm249, 0, %v250
          %252 = vst [vmem:[#allocation2] sm:$0x1] %v251
          %v253 = vld [vmem:[#allocation2 + $0xc] sm:$0x1]
          %v254 = vsel %vm249, 0, %v253
          %255 = vst [vmem:[#allocation2 + $0xc] sm:$0x1] %v254
          %v256 = vld [vmem:[#allocation2 + $0x18] sm:$0x1]
          %v257 = vsel %vm249, 0, %v256
          %258 = vst [vmem:[#allocation2 + $0x18] sm:$0x1] %v257
          %v259 = vld [vmem:[#allocation2 + $0x24] sm:$0x1]
          %v260 = vsel %vm249, 0, %v259
          %261 = vst [vmem:[#allocation2 + $0x24] sm:$0x1] %v260
          %v262 = vld [vmem:[#allocation2 + $0x30] sm:$0x1]
          %v263 = vsel %vm249, 0, %v262
          %264 = vst [vmem:[#allocation2 + $0x30] sm:$0x1] %v263
          %v265 = vld [vmem:[#allocation2 + $0x3c] sm:$0x1]
          %v266 = vsel %vm249, 0, %v265
          %267 = vst [vmem:[#allocation2 + $0x3c] sm:$0x1] %v266
          %v268 = vld [vmem:[#allocation2 + $0x48] sm:$0x1]
          %v269 = vsel %vm249, 0, %v268
          %270 = vst [vmem:[#allocation2 + $0x48] sm:$0x1] %v269
          %v271 = vld [vmem:[#allocation2 + $0x54] sm:$0x1]
          %v272 = vsel %vm249, 0, %v271
          %273 = vst [vmem:[#allocation2 + $0x54] sm:$0x1] %v272
          %v274 = vld [vmem:[#allocation2 + $0x60] sm:$0x1]
          %v275 = vsel %vm249, 0, %v274
          %276 = vst [vmem:[#allocation2 + $0x60] sm:$0x1] %v275
          %v277 = vld [vmem:[#allocation2 + $0x6c] sm:$0x1]
          %v278 = vsel %vm249, 0, %v277
          %279 = vst [vmem:[#allocation2 + $0x6c] sm:$0x1] %v278
          %v280 = vld [vmem:[#allocation2 + $0x78] sm:$0x1]
          %v281 = vsel %vm249, 0, %v280
          %282 = vst [vmem:[#allocation2 + $0x78] sm:$0x1] %v281
          %v283 = vld [vmem:[#allocation2 + $0x84] sm:$0x1]
          %v284 = vsel %vm249, 0, %v283
          %285 = vst [vmem:[#allocation2 + $0x84] sm:$0x1] %v284
          %v286 = vld [vmem:[#allocation2 + $0x90] sm:$0x1]
          %v287 = vsel %vm249, 0, %v286
          %288 = vst [vmem:[#allocation2 + $0x90] sm:$0x1] %v287
          %v289 = vld [vmem:[#allocation2 + $0x9c] sm:$0x1]
          %v290 = vsel %vm249, 0, %v289
          %291 = vst [vmem:[#allocation2 + $0x9c] sm:$0x1] %v290
          %v292 = vld [vmem:[#allocation2 + $0xa8] sm:$0x1]
          %v293 = vsel %vm249, 0, %v292
          %294 = vst [vmem:[#allocation2 + $0xa8] sm:$0x1] %v293
          %v295 = vld [vmem:[#allocation2 + $0xb4] sm:$0x1]
          %v296 = vsel %vm249, 0, %v295
          %297 = vst [vmem:[#allocation2 + $0xb4] sm:$0x1] %v296
          %v298 = vld [vmem:[#allocation2 + $0xc0] sm:$0x1]
          %v299 = vsel %vm249, 0, %v298
          %300 = vst [vmem:[#allocation2 + $0xc0] sm:$0x1] %v299
          %v301 = vld [vmem:[#allocation2 + $0xcc] sm:$0x1]
          %v302 = vsel %vm249, 0, %v301
          %303 = vst [vmem:[#allocation2 + $0xcc] sm:$0x1] %v302
          %vm304 = vsmask.f32 7938
          %vm305 = vmand %vm247, %vm304
          %v306 = vld [vmem:[#allocation2 + $0x8] sm:$0x1]
          %v307 = vsel %vm305, 0, %v306
          %308 = vst [vmem:[#allocation2 + $0x8] sm:$0x1] %v307
          %v309 = vld [vmem:[#allocation2 + $0x14] sm:$0x1]
          %v310 = vsel %vm305, 0, %v309
          %311 = vst [vmem:[#allocation2 + $0x14] sm:$0x1] %v310
          %v312 = vld [vmem:[#allocation2 + $0x20] sm:$0x1]
          %v313 = vsel %vm305, 0, %v312
          %314 = vst [vmem:[#allocation2 + $0x20] sm:$0x1] %v313
          %v315 = vld [vmem:[#allocation2 + $0x2c] sm:$0x1]
          %v316 = vsel %vm305, 0, %v315
          %317 = vst [vmem:[#allocation2 + $0x2c] sm:$0x1] %v316
          %v318 = vld [vmem:[#allocation2 + $0x38] sm:$0x1]
          %v319 = vsel %vm305, 0, %v318
          %320 = vst [vmem:[#allocation2 + $0x38] sm:$0x1] %v319
          %v321 = vld [vmem:[#allocation2 + $0x44] sm:$0x1]
          %v322 = vsel %vm305, 0, %v321
          %323 = vst [vmem:[#allocation2 + $0x44] sm:$0x1] %v322
          %v324 = vld [vmem:[#allocation2 + $0x50] sm:$0x1]
          %v325 = vsel %vm305, 0, %v324
          %326 = vst [vmem:[#allocation2 + $0x50] sm:$0x1] %v325
          %v327 = vld [vmem:[#allocation2 + $0x5c] sm:$0x1]
          %v328 = vsel %vm305, 0, %v327
          %329 = vst [vmem:[#allocation2 + $0x5c] sm:$0x1] %v328
          %v330 = vld [vmem:[#allocation2 + $0x68] sm:$0x1]
          %v331 = vsel %vm305, 0, %v330
          %332 = vst [vmem:[#allocation2 + $0x68] sm:$0x1] %v331
          %v333 = vld [vmem:[#allocation2 + $0x74] sm:$0x1]
          %v334 = vsel %vm305, 0, %v333
          %335 = vst [vmem:[#allocation2 + $0x74] sm:$0x1] %v334
          %v336 = vld [vmem:[#allocation2 + $0x80] sm:$0x1]
          %v337 = vsel %vm305, 0, %v336
          %338 = vst [vmem:[#allocation2 + $0x80] sm:$0x1] %v337
          %v339 = vld [vmem:[#allocation2 + $0x8c] sm:$0x1]
          %v340 = vsel %vm305, 0, %v339
          %341 = vst [vmem:[#allocation2 + $0x8c] sm:$0x1] %v340
          %v342 = vld [vmem:[#allocation2 + $0x98] sm:$0x1]
          %v343 = vsel %vm305, 0, %v342
          %344 = vst [vmem:[#allocation2 + $0x98] sm:$0x1] %v343
          %v345 = vld [vmem:[#allocation2 + $0xa4] sm:$0x1]
          %v346 = vsel %vm305, 0, %v345
          %347 = vst [vmem:[#allocation2 + $0xa4] sm:$0x1] %v346
          %v348 = vld [vmem:[#allocation2 + $0xb0] sm:$0x1]
          %v349 = vsel %vm305, 0, %v348
          %350 = vst [vmem:[#allocation2 + $0xb0] sm:$0x1] %v349
          %v351 = vld [vmem:[#allocation2 + $0xbc] sm:$0x1]
          %v352 = vsel %vm305, 0, %v351
          %353 = vst [vmem:[#allocation2 + $0xbc] sm:$0x1] %v352
          %v354 = vld [vmem:[#allocation2 + $0xc8] sm:$0x1]
          %v355 = vsel %vm305, 0, %v354
          %356 = vst [vmem:[#allocation2 + $0xc8] sm:$0x1] %v355
          %v357 = vld [vmem:[#allocation2 + $0xd4] sm:$0x1]
          %v358 = vsel %vm305, 0, %v357
          %359 = vst [vmem:[#allocation2 + $0xd4] sm:$0x1] %v358
          %v360 = vld [vmem:[%s224] sm:$0xf]
          %v361 = vld [vmem:[%s224 + $0x4] sm:$0xf]
          %v362 = vld [vmem:[%s224 + $0x8] sm:$0xf]
          %v363 = vld [vmem:[%s224 + $0xc] sm:$0xf]
          %v364 = vld [vmem:[%s224 + $0x10] sm:$0xf]
          %v365 = vld [vmem:[%s224 + $0x14] sm:$0xf]
          %v366 = vld [vmem:[%s224 + $0x18] sm:$0xf]
          %v367 = vld [vmem:[%s224 + $0x1c] sm:$0xf]
          %v368 = vld [vmem:[%s224 + $0x20] sm:$0xf]
          %v369 = vld [vmem:[%s224 + $0x24] sm:$0xf]
          %v370 = vld [vmem:[%s224 + $0x28] sm:$0xf]
          %v371 = vld [vmem:[%s224 + $0x2c] sm:$0xf]
          %v372 = vld [vmem:[%s224 + $0x30] sm:$0xf]
          %v373 = vld [vmem:[%s224 + $0x34] sm:$0xf]
          %v374 = vld [vmem:[%s224 + $0x38] sm:$0xf]
          %v375 = vld [vmem:[%s224 + $0x3c] sm:$0xf]
          %v376 = vld [vmem:[%s224 + $0x40] sm:$0xf]
          %v377 = vld [vmem:[%s224 + $0x44] sm:$0xf]
          %v378 = vld [vmem:[%s224 + $0x48] sm:$0xf]
          %v379 = vld [vmem:[%s224 + $0x4c] sm:$0xf]
          %v380 = vld [vmem:[%s224 + $0x50] sm:$0xf]
          %v381 = vld [vmem:[%s224 + $0x54] sm:$0xf]
          %v382 = vld [vmem:[%s224 + $0x58] sm:$0xf]
          %v383 = vld [vmem:[%s224 + $0x5c] sm:$0xf]
          %v384 = vld [vmem:[%s224 + $0x60] sm:$0xf]
          %v385 = vld [vmem:[%s224 + $0x64] sm:$0xf]
          %v386 = vld [vmem:[%s224 + $0x68] sm:$0xf]
          %v387 = vld [vmem:[%s224 + $0x6c] sm:$0xf]
          %v388 = vld [vmem:[%s224 + $0x70] sm:$0xf]
          %v389 = vld [vmem:[%s224 + $0x74] sm:$0xf]
          %v390 = vld [vmem:[%s224 + $0x78] sm:$0xf]
          %v391 = vld [vmem:[%s224 + $0x7c] sm:$0xf]
          %vm392 = vsmask.f32 4368
          %vm393 = vmor %vm248, %vm392
          %v395 = vshrl.u32 %v360, 16
          %v397 = vrot.slane %v395, 7
          %v398 = vshll.u32 %v360, 16
          %v400 = vor.u32 %v397, %v398
          %v401 = vrot.slane %v397, 4
          %v403 = vshrl.u32 %v361, 16
          %v405 = vrot.slane %v403, 7
          %v406 = vshll.u32 %v361, 16
          %v408 = vor.u32 %v405, %v406
          %v409 = vsel %vm393, %v401, %v408
          %v410 = vrot.slane %v405, 4
          %v412 = vshrl.u32 %v362, 16
          %v414 = vrot.slane %v412, 7
          %v415 = vshll.u32 %v362, 16
          %v417 = vor.u32 %v414, %v415
          %v418 = vrot.slane %v414, 4
          %v420 = vshrl.u32 %v363, 16
          %v422 = vrot.slane %v420, 7
          %v423 = vshll.u32 %v363, 16
          %v425 = vor.u32 %v422, %v423
          %v426 = vsel %vm393, %v418, %v425
          %v427 = vrot.slane %v422, 4
          %v429 = vshrl.u32 %v364, 16
          %v431 = vrot.slane %v429, 7
          %v432 = vshll.u32 %v364, 16
          %v434 = vor.u32 %v431, %v432
          %v435 = vrot.slane %v431, 4
          %v437 = vshrl.u32 %v365, 16
          %v439 = vrot.slane %v437, 7
          %v440 = vshll.u32 %v365, 16
          %v442 = vor.u32 %v439, %v440
          %v443 = vsel %vm393, %v435, %v442
          %v444 = vrot.slane %v439, 4
          %v446 = vshrl.u32 %v366, 16
          %v448 = vrot.slane %v446, 7
          %v449 = vshll.u32 %v366, 16
          %v451 = vor.u32 %v448, %v449
          %v452 = vrot.slane %v448, 4
          %v454 = vshrl.u32 %v367, 16
          %v456 = vrot.slane %v454, 7
          %v457 = vshll.u32 %v367, 16
          %v459 = vor.u32 %v456, %v457
          %v460 = vsel %vm393, %v452, %v459
          %v461 = vrot.slane %v456, 4
          %v463 = vshrl.u32 %v368, 16
          %v465 = vrot.slane %v463, 7
          %v466 = vshll.u32 %v368, 16
          %v468 = vor.u32 %v465, %v466
          %v469 = vrot.slane %v465, 4
          %v471 = vshrl.u32 %v369, 16
          %v473 = vrot.slane %v471, 7
          %v474 = vshll.u32 %v369, 16
          %v476 = vor.u32 %v473, %v474
          %v477 = vsel %vm393, %v469, %v476
          %v478 = vrot.slane %v473, 4
          %v480 = vshrl.u32 %v370, 16
          %v482 = vrot.slane %v480, 7
          %v483 = vshll.u32 %v370, 16
          %v485 = vor.u32 %v482, %v483
          %v486 = vrot.slane %v482, 4
          %v488 = vshrl.u32 %v371, 16
          %v490 = vrot.slane %v488, 7
          %v491 = vshll.u32 %v371, 16
          %v493 = vor.u32 %v490, %v491
          %v494 = vsel %vm393, %v486, %v493
          %v495 = vrot.slane %v490, 4
          %v497 = vshrl.u32 %v372, 16
          %v499 = vrot.slane %v497, 7
          %v500 = vshll.u32 %v372, 16
          %v502 = vor.u32 %v499, %v500
          %v503 = vrot.slane %v499, 4
          %v505 = vshrl.u32 %v373, 16
          %v507 = vrot.slane %v505, 7
          %v508 = vshll.u32 %v373, 16
          %v510 = vor.u32 %v507, %v508
          %v511 = vsel %vm393, %v503, %v510
          %v512 = vrot.slane %v507, 4
          %v514 = vshrl.u32 %v374, 16
          %v516 = vrot.slane %v514, 7
          %v517 = vshll.u32 %v374, 16
          %v519 = vor.u32 %v516, %v517
          %v520 = vrot.slane %v516, 4
          %v522 = vshrl.u32 %v375, 16
          %v524 = vrot.slane %v522, 7
          %v525 = vshll.u32 %v375, 16
          %v527 = vor.u32 %v524, %v525
          %v528 = vsel %vm393, %v520, %v527
          %v529 = vrot.slane %v524, 4
          %v531 = vshrl.u32 %v376, 16
          %v533 = vrot.slane %v531, 7
          %v534 = vshll.u32 %v376, 16
          %v536 = vor.u32 %v533, %v534
          %v537 = vrot.slane %v533, 4
          %v539 = vshrl.u32 %v377, 16
          %v541 = vrot.slane %v539, 7
          %v542 = vshll.u32 %v377, 16
          %v544 = vor.u32 %v541, %v542
          %v545 = vsel %vm393, %v537, %v544
          %v546 = vrot.slane %v541, 4
          %v548 = vshrl.u32 %v378, 16
          %v550 = vrot.slane %v548, 7
          %v551 = vshll.u32 %v378, 16
          %v553 = vor.u32 %v550, %v551
          %v554 = vrot.slane %v550, 4
          %v556 = vshrl.u32 %v379, 16
          %v558 = vrot.slane %v556, 7
          %v559 = vshll.u32 %v379, 16
          %v561 = vor.u32 %v558, %v559
          %v562 = vsel %vm393, %v554, %v561
          %v563 = vrot.slane %v558, 4
          %v565 = vshrl.u32 %v380, 16
          %v567 = vrot.slane %v565, 7
          %v568 = vshll.u32 %v380, 16
          %v570 = vor.u32 %v567, %v568
          %v571 = vrot.slane %v567, 4
          %v573 = vshrl.u32 %v381, 16
          %v575 = vrot.slane %v573, 7
          %v576 = vshll.u32 %v381, 16
          %v578 = vor.u32 %v575, %v576
          %v579 = vsel %vm393, %v571, %v578
          %v580 = vrot.slane %v575, 4
          %v582 = vshrl.u32 %v382, 16
          %v584 = vrot.slane %v582, 7
          %v585 = vshll.u32 %v382, 16
          %v587 = vor.u32 %v584, %v585
          %v588 = vrot.slane %v584, 4
          %v590 = vshrl.u32 %v383, 16
          %v592 = vrot.slane %v590, 7
          %v593 = vshll.u32 %v383, 16
          %v595 = vor.u32 %v592, %v593
          %v596 = vsel %vm393, %v588, %v595
          %v597 = vrot.slane %v592, 4
          %v599 = vshrl.u32 %v384, 16
          %v601 = vrot.slane %v599, 7
          %v602 = vshll.u32 %v384, 16
          %v604 = vor.u32 %v601, %v602
          %v605 = vrot.slane %v601, 4
          %v607 = vshrl.u32 %v385, 16
          %v609 = vrot.slane %v607, 7
          %v610 = vshll.u32 %v385, 16
          %v612 = vor.u32 %v609, %v610
          %v613 = vsel %vm393, %v605, %v612
          %v614 = vrot.slane %v609, 4
          %v616 = vshrl.u32 %v386, 16
          %v618 = vrot.slane %v616, 7
          %v619 = vshll.u32 %v386, 16
          %v621 = vor.u32 %v618, %v619
          %v622 = vrot.slane %v618, 4
          %v624 = vshrl.u32 %v387, 16
          %v626 = vrot.slane %v624, 7
          %v627 = vshll.u32 %v387, 16
          %v629 = vor.u32 %v626, %v627
          %v630 = vsel %vm393, %v622, %v629
          %v631 = vrot.slane %v626, 4
          %v633 = vshrl.u32 %v388, 16
          %v635 = vrot.slane %v633, 7
          %v636 = vshll.u32 %v388, 16
          %v638 = vor.u32 %v635, %v636
          %v639 = vrot.slane %v635, 4
          %v641 = vshrl.u32 %v389, 16
          %v643 = vrot.slane %v641, 7
          %v644 = vshll.u32 %v389, 16
          %v646 = vor.u32 %v643, %v644
          %v647 = vsel %vm393, %v639, %v646
          %v648 = vrot.slane %v643, 4
          %v650 = vshrl.u32 %v390, 16
          %v652 = vrot.slane %v650, 7
          %v653 = vshll.u32 %v390, 16
          %v655 = vor.u32 %v652, %v653
          %v656 = vrot.slane %v652, 4
          %v658 = vshrl.u32 %v391, 16
          %v660 = vrot.slane %v658, 7
          %v661 = vshll.u32 %v391, 16
          %v663 = vor.u32 %v660, %v661
          %v664 = vsel %vm393, %v656, %v663
          %v665 = vrot.slane %v660, 4
          %s714 = scalar_lea.vmem [#allocation2], 12
          %vm715 = vcmask 19456
          %vm716 = vmand %vm715, %vm304
          %v717 = vld [vmem:[%s714] sm:$0xf]
          %v718 = vsel %vm716, %v400, %v717
          %719 = vst [vmem:[%s714] sm:$0xf] %v718
          %720 = vst.msk [vmem:[%s714 + $0x4] sm:$0xf] %vm238, %v409
          %v721 = vld [vmem:[%s714 + $0x8] sm:$0x1]
          %v722 = vsel %vm249, %v410, %v721
          %723 = vst [vmem:[%s714 + $0x8] sm:$0x1] %v722
          %v724 = vld [vmem:[%s714 + $0xc] sm:$0xf]
          %v725 = vsel %vm716, %v417, %v724
          %726 = vst [vmem:[%s714 + $0xc] sm:$0xf] %v725
          %727 = vst.msk [vmem:[%s714 + $0x10] sm:$0xf] %vm238, %v426
          %v728 = vld [vmem:[%s714 + $0x14] sm:$0x1]
          %v729 = vsel %vm249, %v427, %v728
          %730 = vst [vmem:[%s714 + $0x14] sm:$0x1] %v729
          %v731 = vld [vmem:[%s714 + $0x18] sm:$0xf]
          %v732 = vsel %vm716, %v434, %v731
          %733 = vst [vmem:[%s714 + $0x18] sm:$0xf] %v732
          %734 = vst.msk [vmem:[%s714 + $0x1c] sm:$0xf] %vm238, %v443
          %v735 = vld [vmem:[%s714 + $0x20] sm:$0x1]
          %v736 = vsel %vm249, %v444, %v735
          %737 = vst [vmem:[%s714 + $0x20] sm:$0x1] %v736
          %v738 = vld [vmem:[%s714 + $0x24] sm:$0xf]
          %v739 = vsel %vm716, %v451, %v738
          %740 = vst [vmem:[%s714 + $0x24] sm:$0xf] %v739
          %741 = vst.msk [vmem:[%s714 + $0x28] sm:$0xf] %vm238, %v460
          %v742 = vld [vmem:[%s714 + $0x2c] sm:$0x1]
          %v743 = vsel %vm249, %v461, %v742
          %744 = vst [vmem:[%s714 + $0x2c] sm:$0x1] %v743
          %v745 = vld [vmem:[%s714 + $0x30] sm:$0xf]
          %v746 = vsel %vm716, %v468, %v745
          %747 = vst [vmem:[%s714 + $0x30] sm:$0xf] %v746
          %748 = vst.msk [vmem:[%s714 + $0x34] sm:$0xf] %vm238, %v477
          %v749 = vld [vmem:[%s714 + $0x38] sm:$0x1]
          %v750 = vsel %vm249, %v478, %v749
          %751 = vst [vmem:[%s714 + $0x38] sm:$0x1] %v750
          %v752 = vld [vmem:[%s714 + $0x3c] sm:$0xf]
          %v753 = vsel %vm716, %v485, %v752
          %754 = vst [vmem:[%s714 + $0x3c] sm:$0xf] %v753
          %755 = vst.msk [vmem:[%s714 + $0x40] sm:$0xf] %vm238, %v494
          %v756 = vld [vmem:[%s714 + $0x44] sm:$0x1]
          %v757 = vsel %vm249, %v495, %v756
          %758 = vst [vmem:[%s714 + $0x44] sm:$0x1] %v757
          %v759 = vld [vmem:[%s714 + $0x48] sm:$0xf]
          %v760 = vsel %vm716, %v502, %v759
          %761 = vst [vmem:[%s714 + $0x48] sm:$0xf] %v760
          %762 = vst.msk [vmem:[%s714 + $0x4c] sm:$0xf] %vm238, %v511
          %v763 = vld [vmem:[%s714 + $0x50] sm:$0x1]
          %v764 = vsel %vm249, %v512, %v763
          %765 = vst [vmem:[%s714 + $0x50] sm:$0x1] %v764
          %v766 = vld [vmem:[%s714 + $0x54] sm:$0xf]
          %v767 = vsel %vm716, %v519, %v766
          %768 = vst [vmem:[%s714 + $0x54] sm:$0xf] %v767
          %769 = vst.msk [vmem:[%s714 + $0x58] sm:$0xf] %vm238, %v528
          %v770 = vld [vmem:[%s714 + $0x5c] sm:$0x1]
          %v771 = vsel %vm249, %v529, %v770
          %772 = vst [vmem:[%s714 + $0x5c] sm:$0x1] %v771
          %v773 = vld [vmem:[%s714 + $0x60] sm:$0xf]
          %v774 = vsel %vm716, %v536, %v773
          %775 = vst [vmem:[%s714 + $0x60] sm:$0xf] %v774
          %776 = vst.msk [vmem:[%s714 + $0x64] sm:$0xf] %vm238, %v545
          %v777 = vld [vmem:[%s714 + $0x68] sm:$0x1]
          %v778 = vsel %vm249, %v546, %v777
          %779 = vst [vmem:[%s714 + $0x68] sm:$0x1] %v778
          %v780 = vld [vmem:[%s714 + $0x6c] sm:$0xf]
          %v781 = vsel %vm716, %v553, %v780
          %782 = vst [vmem:[%s714 + $0x6c] sm:$0xf] %v781
          %783 = vst.msk [vmem:[%s714 + $0x70] sm:$0xf] %vm238, %v562
          %v784 = vld [vmem:[%s714 + $0x74] sm:$0x1]
          %v785 = vsel %vm249, %v563, %v784
          %786 = vst [vmem:[%s714 + $0x74] sm:$0x1] %v785
          %v787 = vld [vmem:[%s714 + $0x78] sm:$0xf]
          %v788 = vsel %vm716, %v570, %v787
          %789 = vst [vmem:[%s714 + $0x78] sm:$0xf] %v788
          %790 = vst.msk [vmem:[%s714 + $0x7c] sm:$0xf] %vm238, %v579
          %v791 = vld [vmem:[%s714 + $0x80] sm:$0x1]
          %v792 = vsel %vm249, %v580, %v791
          %793 = vst [vmem:[%s714 + $0x80] sm:$0x1] %v792
          %v794 = vld [vmem:[%s714 + $0x84] sm:$0xf]
          %v795 = vsel %vm716, %v587, %v794
          %796 = vst [vmem:[%s714 + $0x84] sm:$0xf] %v795
          %797 = vst.msk [vmem:[%s714 + $0x88] sm:$0xf] %vm238, %v596
          %v798 = vld [vmem:[%s714 + $0x8c] sm:$0x1]
          %v799 = vsel %vm249, %v597, %v798
          %800 = vst [vmem:[%s714 + $0x8c] sm:$0x1] %v799
          %v801 = vld [vmem:[%s714 + $0x90] sm:$0xf]
          %v802 = vsel %vm716, %v604, %v801
          %803 = vst [vmem:[%s714 + $0x90] sm:$0xf] %v802
          %804 = vst.msk [vmem:[%s714 + $0x94] sm:$0xf] %vm238, %v613
          %v805 = vld [vmem:[%s714 + $0x98] sm:$0x1]
          %v806 = vsel %vm249, %v614, %v805
          %807 = vst [vmem:[%s714 + $0x98] sm:$0x1] %v806
          %v808 = vld [vmem:[%s714 + $0x9c] sm:$0xf]
          %v809 = vsel %vm716, %v621, %v808
          %810 = vst [vmem:[%s714 + $0x9c] sm:$0xf] %v809
          %811 = vst.msk [vmem:[%s714 + $0xa0] sm:$0xf] %vm238, %v630
          %v812 = vld [vmem:[%s714 + $0xa4] sm:$0x1]
          %v813 = vsel %vm249, %v631, %v812
          %814 = vst [vmem:[%s714 + $0xa4] sm:$0x1] %v813
          %v815 = vld [vmem:[%s714 + $0xa8] sm:$0xf]
          %v816 = vsel %vm716, %v638, %v815
          %817 = vst [vmem:[%s714 + $0xa8] sm:$0xf] %v816
          %818 = vst.msk [vmem:[%s714 + $0xac] sm:$0xf] %vm238, %v647
          %v819 = vld [vmem:[%s714 + $0xb0] sm:$0x1]
          %v820 = vsel %vm249, %v648, %v819
          %821 = vst [vmem:[%s714 + $0xb0] sm:$0x1] %v820
          %v822 = vld [vmem:[%s714 + $0xb4] sm:$0xf]
          %v823 = vsel %vm716, %v655, %v822
          %824 = vst [vmem:[%s714 + $0xb4] sm:$0xf] %v823
          %825 = vst.msk [vmem:[%s714 + $0xb8] sm:$0xf] %vm238, %v664
          %v826 = vld [vmem:[%s714 + $0xbc] sm:$0x1]
          %v827 = vsel %vm249, %v665, %v826
          %828 = vst [vmem:[%s714 + $0xbc] sm:$0x1] %v827
        $region44: #{forward.5} parent=31 // pred_fallthru
          _
        %v829 = vld [vmem:[#allocation2] sm:$0xf]
        %v830 = vld [vmem:[#allocation2 + $0x4] sm:$0xf]
        %v831 = vld [vmem:[#allocation2 + $0xc] sm:$0xf]
        %v832 = vld [vmem:[#allocation2 + $0x10] sm:$0xf]
        %v833 = vld [vmem:[#allocation2 + $0x18] sm:$0xf]
        %v834 = vld [vmem:[#allocation2 + $0x1c] sm:$0xf]
        %v835 = vld [vmem:[#allocation2 + $0x24] sm:$0xf]
        %v836 = vld [vmem:[#allocation2 + $0x28] sm:$0xf]
        %v837 = vld [vmem:[#allocation2 + $0x30] sm:$0xf]
        %v838 = vld [vmem:[#allocation2 + $0x34] sm:$0xf]
        %v839 = vld [vmem:[#allocation2 + $0x3c] sm:$0xf]
        %v840 = vld [vmem:[#allocation2 + $0x40] sm:$0xf]
        %v841 = vld [vmem:[#allocation2 + $0x48] sm:$0xf]
        %v842 = vld [vmem:[#allocation2 + $0x4c] sm:$0xf]
        %v843 = vld [vmem:[#allocation2 + $0x54] sm:$0xf]
        %v844 = vld [vmem:[#allocation2 + $0x58] sm:$0xf]
        %v845 = vld [vmem:[#allocation2 + $0x60] sm:$0xf]
        %v846 = vld [vmem:[#allocation2 + $0x64] sm:$0xf]
        %v847 = vld [vmem:[#allocation2 + $0x6c] sm:$0xf]
        %v848 = vld [vmem:[#allocation2 + $0x70] sm:$0xf]
        %v849 = vld [vmem:[#allocation2 + $0x78] sm:$0xf]
        %v850 = vld [vmem:[#allocation2 + $0x7c] sm:$0xf]
        %v851 = vld [vmem:[#allocation2 + $0x84] sm:$0xf]
        %v852 = vld [vmem:[#allocation2 + $0x88] sm:$0xf]
        %v853 = vld [vmem:[#allocation2 + $0x90] sm:$0xf]
        %v854 = vld [vmem:[#allocation2 + $0x94] sm:$0xf]
        %v855 = vld [vmem:[#allocation2 + $0x9c] sm:$0xf]
        %v856 = vld [vmem:[#allocation2 + $0xa0] sm:$0xf]
        %v857 = vld [vmem:[#allocation2 + $0xa8] sm:$0xf]
        %v858 = vld [vmem:[#allocation2 + $0xac] sm:$0xf]
        %v859 = vld [vmem:[#allocation2 + $0xb4] sm:$0xf]
        %v860 = vld [vmem:[#allocation2 + $0xb8] sm:$0xf]
        %v861 = vld [vmem:[#allocation3] sm:$0x3]
        %v862 = vld [vmem:[#allocation2 + $0x8] sm:$0x1]
        %v863 = vld [vmem:[#allocation2 + $0x14] sm:$0x1]
        %v864 = vld [vmem:[#allocation2 + $0x20] sm:$0x1]
        %v865 = vld [vmem:[#allocation2 + $0x2c] sm:$0x1]
        %v866 = vld [vmem:[#allocation2 + $0x38] sm:$0x1]
        %v867 = vld [vmem:[#allocation2 + $0x44] sm:$0x1]
        %v868 = vld [vmem:[#allocation2 + $0x50] sm:$0x1]
        %v869 = vld [vmem:[#allocation2 + $0x5c] sm:$0x1]
        %v870 = vld [vmem:[#allocation2 + $0x68] sm:$0x1]
        %v871 = vld [vmem:[#allocation2 + $0x74] sm:$0x1]
        %v872 = vld [vmem:[#allocation2 + $0x80] sm:$0x1]
        %v873 = vld [vmem:[#allocation2 + $0x8c] sm:$0x1]
        %v874 = vld [vmem:[#allocation2 + $0x98] sm:$0x1]
        %v875 = vld [vmem:[#allocation2 + $0xa4] sm:$0x1]
        %v876 = vld [vmem:[#allocation2 + $0xb0] sm:$0x1]
        %v877 = vld [vmem:[#allocation2 + $0xbc] sm:$0x1]
        %vm878 = vsmask.f32 3328
        %vm879 = vsmask.f32 7440
        %vm880 = vmor %vm878, %vm879
        %v882 = vshrl.u32 %v829, 16
        %v884 = vrot.slane %v882, 4
        %v885 = vshll.u32 %v829, 16
        %v887 = vrot.slane %v885, 5
        %v888 = vor.u32 %v884, %v887
        %v889 = vrot.slane %v888, 4
        %v891 = vshll.u32 %v830, 16
        %v893 = vrot.slane %v891, 5
        %v894 = vsel %vm880, %v889, %v893
        %v895 = vshrl.u32 %v830, 16
        %v897 = vrot.slane %v895, 4
        %v898 = vor.u32 %v897, %v893
        %v899 = vrot.slane %v898, 4
        %v901 = vshll.u32 %v862, 16
        %v903 = vrot.slane %v901, 5
        %v904 = vsel %vm880, %v899, %v903
        %v906 = vshrl.u32 %v831, 16
        %v908 = vrot.slane %v906, 4
        %v909 = vshll.u32 %v831, 16
        %v911 = vrot.slane %v909, 5
        %v912 = vor.u32 %v908, %v911
        %v913 = vrot.slane %v912, 4
        %v915 = vshll.u32 %v832, 16
        %v917 = vrot.slane %v915, 5
        %v918 = vsel %vm880, %v913, %v917
        %v919 = vshrl.u32 %v832, 16
        %v921 = vrot.slane %v919, 4
        %v922 = vor.u32 %v921, %v917
        %v923 = vrot.slane %v922, 4
        %v925 = vshll.u32 %v863, 16
        %v927 = vrot.slane %v925, 5
        %v928 = vsel %vm880, %v923, %v927
        %v930 = vshrl.u32 %v833, 16
        %v932 = vrot.slane %v930, 4
        %v933 = vshll.u32 %v833, 16
        %v935 = vrot.slane %v933, 5
        %v936 = vor.u32 %v932, %v935
        %v937 = vrot.slane %v936, 4
        %v939 = vshll.u32 %v834, 16
        %v941 = vrot.slane %v939, 5
        %v942 = vsel %vm880, %v937, %v941
        %v943 = vshrl.u32 %v834, 16
        %v945 = vrot.slane %v943, 4
        %v946 = vor.u32 %v945, %v941
        %v947 = vrot.slane %v946, 4
        %v949 = vshll.u32 %v864, 16
        %v951 = vrot.slane %v949, 5
        %v952 = vsel %vm880, %v947, %v951
        %v954 = vshrl.u32 %v835, 16
        %v956 = vrot.slane %v954, 4
        %v957 = vshll.u32 %v835, 16
        %v959 = vrot.slane %v957, 5
        %v960 = vor.u32 %v956, %v959
        %v961 = vrot.slane %v960, 4
        %v963 = vshll.u32 %v836, 16
        %v965 = vrot.slane %v963, 5
        %v966 = vsel %vm880, %v961, %v965
        %v967 = vshrl.u32 %v836, 16
        %v969 = vrot.slane %v967, 4
        %v970 = vor.u32 %v969, %v965
        %v971 = vrot.slane %v970, 4
        %v973 = vshll.u32 %v865, 16
        %v975 = vrot.slane %v973, 5
        %v976 = vsel %vm880, %v971, %v975
        %v978 = vshrl.u32 %v837, 16
        %v980 = vrot.slane %v978, 4
        %v981 = vshll.u32 %v837, 16
        %v983 = vrot.slane %v981, 5
        %v984 = vor.u32 %v980, %v983
        %v985 = vrot.slane %v984, 4
        %v987 = vshll.u32 %v838, 16
        %v989 = vrot.slane %v987, 5
        %v990 = vsel %vm880, %v985, %v989
        %v991 = vshrl.u32 %v838, 16
        %v993 = vrot.slane %v991, 4
        %v994 = vor.u32 %v993, %v989
        %v995 = vrot.slane %v994, 4
        %v997 = vshll.u32 %v866, 16
        %v999 = vrot.slane %v997, 5
        %v1000 = vsel %vm880, %v995, %v999
        %v1002 = vshrl.u32 %v839, 16
        %v1004 = vrot.slane %v1002, 4
        %v1005 = vshll.u32 %v839, 16
        %v1007 = vrot.slane %v1005, 5
        %v1008 = vor.u32 %v1004, %v1007
        %v1009 = vrot.slane %v1008, 4
        %v1011 = vshll.u32 %v840, 16
        %v1013 = vrot.slane %v1011, 5
        %v1014 = vsel %vm880, %v1009, %v1013
        %v1015 = vshrl.u32 %v840, 16
        %v1017 = vrot.slane %v1015, 4
        %v1018 = vor.u32 %v1017, %v1013
        %v1019 = vrot.slane %v1018, 4
        %v1021 = vshll.u32 %v867, 16
        %v1023 = vrot.slane %v1021, 5
        %v1024 = vsel %vm880, %v1019, %v1023
        %v1026 = vshrl.u32 %v841, 16
        %v1028 = vrot.slane %v1026, 4
        %v1029 = vshll.u32 %v841, 16
        %v1031 = vrot.slane %v1029, 5
        %v1032 = vor.u32 %v1028, %v1031
        %v1033 = vrot.slane %v1032, 4
        %v1035 = vshll.u32 %v842, 16
        %v1037 = vrot.slane %v1035, 5
        %v1038 = vsel %vm880, %v1033, %v1037
        %v1039 = vshrl.u32 %v842, 16
        %v1041 = vrot.slane %v1039, 4
        %v1042 = vor.u32 %v1041, %v1037
        %v1043 = vrot.slane %v1042, 4
        %v1045 = vshll.u32 %v868, 16
        %v1047 = vrot.slane %v1045, 5
        %v1048 = vsel %vm880, %v1043, %v1047
        %v1050 = vshrl.u32 %v843, 16
        %v1052 = vrot.slane %v1050, 4
        %v1053 = vshll.u32 %v843, 16
        %v1055 = vrot.slane %v1053, 5
        %v1056 = vor.u32 %v1052, %v1055
        %v1057 = vrot.slane %v1056, 4
        %v1059 = vshll.u32 %v844, 16
        %v1061 = vrot.slane %v1059, 5
        %v1062 = vsel %vm880, %v1057, %v1061
        %v1063 = vshrl.u32 %v844, 16
        %v1065 = vrot.slane %v1063, 4
        %v1066 = vor.u32 %v1065, %v1061
        %v1067 = vrot.slane %v1066, 4
        %v1069 = vshll.u32 %v869, 16
        %v1071 = vrot.slane %v1069, 5
        %v1072 = vsel %vm880, %v1067, %v1071
        %v1074 = vshrl.u32 %v845, 16
        %v1076 = vrot.slane %v1074, 4
        %v1077 = vshll.u32 %v845, 16
        %v1079 = vrot.slane %v1077, 5
        %v1080 = vor.u32 %v1076, %v1079
        %v1081 = vrot.slane %v1080, 4
        %v1083 = vshll.u32 %v846, 16
        %v1085 = vrot.slane %v1083, 5
        %v1086 = vsel %vm880, %v1081, %v1085
        %v1087 = vshrl.u32 %v846, 16
        %v1089 = vrot.slane %v1087, 4
        %v1090 = vor.u32 %v1089, %v1085
        %v1091 = vrot.slane %v1090, 4
        %v1093 = vshll.u32 %v870, 16
        %v1095 = vrot.slane %v1093, 5
        %v1096 = vsel %vm880, %v1091, %v1095
        %v1098 = vshrl.u32 %v847, 16
        %v1100 = vrot.slane %v1098, 4
        %v1101 = vshll.u32 %v847, 16
        %v1103 = vrot.slane %v1101, 5
        %v1104 = vor.u32 %v1100, %v1103
        %v1105 = vrot.slane %v1104, 4
        %v1107 = vshll.u32 %v848, 16
        %v1109 = vrot.slane %v1107, 5
        %v1110 = vsel %vm880, %v1105, %v1109
        %v1111 = vshrl.u32 %v848, 16
        %v1113 = vrot.slane %v1111, 4
        %v1114 = vor.u32 %v1113, %v1109
        %v1115 = vrot.slane %v1114, 4
        %v1117 = vshll.u32 %v871, 16
        %v1119 = vrot.slane %v1117, 5
        %v1120 = vsel %vm880, %v1115, %v1119
        %v1122 = vshrl.u32 %v849, 16
        %v1124 = vrot.slane %v1122, 4
        %v1125 = vshll.u32 %v849, 16
        %v1127 = vrot.slane %v1125, 5
        %v1128 = vor.u32 %v1124, %v1127
        %v1129 = vrot.slane %v1128, 4
        %v1131 = vshll.u32 %v850, 16
        %v1133 = vrot.slane %v1131, 5
        %v1134 = vsel %vm880, %v1129, %v1133
        %v1135 = vshrl.u32 %v850, 16
        %v1137 = vrot.slane %v1135, 4
        %v1138 = vor.u32 %v1137, %v1133
        %v1139 = vrot.slane %v1138, 4
        %v1141 = vshll.u32 %v872, 16
        %v1143 = vrot.slane %v1141, 5
        %v1144 = vsel %vm880, %v1139, %v1143
        %v1146 = vshrl.u32 %v851, 16
        %v1148 = vrot.slane %v1146, 4
        %v1149 = vshll.u32 %v851, 16
        %v1151 = vrot.slane %v1149, 5
        %v1152 = vor.u32 %v1148, %v1151
        %v1153 = vrot.slane %v1152, 4
        %v1155 = vshll.u32 %v852, 16
        %v1157 = vrot.slane %v1155, 5
        %v1158 = vsel %vm880, %v1153, %v1157
        %v1159 = vshrl.u32 %v852, 16
        %v1161 = vrot.slane %v1159, 4
        %v1162 = vor.u32 %v1161, %v1157
        %v1163 = vrot.slane %v1162, 4
        %v1165 = vshll.u32 %v873, 16
        %v1167 = vrot.slane %v1165, 5
        %v1168 = vsel %vm880, %v1163, %v1167
        %v1170 = vshrl.u32 %v853, 16
        %v1172 = vrot.slane %v1170, 4
        %v1173 = vshll.u32 %v853, 16
        %v1175 = vrot.slane %v1173, 5
        %v1176 = vor.u32 %v1172, %v1175
        %v1177 = vrot.slane %v1176, 4
        %v1179 = vshll.u32 %v854, 16
        %v1181 = vrot.slane %v1179, 5
        %v1182 = vsel %vm880, %v1177, %v1181
        %v1183 = vshrl.u32 %v854, 16
        %v1185 = vrot.slane %v1183, 4
        %v1186 = vor.u32 %v1185, %v1181
        %v1187 = vrot.slane %v1186, 4
        %v1189 = vshll.u32 %v874, 16
        %v1191 = vrot.slane %v1189, 5
        %v1192 = vsel %vm880, %v1187, %v1191
        %v1194 = vshrl.u32 %v855, 16
        %v1196 = vrot.slane %v1194, 4
        %v1197 = vshll.u32 %v855, 16
        %v1199 = vrot.slane %v1197, 5
        %v1200 = vor.u32 %v1196, %v1199
        %v1201 = vrot.slane %v1200, 4
        %v1203 = vshll.u32 %v856, 16
        %v1205 = vrot.slane %v1203, 5
        %v1206 = vsel %vm880, %v1201, %v1205
        %v1207 = vshrl.u32 %v856, 16
        %v1209 = vrot.slane %v1207, 4
        %v1210 = vor.u32 %v1209, %v1205
        %v1211 = vrot.slane %v1210, 4
        %v1213 = vshll.u32 %v875, 16
        %v1215 = vrot.slane %v1213, 5
        %v1216 = vsel %vm880, %v1211, %v1215
        %v1218 = vshrl.u32 %v857, 16
        %v1220 = vrot.slane %v1218, 4
        %v1221 = vshll.u32 %v857, 16
        %v1223 = vrot.slane %v1221, 5
        %v1224 = vor.u32 %v1220, %v1223
        %v1225 = vrot.slane %v1224, 4
        %v1227 = vshll.u32 %v858, 16
        %v1229 = vrot.slane %v1227, 5
        %v1230 = vsel %vm880, %v1225, %v1229
        %v1231 = vshrl.u32 %v858, 16
        %v1233 = vrot.slane %v1231, 4
        %v1234 = vor.u32 %v1233, %v1229
        %v1235 = vrot.slane %v1234, 4
        %v1237 = vshll.u32 %v876, 16
        %v1239 = vrot.slane %v1237, 5
        %v1240 = vsel %vm880, %v1235, %v1239
        %v1242 = vshrl.u32 %v859, 16
        %v1244 = vrot.slane %v1242, 4
        %v1245 = vshll.u32 %v859, 16
        %v1247 = vrot.slane %v1245, 5
        %v1248 = vor.u32 %v1244, %v1247
        %v1249 = vrot.slane %v1248, 4
        %v1251 = vshll.u32 %v860, 16
        %v1253 = vrot.slane %v1251, 5
        %v1254 = vsel %vm880, %v1249, %v1253
        %v1255 = vshrl.u32 %v860, 16
        %v1257 = vrot.slane %v1255, 4
        %v1258 = vor.u32 %v1257, %v1253
        %v1259 = vrot.slane %v1258, 4
        %v1261 = vshll.u32 %v877, 16
        %v1263 = vrot.slane %v1261, 5
        %v1264 = vsel %vm880, %v1259, %v1263
        %s1265 = scalar_lea.vmem [#allocation3], 2
        %v1266 = vld [vmem:[%s1265] sm:$0x3]
        %v1267 = vunpack.c.l.b16 %v894
        %v1268 = vunpack.c.l.b16 %v904
        %v1269 = vunpack.c.l.b16 %v918
        %v1270 = vunpack.c.l.b16 %v928
        %v1271 = vunpack.c.l.b16 %v942
        %v1272 = vunpack.c.l.b16 %v952
        %v1273 = vunpack.c.l.b16 %v966
        %v1274 = vunpack.c.l.b16 %v976
        %v1275 = vunpack.c.l.b16 %v990
        %v1276 = vunpack.c.l.b16 %v1000
        %v1277 = vunpack.c.l.b16 %v1014
        %v1278 = vunpack.c.l.b16 %v1024
        %v1279 = vunpack.c.l.b16 %v1038
        %v1280 = vunpack.c.l.b16 %v1048
        %v1281 = vunpack.c.l.b16 %v1062
        %v1282 = vunpack.c.l.b16 %v1072
        %v1283 = vunpack.c.l.b16 %v1086
        %v1284 = vunpack.c.l.b16 %v1096
        %v1285 = vunpack.c.l.b16 %v1110
        %v1286 = vunpack.c.l.b16 %v1120
        %v1287 = vunpack.c.l.b16 %v1134
        %v1288 = vunpack.c.l.b16 %v1144
        %v1289 = vunpack.c.l.b16 %v1158
        %v1290 = vunpack.c.l.b16 %v1168
        %v1291 = vunpack.c.l.b16 %v1182
        %v1292 = vunpack.c.l.b16 %v1192
        %v1293 = vunpack.c.l.b16 %v1206
        %v1294 = vunpack.c.l.b16 %v1216
        %v1295 = vunpack.c.l.b16 %v1230
        %v1296 = vunpack.c.l.b16 %v1240
        %v1297 = vunpack.c.l.b16 %v1254
        %v1298 = vunpack.c.l.b16 %v1264
        %v1299 = vpack.c.b16 %v1268, %v1267
        %v1300 = vpack.c.b16 %v1270, %v1269
        %v1301 = vpack.c.b16 %v1272, %v1271
        %v1302 = vpack.c.b16 %v1274, %v1273
        %v1303 = vpack.c.b16 %v1276, %v1275
        %v1304 = vpack.c.b16 %v1278, %v1277
        %v1305 = vpack.c.b16 %v1280, %v1279
        %v1306 = vpack.c.b16 %v1282, %v1281
        %v1307 = vpack.c.b16 %v1284, %v1283
        %v1308 = vpack.c.b16 %v1286, %v1285
        %v1309 = vpack.c.b16 %v1288, %v1287
        %v1310 = vpack.c.b16 %v1290, %v1289
        %v1311 = vpack.c.b16 %v1292, %v1291
        %v1312 = vpack.c.b16 %v1294, %v1293
        %v1313 = vpack.c.b16 %v1296, %v1295
        %v1314 = vpack.c.b16 %v1298, %v1297
        %vm1315 = vcmask 23552
        %v1317 = vsel %vm1315, %v1299, 0
        %v1320 = vsel %vm1315, %v1300, 0
        %v1323 = vsel %vm1315, %v1301, 0
        %v1326 = vsel %vm1315, %v1302, 0
        %v1329 = vsel %vm1315, %v1303, 0
        %v1332 = vsel %vm1315, %v1304, 0
        %v1335 = vsel %vm1315, %v1305, 0
        %v1338 = vsel %vm1315, %v1306, 0
        %v1341 = vsel %vm1315, %v1307, 0
        %v1344 = vsel %vm1315, %v1308, 0
        %v1347 = vsel %vm1315, %v1309, 0
        %v1350 = vsel %vm1315, %v1310, 0
        %v1353 = vsel %vm1315, %v1311, 0
        %v1356 = vsel %vm1315, %v1312, 0
        %v1359 = vsel %vm1315, %v1313, 0
        %v1362 = vsel %vm1315, %v1314, 0
        %vm1364 = vcmask 1040384
        %vm1365 = vcmask 1041408
        %v1366 = vsel %vm1364, 4294967295, 65535
        %v1367 = vsel %vm1365, %v1366, 0
        %v1369 = vand.u32 %v1266, %v1367
        %1371 = vmatprep.subr.bf16.mxu0 0
        %1372 = vmatpush1.bf16.msra.mxu0 %v1369
        %1373 = vmatprep.subr.bf16.mxu0 0
        %1374 = vmatpush1.bf16.msra.mxu0 0
        %1375 = vmatprep.subr.bf16.mxu0 0
        %1376 = vmatpush1.bf16.msra.mxu0 0
        %1377 = vmatprep.subr.bf16.mxu0 0
        %1378 = vmatpush1.bf16.msra.mxu0 0
        %1379 = vmatprep.subr.bf16.mxu0 0
        %1380 = vmatpush1.bf16.msra.mxu0 0
        %1381 = vmatprep.subr.bf16.mxu0 0
        %1382 = vmatpush1.bf16.msra.mxu0 0
        %1383 = vmatprep.subr.bf16.mxu0 0
        %1384 = vmatpush1.bf16.msra.mxu0 0
        %1385 = vmatprep.subr.bf16.mxu0 0
        %1386 = vmatpush1.bf16.msra.mxu0 0
        %1387 = vmatprep.subr.bf16.mxu0 0
        %1388 = vmatpush1.bf16.msra.mxu0 0
        %1389 = vmatprep.subr.bf16.mxu0 0
        %1390 = vmatpush1.bf16.msra.mxu0 0
        %1391 = vmatprep.subr.bf16.mxu0 0
        %1392 = vmatpush1.bf16.msra.mxu0 0
        %1393 = vmatprep.subr.bf16.mxu0 0
        %1394 = vmatpush1.bf16.msra.mxu0 0
        %1395 = vmatprep.subr.bf16.mxu0 0
        %1396 = vmatpush1.bf16.msra.mxu0 0
        %1397 = vmatprep.subr.bf16.mxu0 0
        %1398 = vmatpush1.bf16.msra.mxu0 0
        %1399 = vmatprep.subr.bf16.mxu0 0
        %1400 = vmatpush1.bf16.msra.mxu0 0
        %1401 = vmatprep.subr.bf16.mxu0 0
        %1402 = vmatpush1.bf16.msra.mxu0 0
        %1403 = vmatprep.mubr.bf16.mxu0 0
        %1404 = vmatmul.mubr.bf16.gmra.mrb[0].mxu0 %v1317
        %v1405 = vpop.f32.mrb[0].mxu0
        %v1406 = vadd.f32 0.0, %v1405
        %v1407 = vpop.f32.mrb[0].mxu0
        %v1408 = vpop.f32.mrb[0].mxu0
        %v1409 = vadd.f32 0.0, %v1408
        %v1410 = vpop.f32.mrb[0].mxu0
        %1411 = vmatprep.mubr.bf16.mxu0 0
        %1412 = vmatmul.mubr.bf16.gmra.mrb[0].mxu0 %v1320
        %v1413 = vpop.f32.mrb[0].mxu0
        %v1414 = vadd.f32 0.0, %v1413
        %v1415 = vpop.f32.mrb[0].mxu0
        %v1416 = vpop.f32.mrb[0].mxu0
        %v1417 = vadd.f32 0.0, %v1416
        %v1418 = vpop.f32.mrb[0].mxu0
        %1419 = vmatprep.mubr.bf16.mxu0 0
        %1420 = vmatmul.mubr.bf16.gmra.mrb[0].mxu0 %v1323
        %v1421 = vpop.f32.mrb[0].mxu0
        %v1422 = vadd.f32 0.0, %v1421
        %v1423 = vpop.f32.mrb[0].mxu0
        %v1424 = vpop.f32.mrb[0].mxu0
        %v1425 = vadd.f32 0.0, %v1424
        %v1426 = vpop.f32.mrb[0].mxu0
        %1427 = vmatprep.mubr.bf16.mxu0 0
        %1428 = vmatmul.mubr.bf16.gmra.mrb[0].mxu0 %v1326
        %v1429 = vpop.f32.mrb[0].mxu0
        %v1430 = vadd.f32 0.0, %v1429
        %v1431 = vpop.f32.mrb[0].mxu0
        %v1432 = vpop.f32.mrb[0].mxu0
        %v1433 = vadd.f32 0.0, %v1432
        %v1434 = vpop.f32.mrb[0].mxu0
        %1435 = vmatprep.mubr.bf16.mxu0 0
        %1436 = vmatmul.mubr.bf16.gmra.mrb[0].mxu0 %v1329
        %v1437 = vpop.f32.mrb[0].mxu0
        %v1438 = vadd.f32 0.0, %v1437
        %v1439 = vpop.f32.mrb[0].mxu0
        %v1440 = vpop.f32.mrb[0].mxu0
        %v1441 = vadd.f32 0.0, %v1440
        %v1442 = vpop.f32.mrb[0].mxu0
        %1443 = vmatprep.mubr.bf16.mxu0 0
        %1444 = vmatmul.mubr.bf16.gmra.mrb[0].mxu0 %v1332
        %v1445 = vpop.f32.mrb[0].mxu0
        %v1446 = vadd.f32 0.0, %v1445
        %v1447 = vpop.f32.mrb[0].mxu0
        %v1448 = vpop.f32.mrb[0].mxu0
        %v1449 = vadd.f32 0.0, %v1448
        %v1450 = vpop.f32.mrb[0].mxu0
        %1451 = vmatprep.mubr.bf16.mxu0 0
        %1452 = vmatmul.mubr.bf16.gmra.mrb[0].mxu0 %v1335
        %v1453 = vpop.f32.mrb[0].mxu0
        %v1454 = vadd.f32 0.0, %v1453
        %v1455 = vpop.f32.mrb[0].mxu0
        %v1456 = vpop.f32.mrb[0].mxu0
        %v1457 = vadd.f32 0.0, %v1456
        %v1458 = vpop.f32.mrb[0].mxu0
        %1459 = vmatprep.mubr.bf16.mxu0 0
        %1460 = vmatmul.mubr.bf16.gmra.mrb[0].mxu0 %v1338
        %v1461 = vpop.f32.mrb[0].mxu0
        %v1462 = vadd.f32 0.0, %v1461
        %v1463 = vpop.f32.mrb[0].mxu0
        %v1464 = vpop.f32.mrb[0].mxu0
        %v1465 = vadd.f32 0.0, %v1464
        %v1466 = vpop.f32.mrb[0].mxu0
        %1467 = vmatprep.mubr.bf16.mxu0 0
        %1468 = vmatmul.mubr.bf16.gmra.mrb[0].mxu0 %v1341
        %v1469 = vpop.f32.mrb[0].mxu0
        %v1470 = vadd.f32 0.0, %v1469
        %v1471 = vpop.f32.mrb[0].mxu0
        %v1472 = vpop.f32.mrb[0].mxu0
        %v1473 = vadd.f32 0.0, %v1472
        %v1474 = vpop.f32.mrb[0].mxu0
        %1475 = vmatprep.mubr.bf16.mxu0 0
        %1476 = vmatmul.mubr.bf16.gmra.mrb[0].mxu0 %v1344
        %v1477 = vpop.f32.mrb[0].mxu0
        %v1478 = vadd.f32 0.0, %v1477
        %v1479 = vpop.f32.mrb[0].mxu0
        %v1480 = vpop.f32.mrb[0].mxu0
        %v1481 = vadd.f32 0.0, %v1480
        %v1482 = vpop.f32.mrb[0].mxu0
        %1483 = vmatprep.mubr.bf16.mxu0 0
        %1484 = vmatmul.mubr.bf16.gmra.mrb[0].mxu0 %v1347
        %v1485 = vpop.f32.mrb[0].mxu0
        %v1486 = vadd.f32 0.0, %v1485
        %v1487 = vpop.f32.mrb[0].mxu0
        %v1488 = vpop.f32.mrb[0].mxu0
        %v1489 = vadd.f32 0.0, %v1488
        %v1490 = vpop.f32.mrb[0].mxu0
        %1491 = vmatprep.mubr.bf16.mxu0 0
        %1492 = vmatmul.mubr.bf16.gmra.mrb[0].mxu0 %v1350
        %v1493 = vpop.f32.mrb[0].mxu0
        %v1494 = vadd.f32 0.0, %v1493
        %v1495 = vpop.f32.mrb[0].mxu0
        %v1496 = vpop.f32.mrb[0].mxu0
        %v1497 = vadd.f32 0.0, %v1496
        %v1498 = vpop.f32.mrb[0].mxu0
        %1499 = vmatprep.mubr.bf16.mxu0 0
        %1500 = vmatmul.mubr.bf16.gmra.mrb[0].mxu0 %v1353
        %v1501 = vpop.f32.mrb[0].mxu0
        %v1502 = vadd.f32 0.0, %v1501
        %v1503 = vpop.f32.mrb[0].mxu0
        %v1504 = vpop.f32.mrb[0].mxu0
        %v1505 = vadd.f32 0.0, %v1504
        %v1506 = vpop.f32.mrb[0].mxu0
        %1507 = vmatprep.mubr.bf16.mxu0 0
        %1508 = vmatmul.mubr.bf16.gmra.mrb[0].mxu0 %v1356
        %v1509 = vpop.f32.mrb[0].mxu0
        %v1510 = vadd.f32 0.0, %v1509
        %v1511 = vpop.f32.mrb[0].mxu0
        %v1512 = vpop.f32.mrb[0].mxu0
        %v1513 = vadd.f32 0.0, %v1512
        %v1514 = vpop.f32.mrb[0].mxu0
        %1515 = vmatprep.mubr.bf16.mxu0 0
        %1516 = vmatmul.mubr.bf16.gmra.mrb[0].mxu0 %v1359
        %v1517 = vpop.f32.mrb[0].mxu0
        %v1518 = vadd.f32 0.0, %v1517
        %v1519 = vpop.f32.mrb[0].mxu0
        %v1520 = vpop.f32.mrb[0].mxu0
        %v1521 = vadd.f32 0.0, %v1520
        %v1522 = vpop.f32.mrb[0].mxu0
        %1523 = vmatprep.mubr.bf16.mxu0 0
        %1524 = vmatmul.mubr.bf16.gmra.mrb[0].mxu0 %v1362
        %v1525 = vpop.f32.mrb[0].mxu0
        %v1526 = vadd.f32 0.0, %v1525
        %v1527 = vpop.f32.mrb[0].mxu0
        %v1528 = vpop.f32.mrb[0].mxu0
        %v1529 = vadd.f32 0.0, %v1528
        %v1530 = vpop.f32.mrb[0].mxu0
        %1531 = vdwg.mxu0
        %v1564 = vunpack.c.l.b16 %v829
        %v1565 = vunpack.c.l.b16 %v830
        %v1566 = vunpack.c.l.b16 %v831
        %v1567 = vunpack.c.l.b16 %v832
        %v1568 = vunpack.c.l.b16 %v833
        %v1569 = vunpack.c.l.b16 %v834
        %v1570 = vunpack.c.l.b16 %v835
        %v1571 = vunpack.c.l.b16 %v836
        %v1572 = vunpack.c.l.b16 %v837
        %v1573 = vunpack.c.l.b16 %v838
        %v1574 = vunpack.c.l.b16 %v839
        %v1575 = vunpack.c.l.b16 %v840
        %v1576 = vunpack.c.l.b16 %v841
        %v1577 = vunpack.c.l.b16 %v842
        %v1578 = vunpack.c.l.b16 %v843
        %v1579 = vunpack.c.l.b16 %v844
        %v1580 = vunpack.c.l.b16 %v845
        %v1581 = vunpack.c.l.b16 %v846
        %v1582 = vunpack.c.l.b16 %v847
        %v1583 = vunpack.c.l.b16 %v848
        %v1584 = vunpack.c.l.b16 %v849
        %v1585 = vunpack.c.l.b16 %v850
        %v1586 = vunpack.c.l.b16 %v851
        %v1587 = vunpack.c.l.b16 %v852
        %v1588 = vunpack.c.l.b16 %v853
        %v1589 = vunpack.c.l.b16 %v854
        %v1590 = vunpack.c.l.b16 %v855
        %v1591 = vunpack.c.l.b16 %v856
        %v1592 = vunpack.c.l.b16 %v857
        %v1593 = vunpack.c.l.b16 %v858
        %v1594 = vunpack.c.l.b16 %v859
        %v1595 = vunpack.c.l.b16 %v860
        %v1596 = vpack.c.b16 %v1565, %v1564
        %v1597 = vpack.c.b16 %v1567, %v1566
        %v1598 = vpack.c.b16 %v1569, %v1568
        %v1599 = vpack.c.b16 %v1571, %v1570
        %v1600 = vpack.c.b16 %v1573, %v1572
        %v1601 = vpack.c.b16 %v1575, %v1574
        %v1602 = vpack.c.b16 %v1577, %v1576
        %v1603 = vpack.c.b16 %v1579, %v1578
        %v1604 = vpack.c.b16 %v1581, %v1580
        %v1605 = vpack.c.b16 %v1583, %v1582
        %v1606 = vpack.c.b16 %v1585, %v1584
        %v1607 = vpack.c.b16 %v1587, %v1586
        %v1608 = vpack.c.b16 %v1589, %v1588
        %v1609 = vpack.c.b16 %v1591, %v1590
        %v1610 = vpack.c.b16 %v1593, %v1592
        %v1611 = vpack.c.b16 %v1595, %v1594
        %v1613 = vsel %vm1315, %v1596, 0
        %v1616 = vsel %vm1315, %v1597, 0
        %v1619 = vsel %vm1315, %v1598, 0
        %v1622 = vsel %vm1315, %v1599, 0
        %v1625 = vsel %vm1315, %v1600, 0
        %v1628 = vsel %vm1315, %v1601, 0
        %v1631 = vsel %vm1315, %v1602, 0
        %v1634 = vsel %vm1315, %v1603, 0
        %v1637 = vsel %vm1315, %v1604, 0
        %v1640 = vsel %vm1315, %v1605, 0
        %v1643 = vsel %vm1315, %v1606, 0
        %v1646 = vsel %vm1315, %v1607, 0
        %v1649 = vsel %vm1315, %v1608, 0
        %v1652 = vsel %vm1315, %v1609, 0
        %v1655 = vsel %vm1315, %v1610, 0
        %v1658 = vsel %vm1315, %v1611, 0
        %v1661 = vand.u32 %v861, %v1367
        %1663 = vmatprep.subr.bf16.mxu0 0
        %1664 = vmatpush1.bf16.msra.mxu0 %v1661
        %1665 = vmatprep.subr.bf16.mxu0 0
        %1666 = vmatpush1.bf16.msra.mxu0 0
        %1667 = vmatprep.subr.bf16.mxu0 0
        %1668 = vmatpush1.bf16.msra.mxu0 0
        %1669 = vmatprep.subr.bf16.mxu0 0
        %1670 = vmatpush1.bf16.msra.mxu0 0
        %1671 = vmatprep.subr.bf16.mxu0 0
        %1672 = vmatpush1.bf16.msra.mxu0 0
        %1673 = vmatprep.subr.bf16.mxu0 0
        %1674 = vmatpush1.bf16.msra.mxu0 0
        %1675 = vmatprep.subr.bf16.mxu0 0
        %1676 = vmatpush1.bf16.msra.mxu0 0
        %1677 = vmatprep.subr.bf16.mxu0 0
        %1678 = vmatpush1.bf16.msra.mxu0 0
        %1679 = vmatprep.subr.bf16.mxu0 0
        %1680 = vmatpush1.bf16.msra.mxu0 0
        %1681 = vmatprep.subr.bf16.mxu0 0
        %1682 = vmatpush1.bf16.msra.mxu0 0
        %1683 = vmatprep.subr.bf16.mxu0 0
        %1684 = vmatpush1.bf16.msra.mxu0 0
        %1685 = vmatprep.subr.bf16.mxu0 0
        %1686 = vmatpush1.bf16.msra.mxu0 0
        %1687 = vmatprep.subr.bf16.mxu0 0
        %1688 = vmatpush1.bf16.msra.mxu0 0
        %1689 = vmatprep.subr.bf16.mxu0 0
        %1690 = vmatpush1.bf16.msra.mxu0 0
        %1691 = vmatprep.subr.bf16.mxu0 0
        %1692 = vmatpush1.bf16.msra.mxu0 0
        %1693 = vmatprep.subr.bf16.mxu0 0
        %1694 = vmatpush1.bf16.msra.mxu0 0
        %1695 = vmatprep.mubr.bf16.mxu0 0
        %1696 = vmatmul.mubr.bf16.gmra.mrb[0].mxu0 %v1613
        %v1697 = vpop.f32.mrb[0].mxu0
        %v1698 = vadd.f32 %v1406, %v1697
        %v1699 = vpop.f32.mrb[0].mxu0
        %v1700 = vpop.f32.mrb[0].mxu0
        %v1701 = vadd.f32 %v1409, %v1700
        %v1702 = vpop.f32.mrb[0].mxu0
        %1703 = vmatprep.mubr.bf16.mxu0 0
        %1704 = vmatmul.mubr.bf16.gmra.mrb[0].mxu0 %v1616
        %v1705 = vpop.f32.mrb[0].mxu0
        %v1706 = vadd.f32 %v1414, %v1705
        %v1707 = vpop.f32.mrb[0].mxu0
        %v1708 = vpop.f32.mrb[0].mxu0
        %v1709 = vadd.f32 %v1417, %v1708
        %v1710 = vpop.f32.mrb[0].mxu0
        %1711 = vmatprep.mubr.bf16.mxu0 0
        %1712 = vmatmul.mubr.bf16.gmra.mrb[0].mxu0 %v1619
        %v1713 = vpop.f32.mrb[0].mxu0
        %v1714 = vadd.f32 %v1422, %v1713
        %v1715 = vpop.f32.mrb[0].mxu0
        %v1716 = vpop.f32.mrb[0].mxu0
        %v1717 = vadd.f32 %v1425, %v1716
        %v1718 = vpop.f32.mrb[0].mxu0
        %1719 = vmatprep.mubr.bf16.mxu0 0
        %1720 = vmatmul.mubr.bf16.gmra.mrb[0].mxu0 %v1622
        %v1721 = vpop.f32.mrb[0].mxu0
        %v1722 = vadd.f32 %v1430, %v1721
        %v1723 = vpop.f32.mrb[0].mxu0
        %v1724 = vpop.f32.mrb[0].mxu0
        %v1725 = vadd.f32 %v1433, %v1724
        %v1726 = vpop.f32.mrb[0].mxu0
        %1727 = vmatprep.mubr.bf16.mxu0 0
        %1728 = vmatmul.mubr.bf16.gmra.mrb[0].mxu0 %v1625
        %v1729 = vpop.f32.mrb[0].mxu0
        %v1730 = vadd.f32 %v1438, %v1729
        %v1731 = vpop.f32.mrb[0].mxu0
        %v1732 = vpop.f32.mrb[0].mxu0
        %v1733 = vadd.f32 %v1441, %v1732
        %v1734 = vpop.f32.mrb[0].mxu0
        %1735 = vmatprep.mubr.bf16.mxu0 0
        %1736 = vmatmul.mubr.bf16.gmra.mrb[0].mxu0 %v1628
        %v1737 = vpop.f32.mrb[0].mxu0
        %v1738 = vadd.f32 %v1446, %v1737
        %v1739 = vpop.f32.mrb[0].mxu0
        %v1740 = vpop.f32.mrb[0].mxu0
        %v1741 = vadd.f32 %v1449, %v1740
        %v1742 = vpop.f32.mrb[0].mxu0
        %1743 = vmatprep.mubr.bf16.mxu0 0
        %1744 = vmatmul.mubr.bf16.gmra.mrb[0].mxu0 %v1631
        %v1745 = vpop.f32.mrb[0].mxu0
        %v1746 = vadd.f32 %v1454, %v1745
        %v1747 = vpop.f32.mrb[0].mxu0
        %v1748 = vpop.f32.mrb[0].mxu0
        %v1749 = vadd.f32 %v1457, %v1748
        %v1750 = vpop.f32.mrb[0].mxu0
        %1751 = vmatprep.mubr.bf16.mxu0 0
        %1752 = vmatmul.mubr.bf16.gmra.mrb[0].mxu0 %v1634
        %v1753 = vpop.f32.mrb[0].mxu0
        %v1754 = vadd.f32 %v1462, %v1753
        %v1755 = vpop.f32.mrb[0].mxu0
        %v1756 = vpop.f32.mrb[0].mxu0
        %v1757 = vadd.f32 %v1465, %v1756
        %v1758 = vpop.f32.mrb[0].mxu0
        %1759 = vmatprep.mubr.bf16.mxu0 0
        %1760 = vmatmul.mubr.bf16.gmra.mrb[0].mxu0 %v1637
        %v1761 = vpop.f32.mrb[0].mxu0
        %v1762 = vadd.f32 %v1470, %v1761
        %v1763 = vpop.f32.mrb[0].mxu0
        %v1764 = vpop.f32.mrb[0].mxu0
        %v1765 = vadd.f32 %v1473, %v1764
        %v1766 = vpop.f32.mrb[0].mxu0
        %1767 = vmatprep.mubr.bf16.mxu0 0
        %1768 = vmatmul.mubr.bf16.gmra.mrb[0].mxu0 %v1640
        %v1769 = vpop.f32.mrb[0].mxu0
        %v1770 = vadd.f32 %v1478, %v1769
        %v1771 = vpop.f32.mrb[0].mxu0
        %v1772 = vpop.f32.mrb[0].mxu0
        %v1773 = vadd.f32 %v1481, %v1772
        %v1774 = vpop.f32.mrb[0].mxu0
        %1775 = vmatprep.mubr.bf16.mxu0 0
        %1776 = vmatmul.mubr.bf16.gmra.mrb[0].mxu0 %v1643
        %v1777 = vpop.f32.mrb[0].mxu0
        %v1778 = vadd.f32 %v1486, %v1777
        %v1779 = vpop.f32.mrb[0].mxu0
        %v1780 = vpop.f32.mrb[0].mxu0
        %v1781 = vadd.f32 %v1489, %v1780
        %v1782 = vpop.f32.mrb[0].mxu0
        %1783 = vmatprep.mubr.bf16.mxu0 0
        %1784 = vmatmul.mubr.bf16.gmra.mrb[0].mxu0 %v1646
        %v1785 = vpop.f32.mrb[0].mxu0
        %v1786 = vadd.f32 %v1494, %v1785
        %v1787 = vpop.f32.mrb[0].mxu0
        %v1788 = vpop.f32.mrb[0].mxu0
        %v1789 = vadd.f32 %v1497, %v1788
        %v1790 = vpop.f32.mrb[0].mxu0
        %1791 = vmatprep.mubr.bf16.mxu0 0
        %1792 = vmatmul.mubr.bf16.gmra.mrb[0].mxu0 %v1649
        %v1793 = vpop.f32.mrb[0].mxu0
        %v1794 = vadd.f32 %v1502, %v1793
        %v1795 = vpop.f32.mrb[0].mxu0
        %v1796 = vpop.f32.mrb[0].mxu0
        %v1797 = vadd.f32 %v1505, %v1796
        %v1798 = vpop.f32.mrb[0].mxu0
        %1799 = vmatprep.mubr.bf16.mxu0 0
        %1800 = vmatmul.mubr.bf16.gmra.mrb[0].mxu0 %v1652
        %v1801 = vpop.f32.mrb[0].mxu0
        %v1802 = vadd.f32 %v1510, %v1801
        %v1803 = vpop.f32.mrb[0].mxu0
        %v1804 = vpop.f32.mrb[0].mxu0
        %v1805 = vadd.f32 %v1513, %v1804
        %v1806 = vpop.f32.mrb[0].mxu0
        %1807 = vmatprep.mubr.bf16.mxu0 0
        %1808 = vmatmul.mubr.bf16.gmra.mrb[0].mxu0 %v1655
        %v1809 = vpop.f32.mrb[0].mxu0
        %v1810 = vadd.f32 %v1518, %v1809
        %v1811 = vpop.f32.mrb[0].mxu0
        %v1812 = vpop.f32.mrb[0].mxu0
        %v1813 = vadd.f32 %v1521, %v1812
        %v1814 = vpop.f32.mrb[0].mxu0
        %1815 = vmatprep.mubr.bf16.mxu0 0
        %1816 = vmatmul.mubr.bf16.gmra.mrb[0].mxu0 %v1658
        %v1817 = vpop.f32.mrb[0].mxu0
        %v1818 = vadd.f32 %v1526, %v1817
        %v1819 = vpop.f32.mrb[0].mxu0
        %v1820 = vpop.f32.mrb[0].mxu0
        %v1821 = vadd.f32 %v1529, %v1820
        %v1822 = vpop.f32.mrb[0].mxu0
        %1823 = vdwg.mxu0
        %v1824 = vld [vmem:[#allocation2] sm:$0xe]
        %v1825 = vld [vmem:[#allocation2 + $0xc] sm:$0xe]
        %v1826 = vld [vmem:[#allocation2 + $0x18] sm:$0xe]
        %v1827 = vld [vmem:[#allocation2 + $0x24] sm:$0xe]
        %v1828 = vld [vmem:[#allocation2 + $0x30] sm:$0xe]
        %v1829 = vld [vmem:[#allocation2 + $0x3c] sm:$0xe]
        %v1830 = vld [vmem:[#allocation2 + $0x48] sm:$0xe]
        %v1831 = vld [vmem:[#allocation2 + $0x54] sm:$0xe]
        %v1832 = vld [vmem:[#allocation2 + $0x60] sm:$0xe]
        %v1833 = vld [vmem:[#allocation2 + $0x6c] sm:$0xe]
        %v1834 = vld [vmem:[#allocation2 + $0x78] sm:$0xe]
        %v1835 = vld [vmem:[#allocation2 + $0x84] sm:$0xe]
        %v1836 = vld [vmem:[#allocation2 + $0x90] sm:$0xe]
        %v1837 = vld [vmem:[#allocation2 + $0x9c] sm:$0xe]
        %v1838 = vld [vmem:[#allocation2 + $0xa8] sm:$0xe]
        %v1839 = vld [vmem:[#allocation2 + $0xb4] sm:$0xe]
        %vm1872 = vcmask 1042432
        %vm1873 = vcmask 1046532
        %vm1874 = vmor %vm1872, %vm1873
        %v1875 = vrot.slane %v1824, 5
        %v1876 = vrot.slane %v1875, 4
        %v1877 = vrot.slane %v830, 5
        %v1878 = vsel %vm1874, %v1876, %v1877
        %v1879 = vrot.slane %v1877, 4
        %v1880 = vrot.slane %v862, 5
        %v1881 = vsel %vm1874, %v1879, %v1880
        %v1882 = vrot.slane %v1825, 5
        %v1883 = vrot.slane %v1882, 4
        %v1884 = vrot.slane %v832, 5
        %v1885 = vsel %vm1874, %v1883, %v1884
        %v1886 = vrot.slane %v1884, 4
        %v1887 = vrot.slane %v863, 5
        %v1888 = vsel %vm1874, %v1886, %v1887
        %v1889 = vrot.slane %v1826, 5
        %v1890 = vrot.slane %v1889, 4
        %v1891 = vrot.slane %v834, 5
        %v1892 = vsel %vm1874, %v1890, %v1891
        %v1893 = vrot.slane %v1891, 4
        %v1894 = vrot.slane %v864, 5
        %v1895 = vsel %vm1874, %v1893, %v1894
        %v1896 = vrot.slane %v1827, 5
        %v1897 = vrot.slane %v1896, 4
        %v1898 = vrot.slane %v836, 5
        %v1899 = vsel %vm1874, %v1897, %v1898
        %v1900 = vrot.slane %v1898, 4
        %v1901 = vrot.slane %v865, 5
        %v1902 = vsel %vm1874, %v1900, %v1901
        %v1903 = vrot.slane %v1828, 5
        %v1904 = vrot.slane %v1903, 4
        %v1905 = vrot.slane %v838, 5
        %v1906 = vsel %vm1874, %v1904, %v1905
        %v1907 = vrot.slane %v1905, 4
        %v1908 = vrot.slane %v866, 5
        %v1909 = vsel %vm1874, %v1907, %v1908
        %v1910 = vrot.slane %v1829, 5
        %v1911 = vrot.slane %v1910, 4
        %v1912 = vrot.slane %v840, 5
        %v1913 = vsel %vm1874, %v1911, %v1912
        %v1914 = vrot.slane %v1912, 4
        %v1915 = vrot.slane %v867, 5
        %v1916 = vsel %vm1874, %v1914, %v1915
        %v1917 = vrot.slane %v1830, 5
        %v1918 = vrot.slane %v1917, 4
        %v1919 = vrot.slane %v842, 5
        %v1920 = vsel %vm1874, %v1918, %v1919
        %v1921 = vrot.slane %v1919, 4
        %v1922 = vrot.slane %v868, 5
        %v1923 = vsel %vm1874, %v1921, %v1922
        %v1924 = vrot.slane %v1831, 5
        %v1925 = vrot.slane %v1924, 4
        %v1926 = vrot.slane %v844, 5
        %v1927 = vsel %vm1874, %v1925, %v1926
        %v1928 = vrot.slane %v1926, 4
        %v1929 = vrot.slane %v869, 5
        %v1930 = vsel %vm1874, %v1928, %v1929
        %v1931 = vrot.slane %v1832, 5
        %v1932 = vrot.slane %v1931, 4
        %v1933 = vrot.slane %v846, 5
        %v1934 = vsel %vm1874, %v1932, %v1933
        %v1935 = vrot.slane %v1933, 4
        %v1936 = vrot.slane %v870, 5
        %v1937 = vsel %vm1874, %v1935, %v1936
        %v1938 = vrot.slane %v1833, 5
        %v1939 = vrot.slane %v1938, 4
        %v1940 = vrot.slane %v848, 5
        %v1941 = vsel %vm1874, %v1939, %v1940
        %v1942 = vrot.slane %v1940, 4
        %v1943 = vrot.slane %v871, 5
        %v1944 = vsel %vm1874, %v1942, %v1943
        %v1945 = vrot.slane %v1834, 5
        %v1946 = vrot.slane %v1945, 4
        %v1947 = vrot.slane %v850, 5
        %v1948 = vsel %vm1874, %v1946, %v1947
        %v1949 = vrot.slane %v1947, 4
        %v1950 = vrot.slane %v872, 5
        %v1951 = vsel %vm1874, %v1949, %v1950
        %v1952 = vrot.slane %v1835, 5
        %v1953 = vrot.slane %v1952, 4
        %v1954 = vrot.slane %v852, 5
        %v1955 = vsel %vm1874, %v1953, %v1954
        %v1956 = vrot.slane %v1954, 4
        %v1957 = vrot.slane %v873, 5
        %v1958 = vsel %vm1874, %v1956, %v1957
        %v1959 = vrot.slane %v1836, 5
        %v1960 = vrot.slane %v1959, 4
        %v1961 = vrot.slane %v854, 5
        %v1962 = vsel %vm1874, %v1960, %v1961
        %v1963 = vrot.slane %v1961, 4
        %v1964 = vrot.slane %v874, 5
        %v1965 = vsel %vm1874, %v1963, %v1964
        %v1966 = vrot.slane %v1837, 5
        %v1967 = vrot.slane %v1966, 4
        %v1968 = vrot.slane %v856, 5
        %v1969 = vsel %vm1874, %v1967, %v1968
        %v1970 = vrot.slane %v1968, 4
        %v1971 = vrot.slane %v875, 5
        %v1972 = vsel %vm1874, %v1970, %v1971
        %v1973 = vrot.slane %v1838, 5
        %v1974 = vrot.slane %v1973, 4
        %v1975 = vrot.slane %v858, 5
        %v1976 = vsel %vm1874, %v1974, %v1975
        %v1977 = vrot.slane %v1975, 4
        %v1978 = vrot.slane %v876, 5
        %v1979 = vsel %vm1874, %v1977, %v1978
        %v1980 = vrot.slane %v1839, 5
        %v1981 = vrot.slane %v1980, 4
        %v1982 = vrot.slane %v860, 5
        %v1983 = vsel %vm1874, %v1981, %v1982
        %v1984 = vrot.slane %v1982, 4
        %v1985 = vrot.slane %v877, 5
        %v1986 = vsel %vm1874, %v1984, %v1985
        %s1987 = scalar_lea.vmem [#allocation3], 4
        %v1988 = vld [vmem:[%s1987] sm:$0x3]
        %v1989 = vunpack.c.l.b16 %v1878
        %v1990 = vunpack.c.l.b16 %v1881
        %v1991 = vunpack.c.l.b16 %v1885
        %v1992 = vunpack.c.l.b16 %v1888
        %v1993 = vunpack.c.l.b16 %v1892
        %v1994 = vunpack.c.l.b16 %v1895
        %v1995 = vunpack.c.l.b16 %v1899
        %v1996 = vunpack.c.l.b16 %v1902
        %v1997 = vunpack.c.l.b16 %v1906
        %v1998 = vunpack.c.l.b16 %v1909
        %v1999 = vunpack.c.l.b16 %v1913
        %v2000 = vunpack.c.l.b16 %v1916
        %v2001 = vunpack.c.l.b16 %v1920
        %v2002 = vunpack.c.l.b16 %v1923
        %v2003 = vunpack.c.l.b16 %v1927
        %v2004 = vunpack.c.l.b16 %v1930
        %v2005 = vunpack.c.l.b16 %v1934
        %v2006 = vunpack.c.l.b16 %v1937
        %v2007 = vunpack.c.l.b16 %v1941
        %v2008 = vunpack.c.l.b16 %v1944
        %v2009 = vunpack.c.l.b16 %v1948
        %v2010 = vunpack.c.l.b16 %v1951
        %v2011 = vunpack.c.l.b16 %v1955
        %v2012 = vunpack.c.l.b16 %v1958
        %v2013 = vunpack.c.l.b16 %v1962
        %v2014 = vunpack.c.l.b16 %v1965
        %v2015 = vunpack.c.l.b16 %v1969
        %v2016 = vunpack.c.l.b16 %v1972
        %v2017 = vunpack.c.l.b16 %v1976
        %v2018 = vunpack.c.l.b16 %v1979
        %v2019 = vunpack.c.l.b16 %v1983
        %v2020 = vunpack.c.l.b16 %v1986
        %v2021 = vpack.c.b16 %v1990, %v1989
        %v2022 = vpack.c.b16 %v1992, %v1991
        %v2023 = vpack.c.b16 %v1994, %v1993
        %v2024 = vpack.c.b16 %v1996, %v1995
        %v2025 = vpack.c.b16 %v1998, %v1997
        %v2026 = vpack.c.b16 %v2000, %v1999
        %v2027 = vpack.c.b16 %v2002, %v2001
        %v2028 = vpack.c.b16 %v2004, %v2003
        %v2029 = vpack.c.b16 %v2006, %v2005
        %v2030 = vpack.c.b16 %v2008, %v2007
        %v2031 = vpack.c.b16 %v2010, %v2009
        %v2032 = vpack.c.b16 %v2012, %v2011
        %v2033 = vpack.c.b16 %v2014, %v2013
        %v2034 = vpack.c.b16 %v2016, %v2015
        %v2035 = vpack.c.b16 %v2018, %v2017
        %v2036 = vpack.c.b16 %v2020, %v2019
        %v2038 = vsel %vm1315, %v2021, 0
        %v2041 = vsel %vm1315, %v2022, 0
        %v2044 = vsel %vm1315, %v2023, 0
        %v2047 = vsel %vm1315, %v2024, 0
        %v2050 = vsel %vm1315, %v2025, 0
        %v2053 = vsel %vm1315, %v2026, 0
        %v2056 = vsel %vm1315, %v2027, 0
        %v2059 = vsel %vm1315, %v2028, 0
        %v2062 = vsel %vm1315, %v2029, 0
        %v2065 = vsel %vm1315, %v2030, 0
        %v2068 = vsel %vm1315, %v2031, 0
        %v2071 = vsel %vm1315, %v2032, 0
        %v2074 = vsel %vm1315, %v2033, 0
        %v2077 = vsel %vm1315, %v2034, 0
        %v2080 = vsel %vm1315, %v2035, 0
        %v2083 = vsel %vm1315, %v2036, 0
        %v2086 = vand.u32 %v1988, %v1367
        %2088 = vmatprep.subr.bf16.mxu0 0
        %2089 = vmatpush1.bf16.msra.mxu0 %v2086
        %2090 = vmatprep.subr.bf16.mxu0 0
        %2091 = vmatpush1.bf16.msra.mxu0 0
        %2092 = vmatprep.subr.bf16.mxu0 0
        %2093 = vmatpush1.bf16.msra.mxu0 0
        %2094 = vmatprep.subr.bf16.mxu0 0
        %2095 = vmatpush1.bf16.msra.mxu0 0
        %2096 = vmatprep.subr.bf16.mxu0 0
        %2097 = vmatpush1.bf16.msra.mxu0 0
        %2098 = vmatprep.subr.bf16.mxu0 0
        %2099 = vmatpush1.bf16.msra.mxu0 0
        %2100 = vmatprep.subr.bf16.mxu0 0
        %2101 = vmatpush1.bf16.msra.mxu0 0
        %2102 = vmatprep.subr.bf16.mxu0 0
        %2103 = vmatpush1.bf16.msra.mxu0 0
        %2104 = vmatprep.subr.bf16.mxu0 0
        %2105 = vmatpush1.bf16.msra.mxu0 0
        %2106 = vmatprep.subr.bf16.mxu0 0
        %2107 = vmatpush1.bf16.msra.mxu0 0
        %2108 = vmatprep.subr.bf16.mxu0 0
        %2109 = vmatpush1.bf16.msra.mxu0 0
        %2110 = vmatprep.subr.bf16.mxu0 0
        %2111 = vmatpush1.bf16.msra.mxu0 0
        %2112 = vmatprep.subr.bf16.mxu0 0
        %2113 = vmatpush1.bf16.msra.mxu0 0
        %2114 = vmatprep.subr.bf16.mxu0 0
        %2115 = vmatpush1.bf16.msra.mxu0 0
        %2116 = vmatprep.subr.bf16.mxu0 0
        %2117 = vmatpush1.bf16.msra.mxu0 0
        %2118 = vmatprep.subr.bf16.mxu0 0
        %2119 = vmatpush1.bf16.msra.mxu0 0
        %2120 = vmatprep.mubr.bf16.mxu0 0
        %2121 = vmatmul.mubr.bf16.gmra.mrb[0].mxu0 %v2038
        %v2122 = vpop.f32.mrb[0].mxu0
        %v2123 = vadd.f32 0.0, %v2122
        %v2124 = vpop.f32.mrb[0].mxu0
        %v2125 = vpop.f32.mrb[0].mxu0
        %v2126 = vadd.f32 0.0, %v2125
        %v2127 = vpop.f32.mrb[0].mxu0
        %2128 = vmatprep.mubr.bf16.mxu0 0
        %2129 = vmatmul.mubr.bf16.gmra.mrb[0].mxu0 %v2041
        %v2130 = vpop.f32.mrb[0].mxu0
        %v2131 = vadd.f32 0.0, %v2130
        %v2132 = vpop.f32.mrb[0].mxu0
        %v2133 = vpop.f32.mrb[0].mxu0
        %v2134 = vadd.f32 0.0, %v2133
        %v2135 = vpop.f32.mrb[0].mxu0
        %2136 = vmatprep.mubr.bf16.mxu0 0
        %2137 = vmatmul.mubr.bf16.gmra.mrb[0].mxu0 %v2044
        %v2138 = vpop.f32.mrb[0].mxu0
        %v2139 = vadd.f32 0.0, %v2138
        %v2140 = vpop.f32.mrb[0].mxu0
        %v2141 = vpop.f32.mrb[0].mxu0
        %v2142 = vadd.f32 0.0, %v2141
        %v2143 = vpop.f32.mrb[0].mxu0
        %2144 = vmatprep.mubr.bf16.mxu0 0
        %2145 = vmatmul.mubr.bf16.gmra.mrb[0].mxu0 %v2047
        %v2146 = vpop.f32.mrb[0].mxu0
        %v2147 = vadd.f32 0.0, %v2146
        %v2148 = vpop.f32.mrb[0].mxu0
        %v2149 = vpop.f32.mrb[0].mxu0
        %v2150 = vadd.f32 0.0, %v2149
        %v2151 = vpop.f32.mrb[0].mxu0
        %2152 = vmatprep.mubr.bf16.mxu0 0
        %2153 = vmatmul.mubr.bf16.gmra.mrb[0].mxu0 %v2050
        %v2154 = vpop.f32.mrb[0].mxu0
        %v2155 = vadd.f32 0.0, %v2154
        %v2156 = vpop.f32.mrb[0].mxu0
        %v2157 = vpop.f32.mrb[0].mxu0
        %v2158 = vadd.f32 0.0, %v2157
        %v2159 = vpop.f32.mrb[0].mxu0
        %2160 = vmatprep.mubr.bf16.mxu0 0
        %2161 = vmatmul.mubr.bf16.gmra.mrb[0].mxu0 %v2053
        %v2162 = vpop.f32.mrb[0].mxu0
        %v2163 = vadd.f32 0.0, %v2162
        %v2164 = vpop.f32.mrb[0].mxu0
        %v2165 = vpop.f32.mrb[0].mxu0
        %v2166 = vadd.f32 0.0, %v2165
        %v2167 = vpop.f32.mrb[0].mxu0
        %2168 = vmatprep.mubr.bf16.mxu0 0
        %2169 = vmatmul.mubr.bf16.gmra.mrb[0].mxu0 %v2056
        %v2170 = vpop.f32.mrb[0].mxu0
        %v2171 = vadd.f32 0.0, %v2170
        %v2172 = vpop.f32.mrb[0].mxu0
        %v2173 = vpop.f32.mrb[0].mxu0
        %v2174 = vadd.f32 0.0, %v2173
        %v2175 = vpop.f32.mrb[0].mxu0
        %2176 = vmatprep.mubr.bf16.mxu0 0
        %2177 = vmatmul.mubr.bf16.gmra.mrb[0].mxu0 %v2059
        %v2178 = vpop.f32.mrb[0].mxu0
        %v2179 = vadd.f32 0.0, %v2178
        %v2180 = vpop.f32.mrb[0].mxu0
        %v2181 = vpop.f32.mrb[0].mxu0
        %v2182 = vadd.f32 0.0, %v2181
        %v2183 = vpop.f32.mrb[0].mxu0
        %2184 = vmatprep.mubr.bf16.mxu0 0
        %2185 = vmatmul.mubr.bf16.gmra.mrb[0].mxu0 %v2062
        %v2186 = vpop.f32.mrb[0].mxu0
        %v2187 = vadd.f32 0.0, %v2186
        %v2188 = vpop.f32.mrb[0].mxu0
        %v2189 = vpop.f32.mrb[0].mxu0
        %v2190 = vadd.f32 0.0, %v2189
        %v2191 = vpop.f32.mrb[0].mxu0
        %2192 = vmatprep.mubr.bf16.mxu0 0
        %2193 = vmatmul.mubr.bf16.gmra.mrb[0].mxu0 %v2065
        %v2194 = vpop.f32.mrb[0].mxu0
        %v2195 = vadd.f32 0.0, %v2194
        %v2196 = vpop.f32.mrb[0].mxu0
        %v2197 = vpop.f32.mrb[0].mxu0
        %v2198 = vadd.f32 0.0, %v2197
        %v2199 = vpop.f32.mrb[0].mxu0
        %2200 = vmatprep.mubr.bf16.mxu0 0
        %2201 = vmatmul.mubr.bf16.gmra.mrb[0].mxu0 %v2068
        %v2202 = vpop.f32.mrb[0].mxu0
        %v2203 = vadd.f32 0.0, %v2202
        %v2204 = vpop.f32.mrb[0].mxu0
        %v2205 = vpop.f32.mrb[0].mxu0
        %v2206 = vadd.f32 0.0, %v2205
        %v2207 = vpop.f32.mrb[0].mxu0
        %2208 = vmatprep.mubr.bf16.mxu0 0
        %2209 = vmatmul.mubr.bf16.gmra.mrb[0].mxu0 %v2071
        %v2210 = vpop.f32.mrb[0].mxu0
        %v2211 = vadd.f32 0.0, %v2210
        %v2212 = vpop.f32.mrb[0].mxu0
        %v2213 = vpop.f32.mrb[0].mxu0
        %v2214 = vadd.f32 0.0, %v2213
        %v2215 = vpop.f32.mrb[0].mxu0
        %2216 = vmatprep.mubr.bf16.mxu0 0
        %2217 = vmatmul.mubr.bf16.gmra.mrb[0].mxu0 %v2074
        %v2218 = vpop.f32.mrb[0].mxu0
        %v2219 = vadd.f32 0.0, %v2218
        %v2220 = vpop.f32.mrb[0].mxu0
        %v2221 = vpop.f32.mrb[0].mxu0
        %v2222 = vadd.f32 0.0, %v2221
        %v2223 = vpop.f32.mrb[0].mxu0
        %2224 = vmatprep.mubr.bf16.mxu0 0
        %2225 = vmatmul.mubr.bf16.gmra.mrb[0].mxu0 %v2077
        %v2226 = vpop.f32.mrb[0].mxu0
        %v2227 = vadd.f32 0.0, %v2226
        %v2228 = vpop.f32.mrb[0].mxu0
        %v2229 = vpop.f32.mrb[0].mxu0
        %v2230 = vadd.f32 0.0, %v2229
        %v2231 = vpop.f32.mrb[0].mxu0
        %2232 = vmatprep.mubr.bf16.mxu0 0
        %2233 = vmatmul.mubr.bf16.gmra.mrb[0].mxu0 %v2080
        %v2234 = vpop.f32.mrb[0].mxu0
        %v2235 = vadd.f32 0.0, %v2234
        %v2236 = vpop.f32.mrb[0].mxu0
        %v2237 = vpop.f32.mrb[0].mxu0
        %v2238 = vadd.f32 0.0, %v2237
        %v2239 = vpop.f32.mrb[0].mxu0
        %2240 = vmatprep.mubr.bf16.mxu0 0
        %2241 = vmatmul.mubr.bf16.gmra.mrb[0].mxu0 %v2083
        %v2242 = vpop.f32.mrb[0].mxu0
        %v2243 = vadd.f32 0.0, %v2242
        %v2244 = vpop.f32.mrb[0].mxu0
        %v2245 = vpop.f32.mrb[0].mxu0
        %v2246 = vadd.f32 0.0, %v2245
        %v2247 = vpop.f32.mrb[0].mxu0
        %2248 = vdwg.mxu0
        %v2249 = vadd.f32 %v1698, %v2123
        %v2250 = vadd.f32 %v1701, %v2126
        %v2251 = vadd.f32 %v1706, %v2131
        %v2252 = vadd.f32 %v1709, %v2134
        %v2253 = vadd.f32 %v1714, %v2139
        %v2254 = vadd.f32 %v1717, %v2142
        %v2255 = vadd.f32 %v1722, %v2147
        %v2256 = vadd.f32 %v1725, %v2150
        %v2257 = vadd.f32 %v1730, %v2155
        %v2258 = vadd.f32 %v1733, %v2158
        %v2259 = vadd.f32 %v1738, %v2163
        %v2260 = vadd.f32 %v1741, %v2166
        %v2261 = vadd.f32 %v1746, %v2171
        %v2262 = vadd.f32 %v1749, %v2174
        %v2263 = vadd.f32 %v1754, %v2179
        %v2264 = vadd.f32 %v1757, %v2182
        %v2265 = vadd.f32 %v1762, %v2187
        %v2266 = vadd.f32 %v1765, %v2190
        %v2267 = vadd.f32 %v1770, %v2195
        %v2268 = vadd.f32 %v1773, %v2198
        %v2269 = vadd.f32 %v1778, %v2203
        %v2270 = vadd.f32 %v1781, %v2206
        %v2271 = vadd.f32 %v1786, %v2211
        %v2272 = vadd.f32 %v1789, %v2214
        %v2273 = vadd.f32 %v1794, %v2219
        %v2274 = vadd.f32 %v1797, %v2222
        %v2275 = vadd.f32 %v1802, %v2227
        %v2276 = vadd.f32 %v1805, %v2230
        %v2277 = vadd.f32 %v1810, %v2235
        %v2278 = vadd.f32 %v1813, %v2238
        %v2279 = vadd.f32 %v1818, %v2243
        %v2280 = vadd.f32 %v1821, %v2246
        %s2281 = scalar_lea.vmem [#allocation2], 12
        %v2282 = vld [vmem:[%s2281] sm:$0xf]
        %v2283 = vld [vmem:[%s2281 + $0x4] sm:$0xf]
        %v2284 = vld [vmem:[%s2281 + $0xc] sm:$0xf]
        %v2285 = vld [vmem:[%s2281 + $0x10] sm:$0xf]
        %v2286 = vld [vmem:[%s2281 + $0x18] sm:$0xf]
        %v2287 = vld [vmem:[%s2281 + $0x1c] sm:$0xf]
        %v2288 = vld [vmem:[%s2281 + $0x24] sm:$0xf]
        %v2289 = vld [vmem:[%s2281 + $0x28] sm:$0xf]
        %v2290 = vld [vmem:[%s2281 + $0x30] sm:$0xf]
        %v2291 = vld [vmem:[%s2281 + $0x34] sm:$0xf]
        %v2292 = vld [vmem:[%s2281 + $0x3c] sm:$0xf]
        %v2293 = vld [vmem:[%s2281 + $0x40] sm:$0xf]
        %v2294 = vld [vmem:[%s2281 + $0x48] sm:$0xf]
        %v2295 = vld [vmem:[%s2281 + $0x4c] sm:$0xf]
        %v2296 = vld [vmem:[%s2281 + $0x54] sm:$0xf]
        %v2297 = vld [vmem:[%s2281 + $0x58] sm:$0xf]
        %v2298 = vld [vmem:[%s2281 + $0x60] sm:$0xf]
        %v2299 = vld [vmem:[%s2281 + $0x64] sm:$0xf]
        %v2300 = vld [vmem:[%s2281 + $0x6c] sm:$0xf]
        %v2301 = vld [vmem:[%s2281 + $0x70] sm:$0xf]
        %v2302 = vld [vmem:[%s2281 + $0x78] sm:$0xf]
        %v2303 = vld [vmem:[%s2281 + $0x7c] sm:$0xf]
        %v2304 = vld [vmem:[%s2281 + $0x84] sm:$0xf]
        %v2305 = vld [vmem:[%s2281 + $0x88] sm:$0xf]
        %v2306 = vld [vmem:[%s2281 + $0x90] sm:$0xf]
        %v2307 = vld [vmem:[%s2281 + $0x94] sm:$0xf]
        %v2308 = vld [vmem:[%s2281 + $0x9c] sm:$0xf]
        %v2309 = vld [vmem:[%s2281 + $0xa0] sm:$0xf]
        %v2310 = vld [vmem:[%s2281 + $0xa8] sm:$0xf]
        %v2311 = vld [vmem:[%s2281 + $0xac] sm:$0xf]
        %v2312 = vld [vmem:[%s2281 + $0xb4] sm:$0xf]
        %v2313 = vld [vmem:[%s2281 + $0xb8] sm:$0xf]
        %s2314 = scalar_lea.vmem [#allocation3], 6
        %v2315 = vld [vmem:[%s2314] sm:$0x3]
        %v2348 = vunpack.c.l.b16 %v2282
        %v2349 = vunpack.c.l.b16 %v2283
        %v2350 = vunpack.c.l.b16 %v2284
        %v2351 = vunpack.c.l.b16 %v2285
        %v2352 = vunpack.c.l.b16 %v2286
        %v2353 = vunpack.c.l.b16 %v2287
        %v2354 = vunpack.c.l.b16 %v2288
        %v2355 = vunpack.c.l.b16 %v2289
        %v2356 = vunpack.c.l.b16 %v2290
        %v2357 = vunpack.c.l.b16 %v2291
        %v2358 = vunpack.c.l.b16 %v2292
        %v2359 = vunpack.c.l.b16 %v2293
        %v2360 = vunpack.c.l.b16 %v2294
        %v2361 = vunpack.c.l.b16 %v2295
        %v2362 = vunpack.c.l.b16 %v2296
        %v2363 = vunpack.c.l.b16 %v2297
        %v2364 = vunpack.c.l.b16 %v2298
        %v2365 = vunpack.c.l.b16 %v2299
        %v2366 = vunpack.c.l.b16 %v2300
        %v2367 = vunpack.c.l.b16 %v2301
        %v2368 = vunpack.c.l.b16 %v2302
        %v2369 = vunpack.c.l.b16 %v2303
        %v2370 = vunpack.c.l.b16 %v2304
        %v2371 = vunpack.c.l.b16 %v2305
        %v2372 = vunpack.c.l.b16 %v2306
        %v2373 = vunpack.c.l.b16 %v2307
        %v2374 = vunpack.c.l.b16 %v2308
        %v2375 = vunpack.c.l.b16 %v2309
        %v2376 = vunpack.c.l.b16 %v2310
        %v2377 = vunpack.c.l.b16 %v2311
        %v2378 = vunpack.c.l.b16 %v2312
        %v2379 = vunpack.c.l.b16 %v2313
        %v2380 = vpack.c.b16 %v2349, %v2348
        %v2381 = vpack.c.b16 %v2351, %v2350
        %v2382 = vpack.c.b16 %v2353, %v2352
        %v2383 = vpack.c.b16 %v2355, %v2354
        %v2384 = vpack.c.b16 %v2357, %v2356
        %v2385 = vpack.c.b16 %v2359, %v2358
        %v2386 = vpack.c.b16 %v2361, %v2360
        %v2387 = vpack.c.b16 %v2363, %v2362
        %v2388 = vpack.c.b16 %v2365, %v2364
        %v2389 = vpack.c.b16 %v2367, %v2366
        %v2390 = vpack.c.b16 %v2369, %v2368
        %v2391 = vpack.c.b16 %v2371, %v2370
        %v2392 = vpack.c.b16 %v2373, %v2372
        %v2393 = vpack.c.b16 %v2375, %v2374
        %v2394 = vpack.c.b16 %v2377, %v2376
        %v2395 = vpack.c.b16 %v2379, %v2378
        %v2397 = vsel %vm1315, %v2380, 0
        %v2400 = vsel %vm1315, %v2381, 0
        %v2403 = vsel %vm1315, %v2382, 0
        %v2406 = vsel %vm1315, %v2383, 0
        %v2409 = vsel %vm1315, %v2384, 0
        %v2412 = vsel %vm1315, %v2385, 0
        %v2415 = vsel %vm1315, %v2386, 0
        %v2418 = vsel %vm1315, %v2387, 0
        %v2421 = vsel %vm1315, %v2388, 0
        %v2424 = vsel %vm1315, %v2389, 0
        %v2427 = vsel %vm1315, %v2390, 0
        %v2430 = vsel %vm1315, %v2391, 0
        %v2433 = vsel %vm1315, %v2392, 0
        %v2436 = vsel %vm1315, %v2393, 0
        %v2439 = vsel %vm1315, %v2394, 0
        %v2442 = vsel %vm1315, %v2395, 0
        %v2445 = vand.u32 %v2315, %v1367
        %2447 = vmatprep.subr.bf16.mxu0 0
        %2448 = vmatpush1.bf16.msra.mxu0 %v2445
        %2449 = vmatprep.subr.bf16.mxu0 0
        %2450 = vmatpush1.bf16.msra.mxu0 0
        %2451 = vmatprep.subr.bf16.mxu0 0
        %2452 = vmatpush1.bf16.msra.mxu0 0
        %2453 = vmatprep.subr.bf16.mxu0 0
        %2454 = vmatpush1.bf16.msra.mxu0 0
        %2455 = vmatprep.subr.bf16.mxu0 0
        %2456 = vmatpush1.bf16.msra.mxu0 0
        %2457 = vmatprep.subr.bf16.mxu0 0
        %2458 = vmatpush1.bf16.msra.mxu0 0
        %2459 = vmatprep.subr.bf16.mxu0 0
        %2460 = vmatpush1.bf16.msra.mxu0 0
        %2461 = vmatprep.subr.bf16.mxu0 0
        %2462 = vmatpush1.bf16.msra.mxu0 0
        %2463 = vmatprep.subr.bf16.mxu0 0
        %2464 = vmatpush1.bf16.msra.mxu0 0
        %2465 = vmatprep.subr.bf16.mxu0 0
        %2466 = vmatpush1.bf16.msra.mxu0 0
        %2467 = vmatprep.subr.bf16.mxu0 0
        %2468 = vmatpush1.bf16.msra.mxu0 0
        %2469 = vmatprep.subr.bf16.mxu0 0
        %2470 = vmatpush1.bf16.msra.mxu0 0
        %2471 = vmatprep.subr.bf16.mxu0 0
        %2472 = vmatpush1.bf16.msra.mxu0 0
        %2473 = vmatprep.subr.bf16.mxu0 0
        %2474 = vmatpush1.bf16.msra.mxu0 0
        %2475 = vmatprep.subr.bf16.mxu0 0
        %2476 = vmatpush1.bf16.msra.mxu0 0
        %2477 = vmatprep.subr.bf16.mxu0 0
        %2478 = vmatpush1.bf16.msra.mxu0 0
        %2479 = vmatprep.mubr.bf16.mxu0 0
        %2480 = vmatmul.mubr.bf16.gmra.mrb[0].mxu0 %v2397
        %v2481 = vpop.f32.mrb[0].mxu0
        %v2482 = vadd.f32 0.0, %v2481
        %v2483 = vpop.f32.mrb[0].mxu0
        %v2484 = vpop.f32.mrb[0].mxu0
        %v2485 = vadd.f32 0.0, %v2484
        %v2486 = vpop.f32.mrb[0].mxu0
        %2487 = vmatprep.mubr.bf16.mxu0 0
        %2488 = vmatmul.mubr.bf16.gmra.mrb[0].mxu0 %v2400
        %v2489 = vpop.f32.mrb[0].mxu0
        %v2490 = vadd.f32 0.0, %v2489
        %v2491 = vpop.f32.mrb[0].mxu0
        %v2492 = vpop.f32.mrb[0].mxu0
        %v2493 = vadd.f32 0.0, %v2492
        %v2494 = vpop.f32.mrb[0].mxu0
        %2495 = vmatprep.mubr.bf16.mxu0 0
        %2496 = vmatmul.mubr.bf16.gmra.mrb[0].mxu0 %v2403
        %v2497 = vpop.f32.mrb[0].mxu0
        %v2498 = vadd.f32 0.0, %v2497
        %v2499 = vpop.f32.mrb[0].mxu0
        %v2500 = vpop.f32.mrb[0].mxu0
        %v2501 = vadd.f32 0.0, %v2500
        %v2502 = vpop.f32.mrb[0].mxu0
        %2503 = vmatprep.mubr.bf16.mxu0 0
        %2504 = vmatmul.mubr.bf16.gmra.mrb[0].mxu0 %v2406
        %v2505 = vpop.f32.mrb[0].mxu0
        %v2506 = vadd.f32 0.0, %v2505
        %v2507 = vpop.f32.mrb[0].mxu0
        %v2508 = vpop.f32.mrb[0].mxu0
        %v2509 = vadd.f32 0.0, %v2508
        %v2510 = vpop.f32.mrb[0].mxu0
        %2511 = vmatprep.mubr.bf16.mxu0 0
        %2512 = vmatmul.mubr.bf16.gmra.mrb[0].mxu0 %v2409
        %v2513 = vpop.f32.mrb[0].mxu0
        %v2514 = vadd.f32 0.0, %v2513
        %v2515 = vpop.f32.mrb[0].mxu0
        %v2516 = vpop.f32.mrb[0].mxu0
        %v2517 = vadd.f32 0.0, %v2516
        %v2518 = vpop.f32.mrb[0].mxu0
        %2519 = vmatprep.mubr.bf16.mxu0 0
        %2520 = vmatmul.mubr.bf16.gmra.mrb[0].mxu0 %v2412
        %v2521 = vpop.f32.mrb[0].mxu0
        %v2522 = vadd.f32 0.0, %v2521
        %v2523 = vpop.f32.mrb[0].mxu0
        %v2524 = vpop.f32.mrb[0].mxu0
        %v2525 = vadd.f32 0.0, %v2524
        %v2526 = vpop.f32.mrb[0].mxu0
        %2527 = vmatprep.mubr.bf16.mxu0 0
        %2528 = vmatmul.mubr.bf16.gmra.mrb[0].mxu0 %v2415
        %v2529 = vpop.f32.mrb[0].mxu0
        %v2530 = vadd.f32 0.0, %v2529
        %v2531 = vpop.f32.mrb[0].mxu0
        %v2532 = vpop.f32.mrb[0].mxu0
        %v2533 = vadd.f32 0.0, %v2532
        %v2534 = vpop.f32.mrb[0].mxu0
        %2535 = vmatprep.mubr.bf16.mxu0 0
        %2536 = vmatmul.mubr.bf16.gmra.mrb[0].mxu0 %v2418
        %v2537 = vpop.f32.mrb[0].mxu0
        %v2538 = vadd.f32 0.0, %v2537
        %v2539 = vpop.f32.mrb[0].mxu0
        %v2540 = vpop.f32.mrb[0].mxu0
        %v2541 = vadd.f32 0.0, %v2540
        %v2542 = vpop.f32.mrb[0].mxu0
        %2543 = vmatprep.mubr.bf16.mxu0 0
        %2544 = vmatmul.mubr.bf16.gmra.mrb[0].mxu0 %v2421
        %v2545 = vpop.f32.mrb[0].mxu0
        %v2546 = vadd.f32 0.0, %v2545
        %v2547 = vpop.f32.mrb[0].mxu0
        %v2548 = vpop.f32.mrb[0].mxu0
        %v2549 = vadd.f32 0.0, %v2548
        %v2550 = vpop.f32.mrb[0].mxu0
        %2551 = vmatprep.mubr.bf16.mxu0 0
        %2552 = vmatmul.mubr.bf16.gmra.mrb[0].mxu0 %v2424
        %v2553 = vpop.f32.mrb[0].mxu0
        %v2554 = vadd.f32 0.0, %v2553
        %v2555 = vpop.f32.mrb[0].mxu0
        %v2556 = vpop.f32.mrb[0].mxu0
        %v2557 = vadd.f32 0.0, %v2556
        %v2558 = vpop.f32.mrb[0].mxu0
        %2559 = vmatprep.mubr.bf16.mxu0 0
        %2560 = vmatmul.mubr.bf16.gmra.mrb[0].mxu0 %v2427
        %v2561 = vpop.f32.mrb[0].mxu0
        %v2562 = vadd.f32 0.0, %v2561
        %v2563 = vpop.f32.mrb[0].mxu0
        %v2564 = vpop.f32.mrb[0].mxu0
        %v2565 = vadd.f32 0.0, %v2564
        %v2566 = vpop.f32.mrb[0].mxu0
        %2567 = vmatprep.mubr.bf16.mxu0 0
        %2568 = vmatmul.mubr.bf16.gmra.mrb[0].mxu0 %v2430
        %v2569 = vpop.f32.mrb[0].mxu0
        %v2570 = vadd.f32 0.0, %v2569
        %v2571 = vpop.f32.mrb[0].mxu0
        %v2572 = vpop.f32.mrb[0].mxu0
        %v2573 = vadd.f32 0.0, %v2572
        %v2574 = vpop.f32.mrb[0].mxu0
        %2575 = vmatprep.mubr.bf16.mxu0 0
        %2576 = vmatmul.mubr.bf16.gmra.mrb[0].mxu0 %v2433
        %v2577 = vpop.f32.mrb[0].mxu0
        %v2578 = vadd.f32 0.0, %v2577
        %v2579 = vpop.f32.mrb[0].mxu0
        %v2580 = vpop.f32.mrb[0].mxu0
        %v2581 = vadd.f32 0.0, %v2580
        %v2582 = vpop.f32.mrb[0].mxu0
        %2583 = vmatprep.mubr.bf16.mxu0 0
        %2584 = vmatmul.mubr.bf16.gmra.mrb[0].mxu0 %v2436
        %v2585 = vpop.f32.mrb[0].mxu0
        %v2586 = vadd.f32 0.0, %v2585
        %v2587 = vpop.f32.mrb[0].mxu0
        %v2588 = vpop.f32.mrb[0].mxu0
        %v2589 = vadd.f32 0.0, %v2588
        %v2590 = vpop.f32.mrb[0].mxu0
        %2591 = vmatprep.mubr.bf16.mxu0 0
        %2592 = vmatmul.mubr.bf16.gmra.mrb[0].mxu0 %v2439
        %v2593 = vpop.f32.mrb[0].mxu0
        %v2594 = vadd.f32 0.0, %v2593
        %v2595 = vpop.f32.mrb[0].mxu0
        %v2596 = vpop.f32.mrb[0].mxu0
        %v2597 = vadd.f32 0.0, %v2596
        %v2598 = vpop.f32.mrb[0].mxu0
        %2599 = vmatprep.mubr.bf16.mxu0 0
        %2600 = vmatmul.mubr.bf16.gmra.mrb[0].mxu0 %v2442
        %v2601 = vpop.f32.mrb[0].mxu0
        %v2602 = vadd.f32 0.0, %v2601
        %v2603 = vpop.f32.mrb[0].mxu0
        %v2604 = vpop.f32.mrb[0].mxu0
        %v2605 = vadd.f32 0.0, %v2604
        %v2606 = vpop.f32.mrb[0].mxu0
        %2607 = vdwg.mxu0
        %v2608 = vadd.f32 %v2249, %v2482
        %v2609 = vadd.f32 %v2250, %v2485
        %v2610 = vadd.f32 %v2251, %v2490
        %v2611 = vadd.f32 %v2252, %v2493
        %v2612 = vadd.f32 %v2253, %v2498
        %v2613 = vadd.f32 %v2254, %v2501
        %v2614 = vadd.f32 %v2255, %v2506
        %v2615 = vadd.f32 %v2256, %v2509
        %v2616 = vadd.f32 %v2257, %v2514
        %v2617 = vadd.f32 %v2258, %v2517
        %v2618 = vadd.f32 %v2259, %v2522
        %v2619 = vadd.f32 %v2260, %v2525
        %v2620 = vadd.f32 %v2261, %v2530
        %v2621 = vadd.f32 %v2262, %v2533
        %v2622 = vadd.f32 %v2263, %v2538
        %v2623 = vadd.f32 %v2264, %v2541
        %v2624 = vadd.f32 %v2265, %v2546
        %v2625 = vadd.f32 %v2266, %v2549
        %v2626 = vadd.f32 %v2267, %v2554
        %v2627 = vadd.f32 %v2268, %v2557
        %v2628 = vadd.f32 %v2269, %v2562
        %v2629 = vadd.f32 %v2270, %v2565
        %v2630 = vadd.f32 %v2271, %v2570
        %v2631 = vadd.f32 %v2272, %v2573
        %v2632 = vadd.f32 %v2273, %v2578
        %v2633 = vadd.f32 %v2274, %v2581
        %v2634 = vadd.f32 %v2275, %v2586
        %v2635 = vadd.f32 %v2276, %v2589
        %v2636 = vadd.f32 %v2277, %v2594
        %v2637 = vadd.f32 %v2278, %v2597
        %v2638 = vadd.f32 %v2279, %v2602
        %v2639 = vadd.f32 %v2280, %v2605
        %v2640 = vld [vmem:[%s2281] sm:$0xf]
        %v2641 = vld [vmem:[%s2281 + $0x4] sm:$0xf]
        %v2642 = vld [vmem:[%s2281 + $0x8] sm:$0x1]
        %v2643 = vld [vmem:[%s2281 + $0xc] sm:$0xf]
        %v2644 = vld [vmem:[%s2281 + $0x10] sm:$0xf]
        %v2645 = vld [vmem:[%s2281 + $0x14] sm:$0x1]
        %v2646 = vld [vmem:[%s2281 + $0x18] sm:$0xf]
        %v2647 = vld [vmem:[%s2281 + $0x1c] sm:$0xf]
        %v2648 = vld [vmem:[%s2281 + $0x20] sm:$0x1]
        %v2649 = vld [vmem:[%s2281 + $0x24] sm:$0xf]
        %v2650 = vld [vmem:[%s2281 + $0x28] sm:$0xf]
        %v2651 = vld [vmem:[%s2281 + $0x2c] sm:$0x1]
        %v2652 = vld [vmem:[%s2281 + $0x30] sm:$0xf]
        %v2653 = vld [vmem:[%s2281 + $0x34] sm:$0xf]
        %v2654 = vld [vmem:[%s2281 + $0x38] sm:$0x1]
        %v2655 = vld [vmem:[%s2281 + $0x3c] sm:$0xf]
        %v2656 = vld [vmem:[%s2281 + $0x40] sm:$0xf]
        %v2657 = vld [vmem:[%s2281 + $0x44] sm:$0x1]
        %v2658 = vld [vmem:[%s2281 + $0x48] sm:$0xf]
        %v2659 = vld [vmem:[%s2281 + $0x4c] sm:$0xf]
        %v2660 = vld [vmem:[%s2281 + $0x50] sm:$0x1]
        %v2661 = vld [vmem:[%s2281 + $0x54] sm:$0xf]
        %v2662 = vld [vmem:[%s2281 + $0x58] sm:$0xf]
        %v2663 = vld [vmem:[%s2281 + $0x5c] sm:$0x1]
        %v2664 = vld [vmem:[%s2281 + $0x60] sm:$0xf]
        %v2665 = vld [vmem:[%s2281 + $0x64] sm:$0xf]
        %v2666 = vld [vmem:[%s2281 + $0x68] sm:$0x1]
        %v2667 = vld [vmem:[%s2281 + $0x6c] sm:$0xf]
        %v2668 = vld [vmem:[%s2281 + $0x70] sm:$0xf]
        %v2669 = vld [vmem:[%s2281 + $0x74] sm:$0x1]
        %v2670 = vld [vmem:[%s2281 + $0x78] sm:$0xf]
        %v2671 = vld [vmem:[%s2281 + $0x7c] sm:$0xf]
        %v2672 = vld [vmem:[%s2281 + $0x80] sm:$0x1]
        %v2673 = vld [vmem:[%s2281 + $0x84] sm:$0xf]
        %v2674 = vld [vmem:[%s2281 + $0x88] sm:$0xf]
        %v2675 = vld [vmem:[%s2281 + $0x8c] sm:$0x1]
        %v2676 = vld [vmem:[%s2281 + $0x90] sm:$0xf]
        %v2677 = vld [vmem:[%s2281 + $0x94] sm:$0xf]
        %v2678 = vld [vmem:[%s2281 + $0x98] sm:$0x1]
        %v2679 = vld [vmem:[%s2281 + $0x9c] sm:$0xf]
        %v2680 = vld [vmem:[%s2281 + $0xa0] sm:$0xf]
        %v2681 = vld [vmem:[%s2281 + $0xa4] sm:$0x1]
        %v2682 = vld [vmem:[%s2281 + $0xa8] sm:$0xf]
        %v2683 = vld [vmem:[%s2281 + $0xac] sm:$0xf]
        %v2684 = vld [vmem:[%s2281 + $0xb0] sm:$0x1]
        %v2685 = vld [vmem:[%s2281 + $0xb4] sm:$0xf]
        %v2686 = vld [vmem:[%s2281 + $0xb8] sm:$0xf]
        %v2687 = vld [vmem:[%s2281 + $0xbc] sm:$0x1]
        %v2689 = vshrl.u32 %v2640, 16
        %v2691 = vrot.slane %v2689, 4
        %v2692 = vshll.u32 %v2640, 16
        %v2694 = vrot.slane %v2692, 5
        %v2695 = vor.u32 %v2691, %v2694
        %v2696 = vrot.slane %v2695, 4
        %v2698 = vshll.u32 %v2641, 16
        %v2700 = vrot.slane %v2698, 5
        %v2701 = vsel %vm880, %v2696, %v2700
        %v2702 = vshrl.u32 %v2641, 16
        %v2704 = vrot.slane %v2702, 4
        %v2705 = vor.u32 %v2704, %v2700
        %v2706 = vrot.slane %v2705, 4
        %v2708 = vshll.u32 %v2642, 16
        %v2710 = vrot.slane %v2708, 5
        %v2711 = vsel %vm880, %v2706, %v2710
        %v2713 = vshrl.u32 %v2643, 16
        %v2715 = vrot.slane %v2713, 4
        %v2716 = vshll.u32 %v2643, 16
        %v2718 = vrot.slane %v2716, 5
        %v2719 = vor.u32 %v2715, %v2718
        %v2720 = vrot.slane %v2719, 4
        %v2722 = vshll.u32 %v2644, 16
        %v2724 = vrot.slane %v2722, 5
        %v2725 = vsel %vm880, %v2720, %v2724
        %v2726 = vshrl.u32 %v2644, 16
        %v2728 = vrot.slane %v2726, 4
        %v2729 = vor.u32 %v2728, %v2724
        %v2730 = vrot.slane %v2729, 4
        %v2732 = vshll.u32 %v2645, 16
        %v2734 = vrot.slane %v2732, 5
        %v2735 = vsel %vm880, %v2730, %v2734
        %v2737 = vshrl.u32 %v2646, 16
        %v2739 = vrot.slane %v2737, 4
        %v2740 = vshll.u32 %v2646, 16
        %v2742 = vrot.slane %v2740, 5
        %v2743 = vor.u32 %v2739, %v2742
        %v2744 = vrot.slane %v2743, 4
        %v2746 = vshll.u32 %v2647, 16
        %v2748 = vrot.slane %v2746, 5
        %v2749 = vsel %vm880, %v2744, %v2748
        %v2750 = vshrl.u32 %v2647, 16
        %v2752 = vrot.slane %v2750, 4
        %v2753 = vor.u32 %v2752, %v2748
        %v2754 = vrot.slane %v2753, 4
        %v2756 = vshll.u32 %v2648, 16
        %v2758 = vrot.slane %v2756, 5
        %v2759 = vsel %vm880, %v2754, %v2758
        %v2761 = vshrl.u32 %v2649, 16
        %v2763 = vrot.slane %v2761, 4
        %v2764 = vshll.u32 %v2649, 16
        %v2766 = vrot.slane %v2764, 5
        %v2767 = vor.u32 %v2763, %v2766
        %v2768 = vrot.slane %v2767, 4
        %v2770 = vshll.u32 %v2650, 16
        %v2772 = vrot.slane %v2770, 5
        %v2773 = vsel %vm880, %v2768, %v2772
        %v2774 = vshrl.u32 %v2650, 16
        %v2776 = vrot.slane %v2774, 4
        %v2777 = vor.u32 %v2776, %v2772
        %v2778 = vrot.slane %v2777, 4
        %v2780 = vshll.u32 %v2651, 16
        %v2782 = vrot.slane %v2780, 5
        %v2783 = vsel %vm880, %v2778, %v2782
        %v2785 = vshrl.u32 %v2652, 16
        %v2787 = vrot.slane %v2785, 4
        %v2788 = vshll.u32 %v2652, 16
        %v2790 = vrot.slane %v2788, 5
        %v2791 = vor.u32 %v2787, %v2790
        %v2792 = vrot.slane %v2791, 4
        %v2794 = vshll.u32 %v2653, 16
        %v2796 = vrot.slane %v2794, 5
        %v2797 = vsel %vm880, %v2792, %v2796
        %v2798 = vshrl.u32 %v2653, 16
        %v2800 = vrot.slane %v2798, 4
        %v2801 = vor.u32 %v2800, %v2796
        %v2802 = vrot.slane %v2801, 4
        %v2804 = vshll.u32 %v2654, 16
        %v2806 = vrot.slane %v2804, 5
        %v2807 = vsel %vm880, %v2802, %v2806
        %v2809 = vshrl.u32 %v2655, 16
        %v2811 = vrot.slane %v2809, 4
        %v2812 = vshll.u32 %v2655, 16
        %v2814 = vrot.slane %v2812, 5
        %v2815 = vor.u32 %v2811, %v2814
        %v2816 = vrot.slane %v2815, 4
        %v2818 = vshll.u32 %v2656, 16
        %v2820 = vrot.slane %v2818, 5
        %v2821 = vsel %vm880, %v2816, %v2820
        %v2822 = vshrl.u32 %v2656, 16
        %v2824 = vrot.slane %v2822, 4
        %v2825 = vor.u32 %v2824, %v2820
        %v2826 = vrot.slane %v2825, 4
        %v2828 = vshll.u32 %v2657, 16
        %v2830 = vrot.slane %v2828, 5
        %v2831 = vsel %vm880, %v2826, %v2830
        %v2833 = vshrl.u32 %v2658, 16
        %v2835 = vrot.slane %v2833, 4
        %v2836 = vshll.u32 %v2658, 16
        %v2838 = vrot.slane %v2836, 5
        %v2839 = vor.u32 %v2835, %v2838
        %v2840 = vrot.slane %v2839, 4
        %v2842 = vshll.u32 %v2659, 16
        %v2844 = vrot.slane %v2842, 5
        %v2845 = vsel %vm880, %v2840, %v2844
        %v2846 = vshrl.u32 %v2659, 16
        %v2848 = vrot.slane %v2846, 4
        %v2849 = vor.u32 %v2848, %v2844
        %v2850 = vrot.slane %v2849, 4
        %v2852 = vshll.u32 %v2660, 16
        %v2854 = vrot.slane %v2852, 5
        %v2855 = vsel %vm880, %v2850, %v2854
        %v2857 = vshrl.u32 %v2661, 16
        %v2859 = vrot.slane %v2857, 4
        %v2860 = vshll.u32 %v2661, 16
        %v2862 = vrot.slane %v2860, 5
        %v2863 = vor.u32 %v2859, %v2862
        %v2864 = vrot.slane %v2863, 4
        %v2866 = vshll.u32 %v2662, 16
        %v2868 = vrot.slane %v2866, 5
        %v2869 = vsel %vm880, %v2864, %v2868
        %v2870 = vshrl.u32 %v2662, 16
        %v2872 = vrot.slane %v2870, 4
        %v2873 = vor.u32 %v2872, %v2868
        %v2874 = vrot.slane %v2873, 4
        %v2876 = vshll.u32 %v2663, 16
        %v2878 = vrot.slane %v2876, 5
        %v2879 = vsel %vm880, %v2874, %v2878
        %v2881 = vshrl.u32 %v2664, 16
        %v2883 = vrot.slane %v2881, 4
        %v2884 = vshll.u32 %v2664, 16
        %v2886 = vrot.slane %v2884, 5
        %v2887 = vor.u32 %v2883, %v2886
        %v2888 = vrot.slane %v2887, 4
        %v2890 = vshll.u32 %v2665, 16
        %v2892 = vrot.slane %v2890, 5
        %v2893 = vsel %vm880, %v2888, %v2892
        %v2894 = vshrl.u32 %v2665, 16
        %v2896 = vrot.slane %v2894, 4
        %v2897 = vor.u32 %v2896, %v2892
        %v2898 = vrot.slane %v2897, 4
        %v2900 = vshll.u32 %v2666, 16
        %v2902 = vrot.slane %v2900, 5
        %v2903 = vsel %vm880, %v2898, %v2902
        %v2905 = vshrl.u32 %v2667, 16
        %v2907 = vrot.slane %v2905, 4
        %v2908 = vshll.u32 %v2667, 16
        %v2910 = vrot.slane %v2908, 5
        %v2911 = vor.u32 %v2907, %v2910
        %v2912 = vrot.slane %v2911, 4
        %v2914 = vshll.u32 %v2668, 16
        %v2916 = vrot.slane %v2914, 5
        %v2917 = vsel %vm880, %v2912, %v2916
        %v2918 = vshrl.u32 %v2668, 16
        %v2920 = vrot.slane %v2918, 4
        %v2921 = vor.u32 %v2920, %v2916
        %v2922 = vrot.slane %v2921, 4
        %v2924 = vshll.u32 %v2669, 16
        %v2926 = vrot.slane %v2924, 5
        %v2927 = vsel %vm880, %v2922, %v2926
        %v2929 = vshrl.u32 %v2670, 16
        %v2931 = vrot.slane %v2929, 4
        %v2932 = vshll.u32 %v2670, 16
        %v2934 = vrot.slane %v2932, 5
        %v2935 = vor.u32 %v2931, %v2934
        %v2936 = vrot.slane %v2935, 4
        %v2938 = vshll.u32 %v2671, 16
        %v2940 = vrot.slane %v2938, 5
        %v2941 = vsel %vm880, %v2936, %v2940
        %v2942 = vshrl.u32 %v2671, 16
        %v2944 = vrot.slane %v2942, 4
        %v2945 = vor.u32 %v2944, %v2940
        %v2946 = vrot.slane %v2945, 4
        %v2948 = vshll.u32 %v2672, 16
        %v2950 = vrot.slane %v2948, 5
        %v2951 = vsel %vm880, %v2946, %v2950
        %v2953 = vshrl.u32 %v2673, 16
        %v2955 = vrot.slane %v2953, 4
        %v2956 = vshll.u32 %v2673, 16
        %v2958 = vrot.slane %v2956, 5
        %v2959 = vor.u32 %v2955, %v2958
        %v2960 = vrot.slane %v2959, 4
        %v2962 = vshll.u32 %v2674, 16
        %v2964 = vrot.slane %v2962, 5
        %v2965 = vsel %vm880, %v2960, %v2964
        %v2966 = vshrl.u32 %v2674, 16
        %v2968 = vrot.slane %v2966, 4
        %v2969 = vor.u32 %v2968, %v2964
        %v2970 = vrot.slane %v2969, 4
        %v2972 = vshll.u32 %v2675, 16
        %v2974 = vrot.slane %v2972, 5
        %v2975 = vsel %vm880, %v2970, %v2974
        %v2977 = vshrl.u32 %v2676, 16
        %v2979 = vrot.slane %v2977, 4
        %v2980 = vshll.u32 %v2676, 16
        %v2982 = vrot.slane %v2980, 5
        %v2983 = vor.u32 %v2979, %v2982
        %v2984 = vrot.slane %v2983, 4
        %v2986 = vshll.u32 %v2677, 16
        %v2988 = vrot.slane %v2986, 5
        %v2989 = vsel %vm880, %v2984, %v2988
        %v2990 = vshrl.u32 %v2677, 16
        %v2992 = vrot.slane %v2990, 4
        %v2993 = vor.u32 %v2992, %v2988
        %v2994 = vrot.slane %v2993, 4
        %v2996 = vshll.u32 %v2678, 16
        %v2998 = vrot.slane %v2996, 5
        %v2999 = vsel %vm880, %v2994, %v2998
        %v3001 = vshrl.u32 %v2679, 16
        %v3003 = vrot.slane %v3001, 4
        %v3004 = vshll.u32 %v2679, 16
        %v3006 = vrot.slane %v3004, 5
        %v3007 = vor.u32 %v3003, %v3006
        %v3008 = vrot.slane %v3007, 4
        %v3010 = vshll.u32 %v2680, 16
        %v3012 = vrot.slane %v3010, 5
        %v3013 = vsel %vm880, %v3008, %v3012
        %v3014 = vshrl.u32 %v2680, 16
        %v3016 = vrot.slane %v3014, 4
        %v3017 = vor.u32 %v3016, %v3012
        %v3018 = vrot.slane %v3017, 4
        %v3020 = vshll.u32 %v2681, 16
        %v3022 = vrot.slane %v3020, 5
        %v3023 = vsel %vm880, %v3018, %v3022
        %v3025 = vshrl.u32 %v2682, 16
        %v3027 = vrot.slane %v3025, 4
        %v3028 = vshll.u32 %v2682, 16
        %v3030 = vrot.slane %v3028, 5
        %v3031 = vor.u32 %v3027, %v3030
        %v3032 = vrot.slane %v3031, 4
        %v3034 = vshll.u32 %v2683, 16
        %v3036 = vrot.slane %v3034, 5
        %v3037 = vsel %vm880, %v3032, %v3036
        %v3038 = vshrl.u32 %v2683, 16
        %v3040 = vrot.slane %v3038, 4
        %v3041 = vor.u32 %v3040, %v3036
        %v3042 = vrot.slane %v3041, 4
        %v3044 = vshll.u32 %v2684, 16
        %v3046 = vrot.slane %v3044, 5
        %v3047 = vsel %vm880, %v3042, %v3046
        %v3049 = vshrl.u32 %v2685, 16
        %v3051 = vrot.slane %v3049, 4
        %v3052 = vshll.u32 %v2685, 16
        %v3054 = vrot.slane %v3052, 5
        %v3055 = vor.u32 %v3051, %v3054
        %v3056 = vrot.slane %v3055, 4
        %v3058 = vshll.u32 %v2686, 16
        %v3060 = vrot.slane %v3058, 5
        %v3061 = vsel %vm880, %v3056, %v3060
        %v3062 = vshrl.u32 %v2686, 16
        %v3064 = vrot.slane %v3062, 4
        %v3065 = vor.u32 %v3064, %v3060
        %v3066 = vrot.slane %v3065, 4
        %v3068 = vshll.u32 %v2687, 16
        %v3070 = vrot.slane %v3068, 5
        %v3071 = vsel %vm880, %v3066, %v3070
        %s3072 = scalar_lea.vmem [#allocation3], 8
        %v3073 = vld [vmem:[%s3072] sm:$0x3]
        %v3074 = vunpack.c.l.b16 %v2701
        %v3075 = vunpack.c.l.b16 %v2711
        %v3076 = vunpack.c.l.b16 %v2725
        %v3077 = vunpack.c.l.b16 %v2735
        %v3078 = vunpack.c.l.b16 %v2749
        %v3079 = vunpack.c.l.b16 %v2759
        %v3080 = vunpack.c.l.b16 %v2773
        %v3081 = vunpack.c.l.b16 %v2783
        %v3082 = vunpack.c.l.b16 %v2797
        %v3083 = vunpack.c.l.b16 %v2807
        %v3084 = vunpack.c.l.b16 %v2821
        %v3085 = vunpack.c.l.b16 %v2831
        %v3086 = vunpack.c.l.b16 %v2845
        %v3087 = vunpack.c.l.b16 %v2855
        %v3088 = vunpack.c.l.b16 %v2869
        %v3089 = vunpack.c.l.b16 %v2879
        %v3090 = vunpack.c.l.b16 %v2893
        %v3091 = vunpack.c.l.b16 %v2903
        %v3092 = vunpack.c.l.b16 %v2917
        %v3093 = vunpack.c.l.b16 %v2927
        %v3094 = vunpack.c.l.b16 %v2941
        %v3095 = vunpack.c.l.b16 %v2951
        %v3096 = vunpack.c.l.b16 %v2965
        %v3097 = vunpack.c.l.b16 %v2975
        %v3098 = vunpack.c.l.b16 %v2989
        %v3099 = vunpack.c.l.b16 %v2999
        %v3100 = vunpack.c.l.b16 %v3013
        %v3101 = vunpack.c.l.b16 %v3023
        %v3102 = vunpack.c.l.b16 %v3037
        %v3103 = vunpack.c.l.b16 %v3047
        %v3104 = vunpack.c.l.b16 %v3061
        %v3105 = vunpack.c.l.b16 %v3071
        %v3106 = vpack.c.b16 %v3075, %v3074
        %v3107 = vpack.c.b16 %v3077, %v3076
        %v3108 = vpack.c.b16 %v3079, %v3078
        %v3109 = vpack.c.b16 %v3081, %v3080
        %v3110 = vpack.c.b16 %v3083, %v3082
        %v3111 = vpack.c.b16 %v3085, %v3084
        %v3112 = vpack.c.b16 %v3087, %v3086
        %v3113 = vpack.c.b16 %v3089, %v3088
        %v3114 = vpack.c.b16 %v3091, %v3090
        %v3115 = vpack.c.b16 %v3093, %v3092
        %v3116 = vpack.c.b16 %v3095, %v3094
        %v3117 = vpack.c.b16 %v3097, %v3096
        %v3118 = vpack.c.b16 %v3099, %v3098
        %v3119 = vpack.c.b16 %v3101, %v3100
        %v3120 = vpack.c.b16 %v3103, %v3102
        %v3121 = vpack.c.b16 %v3105, %v3104
        %v3123 = vsel %vm1315, %v3106, 0
        %v3126 = vsel %vm1315, %v3107, 0
        %v3129 = vsel %vm1315, %v3108, 0
        %v3132 = vsel %vm1315, %v3109, 0
        %v3135 = vsel %vm1315, %v3110, 0
        %v3138 = vsel %vm1315, %v3111, 0
        %v3141 = vsel %vm1315, %v3112, 0
        %v3144 = vsel %vm1315, %v3113, 0
        %v3147 = vsel %vm1315, %v3114, 0
        %v3150 = vsel %vm1315, %v3115, 0
        %v3153 = vsel %vm1315, %v3116, 0
        %v3156 = vsel %vm1315, %v3117, 0
        %v3159 = vsel %vm1315, %v3118, 0
        %v3162 = vsel %vm1315, %v3119, 0
        %v3165 = vsel %vm1315, %v3120, 0
        %v3168 = vsel %vm1315, %v3121, 0
        %v3171 = vand.u32 %v3073, %v1367
        %3173 = vmatprep.subr.bf16.mxu0 0
        %3174 = vmatpush1.bf16.msra.mxu0 %v3171
        %3175 = vmatprep.subr.bf16.mxu0 0
        %3176 = vmatpush1.bf16.msra.mxu0 0
        %3177 = vmatprep.subr.bf16.mxu0 0
        %3178 = vmatpush1.bf16.msra.mxu0 0
        %3179 = vmatprep.subr.bf16.mxu0 0
        %3180 = vmatpush1.bf16.msra.mxu0 0
        %3181 = vmatprep.subr.bf16.mxu0 0
        %3182 = vmatpush1.bf16.msra.mxu0 0
        %3183 = vmatprep.subr.bf16.mxu0 0
        %3184 = vmatpush1.bf16.msra.mxu0 0
        %3185 = vmatprep.subr.bf16.mxu0 0
        %3186 = vmatpush1.bf16.msra.mxu0 0
        %3187 = vmatprep.subr.bf16.mxu0 0
        %3188 = vmatpush1.bf16.msra.mxu0 0
        %3189 = vmatprep.subr.bf16.mxu0 0
        %3190 = vmatpush1.bf16.msra.mxu0 0
        %3191 = vmatprep.subr.bf16.mxu0 0
        %3192 = vmatpush1.bf16.msra.mxu0 0
        %3193 = vmatprep.subr.bf16.mxu0 0
        %3194 = vmatpush1.bf16.msra.mxu0 0
        %3195 = vmatprep.subr.bf16.mxu0 0
        %3196 = vmatpush1.bf16.msra.mxu0 0
        %3197 = vmatprep.subr.bf16.mxu0 0
        %3198 = vmatpush1.bf16.msra.mxu0 0
        %3199 = vmatprep.subr.bf16.mxu0 0
        %3200 = vmatpush1.bf16.msra.mxu0 0
        %3201 = vmatprep.subr.bf16.mxu0 0
        %3202 = vmatpush1.bf16.msra.mxu0 0
        %3203 = vmatprep.subr.bf16.mxu0 0
        %3204 = vmatpush1.bf16.msra.mxu0 0
        %3205 = vmatprep.mubr.bf16.mxu0 0
        %3206 = vmatmul.mubr.bf16.gmra.mrb[0].mxu0 %v3123
        %v3207 = vpop.f32.mrb[0].mxu0
        %v3208 = vadd.f32 0.0, %v3207
        %v3209 = vpop.f32.mrb[0].mxu0
        %v3210 = vpop.f32.mrb[0].mxu0
        %v3211 = vadd.f32 0.0, %v3210
        %v3212 = vpop.f32.mrb[0].mxu0
        %3213 = vmatprep.mubr.bf16.mxu0 0
        %3214 = vmatmul.mubr.bf16.gmra.mrb[0].mxu0 %v3126
        %v3215 = vpop.f32.mrb[0].mxu0
        %v3216 = vadd.f32 0.0, %v3215
        %v3217 = vpop.f32.mrb[0].mxu0
        %v3218 = vpop.f32.mrb[0].mxu0
        %v3219 = vadd.f32 0.0, %v3218
        %v3220 = vpop.f32.mrb[0].mxu0
        %3221 = vmatprep.mubr.bf16.mxu0 0
        %3222 = vmatmul.mubr.bf16.gmra.mrb[0].mxu0 %v3129
        %v3223 = vpop.f32.mrb[0].mxu0
        %v3224 = vadd.f32 0.0, %v3223
        %v3225 = vpop.f32.mrb[0].mxu0
        %v3226 = vpop.f32.mrb[0].mxu0
        %v3227 = vadd.f32 0.0, %v3226
        %v3228 = vpop.f32.mrb[0].mxu0
        %3229 = vmatprep.mubr.bf16.mxu0 0
        %3230 = vmatmul.mubr.bf16.gmra.mrb[0].mxu0 %v3132
        %v3231 = vpop.f32.mrb[0].mxu0
        %v3232 = vadd.f32 0.0, %v3231
        %v3233 = vpop.f32.mrb[0].mxu0
        %v3234 = vpop.f32.mrb[0].mxu0
        %v3235 = vadd.f32 0.0, %v3234
        %v3236 = vpop.f32.mrb[0].mxu0
        %3237 = vmatprep.mubr.bf16.mxu0 0
        %3238 = vmatmul.mubr.bf16.gmra.mrb[0].mxu0 %v3135
        %v3239 = vpop.f32.mrb[0].mxu0
        %v3240 = vadd.f32 0.0, %v3239
        %v3241 = vpop.f32.mrb[0].mxu0
        %v3242 = vpop.f32.mrb[0].mxu0
        %v3243 = vadd.f32 0.0, %v3242
        %v3244 = vpop.f32.mrb[0].mxu0
        %3245 = vmatprep.mubr.bf16.mxu0 0
        %3246 = vmatmul.mubr.bf16.gmra.mrb[0].mxu0 %v3138
        %v3247 = vpop.f32.mrb[0].mxu0
        %v3248 = vadd.f32 0.0, %v3247
        %v3249 = vpop.f32.mrb[0].mxu0
        %v3250 = vpop.f32.mrb[0].mxu0
        %v3251 = vadd.f32 0.0, %v3250
        %v3252 = vpop.f32.mrb[0].mxu0
        %3253 = vmatprep.mubr.bf16.mxu0 0
        %3254 = vmatmul.mubr.bf16.gmra.mrb[0].mxu0 %v3141
        %v3255 = vpop.f32.mrb[0].mxu0
        %v3256 = vadd.f32 0.0, %v3255
        %v3257 = vpop.f32.mrb[0].mxu0
        %v3258 = vpop.f32.mrb[0].mxu0
        %v3259 = vadd.f32 0.0, %v3258
        %v3260 = vpop.f32.mrb[0].mxu0
        %3261 = vmatprep.mubr.bf16.mxu0 0
        %3262 = vmatmul.mubr.bf16.gmra.mrb[0].mxu0 %v3144
        %v3263 = vpop.f32.mrb[0].mxu0
        %v3264 = vadd.f32 0.0, %v3263
        %v3265 = vpop.f32.mrb[0].mxu0
        %v3266 = vpop.f32.mrb[0].mxu0
        %v3267 = vadd.f32 0.0, %v3266
        %v3268 = vpop.f32.mrb[0].mxu0
        %3269 = vmatprep.mubr.bf16.mxu0 0
        %3270 = vmatmul.mubr.bf16.gmra.mrb[0].mxu0 %v3147
        %v3271 = vpop.f32.mrb[0].mxu0
        %v3272 = vadd.f32 0.0, %v3271
        %v3273 = vpop.f32.mrb[0].mxu0
        %v3274 = vpop.f32.mrb[0].mxu0
        %v3275 = vadd.f32 0.0, %v3274
        %v3276 = vpop.f32.mrb[0].mxu0
        %3277 = vmatprep.mubr.bf16.mxu0 0
        %3278 = vmatmul.mubr.bf16.gmra.mrb[0].mxu0 %v3150
        %v3279 = vpop.f32.mrb[0].mxu0
        %v3280 = vadd.f32 0.0, %v3279
        %v3281 = vpop.f32.mrb[0].mxu0
        %v3282 = vpop.f32.mrb[0].mxu0
        %v3283 = vadd.f32 0.0, %v3282
        %v3284 = vpop.f32.mrb[0].mxu0
        %3285 = vmatprep.mubr.bf16.mxu0 0
        %3286 = vmatmul.mubr.bf16.gmra.mrb[0].mxu0 %v3153
        %v3287 = vpop.f32.mrb[0].mxu0
        %v3288 = vadd.f32 0.0, %v3287
        %v3289 = vpop.f32.mrb[0].mxu0
        %v3290 = vpop.f32.mrb[0].mxu0
        %v3291 = vadd.f32 0.0, %v3290
        %v3292 = vpop.f32.mrb[0].mxu0
        %3293 = vmatprep.mubr.bf16.mxu0 0
        %3294 = vmatmul.mubr.bf16.gmra.mrb[0].mxu0 %v3156
        %v3295 = vpop.f32.mrb[0].mxu0
        %v3296 = vadd.f32 0.0, %v3295
        %v3297 = vpop.f32.mrb[0].mxu0
        %v3298 = vpop.f32.mrb[0].mxu0
        %v3299 = vadd.f32 0.0, %v3298
        %v3300 = vpop.f32.mrb[0].mxu0
        %3301 = vmatprep.mubr.bf16.mxu0 0
        %3302 = vmatmul.mubr.bf16.gmra.mrb[0].mxu0 %v3159
        %v3303 = vpop.f32.mrb[0].mxu0
        %v3304 = vadd.f32 0.0, %v3303
        %v3305 = vpop.f32.mrb[0].mxu0
        %v3306 = vpop.f32.mrb[0].mxu0
        %v3307 = vadd.f32 0.0, %v3306
        %v3308 = vpop.f32.mrb[0].mxu0
        %3309 = vmatprep.mubr.bf16.mxu0 0
        %3310 = vmatmul.mubr.bf16.gmra.mrb[0].mxu0 %v3162
        %v3311 = vpop.f32.mrb[0].mxu0
        %v3312 = vadd.f32 0.0, %v3311
        %v3313 = vpop.f32.mrb[0].mxu0
        %v3314 = vpop.f32.mrb[0].mxu0
        %v3315 = vadd.f32 0.0, %v3314
        %v3316 = vpop.f32.mrb[0].mxu0
        %3317 = vmatprep.mubr.bf16.mxu0 0
        %3318 = vmatmul.mubr.bf16.gmra.mrb[0].mxu0 %v3165
        %v3319 = vpop.f32.mrb[0].mxu0
        %v3320 = vadd.f32 0.0, %v3319
        %v3321 = vpop.f32.mrb[0].mxu0
        %v3322 = vpop.f32.mrb[0].mxu0
        %v3323 = vadd.f32 0.0, %v3322
        %v3324 = vpop.f32.mrb[0].mxu0
        %3325 = vmatprep.mubr.bf16.mxu0 0
        %3326 = vmatmul.mubr.bf16.gmra.mrb[0].mxu0 %v3168
        %v3327 = vpop.f32.mrb[0].mxu0
        %v3328 = vadd.f32 0.0, %v3327
        %v3329 = vpop.f32.mrb[0].mxu0
        %v3330 = vpop.f32.mrb[0].mxu0
        %v3331 = vadd.f32 0.0, %v3330
        %v3332 = vpop.f32.mrb[0].mxu0
        %3333 = vdwg.mxu0
        %v3334 = vadd.f32 %v2608, %v3208
        %v3335 = vadd.f32 %v2609, %v3211
        %v3336 = vadd.f32 %v2610, %v3216
        %v3337 = vadd.f32 %v2611, %v3219
        %v3338 = vadd.f32 %v2612, %v3224
        %v3339 = vadd.f32 %v2613, %v3227
        %v3340 = vadd.f32 %v2614, %v3232
        %v3341 = vadd.f32 %v2615, %v3235
        %v3342 = vadd.f32 %v2616, %v3240
        %v3343 = vadd.f32 %v2617, %v3243
        %v3344 = vadd.f32 %v2618, %v3248
        %v3345 = vadd.f32 %v2619, %v3251
        %v3346 = vadd.f32 %v2620, %v3256
        %v3347 = vadd.f32 %v2621, %v3259
        %v3348 = vadd.f32 %v2622, %v3264
        %v3349 = vadd.f32 %v2623, %v3267
        %v3350 = vadd.f32 %v2624, %v3272
        %v3351 = vadd.f32 %v2625, %v3275
        %v3352 = vadd.f32 %v2626, %v3280
        %v3353 = vadd.f32 %v2627, %v3283
        %v3354 = vadd.f32 %v2628, %v3288
        %v3355 = vadd.f32 %v2629, %v3291
        %v3356 = vadd.f32 %v2630, %v3296
        %v3357 = vadd.f32 %v2631, %v3299
        %v3358 = vadd.f32 %v2632, %v3304
        %v3359 = vadd.f32 %v2633, %v3307
        %v3360 = vadd.f32 %v2634, %v3312
        %v3361 = vadd.f32 %v2635, %v3315
        %v3362 = vadd.f32 %v2636, %v3320
        %v3363 = vadd.f32 %v2637, %v3323
        %v3364 = vadd.f32 %v2638, %v3328
        %v3365 = vadd.f32 %v2639, %v3331
        %v3366 = vld [vmem:[%s2281] sm:$0xe]
        %v3367 = vld [vmem:[%s2281 + $0xc] sm:$0xe]
        %v3368 = vld [vmem:[%s2281 + $0x18] sm:$0xe]
        %v3369 = vld [vmem:[%s2281 + $0x24] sm:$0xe]
        %v3370 = vld [vmem:[%s2281 + $0x30] sm:$0xe]
        %v3371 = vld [vmem:[%s2281 + $0x3c] sm:$0xe]
        %v3372 = vld [vmem:[%s2281 + $0x48] sm:$0xe]
        %v3373 = vld [vmem:[%s2281 + $0x54] sm:$0xe]
        %v3374 = vld [vmem:[%s2281 + $0x60] sm:$0xe]
        %v3375 = vld [vmem:[%s2281 + $0x6c] sm:$0xe]
        %v3376 = vld [vmem:[%s2281 + $0x78] sm:$0xe]
        %v3377 = vld [vmem:[%s2281 + $0x84] sm:$0xe]
        %v3378 = vld [vmem:[%s2281 + $0x90] sm:$0xe]
        %v3379 = vld [vmem:[%s2281 + $0x9c] sm:$0xe]
        %v3380 = vld [vmem:[%s2281 + $0xa8] sm:$0xe]
        %v3381 = vld [vmem:[%s2281 + $0xb4] sm:$0xe]
        %v3430 = vrot.slane %v3366, 5
        %v3431 = vrot.slane %v3430, 4
        %v3432 = vrot.slane %v2641, 5
        %v3433 = vsel %vm1874, %v3431, %v3432
        %v3434 = vrot.slane %v3432, 4
        %v3435 = vrot.slane %v2642, 5
        %v3436 = vsel %vm1874, %v3434, %v3435
        %v3437 = vrot.slane %v3367, 5
        %v3438 = vrot.slane %v3437, 4
        %v3439 = vrot.slane %v2644, 5
        %v3440 = vsel %vm1874, %v3438, %v3439
        %v3441 = vrot.slane %v3439, 4
        %v3442 = vrot.slane %v2645, 5
        %v3443 = vsel %vm1874, %v3441, %v3442
        %v3444 = vrot.slane %v3368, 5
        %v3445 = vrot.slane %v3444, 4
        %v3446 = vrot.slane %v2647, 5
        %v3447 = vsel %vm1874, %v3445, %v3446
        %v3448 = vrot.slane %v3446, 4
        %v3449 = vrot.slane %v2648, 5
        %v3450 = vsel %vm1874, %v3448, %v3449
        %v3451 = vrot.slane %v3369, 5
        %v3452 = vrot.slane %v3451, 4
        %v3453 = vrot.slane %v2650, 5
        %v3454 = vsel %vm1874, %v3452, %v3453
        %v3455 = vrot.slane %v3453, 4
        %v3456 = vrot.slane %v2651, 5
        %v3457 = vsel %vm1874, %v3455, %v3456
        %v3458 = vrot.slane %v3370, 5
        %v3459 = vrot.slane %v3458, 4
        %v3460 = vrot.slane %v2653, 5
        %v3461 = vsel %vm1874, %v3459, %v3460
        %v3462 = vrot.slane %v3460, 4
        %v3463 = vrot.slane %v2654, 5
        %v3464 = vsel %vm1874, %v3462, %v3463
        %v3465 = vrot.slane %v3371, 5
        %v3466 = vrot.slane %v3465, 4
        %v3467 = vrot.slane %v2656, 5
        %v3468 = vsel %vm1874, %v3466, %v3467
        %v3469 = vrot.slane %v3467, 4
        %v3470 = vrot.slane %v2657, 5
        %v3471 = vsel %vm1874, %v3469, %v3470
        %v3472 = vrot.slane %v3372, 5
        %v3473 = vrot.slane %v3472, 4
        %v3474 = vrot.slane %v2659, 5
        %v3475 = vsel %vm1874, %v3473, %v3474
        %v3476 = vrot.slane %v3474, 4
        %v3477 = vrot.slane %v2660, 5
        %v3478 = vsel %vm1874, %v3476, %v3477
        %v3479 = vrot.slane %v3373, 5
        %v3480 = vrot.slane %v3479, 4
        %v3481 = vrot.slane %v2662, 5
        %v3482 = vsel %vm1874, %v3480, %v3481
        %v3483 = vrot.slane %v3481, 4
        %v3484 = vrot.slane %v2663, 5
        %v3485 = vsel %vm1874, %v3483, %v3484
        %v3486 = vrot.slane %v3374, 5
        %v3487 = vrot.slane %v3486, 4
        %v3488 = vrot.slane %v2665, 5
        %v3489 = vsel %vm1874, %v3487, %v3488
        %v3490 = vrot.slane %v3488, 4
        %v3491 = vrot.slane %v2666, 5
        %v3492 = vsel %vm1874, %v3490, %v3491
        %v3493 = vrot.slane %v3375, 5
        %v3494 = vrot.slane %v3493, 4
        %v3495 = vrot.slane %v2668, 5
        %v3496 = vsel %vm1874, %v3494, %v3495
        %v3497 = vrot.slane %v3495, 4
        %v3498 = vrot.slane %v2669, 5
        %v3499 = vsel %vm1874, %v3497, %v3498
        %v3500 = vrot.slane %v3376, 5
        %v3501 = vrot.slane %v3500, 4
        %v3502 = vrot.slane %v2671, 5
        %v3503 = vsel %vm1874, %v3501, %v3502
        %v3504 = vrot.slane %v3502, 4
        %v3505 = vrot.slane %v2672, 5
        %v3506 = vsel %vm1874, %v3504, %v3505
        %v3507 = vrot.slane %v3377, 5
        %v3508 = vrot.slane %v3507, 4
        %v3509 = vrot.slane %v2674, 5
        %v3510 = vsel %vm1874, %v3508, %v3509
        %v3511 = vrot.slane %v3509, 4
        %v3512 = vrot.slane %v2675, 5
        %v3513 = vsel %vm1874, %v3511, %v3512
        %v3514 = vrot.slane %v3378, 5
        %v3515 = vrot.slane %v3514, 4
        %v3516 = vrot.slane %v2677, 5
        %v3517 = vsel %vm1874, %v3515, %v3516
        %v3518 = vrot.slane %v3516, 4
        %v3519 = vrot.slane %v2678, 5
        %v3520 = vsel %vm1874, %v3518, %v3519
        %v3521 = vrot.slane %v3379, 5
        %v3522 = vrot.slane %v3521, 4
        %v3523 = vrot.slane %v2680, 5
        %v3524 = vsel %vm1874, %v3522, %v3523
        %v3525 = vrot.slane %v3523, 4
        %v3526 = vrot.slane %v2681, 5
        %v3527 = vsel %vm1874, %v3525, %v3526
        %v3528 = vrot.slane %v3380, 5
        %v3529 = vrot.slane %v3528, 4
        %v3530 = vrot.slane %v2683, 5
        %v3531 = vsel %vm1874, %v3529, %v3530
        %v3532 = vrot.slane %v3530, 4
        %v3533 = vrot.slane %v2684, 5
        %v3534 = vsel %vm1874, %v3532, %v3533
        %v3535 = vrot.slane %v3381, 5
        %v3536 = vrot.slane %v3535, 4
        %v3537 = vrot.slane %v2686, 5
        %v3538 = vsel %vm1874, %v3536, %v3537
        %v3539 = vrot.slane %v3537, 4
        %v3540 = vrot.slane %v2687, 5
        %v3541 = vsel %vm1874, %v3539, %v3540
        %s3542 = scalar_lea.vmem [#allocation3], 10
        %v3543 = vld [vmem:[%s3542] sm:$0x3]
        %v3544 = vunpack.c.l.b16 %v3433
        %v3545 = vunpack.c.l.b16 %v3436
        %v3546 = vunpack.c.l.b16 %v3440
        %v3547 = vunpack.c.l.b16 %v3443
        %v3548 = vunpack.c.l.b16 %v3447
        %v3549 = vunpack.c.l.b16 %v3450
        %v3550 = vunpack.c.l.b16 %v3454
        %v3551 = vunpack.c.l.b16 %v3457
        %v3552 = vunpack.c.l.b16 %v3461
        %v3553 = vunpack.c.l.b16 %v3464
        %v3554 = vunpack.c.l.b16 %v3468
        %v3555 = vunpack.c.l.b16 %v3471
        %v3556 = vunpack.c.l.b16 %v3475
        %v3557 = vunpack.c.l.b16 %v3478
        %v3558 = vunpack.c.l.b16 %v3482
        %v3559 = vunpack.c.l.b16 %v3485
        %v3560 = vunpack.c.l.b16 %v3489
        %v3561 = vunpack.c.l.b16 %v3492
        %v3562 = vunpack.c.l.b16 %v3496
        %v3563 = vunpack.c.l.b16 %v3499
        %v3564 = vunpack.c.l.b16 %v3503
        %v3565 = vunpack.c.l.b16 %v3506
        %v3566 = vunpack.c.l.b16 %v3510
        %v3567 = vunpack.c.l.b16 %v3513
        %v3568 = vunpack.c.l.b16 %v3517
        %v3569 = vunpack.c.l.b16 %v3520
        %v3570 = vunpack.c.l.b16 %v3524
        %v3571 = vunpack.c.l.b16 %v3527
        %v3572 = vunpack.c.l.b16 %v3531
        %v3573 = vunpack.c.l.b16 %v3534
        %v3574 = vunpack.c.l.b16 %v3538
        %v3575 = vunpack.c.l.b16 %v3541
        %v3576 = vpack.c.b16 %v3545, %v3544
        %v3577 = vpack.c.b16 %v3547, %v3546
        %v3578 = vpack.c.b16 %v3549, %v3548
        %v3579 = vpack.c.b16 %v3551, %v3550
        %v3580 = vpack.c.b16 %v3553, %v3552
        %v3581 = vpack.c.b16 %v3555, %v3554
        %v3582 = vpack.c.b16 %v3557, %v3556
        %v3583 = vpack.c.b16 %v3559, %v3558
        %v3584 = vpack.c.b16 %v3561, %v3560
        %v3585 = vpack.c.b16 %v3563, %v3562
        %v3586 = vpack.c.b16 %v3565, %v3564
        %v3587 = vpack.c.b16 %v3567, %v3566
        %v3588 = vpack.c.b16 %v3569, %v3568
        %v3589 = vpack.c.b16 %v3571, %v3570
        %v3590 = vpack.c.b16 %v3573, %v3572
        %v3591 = vpack.c.b16 %v3575, %v3574
        %v3593 = vsel %vm1315, %v3576, 0
        %v3596 = vsel %vm1315, %v3577, 0
        %v3599 = vsel %vm1315, %v3578, 0
        %v3602 = vsel %vm1315, %v3579, 0
        %v3605 = vsel %vm1315, %v3580, 0
        %v3608 = vsel %vm1315, %v3581, 0
        %v3611 = vsel %vm1315, %v3582, 0
        %v3614 = vsel %vm1315, %v3583, 0
        %v3617 = vsel %vm1315, %v3584, 0
        %v3620 = vsel %vm1315, %v3585, 0
        %v3623 = vsel %vm1315, %v3586, 0
        %v3626 = vsel %vm1315, %v3587, 0
        %v3629 = vsel %vm1315, %v3588, 0
        %v3632 = vsel %vm1315, %v3589, 0
        %v3635 = vsel %vm1315, %v3590, 0
        %v3638 = vsel %vm1315, %v3591, 0
        %v3641 = vand.u32 %v3543, %v1367
        %3643 = vmatprep.subr.bf16.mxu0 0
        %3644 = vmatpush1.bf16.msra.mxu0 %v3641
        %3645 = vmatprep.subr.bf16.mxu0 0
        %3646 = vmatpush1.bf16.msra.mxu0 0
        %3647 = vmatprep.subr.bf16.mxu0 0
        %3648 = vmatpush1.bf16.msra.mxu0 0
        %3649 = vmatprep.subr.bf16.mxu0 0
        %3650 = vmatpush1.bf16.msra.mxu0 0
        %3651 = vmatprep.subr.bf16.mxu0 0
        %3652 = vmatpush1.bf16.msra.mxu0 0
        %3653 = vmatprep.subr.bf16.mxu0 0
        %3654 = vmatpush1.bf16.msra.mxu0 0
        %3655 = vmatprep.subr.bf16.mxu0 0
        %3656 = vmatpush1.bf16.msra.mxu0 0
        %3657 = vmatprep.subr.bf16.mxu0 0
        %3658 = vmatpush1.bf16.msra.mxu0 0
        %3659 = vmatprep.subr.bf16.mxu0 0
        %3660 = vmatpush1.bf16.msra.mxu0 0
        %3661 = vmatprep.subr.bf16.mxu0 0
        %3662 = vmatpush1.bf16.msra.mxu0 0
        %3663 = vmatprep.subr.bf16.mxu0 0
        %3664 = vmatpush1.bf16.msra.mxu0 0
        %3665 = vmatprep.subr.bf16.mxu0 0
        %3666 = vmatpush1.bf16.msra.mxu0 0
        %3667 = vmatprep.subr.bf16.mxu0 0
        %3668 = vmatpush1.bf16.msra.mxu0 0
        %3669 = vmatprep.subr.bf16.mxu0 0
        %3670 = vmatpush1.bf16.msra.mxu0 0
        %3671 = vmatprep.subr.bf16.mxu0 0
        %3672 = vmatpush1.bf16.msra.mxu0 0
        %3673 = vmatprep.subr.bf16.mxu0 0
        %3674 = vmatpush1.bf16.msra.mxu0 0
        %3675 = vmatprep.mubr.bf16.mxu0 0
        %3676 = vmatmul.mubr.bf16.gmra.mrb[0].mxu0 %v3593
        %v3677 = vpop.f32.mrb[0].mxu0
        %v3678 = vadd.f32 0.0, %v3677
        %v3679 = vpop.f32.mrb[0].mxu0
        %v3680 = vpop.f32.mrb[0].mxu0
        %v3681 = vadd.f32 0.0, %v3680
        %v3682 = vpop.f32.mrb[0].mxu0
        %3683 = vmatprep.mubr.bf16.mxu0 0
        %3684 = vmatmul.mubr.bf16.gmra.mrb[0].mxu0 %v3596
        %v3685 = vpop.f32.mrb[0].mxu0
        %v3686 = vadd.f32 0.0, %v3685
        %v3687 = vpop.f32.mrb[0].mxu0
        %v3688 = vpop.f32.mrb[0].mxu0
        %v3689 = vadd.f32 0.0, %v3688
        %v3690 = vpop.f32.mrb[0].mxu0
        %3691 = vmatprep.mubr.bf16.mxu0 0
        %3692 = vmatmul.mubr.bf16.gmra.mrb[0].mxu0 %v3599
        %v3693 = vpop.f32.mrb[0].mxu0
        %v3694 = vadd.f32 0.0, %v3693
        %v3695 = vpop.f32.mrb[0].mxu0
        %v3696 = vpop.f32.mrb[0].mxu0
        %v3697 = vadd.f32 0.0, %v3696
        %v3698 = vpop.f32.mrb[0].mxu0
        %3699 = vmatprep.mubr.bf16.mxu0 0
        %3700 = vmatmul.mubr.bf16.gmra.mrb[0].mxu0 %v3602
        %v3701 = vpop.f32.mrb[0].mxu0
        %v3702 = vadd.f32 0.0, %v3701
        %v3703 = vpop.f32.mrb[0].mxu0
        %v3704 = vpop.f32.mrb[0].mxu0
        %v3705 = vadd.f32 0.0, %v3704
        %v3706 = vpop.f32.mrb[0].mxu0
        %3707 = vmatprep.mubr.bf16.mxu0 0
        %3708 = vmatmul.mubr.bf16.gmra.mrb[0].mxu0 %v3605
        %v3709 = vpop.f32.mrb[0].mxu0
        %v3710 = vadd.f32 0.0, %v3709
        %v3711 = vpop.f32.mrb[0].mxu0
        %v3712 = vpop.f32.mrb[0].mxu0
        %v3713 = vadd.f32 0.0, %v3712
        %v3714 = vpop.f32.mrb[0].mxu0
        %3715 = vmatprep.mubr.bf16.mxu0 0
        %3716 = vmatmul.mubr.bf16.gmra.mrb[0].mxu0 %v3608
        %v3717 = vpop.f32.mrb[0].mxu0
        %v3718 = vadd.f32 0.0, %v3717
        %v3719 = vpop.f32.mrb[0].mxu0
        %v3720 = vpop.f32.mrb[0].mxu0
        %v3721 = vadd.f32 0.0, %v3720
        %v3722 = vpop.f32.mrb[0].mxu0
        %3723 = vmatprep.mubr.bf16.mxu0 0
        %3724 = vmatmul.mubr.bf16.gmra.mrb[0].mxu0 %v3611
        %v3725 = vpop.f32.mrb[0].mxu0
        %v3726 = vadd.f32 0.0, %v3725
        %v3727 = vpop.f32.mrb[0].mxu0
        %v3728 = vpop.f32.mrb[0].mxu0
        %v3729 = vadd.f32 0.0, %v3728
        %v3730 = vpop.f32.mrb[0].mxu0
        %3731 = vmatprep.mubr.bf16.mxu0 0
        %3732 = vmatmul.mubr.bf16.gmra.mrb[0].mxu0 %v3614
        %v3733 = vpop.f32.mrb[0].mxu0
        %v3734 = vadd.f32 0.0, %v3733
        %v3735 = vpop.f32.mrb[0].mxu0
        %v3736 = vpop.f32.mrb[0].mxu0
        %v3737 = vadd.f32 0.0, %v3736
        %v3738 = vpop.f32.mrb[0].mxu0
        %3739 = vmatprep.mubr.bf16.mxu0 0
        %3740 = vmatmul.mubr.bf16.gmra.mrb[0].mxu0 %v3617
        %v3741 = vpop.f32.mrb[0].mxu0
        %v3742 = vadd.f32 0.0, %v3741
        %v3743 = vpop.f32.mrb[0].mxu0
        %v3744 = vpop.f32.mrb[0].mxu0
        %v3745 = vadd.f32 0.0, %v3744
        %v3746 = vpop.f32.mrb[0].mxu0
        %3747 = vmatprep.mubr.bf16.mxu0 0
        %3748 = vmatmul.mubr.bf16.gmra.mrb[0].mxu0 %v3620
        %v3749 = vpop.f32.mrb[0].mxu0
        %v3750 = vadd.f32 0.0, %v3749
        %v3751 = vpop.f32.mrb[0].mxu0
        %v3752 = vpop.f32.mrb[0].mxu0
        %v3753 = vadd.f32 0.0, %v3752
        %v3754 = vpop.f32.mrb[0].mxu0
        %3755 = vmatprep.mubr.bf16.mxu0 0
        %3756 = vmatmul.mubr.bf16.gmra.mrb[0].mxu0 %v3623
        %v3757 = vpop.f32.mrb[0].mxu0
        %v3758 = vadd.f32 0.0, %v3757
        %v3759 = vpop.f32.mrb[0].mxu0
        %v3760 = vpop.f32.mrb[0].mxu0
        %v3761 = vadd.f32 0.0, %v3760
        %v3762 = vpop.f32.mrb[0].mxu0
        %3763 = vmatprep.mubr.bf16.mxu0 0
        %3764 = vmatmul.mubr.bf16.gmra.mrb[0].mxu0 %v3626
        %v3765 = vpop.f32.mrb[0].mxu0
        %v3766 = vadd.f32 0.0, %v3765
        %v3767 = vpop.f32.mrb[0].mxu0
        %v3768 = vpop.f32.mrb[0].mxu0
        %v3769 = vadd.f32 0.0, %v3768
        %v3770 = vpop.f32.mrb[0].mxu0
        %3771 = vmatprep.mubr.bf16.mxu0 0
        %3772 = vmatmul.mubr.bf16.gmra.mrb[0].mxu0 %v3629
        %v3773 = vpop.f32.mrb[0].mxu0
        %v3774 = vadd.f32 0.0, %v3773
        %v3775 = vpop.f32.mrb[0].mxu0
        %v3776 = vpop.f32.mrb[0].mxu0
        %v3777 = vadd.f32 0.0, %v3776
        %v3778 = vpop.f32.mrb[0].mxu0
        %3779 = vmatprep.mubr.bf16.mxu0 0
        %3780 = vmatmul.mubr.bf16.gmra.mrb[0].mxu0 %v3632
        %v3781 = vpop.f32.mrb[0].mxu0
        %v3782 = vadd.f32 0.0, %v3781
        %v3783 = vpop.f32.mrb[0].mxu0
        %v3784 = vpop.f32.mrb[0].mxu0
        %v3785 = vadd.f32 0.0, %v3784
        %v3786 = vpop.f32.mrb[0].mxu0
        %3787 = vmatprep.mubr.bf16.mxu0 0
        %3788 = vmatmul.mubr.bf16.gmra.mrb[0].mxu0 %v3635
        %v3789 = vpop.f32.mrb[0].mxu0
        %v3790 = vadd.f32 0.0, %v3789
        %v3791 = vpop.f32.mrb[0].mxu0
        %v3792 = vpop.f32.mrb[0].mxu0
        %v3793 = vadd.f32 0.0, %v3792
        %v3794 = vpop.f32.mrb[0].mxu0
        %3795 = vmatprep.mubr.bf16.mxu0 0
        %3796 = vmatmul.mubr.bf16.gmra.mrb[0].mxu0 %v3638
        %v3797 = vpop.f32.mrb[0].mxu0
        %v3798 = vadd.f32 0.0, %v3797
        %v3799 = vpop.f32.mrb[0].mxu0
        %v3800 = vpop.f32.mrb[0].mxu0
        %v3801 = vadd.f32 0.0, %v3800
        %v3802 = vpop.f32.mrb[0].mxu0
        %3803 = vdwg.mxu0
        %v3804 = vadd.f32 %v3334, %v3678
        %v3805 = vadd.f32 %v3335, %v3681
        %v3806 = vadd.f32 %v3336, %v3686
        %v3807 = vadd.f32 %v3337, %v3689
        %v3808 = vadd.f32 %v3338, %v3694
        %v3809 = vadd.f32 %v3339, %v3697
        %v3810 = vadd.f32 %v3340, %v3702
        %v3811 = vadd.f32 %v3341, %v3705
        %v3812 = vadd.f32 %v3342, %v3710
        %v3813 = vadd.f32 %v3343, %v3713
        %v3814 = vadd.f32 %v3344, %v3718
        %v3815 = vadd.f32 %v3345, %v3721
        %v3816 = vadd.f32 %v3346, %v3726
        %v3817 = vadd.f32 %v3347, %v3729
        %v3818 = vadd.f32 %v3348, %v3734
        %v3819 = vadd.f32 %v3349, %v3737
        %v3820 = vadd.f32 %v3350, %v3742
        %v3821 = vadd.f32 %v3351, %v3745
        %v3822 = vadd.f32 %v3352, %v3750
        %v3823 = vadd.f32 %v3353, %v3753
        %v3824 = vadd.f32 %v3354, %v3758
        %v3825 = vadd.f32 %v3355, %v3761
        %v3826 = vadd.f32 %v3356, %v3766
        %v3827 = vadd.f32 %v3357, %v3769
        %v3828 = vadd.f32 %v3358, %v3774
        %v3829 = vadd.f32 %v3359, %v3777
        %v3830 = vadd.f32 %v3360, %v3782
        %v3831 = vadd.f32 %v3361, %v3785
        %v3832 = vadd.f32 %v3362, %v3790
        %v3833 = vadd.f32 %v3363, %v3793
        %v3834 = vadd.f32 %v3364, %v3798
        %v3835 = vadd.f32 %v3365, %v3801
        %s3836 = scalar_lea.vmem [#allocation2], 24
        %v3837 = vld [vmem:[%s3836] sm:$0xf]
        %v3838 = vld [vmem:[%s3836 + $0x4] sm:$0xf]
        %v3839 = vld [vmem:[%s3836 + $0xc] sm:$0xf]
        %v3840 = vld [vmem:[%s3836 + $0x10] sm:$0xf]
        %v3841 = vld [vmem:[%s3836 + $0x18] sm:$0xf]
        %v3842 = vld [vmem:[%s3836 + $0x1c] sm:$0xf]
        %v3843 = vld [vmem:[%s3836 + $0x24] sm:$0xf]
        %v3844 = vld [vmem:[%s3836 + $0x28] sm:$0xf]
        %v3845 = vld [vmem:[%s3836 + $0x30] sm:$0xf]
        %v3846 = vld [vmem:[%s3836 + $0x34] sm:$0xf]
        %v3847 = vld [vmem:[%s3836 + $0x3c] sm:$0xf]
        %v3848 = vld [vmem:[%s3836 + $0x40] sm:$0xf]
        %v3849 = vld [vmem:[%s3836 + $0x48] sm:$0xf]
        %v3850 = vld [vmem:[%s3836 + $0x4c] sm:$0xf]
        %v3851 = vld [vmem:[%s3836 + $0x54] sm:$0xf]
        %v3852 = vld [vmem:[%s3836 + $0x58] sm:$0xf]
        %v3853 = vld [vmem:[%s3836 + $0x60] sm:$0xf]
        %v3854 = vld [vmem:[%s3836 + $0x64] sm:$0xf]
        %v3855 = vld [vmem:[%s3836 + $0x6c] sm:$0xf]
        %v3856 = vld [vmem:[%s3836 + $0x70] sm:$0xf]
        %v3857 = vld [vmem:[%s3836 + $0x78] sm:$0xf]
        %v3858 = vld [vmem:[%s3836 + $0x7c] sm:$0xf]
        %v3859 = vld [vmem:[%s3836 + $0x84] sm:$0xf]
        %v3860 = vld [vmem:[%s3836 + $0x88] sm:$0xf]
        %v3861 = vld [vmem:[%s3836 + $0x90] sm:$0xf]
        %v3862 = vld [vmem:[%s3836 + $0x94] sm:$0xf]
        %v3863 = vld [vmem:[%s3836 + $0x9c] sm:$0xf]
        %v3864 = vld [vmem:[%s3836 + $0xa0] sm:$0xf]
        %v3865 = vld [vmem:[%s3836 + $0xa8] sm:$0xf]
        %v3866 = vld [vmem:[%s3836 + $0xac] sm:$0xf]
        %v3867 = vld [vmem:[%s3836 + $0xb4] sm:$0xf]
        %v3868 = vld [vmem:[%s3836 + $0xb8] sm:$0xf]
        %s3869 = scalar_lea.vmem [#allocation3], 12
        %v3870 = vld [vmem:[%s3869] sm:$0x3]
        %v3903 = vunpack.c.l.b16 %v3837
        %v3904 = vunpack.c.l.b16 %v3838
        %v3905 = vunpack.c.l.b16 %v3839
        %v3906 = vunpack.c.l.b16 %v3840
        %v3907 = vunpack.c.l.b16 %v3841
        %v3908 = vunpack.c.l.b16 %v3842
        %v3909 = vunpack.c.l.b16 %v3843
        %v3910 = vunpack.c.l.b16 %v3844
        %v3911 = vunpack.c.l.b16 %v3845
        %v3912 = vunpack.c.l.b16 %v3846
        %v3913 = vunpack.c.l.b16 %v3847
        %v3914 = vunpack.c.l.b16 %v3848
        %v3915 = vunpack.c.l.b16 %v3849
        %v3916 = vunpack.c.l.b16 %v3850
        %v3917 = vunpack.c.l.b16 %v3851
        %v3918 = vunpack.c.l.b16 %v3852
        %v3919 = vunpack.c.l.b16 %v3853
        %v3920 = vunpack.c.l.b16 %v3854
        %v3921 = vunpack.c.l.b16 %v3855
        %v3922 = vunpack.c.l.b16 %v3856
        %v3923 = vunpack.c.l.b16 %v3857
        %v3924 = vunpack.c.l.b16 %v3858
        %v3925 = vunpack.c.l.b16 %v3859
        %v3926 = vunpack.c.l.b16 %v3860
        %v3927 = vunpack.c.l.b16 %v3861
        %v3928 = vunpack.c.l.b16 %v3862
        %v3929 = vunpack.c.l.b16 %v3863
        %v3930 = vunpack.c.l.b16 %v3864
        %v3931 = vunpack.c.l.b16 %v3865
        %v3932 = vunpack.c.l.b16 %v3866
        %v3933 = vunpack.c.l.b16 %v3867
        %v3934 = vunpack.c.l.b16 %v3868
        %v3935 = vpack.c.b16 %v3904, %v3903
        %v3936 = vpack.c.b16 %v3906, %v3905
        %v3937 = vpack.c.b16 %v3908, %v3907
        %v3938 = vpack.c.b16 %v3910, %v3909
        %v3939 = vpack.c.b16 %v3912, %v3911
        %v3940 = vpack.c.b16 %v3914, %v3913
        %v3941 = vpack.c.b16 %v3916, %v3915
        %v3942 = vpack.c.b16 %v3918, %v3917
        %v3943 = vpack.c.b16 %v3920, %v3919
        %v3944 = vpack.c.b16 %v3922, %v3921
        %v3945 = vpack.c.b16 %v3924, %v3923
        %v3946 = vpack.c.b16 %v3926, %v3925
        %v3947 = vpack.c.b16 %v3928, %v3927
        %v3948 = vpack.c.b16 %v3930, %v3929
        %v3949 = vpack.c.b16 %v3932, %v3931
        %v3950 = vpack.c.b16 %v3934, %v3933
        %v3952 = vsel %vm1315, %v3935, 0
        %v3955 = vsel %vm1315, %v3936, 0
        %v3958 = vsel %vm1315, %v3937, 0
        %v3961 = vsel %vm1315, %v3938, 0
        %v3964 = vsel %vm1315, %v3939, 0
        %v3967 = vsel %vm1315, %v3940, 0
        %v3970 = vsel %vm1315, %v3941, 0
        %v3973 = vsel %vm1315, %v3942, 0
        %v3976 = vsel %vm1315, %v3943, 0
        %v3979 = vsel %vm1315, %v3944, 0
        %v3982 = vsel %vm1315, %v3945, 0
        %v3985 = vsel %vm1315, %v3946, 0
        %v3988 = vsel %vm1315, %v3947, 0
        %v3991 = vsel %vm1315, %v3948, 0
        %v3994 = vsel %vm1315, %v3949, 0
        %v3997 = vsel %vm1315, %v3950, 0
        %v4000 = vand.u32 %v3870, %v1367
        %4002 = vmatprep.subr.bf16.mxu0 0
        %4003 = vmatpush1.bf16.msra.mxu0 %v4000
        %4004 = vmatprep.subr.bf16.mxu0 0
        %4005 = vmatpush1.bf16.msra.mxu0 0
        %4006 = vmatprep.subr.bf16.mxu0 0
        %4007 = vmatpush1.bf16.msra.mxu0 0
        %4008 = vmatprep.subr.bf16.mxu0 0
        %4009 = vmatpush1.bf16.msra.mxu0 0
        %4010 = vmatprep.subr.bf16.mxu0 0
        %4011 = vmatpush1.bf16.msra.mxu0 0
        %4012 = vmatprep.subr.bf16.mxu0 0
        %4013 = vmatpush1.bf16.msra.mxu0 0
        %4014 = vmatprep.subr.bf16.mxu0 0
        %4015 = vmatpush1.bf16.msra.mxu0 0
        %4016 = vmatprep.subr.bf16.mxu0 0
        %4017 = vmatpush1.bf16.msra.mxu0 0
        %4018 = vmatprep.subr.bf16.mxu0 0
        %4019 = vmatpush1.bf16.msra.mxu0 0
        %4020 = vmatprep.subr.bf16.mxu0 0
        %4021 = vmatpush1.bf16.msra.mxu0 0
        %4022 = vmatprep.subr.bf16.mxu0 0
        %4023 = vmatpush1.bf16.msra.mxu0 0
        %4024 = vmatprep.subr.bf16.mxu0 0
        %4025 = vmatpush1.bf16.msra.mxu0 0
        %4026 = vmatprep.subr.bf16.mxu0 0
        %4027 = vmatpush1.bf16.msra.mxu0 0
        %4028 = vmatprep.subr.bf16.mxu0 0
        %4029 = vmatpush1.bf16.msra.mxu0 0
        %4030 = vmatprep.subr.bf16.mxu0 0
        %4031 = vmatpush1.bf16.msra.mxu0 0
        %4032 = vmatprep.subr.bf16.mxu0 0
        %4033 = vmatpush1.bf16.msra.mxu0 0
        %4034 = vmatprep.mubr.bf16.mxu0 0
        %4035 = vmatmul.mubr.bf16.gmra.mrb[0].mxu0 %v3952
        %v4036 = vpop.f32.mrb[0].mxu0
        %v4037 = vadd.f32 0.0, %v4036
        %v4038 = vpop.f32.mrb[0].mxu0
        %v4039 = vpop.f32.mrb[0].mxu0
        %v4040 = vadd.f32 0.0, %v4039
        %v4041 = vpop.f32.mrb[0].mxu0
        %4042 = vmatprep.mubr.bf16.mxu0 0
        %4043 = vmatmul.mubr.bf16.gmra.mrb[0].mxu0 %v3955
        %v4044 = vpop.f32.mrb[0].mxu0
        %v4045 = vadd.f32 0.0, %v4044
        %v4046 = vpop.f32.mrb[0].mxu0
        %v4047 = vpop.f32.mrb[0].mxu0
        %v4048 = vadd.f32 0.0, %v4047
        %v4049 = vpop.f32.mrb[0].mxu0
        %4050 = vmatprep.mubr.bf16.mxu0 0
        %4051 = vmatmul.mubr.bf16.gmra.mrb[0].mxu0 %v3958
        %v4052 = vpop.f32.mrb[0].mxu0
        %v4053 = vadd.f32 0.0, %v4052
        %v4054 = vpop.f32.mrb[0].mxu0
        %v4055 = vpop.f32.mrb[0].mxu0
        %v4056 = vadd.f32 0.0, %v4055
        %v4057 = vpop.f32.mrb[0].mxu0
        %4058 = vmatprep.mubr.bf16.mxu0 0
        %4059 = vmatmul.mubr.bf16.gmra.mrb[0].mxu0 %v3961
        %v4060 = vpop.f32.mrb[0].mxu0
        %v4061 = vadd.f32 0.0, %v4060
        %v4062 = vpop.f32.mrb[0].mxu0
        %v4063 = vpop.f32.mrb[0].mxu0
        %v4064 = vadd.f32 0.0, %v4063
        %v4065 = vpop.f32.mrb[0].mxu0
        %4066 = vmatprep.mubr.bf16.mxu0 0
        %4067 = vmatmul.mubr.bf16.gmra.mrb[0].mxu0 %v3964
        %v4068 = vpop.f32.mrb[0].mxu0
        %v4069 = vadd.f32 0.0, %v4068
        %v4070 = vpop.f32.mrb[0].mxu0
        %v4071 = vpop.f32.mrb[0].mxu0
        %v4072 = vadd.f32 0.0, %v4071
        %v4073 = vpop.f32.mrb[0].mxu0
        %4074 = vmatprep.mubr.bf16.mxu0 0
        %4075 = vmatmul.mubr.bf16.gmra.mrb[0].mxu0 %v3967
        %v4076 = vpop.f32.mrb[0].mxu0
        %v4077 = vadd.f32 0.0, %v4076
        %v4078 = vpop.f32.mrb[0].mxu0
        %v4079 = vpop.f32.mrb[0].mxu0
        %v4080 = vadd.f32 0.0, %v4079
        %v4081 = vpop.f32.mrb[0].mxu0
        %4082 = vmatprep.mubr.bf16.mxu0 0
        %4083 = vmatmul.mubr.bf16.gmra.mrb[0].mxu0 %v3970
        %v4084 = vpop.f32.mrb[0].mxu0
        %v4085 = vadd.f32 0.0, %v4084
        %v4086 = vpop.f32.mrb[0].mxu0
        %v4087 = vpop.f32.mrb[0].mxu0
        %v4088 = vadd.f32 0.0, %v4087
        %v4089 = vpop.f32.mrb[0].mxu0
        %4090 = vmatprep.mubr.bf16.mxu0 0
        %4091 = vmatmul.mubr.bf16.gmra.mrb[0].mxu0 %v3973
        %v4092 = vpop.f32.mrb[0].mxu0
        %v4093 = vadd.f32 0.0, %v4092
        %v4094 = vpop.f32.mrb[0].mxu0
        %v4095 = vpop.f32.mrb[0].mxu0
        %v4096 = vadd.f32 0.0, %v4095
        %v4097 = vpop.f32.mrb[0].mxu0
        %4098 = vmatprep.mubr.bf16.mxu0 0
        %4099 = vmatmul.mubr.bf16.gmra.mrb[0].mxu0 %v3976
        %v4100 = vpop.f32.mrb[0].mxu0
        %v4101 = vadd.f32 0.0, %v4100
        %v4102 = vpop.f32.mrb[0].mxu0
        %v4103 = vpop.f32.mrb[0].mxu0
        %v4104 = vadd.f32 0.0, %v4103
        %v4105 = vpop.f32.mrb[0].mxu0
        %4106 = vmatprep.mubr.bf16.mxu0 0
        %4107 = vmatmul.mubr.bf16.gmra.mrb[0].mxu0 %v3979
        %v4108 = vpop.f32.mrb[0].mxu0
        %v4109 = vadd.f32 0.0, %v4108
        %v4110 = vpop.f32.mrb[0].mxu0
        %v4111 = vpop.f32.mrb[0].mxu0
        %v4112 = vadd.f32 0.0, %v4111
        %v4113 = vpop.f32.mrb[0].mxu0
        %4114 = vmatprep.mubr.bf16.mxu0 0
        %4115 = vmatmul.mubr.bf16.gmra.mrb[0].mxu0 %v3982
        %v4116 = vpop.f32.mrb[0].mxu0
        %v4117 = vadd.f32 0.0, %v4116
        %v4118 = vpop.f32.mrb[0].mxu0
        %v4119 = vpop.f32.mrb[0].mxu0
        %v4120 = vadd.f32 0.0, %v4119
        %v4121 = vpop.f32.mrb[0].mxu0
        %4122 = vmatprep.mubr.bf16.mxu0 0
        %4123 = vmatmul.mubr.bf16.gmra.mrb[0].mxu0 %v3985
        %v4124 = vpop.f32.mrb[0].mxu0
        %v4125 = vadd.f32 0.0, %v4124
        %v4126 = vpop.f32.mrb[0].mxu0
        %v4127 = vpop.f32.mrb[0].mxu0
        %v4128 = vadd.f32 0.0, %v4127
        %v4129 = vpop.f32.mrb[0].mxu0
        %4130 = vmatprep.mubr.bf16.mxu0 0
        %4131 = vmatmul.mubr.bf16.gmra.mrb[0].mxu0 %v3988
        %v4132 = vpop.f32.mrb[0].mxu0
        %v4133 = vadd.f32 0.0, %v4132
        %v4134 = vpop.f32.mrb[0].mxu0
        %v4135 = vpop.f32.mrb[0].mxu0
        %v4136 = vadd.f32 0.0, %v4135
        %v4137 = vpop.f32.mrb[0].mxu0
        %4138 = vmatprep.mubr.bf16.mxu0 0
        %4139 = vmatmul.mubr.bf16.gmra.mrb[0].mxu0 %v3991
        %v4140 = vpop.f32.mrb[0].mxu0
        %v4141 = vadd.f32 0.0, %v4140
        %v4142 = vpop.f32.mrb[0].mxu0
        %v4143 = vpop.f32.mrb[0].mxu0
        %v4144 = vadd.f32 0.0, %v4143
        %v4145 = vpop.f32.mrb[0].mxu0
        %4146 = vmatprep.mubr.bf16.mxu0 0
        %4147 = vmatmul.mubr.bf16.gmra.mrb[0].mxu0 %v3994
        %v4148 = vpop.f32.mrb[0].mxu0
        %v4149 = vadd.f32 0.0, %v4148
        %v4150 = vpop.f32.mrb[0].mxu0
        %v4151 = vpop.f32.mrb[0].mxu0
        %v4152 = vadd.f32 0.0, %v4151
        %v4153 = vpop.f32.mrb[0].mxu0
        %4154 = vmatprep.mubr.bf16.mxu0 0
        %4155 = vmatmul.mubr.bf16.gmra.mrb[0].mxu0 %v3997
        %v4156 = vpop.f32.mrb[0].mxu0
        %v4157 = vadd.f32 0.0, %v4156
        %v4158 = vpop.f32.mrb[0].mxu0
        %v4159 = vpop.f32.mrb[0].mxu0
        %v4160 = vadd.f32 0.0, %v4159
        %v4161 = vpop.f32.mrb[0].mxu0
        %4162 = vdwg.mxu0
        %v4163 = vadd.f32 %v3804, %v4037
        %v4164 = vadd.f32 %v3805, %v4040
        %v4165 = vadd.f32 %v3806, %v4045
        %v4166 = vadd.f32 %v3807, %v4048
        %v4167 = vadd.f32 %v3808, %v4053
        %v4168 = vadd.f32 %v3809, %v4056
        %v4169 = vadd.f32 %v3810, %v4061
        %v4170 = vadd.f32 %v3811, %v4064
        %v4171 = vadd.f32 %v3812, %v4069
        %v4172 = vadd.f32 %v3813, %v4072
        %v4173 = vadd.f32 %v3814, %v4077
        %v4174 = vadd.f32 %v3815, %v4080
        %v4175 = vadd.f32 %v3816, %v4085
        %v4176 = vadd.f32 %v3817, %v4088
        %v4177 = vadd.f32 %v3818, %v4093
        %v4178 = vadd.f32 %v3819, %v4096
        %v4179 = vadd.f32 %v3820, %v4101
        %v4180 = vadd.f32 %v3821, %v4104
        %v4181 = vadd.f32 %v3822, %v4109
        %v4182 = vadd.f32 %v3823, %v4112
        %v4183 = vadd.f32 %v3824, %v4117
        %v4184 = vadd.f32 %v3825, %v4120
        %v4185 = vadd.f32 %v3826, %v4125
        %v4186 = vadd.f32 %v3827, %v4128
        %v4187 = vadd.f32 %v3828, %v4133
        %v4188 = vadd.f32 %v3829, %v4136
        %v4189 = vadd.f32 %v3830, %v4141
        %v4190 = vadd.f32 %v3831, %v4144
        %v4191 = vadd.f32 %v3832, %v4149
        %v4192 = vadd.f32 %v3833, %v4152
        %v4193 = vadd.f32 %v3834, %v4157
        %v4194 = vadd.f32 %v3835, %v4160
        %v4195 = vld [vmem:[%s3836] sm:$0xf]
        %v4196 = vld [vmem:[%s3836 + $0x4] sm:$0xf]
        %v4197 = vld [vmem:[%s3836 + $0x8] sm:$0x1]
        %v4198 = vld [vmem:[%s3836 + $0xc] sm:$0xf]
        %v4199 = vld [vmem:[%s3836 + $0x10] sm:$0xf]
        %v4200 = vld [vmem:[%s3836 + $0x14] sm:$0x1]
        %v4201 = vld [vmem:[%s3836 + $0x18] sm:$0xf]
        %v4202 = vld [vmem:[%s3836 + $0x1c] sm:$0xf]
        %v4203 = vld [vmem:[%s3836 + $0x20] sm:$0x1]
        %v4204 = vld [vmem:[%s3836 + $0x24] sm:$0xf]
        %v4205 = vld [vmem:[%s3836 + $0x28] sm:$0xf]
        %v4206 = vld [vmem:[%s3836 + $0x2c] sm:$0x1]
        %v4207 = vld [vmem:[%s3836 + $0x30] sm:$0xf]
        %v4208 = vld [vmem:[%s3836 + $0x34] sm:$0xf]
        %v4209 = vld [vmem:[%s3836 + $0x38] sm:$0x1]
        %v4210 = vld [vmem:[%s3836 + $0x3c] sm:$0xf]
        %v4211 = vld [vmem:[%s3836 + $0x40] sm:$0xf]
        %v4212 = vld [vmem:[%s3836 + $0x44] sm:$0x1]
        %v4213 = vld [vmem:[%s3836 + $0x48] sm:$0xf]
        %v4214 = vld [vmem:[%s3836 + $0x4c] sm:$0xf]
        %v4215 = vld [vmem:[%s3836 + $0x50] sm:$0x1]
        %v4216 = vld [vmem:[%s3836 + $0x54] sm:$0xf]
        %v4217 = vld [vmem:[%s3836 + $0x58] sm:$0xf]
        %v4218 = vld [vmem:[%s3836 + $0x5c] sm:$0x1]
        %v4219 = vld [vmem:[%s3836 + $0x60] sm:$0xf]
        %v4220 = vld [vmem:[%s3836 + $0x64] sm:$0xf]
        %v4221 = vld [vmem:[%s3836 + $0x68] sm:$0x1]
        %v4222 = vld [vmem:[%s3836 + $0x6c] sm:$0xf]
        %v4223 = vld [vmem:[%s3836 + $0x70] sm:$0xf]
        %v4224 = vld [vmem:[%s3836 + $0x74] sm:$0x1]
        %v4225 = vld [vmem:[%s3836 + $0x78] sm:$0xf]
        %v4226 = vld [vmem:[%s3836 + $0x7c] sm:$0xf]
        %v4227 = vld [vmem:[%s3836 + $0x80] sm:$0x1]
        %v4228 = vld [vmem:[%s3836 + $0x84] sm:$0xf]
        %v4229 = vld [vmem:[%s3836 + $0x88] sm:$0xf]
        %v4230 = vld [vmem:[%s3836 + $0x8c] sm:$0x1]
        %v4231 = vld [vmem:[%s3836 + $0x90] sm:$0xf]
        %v4232 = vld [vmem:[%s3836 + $0x94] sm:$0xf]
        %v4233 = vld [vmem:[%s3836 + $0x98] sm:$0x1]
        %v4234 = vld [vmem:[%s3836 + $0x9c] sm:$0xf]
        %v4235 = vld [vmem:[%s3836 + $0xa0] sm:$0xf]
        %v4236 = vld [vmem:[%s3836 + $0xa4] sm:$0x1]
        %v4237 = vld [vmem:[%s3836 + $0xa8] sm:$0xf]
        %v4238 = vld [vmem:[%s3836 + $0xac] sm:$0xf]
        %v4239 = vld [vmem:[%s3836 + $0xb0] sm:$0x1]
        %v4240 = vld [vmem:[%s3836 + $0xb4] sm:$0xf]
        %v4241 = vld [vmem:[%s3836 + $0xb8] sm:$0xf]
        %v4242 = vld [vmem:[%s3836 + $0xbc] sm:$0x1]
        %v4244 = vshrl.u32 %v4195, 16
        %v4246 = vrot.slane %v4244, 4
        %v4247 = vshll.u32 %v4195, 16
        %v4249 = vrot.slane %v4247, 5
        %v4250 = vor.u32 %v4246, %v4249
        %v4251 = vrot.slane %v4250, 4
        %v4253 = vshll.u32 %v4196, 16
        %v4255 = vrot.slane %v4253, 5
        %v4256 = vsel %vm880, %v4251, %v4255
        %v4257 = vshrl.u32 %v4196, 16
        %v4259 = vrot.slane %v4257, 4
        %v4260 = vor.u32 %v4259, %v4255
        %v4261 = vrot.slane %v4260, 4
        %v4263 = vshll.u32 %v4197, 16
        %v4265 = vrot.slane %v4263, 5
        %v4266 = vsel %vm880, %v4261, %v4265
        %v4268 = vshrl.u32 %v4198, 16
        %v4270 = vrot.slane %v4268, 4
        %v4271 = vshll.u32 %v4198, 16
        %v4273 = vrot.slane %v4271, 5
        %v4274 = vor.u32 %v4270, %v4273
        %v4275 = vrot.slane %v4274, 4
        %v4277 = vshll.u32 %v4199, 16
        %v4279 = vrot.slane %v4277, 5
        %v4280 = vsel %vm880, %v4275, %v4279
        %v4281 = vshrl.u32 %v4199, 16
        %v4283 = vrot.slane %v4281, 4
        %v4284 = vor.u32 %v4283, %v4279
        %v4285 = vrot.slane %v4284, 4
        %v4287 = vshll.u32 %v4200, 16
        %v4289 = vrot.slane %v4287, 5
        %v4290 = vsel %vm880, %v4285, %v4289
        %v4292 = vshrl.u32 %v4201, 16
        %v4294 = vrot.slane %v4292, 4
        %v4295 = vshll.u32 %v4201, 16
        %v4297 = vrot.slane %v4295, 5
        %v4298 = vor.u32 %v4294, %v4297
        %v4299 = vrot.slane %v4298, 4
        %v4301 = vshll.u32 %v4202, 16
        %v4303 = vrot.slane %v4301, 5
        %v4304 = vsel %vm880, %v4299, %v4303
        %v4305 = vshrl.u32 %v4202, 16
        %v4307 = vrot.slane %v4305, 4
        %v4308 = vor.u32 %v4307, %v4303
        %v4309 = vrot.slane %v4308, 4
        %v4311 = vshll.u32 %v4203, 16
        %v4313 = vrot.slane %v4311, 5
        %v4314 = vsel %vm880, %v4309, %v4313
        %v4316 = vshrl.u32 %v4204, 16
        %v4318 = vrot.slane %v4316, 4
        %v4319 = vshll.u32 %v4204, 16
        %v4321 = vrot.slane %v4319, 5
        %v4322 = vor.u32 %v4318, %v4321
        %v4323 = vrot.slane %v4322, 4
        %v4325 = vshll.u32 %v4205, 16
        %v4327 = vrot.slane %v4325, 5
        %v4328 = vsel %vm880, %v4323, %v4327
        %v4329 = vshrl.u32 %v4205, 16
        %v4331 = vrot.slane %v4329, 4
        %v4332 = vor.u32 %v4331, %v4327
        %v4333 = vrot.slane %v4332, 4
        %v4335 = vshll.u32 %v4206, 16
        %v4337 = vrot.slane %v4335, 5
        %v4338 = vsel %vm880, %v4333, %v4337
        %v4340 = vshrl.u32 %v4207, 16
        %v4342 = vrot.slane %v4340, 4
        %v4343 = vshll.u32 %v4207, 16
        %v4345 = vrot.slane %v4343, 5
        %v4346 = vor.u32 %v4342, %v4345
        %v4347 = vrot.slane %v4346, 4
        %v4349 = vshll.u32 %v4208, 16
        %v4351 = vrot.slane %v4349, 5
        %v4352 = vsel %vm880, %v4347, %v4351
        %v4353 = vshrl.u32 %v4208, 16
        %v4355 = vrot.slane %v4353, 4
        %v4356 = vor.u32 %v4355, %v4351
        %v4357 = vrot.slane %v4356, 4
        %v4359 = vshll.u32 %v4209, 16
        %v4361 = vrot.slane %v4359, 5
        %v4362 = vsel %vm880, %v4357, %v4361
        %v4364 = vshrl.u32 %v4210, 16
        %v4366 = vrot.slane %v4364, 4
        %v4367 = vshll.u32 %v4210, 16
        %v4369 = vrot.slane %v4367, 5
        %v4370 = vor.u32 %v4366, %v4369
        %v4371 = vrot.slane %v4370, 4
        %v4373 = vshll.u32 %v4211, 16
        %v4375 = vrot.slane %v4373, 5
        %v4376 = vsel %vm880, %v4371, %v4375
        %v4377 = vshrl.u32 %v4211, 16
        %v4379 = vrot.slane %v4377, 4
        %v4380 = vor.u32 %v4379, %v4375
        %v4381 = vrot.slane %v4380, 4
        %v4383 = vshll.u32 %v4212, 16
        %v4385 = vrot.slane %v4383, 5
        %v4386 = vsel %vm880, %v4381, %v4385
        %v4388 = vshrl.u32 %v4213, 16
        %v4390 = vrot.slane %v4388, 4
        %v4391 = vshll.u32 %v4213, 16
        %v4393 = vrot.slane %v4391, 5
        %v4394 = vor.u32 %v4390, %v4393
        %v4395 = vrot.slane %v4394, 4
        %v4397 = vshll.u32 %v4214, 16
        %v4399 = vrot.slane %v4397, 5
        %v4400 = vsel %vm880, %v4395, %v4399
        %v4401 = vshrl.u32 %v4214, 16
        %v4403 = vrot.slane %v4401, 4
        %v4404 = vor.u32 %v4403, %v4399
        %v4405 = vrot.slane %v4404, 4
        %v4407 = vshll.u32 %v4215, 16
        %v4409 = vrot.slane %v4407, 5
        %v4410 = vsel %vm880, %v4405, %v4409
        %v4412 = vshrl.u32 %v4216, 16
        %v4414 = vrot.slane %v4412, 4
        %v4415 = vshll.u32 %v4216, 16
        %v4417 = vrot.slane %v4415, 5
        %v4418 = vor.u32 %v4414, %v4417
        %v4419 = vrot.slane %v4418, 4
        %v4421 = vshll.u32 %v4217, 16
        %v4423 = vrot.slane %v4421, 5
        %v4424 = vsel %vm880, %v4419, %v4423
        %v4425 = vshrl.u32 %v4217, 16
        %v4427 = vrot.slane %v4425, 4
        %v4428 = vor.u32 %v4427, %v4423
        %v4429 = vrot.slane %v4428, 4
        %v4431 = vshll.u32 %v4218, 16
        %v4433 = vrot.slane %v4431, 5
        %v4434 = vsel %vm880, %v4429, %v4433
        %v4436 = vshrl.u32 %v4219, 16
        %v4438 = vrot.slane %v4436, 4
        %v4439 = vshll.u32 %v4219, 16
        %v4441 = vrot.slane %v4439, 5
        %v4442 = vor.u32 %v4438, %v4441
        %v4443 = vrot.slane %v4442, 4
        %v4445 = vshll.u32 %v4220, 16
        %v4447 = vrot.slane %v4445, 5
        %v4448 = vsel %vm880, %v4443, %v4447
        %v4449 = vshrl.u32 %v4220, 16
        %v4451 = vrot.slane %v4449, 4
        %v4452 = vor.u32 %v4451, %v4447
        %v4453 = vrot.slane %v4452, 4
        %v4455 = vshll.u32 %v4221, 16
        %v4457 = vrot.slane %v4455, 5
        %v4458 = vsel %vm880, %v4453, %v4457
        %v4460 = vshrl.u32 %v4222, 16
        %v4462 = vrot.slane %v4460, 4
        %v4463 = vshll.u32 %v4222, 16
        %v4465 = vrot.slane %v4463, 5
        %v4466 = vor.u32 %v4462, %v4465
        %v4467 = vrot.slane %v4466, 4
        %v4469 = vshll.u32 %v4223, 16
        %v4471 = vrot.slane %v4469, 5
        %v4472 = vsel %vm880, %v4467, %v4471
        %v4473 = vshrl.u32 %v4223, 16
        %v4475 = vrot.slane %v4473, 4
        %v4476 = vor.u32 %v4475, %v4471
        %v4477 = vrot.slane %v4476, 4
        %v4479 = vshll.u32 %v4224, 16
        %v4481 = vrot.slane %v4479, 5
        %v4482 = vsel %vm880, %v4477, %v4481
        %v4484 = vshrl.u32 %v4225, 16
        %v4486 = vrot.slane %v4484, 4
        %v4487 = vshll.u32 %v4225, 16
        %v4489 = vrot.slane %v4487, 5
        %v4490 = vor.u32 %v4486, %v4489
        %v4491 = vrot.slane %v4490, 4
        %v4493 = vshll.u32 %v4226, 16
        %v4495 = vrot.slane %v4493, 5
        %v4496 = vsel %vm880, %v4491, %v4495
        %v4497 = vshrl.u32 %v4226, 16
        %v4499 = vrot.slane %v4497, 4
        %v4500 = vor.u32 %v4499, %v4495
        %v4501 = vrot.slane %v4500, 4
        %v4503 = vshll.u32 %v4227, 16
        %v4505 = vrot.slane %v4503, 5
        %v4506 = vsel %vm880, %v4501, %v4505
        %v4508 = vshrl.u32 %v4228, 16
        %v4510 = vrot.slane %v4508, 4
        %v4511 = vshll.u32 %v4228, 16
        %v4513 = vrot.slane %v4511, 5
        %v4514 = vor.u32 %v4510, %v4513
        %v4515 = vrot.slane %v4514, 4
        %v4517 = vshll.u32 %v4229, 16
        %v4519 = vrot.slane %v4517, 5
        %v4520 = vsel %vm880, %v4515, %v4519
        %v4521 = vshrl.u32 %v4229, 16
        %v4523 = vrot.slane %v4521, 4
        %v4524 = vor.u32 %v4523, %v4519
        %v4525 = vrot.slane %v4524, 4
        %v4527 = vshll.u32 %v4230, 16
        %v4529 = vrot.slane %v4527, 5
        %v4530 = vsel %vm880, %v4525, %v4529
        %v4532 = vshrl.u32 %v4231, 16
        %v4534 = vrot.slane %v4532, 4
        %v4535 = vshll.u32 %v4231, 16
        %v4537 = vrot.slane %v4535, 5
        %v4538 = vor.u32 %v4534, %v4537
        %v4539 = vrot.slane %v4538, 4
        %v4541 = vshll.u32 %v4232, 16
        %v4543 = vrot.slane %v4541, 5
        %v4544 = vsel %vm880, %v4539, %v4543
        %v4545 = vshrl.u32 %v4232, 16
        %v4547 = vrot.slane %v4545, 4
        %v4548 = vor.u32 %v4547, %v4543
        %v4549 = vrot.slane %v4548, 4
        %v4551 = vshll.u32 %v4233, 16
        %v4553 = vrot.slane %v4551, 5
        %v4554 = vsel %vm880, %v4549, %v4553
        %v4556 = vshrl.u32 %v4234, 16
        %v4558 = vrot.slane %v4556, 4
        %v4559 = vshll.u32 %v4234, 16
        %v4561 = vrot.slane %v4559, 5
        %v4562 = vor.u32 %v4558, %v4561
        %v4563 = vrot.slane %v4562, 4
        %v4565 = vshll.u32 %v4235, 16
        %v4567 = vrot.slane %v4565, 5
        %v4568 = vsel %vm880, %v4563, %v4567
        %v4569 = vshrl.u32 %v4235, 16
        %v4571 = vrot.slane %v4569, 4
        %v4572 = vor.u32 %v4571, %v4567
        %v4573 = vrot.slane %v4572, 4
        %v4575 = vshll.u32 %v4236, 16
        %v4577 = vrot.slane %v4575, 5
        %v4578 = vsel %vm880, %v4573, %v4577
        %v4580 = vshrl.u32 %v4237, 16
        %v4582 = vrot.slane %v4580, 4
        %v4583 = vshll.u32 %v4237, 16
        %v4585 = vrot.slane %v4583, 5
        %v4586 = vor.u32 %v4582, %v4585
        %v4587 = vrot.slane %v4586, 4
        %v4589 = vshll.u32 %v4238, 16
        %v4591 = vrot.slane %v4589, 5
        %v4592 = vsel %vm880, %v4587, %v4591
        %v4593 = vshrl.u32 %v4238, 16
        %v4595 = vrot.slane %v4593, 4
        %v4596 = vor.u32 %v4595, %v4591
        %v4597 = vrot.slane %v4596, 4
        %v4599 = vshll.u32 %v4239, 16
        %v4601 = vrot.slane %v4599, 5
        %v4602 = vsel %vm880, %v4597, %v4601
        %v4604 = vshrl.u32 %v4240, 16
        %v4606 = vrot.slane %v4604, 4
        %v4607 = vshll.u32 %v4240, 16
        %v4609 = vrot.slane %v4607, 5
        %v4610 = vor.u32 %v4606, %v4609
        %v4611 = vrot.slane %v4610, 4
        %v4613 = vshll.u32 %v4241, 16
        %v4615 = vrot.slane %v4613, 5
        %v4616 = vsel %vm880, %v4611, %v4615
        %v4617 = vshrl.u32 %v4241, 16
        %v4619 = vrot.slane %v4617, 4
        %v4620 = vor.u32 %v4619, %v4615
        %v4621 = vrot.slane %v4620, 4
        %v4623 = vshll.u32 %v4242, 16
        %v4625 = vrot.slane %v4623, 5
        %v4626 = vsel %vm880, %v4621, %v4625
        %s4627 = scalar_lea.vmem [#allocation3], 14
        %v4628 = vld [vmem:[%s4627] sm:$0x3]
        %v4629 = vunpack.c.l.b16 %v4256
        %v4630 = vunpack.c.l.b16 %v4266
        %v4631 = vunpack.c.l.b16 %v4280
        %v4632 = vunpack.c.l.b16 %v4290
        %v4633 = vunpack.c.l.b16 %v4304
        %v4634 = vunpack.c.l.b16 %v4314
        %v4635 = vunpack.c.l.b16 %v4328
        %v4636 = vunpack.c.l.b16 %v4338
        %v4637 = vunpack.c.l.b16 %v4352
        %v4638 = vunpack.c.l.b16 %v4362
        %v4639 = vunpack.c.l.b16 %v4376
        %v4640 = vunpack.c.l.b16 %v4386
        %v4641 = vunpack.c.l.b16 %v4400
        %v4642 = vunpack.c.l.b16 %v4410
        %v4643 = vunpack.c.l.b16 %v4424
        %v4644 = vunpack.c.l.b16 %v4434
        %v4645 = vunpack.c.l.b16 %v4448
        %v4646 = vunpack.c.l.b16 %v4458
        %v4647 = vunpack.c.l.b16 %v4472
        %v4648 = vunpack.c.l.b16 %v4482
        %v4649 = vunpack.c.l.b16 %v4496
        %v4650 = vunpack.c.l.b16 %v4506
        %v4651 = vunpack.c.l.b16 %v4520
        %v4652 = vunpack.c.l.b16 %v4530
        %v4653 = vunpack.c.l.b16 %v4544
        %v4654 = vunpack.c.l.b16 %v4554
        %v4655 = vunpack.c.l.b16 %v4568
        %v4656 = vunpack.c.l.b16 %v4578
        %v4657 = vunpack.c.l.b16 %v4592
        %v4658 = vunpack.c.l.b16 %v4602
        %v4659 = vunpack.c.l.b16 %v4616
        %v4660 = vunpack.c.l.b16 %v4626
        %v4661 = vpack.c.b16 %v4630, %v4629
        %v4662 = vpack.c.b16 %v4632, %v4631
        %v4663 = vpack.c.b16 %v4634, %v4633
        %v4664 = vpack.c.b16 %v4636, %v4635
        %v4665 = vpack.c.b16 %v4638, %v4637
        %v4666 = vpack.c.b16 %v4640, %v4639
        %v4667 = vpack.c.b16 %v4642, %v4641
        %v4668 = vpack.c.b16 %v4644, %v4643
        %v4669 = vpack.c.b16 %v4646, %v4645
        %v4670 = vpack.c.b16 %v4648, %v4647
        %v4671 = vpack.c.b16 %v4650, %v4649
        %v4672 = vpack.c.b16 %v4652, %v4651
        %v4673 = vpack.c.b16 %v4654, %v4653
        %v4674 = vpack.c.b16 %v4656, %v4655
        %v4675 = vpack.c.b16 %v4658, %v4657
        %v4676 = vpack.c.b16 %v4660, %v4659
        %v4678 = vsel %vm1315, %v4661, 0
        %v4681 = vsel %vm1315, %v4662, 0
        %v4684 = vsel %vm1315, %v4663, 0
        %v4687 = vsel %vm1315, %v4664, 0
        %v4690 = vsel %vm1315, %v4665, 0
        %v4693 = vsel %vm1315, %v4666, 0
        %v4696 = vsel %vm1315, %v4667, 0
        %v4699 = vsel %vm1315, %v4668, 0
        %v4702 = vsel %vm1315, %v4669, 0
        %v4705 = vsel %vm1315, %v4670, 0
        %v4708 = vsel %vm1315, %v4671, 0
        %v4711 = vsel %vm1315, %v4672, 0
        %v4714 = vsel %vm1315, %v4673, 0
        %v4717 = vsel %vm1315, %v4674, 0
        %v4720 = vsel %vm1315, %v4675, 0
        %v4723 = vsel %vm1315, %v4676, 0
        %v4726 = vand.u32 %v4628, %v1367
        %4728 = vmatprep.subr.bf16.mxu0 0
        %4729 = vmatpush1.bf16.msra.mxu0 %v4726
        %4730 = vmatprep.subr.bf16.mxu0 0
        %4731 = vmatpush1.bf16.msra.mxu0 0
        %4732 = vmatprep.subr.bf16.mxu0 0
        %4733 = vmatpush1.bf16.msra.mxu0 0
        %4734 = vmatprep.subr.bf16.mxu0 0
        %4735 = vmatpush1.bf16.msra.mxu0 0
        %4736 = vmatprep.subr.bf16.mxu0 0
        %4737 = vmatpush1.bf16.msra.mxu0 0
        %4738 = vmatprep.subr.bf16.mxu0 0
        %4739 = vmatpush1.bf16.msra.mxu0 0
        %4740 = vmatprep.subr.bf16.mxu0 0
        %4741 = vmatpush1.bf16.msra.mxu0 0
        %4742 = vmatprep.subr.bf16.mxu0 0
        %4743 = vmatpush1.bf16.msra.mxu0 0
        %4744 = vmatprep.subr.bf16.mxu0 0
        %4745 = vmatpush1.bf16.msra.mxu0 0
        %4746 = vmatprep.subr.bf16.mxu0 0
        %4747 = vmatpush1.bf16.msra.mxu0 0
        %4748 = vmatprep.subr.bf16.mxu0 0
        %4749 = vmatpush1.bf16.msra.mxu0 0
        %4750 = vmatprep.subr.bf16.mxu0 0
        %4751 = vmatpush1.bf16.msra.mxu0 0
        %4752 = vmatprep.subr.bf16.mxu0 0
        %4753 = vmatpush1.bf16.msra.mxu0 0
        %4754 = vmatprep.subr.bf16.mxu0 0
        %4755 = vmatpush1.bf16.msra.mxu0 0
        %4756 = vmatprep.subr.bf16.mxu0 0
        %4757 = vmatpush1.bf16.msra.mxu0 0
        %4758 = vmatprep.subr.bf16.mxu0 0
        %4759 = vmatpush1.bf16.msra.mxu0 0
        %4760 = vmatprep.mubr.bf16.mxu0 0
        %4761 = vmatmul.mubr.bf16.gmra.mrb[0].mxu0 %v4678
        %v4762 = vpop.f32.mrb[0].mxu0
        %v4763 = vadd.f32 0.0, %v4762
        %v4764 = vpop.f32.mrb[0].mxu0
        %v4765 = vpop.f32.mrb[0].mxu0
        %v4766 = vadd.f32 0.0, %v4765
        %v4767 = vpop.f32.mrb[0].mxu0
        %4768 = vmatprep.mubr.bf16.mxu0 0
        %4769 = vmatmul.mubr.bf16.gmra.mrb[0].mxu0 %v4681
        %v4770 = vpop.f32.mrb[0].mxu0
        %v4771 = vadd.f32 0.0, %v4770
        %v4772 = vpop.f32.mrb[0].mxu0
        %v4773 = vpop.f32.mrb[0].mxu0
        %v4774 = vadd.f32 0.0, %v4773
        %v4775 = vpop.f32.mrb[0].mxu0
        %4776 = vmatprep.mubr.bf16.mxu0 0
        %4777 = vmatmul.mubr.bf16.gmra.mrb[0].mxu0 %v4684
        %v4778 = vpop.f32.mrb[0].mxu0
        %v4779 = vadd.f32 0.0, %v4778
        %v4780 = vpop.f32.mrb[0].mxu0
        %v4781 = vpop.f32.mrb[0].mxu0
        %v4782 = vadd.f32 0.0, %v4781
        %v4783 = vpop.f32.mrb[0].mxu0
        %4784 = vmatprep.mubr.bf16.mxu0 0
        %4785 = vmatmul.mubr.bf16.gmra.mrb[0].mxu0 %v4687
        %v4786 = vpop.f32.mrb[0].mxu0
        %v4787 = vadd.f32 0.0, %v4786
        %v4788 = vpop.f32.mrb[0].mxu0
        %v4789 = vpop.f32.mrb[0].mxu0
        %v4790 = vadd.f32 0.0, %v4789
        %v4791 = vpop.f32.mrb[0].mxu0
        %4792 = vmatprep.mubr.bf16.mxu0 0
        %4793 = vmatmul.mubr.bf16.gmra.mrb[0].mxu0 %v4690
        %v4794 = vpop.f32.mrb[0].mxu0
        %v4795 = vadd.f32 0.0, %v4794
        %v4796 = vpop.f32.mrb[0].mxu0
        %v4797 = vpop.f32.mrb[0].mxu0
        %v4798 = vadd.f32 0.0, %v4797
        %v4799 = vpop.f32.mrb[0].mxu0
        %4800 = vmatprep.mubr.bf16.mxu0 0
        %4801 = vmatmul.mubr.bf16.gmra.mrb[0].mxu0 %v4693
        %v4802 = vpop.f32.mrb[0].mxu0
        %v4803 = vadd.f32 0.0, %v4802
        %v4804 = vpop.f32.mrb[0].mxu0
        %v4805 = vpop.f32.mrb[0].mxu0
        %v4806 = vadd.f32 0.0, %v4805
        %v4807 = vpop.f32.mrb[0].mxu0
        %4808 = vmatprep.mubr.bf16.mxu0 0
        %4809 = vmatmul.mubr.bf16.gmra.mrb[0].mxu0 %v4696
        %v4810 = vpop.f32.mrb[0].mxu0
        %v4811 = vadd.f32 0.0, %v4810
        %v4812 = vpop.f32.mrb[0].mxu0
        %v4813 = vpop.f32.mrb[0].mxu0
        %v4814 = vadd.f32 0.0, %v4813
        %v4815 = vpop.f32.mrb[0].mxu0
        %4816 = vmatprep.mubr.bf16.mxu0 0
        %4817 = vmatmul.mubr.bf16.gmra.mrb[0].mxu0 %v4699
        %v4818 = vpop.f32.mrb[0].mxu0
        %v4819 = vadd.f32 0.0, %v4818
        %v4820 = vpop.f32.mrb[0].mxu0
        %v4821 = vpop.f32.mrb[0].mxu0
        %v4822 = vadd.f32 0.0, %v4821
        %v4823 = vpop.f32.mrb[0].mxu0
        %4824 = vmatprep.mubr.bf16.mxu0 0
        %4825 = vmatmul.mubr.bf16.gmra.mrb[0].mxu0 %v4702
        %v4826 = vpop.f32.mrb[0].mxu0
        %v4827 = vadd.f32 0.0, %v4826
        %v4828 = vpop.f32.mrb[0].mxu0
        %v4829 = vpop.f32.mrb[0].mxu0
        %v4830 = vadd.f32 0.0, %v4829
        %v4831 = vpop.f32.mrb[0].mxu0
        %4832 = vmatprep.mubr.bf16.mxu0 0
        %4833 = vmatmul.mubr.bf16.gmra.mrb[0].mxu0 %v4705
        %v4834 = vpop.f32.mrb[0].mxu0
        %v4835 = vadd.f32 0.0, %v4834
        %v4836 = vpop.f32.mrb[0].mxu0
        %v4837 = vpop.f32.mrb[0].mxu0
        %v4838 = vadd.f32 0.0, %v4837
        %v4839 = vpop.f32.mrb[0].mxu0
        %4840 = vmatprep.mubr.bf16.mxu0 0
        %4841 = vmatmul.mubr.bf16.gmra.mrb[0].mxu0 %v4708
        %v4842 = vpop.f32.mrb[0].mxu0
        %v4843 = vadd.f32 0.0, %v4842
        %v4844 = vpop.f32.mrb[0].mxu0
        %v4845 = vpop.f32.mrb[0].mxu0
        %v4846 = vadd.f32 0.0, %v4845
        %v4847 = vpop.f32.mrb[0].mxu0
        %4848 = vmatprep.mubr.bf16.mxu0 0
        %4849 = vmatmul.mubr.bf16.gmra.mrb[0].mxu0 %v4711
        %v4850 = vpop.f32.mrb[0].mxu0
        %v4851 = vadd.f32 0.0, %v4850
        %v4852 = vpop.f32.mrb[0].mxu0
        %v4853 = vpop.f32.mrb[0].mxu0
        %v4854 = vadd.f32 0.0, %v4853
        %v4855 = vpop.f32.mrb[0].mxu0
        %4856 = vmatprep.mubr.bf16.mxu0 0
        %4857 = vmatmul.mubr.bf16.gmra.mrb[0].mxu0 %v4714
        %v4858 = vpop.f32.mrb[0].mxu0
        %v4859 = vadd.f32 0.0, %v4858
        %v4860 = vpop.f32.mrb[0].mxu0
        %v4861 = vpop.f32.mrb[0].mxu0
        %v4862 = vadd.f32 0.0, %v4861
        %v4863 = vpop.f32.mrb[0].mxu0
        %4864 = vmatprep.mubr.bf16.mxu0 0
        %4865 = vmatmul.mubr.bf16.gmra.mrb[0].mxu0 %v4717
        %v4866 = vpop.f32.mrb[0].mxu0
        %v4867 = vadd.f32 0.0, %v4866
        %v4868 = vpop.f32.mrb[0].mxu0
        %v4869 = vpop.f32.mrb[0].mxu0
        %v4870 = vadd.f32 0.0, %v4869
        %v4871 = vpop.f32.mrb[0].mxu0
        %4872 = vmatprep.mubr.bf16.mxu0 0
        %4873 = vmatmul.mubr.bf16.gmra.mrb[0].mxu0 %v4720
        %v4874 = vpop.f32.mrb[0].mxu0
        %v4875 = vadd.f32 0.0, %v4874
        %v4876 = vpop.f32.mrb[0].mxu0
        %v4877 = vpop.f32.mrb[0].mxu0
        %v4878 = vadd.f32 0.0, %v4877
        %v4879 = vpop.f32.mrb[0].mxu0
        %4880 = vmatprep.mubr.bf16.mxu0 0
        %4881 = vmatmul.mubr.bf16.gmra.mrb[0].mxu0 %v4723
        %v4882 = vpop.f32.mrb[0].mxu0
        %v4883 = vadd.f32 0.0, %v4882
        %v4884 = vpop.f32.mrb[0].mxu0
        %v4885 = vpop.f32.mrb[0].mxu0
        %v4886 = vadd.f32 0.0, %v4885
        %v4887 = vpop.f32.mrb[0].mxu0
        %4888 = vdwg.mxu0
        %v4889 = vadd.f32 %v4163, %v4763
        %v4890 = vadd.f32 %v4164, %v4766
        %v4891 = vadd.f32 %v4165, %v4771
        %v4892 = vadd.f32 %v4166, %v4774
        %v4893 = vadd.f32 %v4167, %v4779
        %v4894 = vadd.f32 %v4168, %v4782
        %v4895 = vadd.f32 %v4169, %v4787
        %v4896 = vadd.f32 %v4170, %v4790
        %v4897 = vadd.f32 %v4171, %v4795
        %v4898 = vadd.f32 %v4172, %v4798
        %v4899 = vadd.f32 %v4173, %v4803
        %v4900 = vadd.f32 %v4174, %v4806
        %v4901 = vadd.f32 %v4175, %v4811
        %v4902 = vadd.f32 %v4176, %v4814
        %v4903 = vadd.f32 %v4177, %v4819
        %v4904 = vadd.f32 %v4178, %v4822
        %v4905 = vadd.f32 %v4179, %v4827
        %v4906 = vadd.f32 %v4180, %v4830
        %v4907 = vadd.f32 %v4181, %v4835
        %v4908 = vadd.f32 %v4182, %v4838
        %v4909 = vadd.f32 %v4183, %v4843
        %v4910 = vadd.f32 %v4184, %v4846
        %v4911 = vadd.f32 %v4185, %v4851
        %v4912 = vadd.f32 %v4186, %v4854
        %v4913 = vadd.f32 %v4187, %v4859
        %v4914 = vadd.f32 %v4188, %v4862
        %v4915 = vadd.f32 %v4189, %v4867
        %v4916 = vadd.f32 %v4190, %v4870
        %v4917 = vadd.f32 %v4191, %v4875
        %v4918 = vadd.f32 %v4192, %v4878
        %v4919 = vadd.f32 %v4193, %v4883
        %v4920 = vadd.f32 %v4194, %v4886
        %v4921 = vld [vmem:[%s3836] sm:$0xe]
        %v4922 = vld [vmem:[%s3836 + $0xc] sm:$0xe]
        %v4923 = vld [vmem:[%s3836 + $0x18] sm:$0xe]
        %v4924 = vld [vmem:[%s3836 + $0x24] sm:$0xe]
        %v4925 = vld [vmem:[%s3836 + $0x30] sm:$0xe]
        %v4926 = vld [vmem:[%s3836 + $0x3c] sm:$0xe]
        %v4927 = vld [vmem:[%s3836 + $0x48] sm:$0xe]
        %v4928 = vld [vmem:[%s3836 + $0x54] sm:$0xe]
        %v4929 = vld [vmem:[%s3836 + $0x60] sm:$0xe]
        %v4930 = vld [vmem:[%s3836 + $0x6c] sm:$0xe]
        %v4931 = vld [vmem:[%s3836 + $0x78] sm:$0xe]
        %v4932 = vld [vmem:[%s3836 + $0x84] sm:$0xe]
        %v4933 = vld [vmem:[%s3836 + $0x90] sm:$0xe]
        %v4934 = vld [vmem:[%s3836 + $0x9c] sm:$0xe]
        %v4935 = vld [vmem:[%s3836 + $0xa8] sm:$0xe]
        %v4936 = vld [vmem:[%s3836 + $0xb4] sm:$0xe]
        %v4985 = vrot.slane %v4921, 5
        %v4986 = vrot.slane %v4985, 4
        %v4987 = vrot.slane %v4196, 5
        %v4988 = vsel %vm1874, %v4986, %v4987
        %v4989 = vrot.slane %v4987, 4
        %v4990 = vrot.slane %v4197, 5
        %v4991 = vsel %vm1874, %v4989, %v4990
        %v4992 = vrot.slane %v4922, 5
        %v4993 = vrot.slane %v4992, 4
        %v4994 = vrot.slane %v4199, 5
        %v4995 = vsel %vm1874, %v4993, %v4994
        %v4996 = vrot.slane %v4994, 4
        %v4997 = vrot.slane %v4200, 5
        %v4998 = vsel %vm1874, %v4996, %v4997
        %v4999 = vrot.slane %v4923, 5
        %v5000 = vrot.slane %v4999, 4
        %v5001 = vrot.slane %v4202, 5
        %v5002 = vsel %vm1874, %v5000, %v5001
        %v5003 = vrot.slane %v5001, 4
        %v5004 = vrot.slane %v4203, 5
        %v5005 = vsel %vm1874, %v5003, %v5004
        %v5006 = vrot.slane %v4924, 5
        %v5007 = vrot.slane %v5006, 4
        %v5008 = vrot.slane %v4205, 5
        %v5009 = vsel %vm1874, %v5007, %v5008
        %v5010 = vrot.slane %v5008, 4
        %v5011 = vrot.slane %v4206, 5
        %v5012 = vsel %vm1874, %v5010, %v5011
        %v5013 = vrot.slane %v4925, 5
        %v5014 = vrot.slane %v5013, 4
        %v5015 = vrot.slane %v4208, 5
        %v5016 = vsel %vm1874, %v5014, %v5015
        %v5017 = vrot.slane %v5015, 4
        %v5018 = vrot.slane %v4209, 5
        %v5019 = vsel %vm1874, %v5017, %v5018
        %v5020 = vrot.slane %v4926, 5
        %v5021 = vrot.slane %v5020, 4
        %v5022 = vrot.slane %v4211, 5
        %v5023 = vsel %vm1874, %v5021, %v5022
        %v5024 = vrot.slane %v5022, 4
        %v5025 = vrot.slane %v4212, 5
        %v5026 = vsel %vm1874, %v5024, %v5025
        %v5027 = vrot.slane %v4927, 5
        %v5028 = vrot.slane %v5027, 4
        %v5029 = vrot.slane %v4214, 5
        %v5030 = vsel %vm1874, %v5028, %v5029
        %v5031 = vrot.slane %v5029, 4
        %v5032 = vrot.slane %v4215, 5
        %v5033 = vsel %vm1874, %v5031, %v5032
        %v5034 = vrot.slane %v4928, 5
        %v5035 = vrot.slane %v5034, 4
        %v5036 = vrot.slane %v4217, 5
        %v5037 = vsel %vm1874, %v5035, %v5036
        %v5038 = vrot.slane %v5036, 4
        %v5039 = vrot.slane %v4218, 5
        %v5040 = vsel %vm1874, %v5038, %v5039
        %v5041 = vrot.slane %v4929, 5
        %v5042 = vrot.slane %v5041, 4
        %v5043 = vrot.slane %v4220, 5
        %v5044 = vsel %vm1874, %v5042, %v5043
        %v5045 = vrot.slane %v5043, 4
        %v5046 = vrot.slane %v4221, 5
        %v5047 = vsel %vm1874, %v5045, %v5046
        %v5048 = vrot.slane %v4930, 5
        %v5049 = vrot.slane %v5048, 4
        %v5050 = vrot.slane %v4223, 5
        %v5051 = vsel %vm1874, %v5049, %v5050
        %v5052 = vrot.slane %v5050, 4
        %v5053 = vrot.slane %v4224, 5
        %v5054 = vsel %vm1874, %v5052, %v5053
        %v5055 = vrot.slane %v4931, 5
        %v5056 = vrot.slane %v5055, 4
        %v5057 = vrot.slane %v4226, 5
        %v5058 = vsel %vm1874, %v5056, %v5057
        %v5059 = vrot.slane %v5057, 4
        %v5060 = vrot.slane %v4227, 5
        %v5061 = vsel %vm1874, %v5059, %v5060
        %v5062 = vrot.slane %v4932, 5
        %v5063 = vrot.slane %v5062, 4
        %v5064 = vrot.slane %v4229, 5
        %v5065 = vsel %vm1874, %v5063, %v5064
        %v5066 = vrot.slane %v5064, 4
        %v5067 = vrot.slane %v4230, 5
        %v5068 = vsel %vm1874, %v5066, %v5067
        %v5069 = vrot.slane %v4933, 5
        %v5070 = vrot.slane %v5069, 4
        %v5071 = vrot.slane %v4232, 5
        %v5072 = vsel %vm1874, %v5070, %v5071
        %v5073 = vrot.slane %v5071, 4
        %v5074 = vrot.slane %v4233, 5
        %v5075 = vsel %vm1874, %v5073, %v5074
        %v5076 = vrot.slane %v4934, 5
        %v5077 = vrot.slane %v5076, 4
        %v5078 = vrot.slane %v4235, 5
        %v5079 = vsel %vm1874, %v5077, %v5078
        %v5080 = vrot.slane %v5078, 4
        %v5081 = vrot.slane %v4236, 5
        %v5082 = vsel %vm1874, %v5080, %v5081
        %v5083 = vrot.slane %v4935, 5
        %v5084 = vrot.slane %v5083, 4
        %v5085 = vrot.slane %v4238, 5
        %v5086 = vsel %vm1874, %v5084, %v5085
        %v5087 = vrot.slane %v5085, 4
        %v5088 = vrot.slane %v4239, 5
        %v5089 = vsel %vm1874, %v5087, %v5088
        %v5090 = vrot.slane %v4936, 5
        %v5091 = vrot.slane %v5090, 4
        %v5092 = vrot.slane %v4241, 5
        %v5093 = vsel %vm1874, %v5091, %v5092
        %v5094 = vrot.slane %v5092, 4
        %v5095 = vrot.slane %v4242, 5
        %v5096 = vsel %vm1874, %v5094, %v5095
        %s5097 = scalar_lea.vmem [#allocation3], 16
        %v5098 = vld [vmem:[%s5097] sm:$0x3]
        %v5099 = vunpack.c.l.b16 %v4988
        %v5100 = vunpack.c.l.b16 %v4991
        %v5101 = vunpack.c.l.b16 %v4995
        %v5102 = vunpack.c.l.b16 %v4998
        %v5103 = vunpack.c.l.b16 %v5002
        %v5104 = vunpack.c.l.b16 %v5005
        %v5105 = vunpack.c.l.b16 %v5009
        %v5106 = vunpack.c.l.b16 %v5012
        %v5107 = vunpack.c.l.b16 %v5016
        %v5108 = vunpack.c.l.b16 %v5019
        %v5109 = vunpack.c.l.b16 %v5023
        %v5110 = vunpack.c.l.b16 %v5026
        %v5111 = vunpack.c.l.b16 %v5030
        %v5112 = vunpack.c.l.b16 %v5033
        %v5113 = vunpack.c.l.b16 %v5037
        %v5114 = vunpack.c.l.b16 %v5040
        %v5115 = vunpack.c.l.b16 %v5044
        %v5116 = vunpack.c.l.b16 %v5047
        %v5117 = vunpack.c.l.b16 %v5051
        %v5118 = vunpack.c.l.b16 %v5054
        %v5119 = vunpack.c.l.b16 %v5058
        %v5120 = vunpack.c.l.b16 %v5061
        %v5121 = vunpack.c.l.b16 %v5065
        %v5122 = vunpack.c.l.b16 %v5068
        %v5123 = vunpack.c.l.b16 %v5072
        %v5124 = vunpack.c.l.b16 %v5075
        %v5125 = vunpack.c.l.b16 %v5079
        %v5126 = vunpack.c.l.b16 %v5082
        %v5127 = vunpack.c.l.b16 %v5086
        %v5128 = vunpack.c.l.b16 %v5089
        %v5129 = vunpack.c.l.b16 %v5093
        %v5130 = vunpack.c.l.b16 %v5096
        %v5131 = vpack.c.b16 %v5100, %v5099
        %v5132 = vpack.c.b16 %v5102, %v5101
        %v5133 = vpack.c.b16 %v5104, %v5103
        %v5134 = vpack.c.b16 %v5106, %v5105
        %v5135 = vpack.c.b16 %v5108, %v5107
        %v5136 = vpack.c.b16 %v5110, %v5109
        %v5137 = vpack.c.b16 %v5112, %v5111
        %v5138 = vpack.c.b16 %v5114, %v5113
        %v5139 = vpack.c.b16 %v5116, %v5115
        %v5140 = vpack.c.b16 %v5118, %v5117
        %v5141 = vpack.c.b16 %v5120, %v5119
        %v5142 = vpack.c.b16 %v5122, %v5121
        %v5143 = vpack.c.b16 %v5124, %v5123
        %v5144 = vpack.c.b16 %v5126, %v5125
        %v5145 = vpack.c.b16 %v5128, %v5127
        %v5146 = vpack.c.b16 %v5130, %v5129
        %v5148 = vsel %vm1315, %v5131, 0
        %v5151 = vsel %vm1315, %v5132, 0
        %v5154 = vsel %vm1315, %v5133, 0
        %v5157 = vsel %vm1315, %v5134, 0
        %v5160 = vsel %vm1315, %v5135, 0
        %v5163 = vsel %vm1315, %v5136, 0
        %v5166 = vsel %vm1315, %v5137, 0
        %v5169 = vsel %vm1315, %v5138, 0
        %v5172 = vsel %vm1315, %v5139, 0
        %v5175 = vsel %vm1315, %v5140, 0
        %v5178 = vsel %vm1315, %v5141, 0
        %v5181 = vsel %vm1315, %v5142, 0
        %v5184 = vsel %vm1315, %v5143, 0
        %v5187 = vsel %vm1315, %v5144, 0
        %v5190 = vsel %vm1315, %v5145, 0
        %v5193 = vsel %vm1315, %v5146, 0
        %v5196 = vand.u32 %v5098, %v1367
        %5198 = vmatprep.subr.bf16.mxu0 0
        %5199 = vmatpush1.bf16.msra.mxu0 %v5196
        %5200 = vmatprep.subr.bf16.mxu0 0
        %5201 = vmatpush1.bf16.msra.mxu0 0
        %5202 = vmatprep.subr.bf16.mxu0 0
        %5203 = vmatpush1.bf16.msra.mxu0 0
        %5204 = vmatprep.subr.bf16.mxu0 0
        %5205 = vmatpush1.bf16.msra.mxu0 0
        %5206 = vmatprep.subr.bf16.mxu0 0
        %5207 = vmatpush1.bf16.msra.mxu0 0
        %5208 = vmatprep.subr.bf16.mxu0 0
        %5209 = vmatpush1.bf16.msra.mxu0 0
        %5210 = vmatprep.subr.bf16.mxu0 0
        %5211 = vmatpush1.bf16.msra.mxu0 0
        %5212 = vmatprep.subr.bf16.mxu0 0
        %5213 = vmatpush1.bf16.msra.mxu0 0
        %5214 = vmatprep.subr.bf16.mxu0 0
        %5215 = vmatpush1.bf16.msra.mxu0 0
        %5216 = vmatprep.subr.bf16.mxu0 0
        %5217 = vmatpush1.bf16.msra.mxu0 0
        %5218 = vmatprep.subr.bf16.mxu0 0
        %5219 = vmatpush1.bf16.msra.mxu0 0
        %5220 = vmatprep.subr.bf16.mxu0 0
        %5221 = vmatpush1.bf16.msra.mxu0 0
        %5222 = vmatprep.subr.bf16.mxu0 0
        %5223 = vmatpush1.bf16.msra.mxu0 0
        %5224 = vmatprep.subr.bf16.mxu0 0
        %5225 = vmatpush1.bf16.msra.mxu0 0
        %5226 = vmatprep.subr.bf16.mxu0 0
        %5227 = vmatpush1.bf16.msra.mxu0 0
        %5228 = vmatprep.subr.bf16.mxu0 0
        %5229 = vmatpush1.bf16.msra.mxu0 0
        %5230 = vmatprep.mubr.bf16.mxu0 0
        %5231 = vmatmul.mubr.bf16.gmra.mrb[0].mxu0 %v5148
        %v5232 = vpop.f32.mrb[0].mxu0
        %v5233 = vadd.f32 0.0, %v5232
        %v5234 = vpop.f32.mrb[0].mxu0
        %v5235 = vpop.f32.mrb[0].mxu0
        %v5236 = vadd.f32 0.0, %v5235
        %v5237 = vpop.f32.mrb[0].mxu0
        %5238 = vmatprep.mubr.bf16.mxu0 0
        %5239 = vmatmul.mubr.bf16.gmra.mrb[0].mxu0 %v5151
        %v5240 = vpop.f32.mrb[0].mxu0
        %v5241 = vadd.f32 0.0, %v5240
        %v5242 = vpop.f32.mrb[0].mxu0
        %v5243 = vpop.f32.mrb[0].mxu0
        %v5244 = vadd.f32 0.0, %v5243
        %v5245 = vpop.f32.mrb[0].mxu0
        %5246 = vmatprep.mubr.bf16.mxu0 0
        %5247 = vmatmul.mubr.bf16.gmra.mrb[0].mxu0 %v5154
        %v5248 = vpop.f32.mrb[0].mxu0
        %v5249 = vadd.f32 0.0, %v5248
        %v5250 = vpop.f32.mrb[0].mxu0
        %v5251 = vpop.f32.mrb[0].mxu0
        %v5252 = vadd.f32 0.0, %v5251
        %v5253 = vpop.f32.mrb[0].mxu0
        %5254 = vmatprep.mubr.bf16.mxu0 0
        %5255 = vmatmul.mubr.bf16.gmra.mrb[0].mxu0 %v5157
        %v5256 = vpop.f32.mrb[0].mxu0
        %v5257 = vadd.f32 0.0, %v5256
        %v5258 = vpop.f32.mrb[0].mxu0
        %v5259 = vpop.f32.mrb[0].mxu0
        %v5260 = vadd.f32 0.0, %v5259
        %v5261 = vpop.f32.mrb[0].mxu0
        %5262 = vmatprep.mubr.bf16.mxu0 0
        %5263 = vmatmul.mubr.bf16.gmra.mrb[0].mxu0 %v5160
        %v5264 = vpop.f32.mrb[0].mxu0
        %v5265 = vadd.f32 0.0, %v5264
        %v5266 = vpop.f32.mrb[0].mxu0
        %v5267 = vpop.f32.mrb[0].mxu0
        %v5268 = vadd.f32 0.0, %v5267
        %v5269 = vpop.f32.mrb[0].mxu0
        %5270 = vmatprep.mubr.bf16.mxu0 0
        %5271 = vmatmul.mubr.bf16.gmra.mrb[0].mxu0 %v5163
        %v5272 = vpop.f32.mrb[0].mxu0
        %v5273 = vadd.f32 0.0, %v5272
        %v5274 = vpop.f32.mrb[0].mxu0
        %v5275 = vpop.f32.mrb[0].mxu0
        %v5276 = vadd.f32 0.0, %v5275
        %v5277 = vpop.f32.mrb[0].mxu0
        %5278 = vmatprep.mubr.bf16.mxu0 0
        %5279 = vmatmul.mubr.bf16.gmra.mrb[0].mxu0 %v5166
        %v5280 = vpop.f32.mrb[0].mxu0
        %v5281 = vadd.f32 0.0, %v5280
        %v5282 = vpop.f32.mrb[0].mxu0
        %v5283 = vpop.f32.mrb[0].mxu0
        %v5284 = vadd.f32 0.0, %v5283
        %v5285 = vpop.f32.mrb[0].mxu0
        %5286 = vmatprep.mubr.bf16.mxu0 0
        %5287 = vmatmul.mubr.bf16.gmra.mrb[0].mxu0 %v5169
        %v5288 = vpop.f32.mrb[0].mxu0
        %v5289 = vadd.f32 0.0, %v5288
        %v5290 = vpop.f32.mrb[0].mxu0
        %v5291 = vpop.f32.mrb[0].mxu0
        %v5292 = vadd.f32 0.0, %v5291
        %v5293 = vpop.f32.mrb[0].mxu0
        %5294 = vmatprep.mubr.bf16.mxu0 0
        %5295 = vmatmul.mubr.bf16.gmra.mrb[0].mxu0 %v5172
        %v5296 = vpop.f32.mrb[0].mxu0
        %v5297 = vadd.f32 0.0, %v5296
        %v5298 = vpop.f32.mrb[0].mxu0
        %v5299 = vpop.f32.mrb[0].mxu0
        %v5300 = vadd.f32 0.0, %v5299
        %v5301 = vpop.f32.mrb[0].mxu0
        %5302 = vmatprep.mubr.bf16.mxu0 0
        %5303 = vmatmul.mubr.bf16.gmra.mrb[0].mxu0 %v5175
        %v5304 = vpop.f32.mrb[0].mxu0
        %v5305 = vadd.f32 0.0, %v5304
        %v5306 = vpop.f32.mrb[0].mxu0
        %v5307 = vpop.f32.mrb[0].mxu0
        %v5308 = vadd.f32 0.0, %v5307
        %v5309 = vpop.f32.mrb[0].mxu0
        %5310 = vmatprep.mubr.bf16.mxu0 0
        %5311 = vmatmul.mubr.bf16.gmra.mrb[0].mxu0 %v5178
        %v5312 = vpop.f32.mrb[0].mxu0
        %v5313 = vadd.f32 0.0, %v5312
        %v5314 = vpop.f32.mrb[0].mxu0
        %v5315 = vpop.f32.mrb[0].mxu0
        %v5316 = vadd.f32 0.0, %v5315
        %v5317 = vpop.f32.mrb[0].mxu0
        %5318 = vmatprep.mubr.bf16.mxu0 0
        %5319 = vmatmul.mubr.bf16.gmra.mrb[0].mxu0 %v5181
        %v5320 = vpop.f32.mrb[0].mxu0
        %v5321 = vadd.f32 0.0, %v5320
        %v5322 = vpop.f32.mrb[0].mxu0
        %v5323 = vpop.f32.mrb[0].mxu0
        %v5324 = vadd.f32 0.0, %v5323
        %v5325 = vpop.f32.mrb[0].mxu0
        %5326 = vmatprep.mubr.bf16.mxu0 0
        %5327 = vmatmul.mubr.bf16.gmra.mrb[0].mxu0 %v5184
        %v5328 = vpop.f32.mrb[0].mxu0
        %v5329 = vadd.f32 0.0, %v5328
        %v5330 = vpop.f32.mrb[0].mxu0
        %v5331 = vpop.f32.mrb[0].mxu0
        %v5332 = vadd.f32 0.0, %v5331
        %v5333 = vpop.f32.mrb[0].mxu0
        %5334 = vmatprep.mubr.bf16.mxu0 0
        %5335 = vmatmul.mubr.bf16.gmra.mrb[0].mxu0 %v5187
        %v5336 = vpop.f32.mrb[0].mxu0
        %v5337 = vadd.f32 0.0, %v5336
        %v5338 = vpop.f32.mrb[0].mxu0
        %v5339 = vpop.f32.mrb[0].mxu0
        %v5340 = vadd.f32 0.0, %v5339
        %v5341 = vpop.f32.mrb[0].mxu0
        %5342 = vmatprep.mubr.bf16.mxu0 0
        %5343 = vmatmul.mubr.bf16.gmra.mrb[0].mxu0 %v5190
        %v5344 = vpop.f32.mrb[0].mxu0
        %v5345 = vadd.f32 0.0, %v5344
        %v5346 = vpop.f32.mrb[0].mxu0
        %v5347 = vpop.f32.mrb[0].mxu0
        %v5348 = vadd.f32 0.0, %v5347
        %v5349 = vpop.f32.mrb[0].mxu0
        %5350 = vmatprep.mubr.bf16.mxu0 0
        %5351 = vmatmul.mubr.bf16.gmra.mrb[0].mxu0 %v5193
        %v5352 = vpop.f32.mrb[0].mxu0
        %v5353 = vadd.f32 0.0, %v5352
        %v5354 = vpop.f32.mrb[0].mxu0
        %v5355 = vpop.f32.mrb[0].mxu0
        %v5356 = vadd.f32 0.0, %v5355
        %v5357 = vpop.f32.mrb[0].mxu0
        %5358 = vdwg.mxu0
        %v5359 = vadd.f32 %v4889, %v5233
        %v5360 = vadd.f32 %v4890, %v5236
        %v5361 = vadd.f32 %v4891, %v5241
        %v5362 = vadd.f32 %v4892, %v5244
        %v5363 = vadd.f32 %v4893, %v5249
        %v5364 = vadd.f32 %v4894, %v5252
        %v5365 = vadd.f32 %v4895, %v5257
        %v5366 = vadd.f32 %v4896, %v5260
        %v5367 = vadd.f32 %v4897, %v5265
        %v5368 = vadd.f32 %v4898, %v5268
        %v5369 = vadd.f32 %v4899, %v5273
        %v5370 = vadd.f32 %v4900, %v5276
        %v5371 = vadd.f32 %v4901, %v5281
        %v5372 = vadd.f32 %v4902, %v5284
        %v5373 = vadd.f32 %v4903, %v5289
        %v5374 = vadd.f32 %v4904, %v5292
        %v5375 = vadd.f32 %v4905, %v5297
        %v5376 = vadd.f32 %v4906, %v5300
        %v5377 = vadd.f32 %v4907, %v5305
        %v5378 = vadd.f32 %v4908, %v5308
        %v5379 = vadd.f32 %v4909, %v5313
        %v5380 = vadd.f32 %v4910, %v5316
        %v5381 = vadd.f32 %v4911, %v5321
        %v5382 = vadd.f32 %v4912, %v5324
        %v5383 = vadd.f32 %v4913, %v5329
        %v5384 = vadd.f32 %v4914, %v5332
        %v5385 = vadd.f32 %v4915, %v5337
        %v5386 = vadd.f32 %v4916, %v5340
        %v5387 = vadd.f32 %v4917, %v5345
        %v5388 = vadd.f32 %v4918, %v5348
        %v5389 = vadd.f32 %v4919, %v5353
        %v5390 = vadd.f32 %v4920, %v5356
        %v5391 = vld [vmem:[#allocation5] sm:$0x1]
        %v5393 = vlaneseq
        %v5394 = vshrl.u32 %v5393, 7
        %v5395 = vsub.s32 0, %v5394
        %v5396 = vrot.slane %v5391, %v5395
        %v5398 = vadd.f32 %v5359, %v5396
        %v5399 = vadd.f32 %v5360, %v5396
        %v5400 = vadd.f32 %v5361, %v5396
        %v5401 = vadd.f32 %v5362, %v5396
        %v5402 = vadd.f32 %v5363, %v5396
        %v5403 = vadd.f32 %v5364, %v5396
        %v5404 = vadd.f32 %v5365, %v5396
        %v5405 = vadd.f32 %v5366, %v5396
        %v5406 = vadd.f32 %v5367, %v5396
        %v5407 = vadd.f32 %v5368, %v5396
        %v5408 = vadd.f32 %v5369, %v5396
        %v5409 = vadd.f32 %v5370, %v5396
        %v5410 = vadd.f32 %v5371, %v5396
        %v5411 = vadd.f32 %v5372, %v5396
        %v5412 = vadd.f32 %v5373, %v5396
        %v5413 = vadd.f32 %v5374, %v5396
        %v5414 = vadd.f32 %v5375, %v5396
        %v5415 = vadd.f32 %v5376, %v5396
        %v5416 = vadd.f32 %v5377, %v5396
        %v5417 = vadd.f32 %v5378, %v5396
        %v5418 = vadd.f32 %v5379, %v5396
        %v5419 = vadd.f32 %v5380, %v5396
        %v5420 = vadd.f32 %v5381, %v5396
        %v5421 = vadd.f32 %v5382, %v5396
        %v5422 = vadd.f32 %v5383, %v5396
        %v5423 = vadd.f32 %v5384, %v5396
        %v5424 = vadd.f32 %v5385, %v5396
        %v5425 = vadd.f32 %v5386, %v5396
        %v5426 = vadd.f32 %v5387, %v5396
        %v5427 = vadd.f32 %v5388, %v5396
        %v5428 = vadd.f32 %v5389, %v5396
        %v5429 = vadd.f32 %v5390, %v5396
        %v5430 = vmax.f32 %v5398, 0.0
        %v5431 = vmax.f32 %v5399, 0.0
        %v5432 = vmax.f32 %v5400, 0.0
        %v5433 = vmax.f32 %v5401, 0.0
        %v5434 = vmax.f32 %v5402, 0.0
        %v5435 = vmax.f32 %v5403, 0.0
        %v5436 = vmax.f32 %v5404, 0.0
        %v5437 = vmax.f32 %v5405, 0.0
        %v5438 = vmax.f32 %v5406, 0.0
        %v5439 = vmax.f32 %v5407, 0.0
        %v5440 = vmax.f32 %v5408, 0.0
        %v5441 = vmax.f32 %v5409, 0.0
        %v5442 = vmax.f32 %v5410, 0.0
        %v5443 = vmax.f32 %v5411, 0.0
        %v5444 = vmax.f32 %v5412, 0.0
        %v5445 = vmax.f32 %v5413, 0.0
        %v5446 = vmax.f32 %v5414, 0.0
        %v5447 = vmax.f32 %v5415, 0.0
        %v5448 = vmax.f32 %v5416, 0.0
        %v5449 = vmax.f32 %v5417, 0.0
        %v5450 = vmax.f32 %v5418, 0.0
        %v5451 = vmax.f32 %v5419, 0.0
        %v5452 = vmax.f32 %v5420, 0.0
        %v5453 = vmax.f32 %v5421, 0.0
        %v5454 = vmax.f32 %v5422, 0.0
        %v5455 = vmax.f32 %v5423, 0.0
        %v5456 = vmax.f32 %v5424, 0.0
        %v5457 = vmax.f32 %v5425, 0.0
        %v5458 = vmax.f32 %v5426, 0.0
        %v5459 = vmax.f32 %v5427, 0.0
        %v5460 = vmax.f32 %v5428, 0.0
        %v5461 = vmax.f32 %v5429, 0.0
        %v5494 = vcombine.high %v5430, %v5430
        %v5496 = vunpack.c.l.s4 1983009808
        %v5497 = vunpack.c.0.s8 %v5496
        %v5498 = vlaneseq
        %v5499 = vshrl.u32 %v5498, 7
        %v5500 = vsub.s32 %v5497, %v5499
        %v5501 = vrot.slane %v5430, %v5500
        %v5503 = vunpack.c.l.s4 1983009808
        %v5504 = vunpack.c.0.s8 %v5503
        %v5505 = vlaneseq
        %v5506 = vshrl.u32 %v5505, 7
        %v5507 = vsub.s32 %v5504, %v5506
        %v5508 = vrot.slane %v5494, %v5507
        %v5509 = vcombine.high %v5501, %v5501
        %v5510 = vcombine.high %v5508, %v5508
        %v5511 = vcombine.high %v5431, %v5431
        %v5513 = vunpack.c.l.s4 1983009808
        %v5514 = vunpack.c.0.s8 %v5513
        %v5515 = vlaneseq
        %v5516 = vshrl.u32 %v5515, 7
        %v5517 = vsub.s32 %v5514, %v5516
        %v5518 = vrot.slane %v5431, %v5517
        %v5520 = vunpack.c.l.s4 1983009808
        %v5521 = vunpack.c.0.s8 %v5520
        %v5522 = vlaneseq
        %v5523 = vshrl.u32 %v5522, 7
        %v5524 = vsub.s32 %v5521, %v5523
        %v5525 = vrot.slane %v5511, %v5524
        %v5526 = vcombine.high %v5518, %v5518
        %v5527 = vcombine.high %v5525, %v5525
        %v5528 = vcombine.high %v5432, %v5432
        %v5530 = vunpack.c.l.s4 1983009808
        %v5531 = vunpack.c.0.s8 %v5530
        %v5532 = vlaneseq
        %v5533 = vshrl.u32 %v5532, 7
        %v5534 = vsub.s32 %v5531, %v5533
        %v5535 = vrot.slane %v5432, %v5534
        %v5537 = vunpack.c.l.s4 1983009808
        %v5538 = vunpack.c.0.s8 %v5537
        %v5539 = vlaneseq
        %v5540 = vshrl.u32 %v5539, 7
        %v5541 = vsub.s32 %v5538, %v5540
        %v5542 = vrot.slane %v5528, %v5541
        %v5543 = vcombine.high %v5535, %v5535
        %v5544 = vcombine.high %v5542, %v5542
        %v5545 = vcombine.high %v5433, %v5433
        %v5547 = vunpack.c.l.s4 1983009808
        %v5548 = vunpack.c.0.s8 %v5547
        %v5549 = vlaneseq
        %v5550 = vshrl.u32 %v5549, 7
        %v5551 = vsub.s32 %v5548, %v5550
        %v5552 = vrot.slane %v5433, %v5551
        %v5554 = vunpack.c.l.s4 1983009808
        %v5555 = vunpack.c.0.s8 %v5554
        %v5556 = vlaneseq
        %v5557 = vshrl.u32 %v5556, 7
        %v5558 = vsub.s32 %v5555, %v5557
        %v5559 = vrot.slane %v5545, %v5558
        %v5560 = vcombine.high %v5552, %v5552
        %v5561 = vcombine.high %v5559, %v5559
        %v5562 = vcombine.high %v5434, %v5434
        %v5564 = vunpack.c.l.s4 1983009808
        %v5565 = vunpack.c.0.s8 %v5564
        %v5566 = vlaneseq
        %v5567 = vshrl.u32 %v5566, 7
        %v5568 = vsub.s32 %v5565, %v5567
        %v5569 = vrot.slane %v5434, %v5568
        %v5571 = vunpack.c.l.s4 1983009808
        %v5572 = vunpack.c.0.s8 %v5571
        %v5573 = vlaneseq
        %v5574 = vshrl.u32 %v5573, 7
        %v5575 = vsub.s32 %v5572, %v5574
        %v5576 = vrot.slane %v5562, %v5575
        %v5577 = vcombine.high %v5569, %v5569
        %v5578 = vcombine.high %v5576, %v5576
        %v5579 = vcombine.high %v5435, %v5435
        %v5581 = vunpack.c.l.s4 1983009808
        %v5582 = vunpack.c.0.s8 %v5581
        %v5583 = vlaneseq
        %v5584 = vshrl.u32 %v5583, 7
        %v5585 = vsub.s32 %v5582, %v5584
        %v5586 = vrot.slane %v5435, %v5585
        %v5588 = vunpack.c.l.s4 1983009808
        %v5589 = vunpack.c.0.s8 %v5588
        %v5590 = vlaneseq
        %v5591 = vshrl.u32 %v5590, 7
        %v5592 = vsub.s32 %v5589, %v5591
        %v5593 = vrot.slane %v5579, %v5592
        %v5594 = vcombine.high %v5586, %v5586
        %v5595 = vcombine.high %v5593, %v5593
        %v5596 = vcombine.high %v5436, %v5436
        %v5598 = vunpack.c.l.s4 1983009808
        %v5599 = vunpack.c.0.s8 %v5598
        %v5600 = vlaneseq
        %v5601 = vshrl.u32 %v5600, 7
        %v5602 = vsub.s32 %v5599, %v5601
        %v5603 = vrot.slane %v5436, %v5602
        %v5605 = vunpack.c.l.s4 1983009808
        %v5606 = vunpack.c.0.s8 %v5605
        %v5607 = vlaneseq
        %v5608 = vshrl.u32 %v5607, 7
        %v5609 = vsub.s32 %v5606, %v5608
        %v5610 = vrot.slane %v5596, %v5609
        %v5611 = vcombine.high %v5603, %v5603
        %v5612 = vcombine.high %v5610, %v5610
        %v5613 = vcombine.high %v5437, %v5437
        %v5615 = vunpack.c.l.s4 1983009808
        %v5616 = vunpack.c.0.s8 %v5615
        %v5617 = vlaneseq
        %v5618 = vshrl.u32 %v5617, 7
        %v5619 = vsub.s32 %v5616, %v5618
        %v5620 = vrot.slane %v5437, %v5619
        %v5622 = vunpack.c.l.s4 1983009808
        %v5623 = vunpack.c.0.s8 %v5622
        %v5624 = vlaneseq
        %v5625 = vshrl.u32 %v5624, 7
        %v5626 = vsub.s32 %v5623, %v5625
        %v5627 = vrot.slane %v5613, %v5626
        %v5628 = vcombine.high %v5620, %v5620
        %v5629 = vcombine.high %v5627, %v5627
        %v5630 = vcombine.high %v5438, %v5438
        %v5632 = vunpack.c.l.s4 1983009808
        %v5633 = vunpack.c.0.s8 %v5632
        %v5634 = vlaneseq
        %v5635 = vshrl.u32 %v5634, 7
        %v5636 = vsub.s32 %v5633, %v5635
        %v5637 = vrot.slane %v5438, %v5636
        %v5639 = vunpack.c.l.s4 1983009808
        %v5640 = vunpack.c.0.s8 %v5639
        %v5641 = vlaneseq
        %v5642 = vshrl.u32 %v5641, 7
        %v5643 = vsub.s32 %v5640, %v5642
        %v5644 = vrot.slane %v5630, %v5643
        %v5645 = vcombine.high %v5637, %v5637
        %v5646 = vcombine.high %v5644, %v5644
        %v5647 = vcombine.high %v5439, %v5439
        %v5649 = vunpack.c.l.s4 1983009808
        %v5650 = vunpack.c.0.s8 %v5649
        %v5651 = vlaneseq
        %v5652 = vshrl.u32 %v5651, 7
        %v5653 = vsub.s32 %v5650, %v5652
        %v5654 = vrot.slane %v5439, %v5653
        %v5656 = vunpack.c.l.s4 1983009808
        %v5657 = vunpack.c.0.s8 %v5656
        %v5658 = vlaneseq
        %v5659 = vshrl.u32 %v5658, 7
        %v5660 = vsub.s32 %v5657, %v5659
        %v5661 = vrot.slane %v5647, %v5660
        %v5662 = vcombine.high %v5654, %v5654
        %v5663 = vcombine.high %v5661, %v5661
        %v5664 = vcombine.high %v5440, %v5440
        %v5666 = vunpack.c.l.s4 1983009808
        %v5667 = vunpack.c.0.s8 %v5666
        %v5668 = vlaneseq
        %v5669 = vshrl.u32 %v5668, 7
        %v5670 = vsub.s32 %v5667, %v5669
        %v5671 = vrot.slane %v5440, %v5670
        %v5673 = vunpack.c.l.s4 1983009808
        %v5674 = vunpack.c.0.s8 %v5673
        %v5675 = vlaneseq
        %v5676 = vshrl.u32 %v5675, 7
        %v5677 = vsub.s32 %v5674, %v5676
        %v5678 = vrot.slane %v5664, %v5677
        %v5679 = vcombine.high %v5671, %v5671
        %v5680 = vcombine.high %v5678, %v5678
        %v5681 = vcombine.high %v5441, %v5441
        %v5683 = vunpack.c.l.s4 1983009808
        %v5684 = vunpack.c.0.s8 %v5683
        %v5685 = vlaneseq
        %v5686 = vshrl.u32 %v5685, 7
        %v5687 = vsub.s32 %v5684, %v5686
        %v5688 = vrot.slane %v5441, %v5687
        %v5690 = vunpack.c.l.s4 1983009808
        %v5691 = vunpack.c.0.s8 %v5690
        %v5692 = vlaneseq
        %v5693 = vshrl.u32 %v5692, 7
        %v5694 = vsub.s32 %v5691, %v5693
        %v5695 = vrot.slane %v5681, %v5694
        %v5696 = vcombine.high %v5688, %v5688
        %v5697 = vcombine.high %v5695, %v5695
        %v5698 = vcombine.high %v5442, %v5442
        %v5700 = vunpack.c.l.s4 1983009808
        %v5701 = vunpack.c.0.s8 %v5700
        %v5702 = vlaneseq
        %v5703 = vshrl.u32 %v5702, 7
        %v5704 = vsub.s32 %v5701, %v5703
        %v5705 = vrot.slane %v5442, %v5704
        %v5707 = vunpack.c.l.s4 1983009808
        %v5708 = vunpack.c.0.s8 %v5707
        %v5709 = vlaneseq
        %v5710 = vshrl.u32 %v5709, 7
        %v5711 = vsub.s32 %v5708, %v5710
        %v5712 = vrot.slane %v5698, %v5711
        %v5713 = vcombine.high %v5705, %v5705
        %v5714 = vcombine.high %v5712, %v5712
        %v5715 = vcombine.high %v5443, %v5443
        %v5717 = vunpack.c.l.s4 1983009808
        %v5718 = vunpack.c.0.s8 %v5717
        %v5719 = vlaneseq
        %v5720 = vshrl.u32 %v5719, 7
        %v5721 = vsub.s32 %v5718, %v5720
        %v5722 = vrot.slane %v5443, %v5721
        %v5724 = vunpack.c.l.s4 1983009808
        %v5725 = vunpack.c.0.s8 %v5724
        %v5726 = vlaneseq
        %v5727 = vshrl.u32 %v5726, 7
        %v5728 = vsub.s32 %v5725, %v5727
        %v5729 = vrot.slane %v5715, %v5728
        %v5730 = vcombine.high %v5722, %v5722
        %v5731 = vcombine.high %v5729, %v5729
        %v5732 = vcombine.high %v5444, %v5444
        %v5734 = vunpack.c.l.s4 1983009808
        %v5735 = vunpack.c.0.s8 %v5734
        %v5736 = vlaneseq
        %v5737 = vshrl.u32 %v5736, 7
        %v5738 = vsub.s32 %v5735, %v5737
        %v5739 = vrot.slane %v5444, %v5738
        %v5741 = vunpack.c.l.s4 1983009808
        %v5742 = vunpack.c.0.s8 %v5741
        %v5743 = vlaneseq
        %v5744 = vshrl.u32 %v5743, 7
        %v5745 = vsub.s32 %v5742, %v5744
        %v5746 = vrot.slane %v5732, %v5745
        %v5747 = vcombine.high %v5739, %v5739
        %v5748 = vcombine.high %v5746, %v5746
        %v5749 = vcombine.high %v5445, %v5445
        %v5751 = vunpack.c.l.s4 1983009808
        %v5752 = vunpack.c.0.s8 %v5751
        %v5753 = vlaneseq
        %v5754 = vshrl.u32 %v5753, 7
        %v5755 = vsub.s32 %v5752, %v5754
        %v5756 = vrot.slane %v5445, %v5755
        %v5758 = vunpack.c.l.s4 1983009808
        %v5759 = vunpack.c.0.s8 %v5758
        %v5760 = vlaneseq
        %v5761 = vshrl.u32 %v5760, 7
        %v5762 = vsub.s32 %v5759, %v5761
        %v5763 = vrot.slane %v5749, %v5762
        %v5764 = vcombine.high %v5756, %v5756
        %v5765 = vcombine.high %v5763, %v5763
        %v5766 = vcombine.high %v5446, %v5446
        %v5768 = vunpack.c.l.s4 1983009808
        %v5769 = vunpack.c.0.s8 %v5768
        %v5770 = vlaneseq
        %v5771 = vshrl.u32 %v5770, 7
        %v5772 = vsub.s32 %v5769, %v5771
        %v5773 = vrot.slane %v5446, %v5772
        %v5775 = vunpack.c.l.s4 1983009808
        %v5776 = vunpack.c.0.s8 %v5775
        %v5777 = vlaneseq
        %v5778 = vshrl.u32 %v5777, 7
        %v5779 = vsub.s32 %v5776, %v5778
        %v5780 = vrot.slane %v5766, %v5779
        %v5781 = vcombine.high %v5773, %v5773
        %v5782 = vcombine.high %v5780, %v5780
        %v5783 = vcombine.high %v5447, %v5447
        %v5785 = vunpack.c.l.s4 1983009808
        %v5786 = vunpack.c.0.s8 %v5785
        %v5787 = vlaneseq
        %v5788 = vshrl.u32 %v5787, 7
        %v5789 = vsub.s32 %v5786, %v5788
        %v5790 = vrot.slane %v5447, %v5789
        %v5792 = vunpack.c.l.s4 1983009808
        %v5793 = vunpack.c.0.s8 %v5792
        %v5794 = vlaneseq
        %v5795 = vshrl.u32 %v5794, 7
        %v5796 = vsub.s32 %v5793, %v5795
        %v5797 = vrot.slane %v5783, %v5796
        %v5798 = vcombine.high %v5790, %v5790
        %v5799 = vcombine.high %v5797, %v5797
        %v5800 = vcombine.high %v5448, %v5448
        %v5802 = vunpack.c.l.s4 1983009808
        %v5803 = vunpack.c.0.s8 %v5802
        %v5804 = vlaneseq
        %v5805 = vshrl.u32 %v5804, 7
        %v5806 = vsub.s32 %v5803, %v5805
        %v5807 = vrot.slane %v5448, %v5806
        %v5809 = vunpack.c.l.s4 1983009808
        %v5810 = vunpack.c.0.s8 %v5809
        %v5811 = vlaneseq
        %v5812 = vshrl.u32 %v5811, 7
        %v5813 = vsub.s32 %v5810, %v5812
        %v5814 = vrot.slane %v5800, %v5813
        %v5815 = vcombine.high %v5807, %v5807
        %v5816 = vcombine.high %v5814, %v5814
        %v5817 = vcombine.high %v5449, %v5449
        %v5819 = vunpack.c.l.s4 1983009808
        %v5820 = vunpack.c.0.s8 %v5819
        %v5821 = vlaneseq
        %v5822 = vshrl.u32 %v5821, 7
        %v5823 = vsub.s32 %v5820, %v5822
        %v5824 = vrot.slane %v5449, %v5823
        %v5826 = vunpack.c.l.s4 1983009808
        %v5827 = vunpack.c.0.s8 %v5826
        %v5828 = vlaneseq
        %v5829 = vshrl.u32 %v5828, 7
        %v5830 = vsub.s32 %v5827, %v5829
        %v5831 = vrot.slane %v5817, %v5830
        %v5832 = vcombine.high %v5824, %v5824
        %v5833 = vcombine.high %v5831, %v5831
        %v5834 = vcombine.high %v5450, %v5450
        %v5836 = vunpack.c.l.s4 1983009808
        %v5837 = vunpack.c.0.s8 %v5836
        %v5838 = vlaneseq
        %v5839 = vshrl.u32 %v5838, 7
        %v5840 = vsub.s32 %v5837, %v5839
        %v5841 = vrot.slane %v5450, %v5840
        %v5843 = vunpack.c.l.s4 1983009808
        %v5844 = vunpack.c.0.s8 %v5843
        %v5845 = vlaneseq
        %v5846 = vshrl.u32 %v5845, 7
        %v5847 = vsub.s32 %v5844, %v5846
        %v5848 = vrot.slane %v5834, %v5847
        %v5849 = vcombine.high %v5841, %v5841
        %v5850 = vcombine.high %v5848, %v5848
        %v5851 = vcombine.high %v5451, %v5451
        %v5853 = vunpack.c.l.s4 1983009808
        %v5854 = vunpack.c.0.s8 %v5853
        %v5855 = vlaneseq
        %v5856 = vshrl.u32 %v5855, 7
        %v5857 = vsub.s32 %v5854, %v5856
        %v5858 = vrot.slane %v5451, %v5857
        %v5860 = vunpack.c.l.s4 1983009808
        %v5861 = vunpack.c.0.s8 %v5860
        %v5862 = vlaneseq
        %v5863 = vshrl.u32 %v5862, 7
        %v5864 = vsub.s32 %v5861, %v5863
        %v5865 = vrot.slane %v5851, %v5864
        %v5866 = vcombine.high %v5858, %v5858
        %v5867 = vcombine.high %v5865, %v5865
        %v5868 = vcombine.high %v5452, %v5452
        %v5870 = vunpack.c.l.s4 1983009808
        %v5871 = vunpack.c.0.s8 %v5870
        %v5872 = vlaneseq
        %v5873 = vshrl.u32 %v5872, 7
        %v5874 = vsub.s32 %v5871, %v5873
        %v5875 = vrot.slane %v5452, %v5874
        %v5877 = vunpack.c.l.s4 1983009808
        %v5878 = vunpack.c.0.s8 %v5877
        %v5879 = vlaneseq
        %v5880 = vshrl.u32 %v5879, 7
        %v5881 = vsub.s32 %v5878, %v5880
        %v5882 = vrot.slane %v5868, %v5881
        %v5883 = vcombine.high %v5875, %v5875
        %v5884 = vcombine.high %v5882, %v5882
        %v5885 = vcombine.high %v5453, %v5453
        %v5887 = vunpack.c.l.s4 1983009808
        %v5888 = vunpack.c.0.s8 %v5887
        %v5889 = vlaneseq
        %v5890 = vshrl.u32 %v5889, 7
        %v5891 = vsub.s32 %v5888, %v5890
        %v5892 = vrot.slane %v5453, %v5891
        %v5894 = vunpack.c.l.s4 1983009808
        %v5895 = vunpack.c.0.s8 %v5894
        %v5896 = vlaneseq
        %v5897 = vshrl.u32 %v5896, 7
        %v5898 = vsub.s32 %v5895, %v5897
        %v5899 = vrot.slane %v5885, %v5898
        %v5900 = vcombine.high %v5892, %v5892
        %v5901 = vcombine.high %v5899, %v5899
        %v5902 = vcombine.high %v5454, %v5454
        %v5904 = vunpack.c.l.s4 1983009808
        %v5905 = vunpack.c.0.s8 %v5904
        %v5906 = vlaneseq
        %v5907 = vshrl.u32 %v5906, 7
        %v5908 = vsub.s32 %v5905, %v5907
        %v5909 = vrot.slane %v5454, %v5908
        %v5911 = vunpack.c.l.s4 1983009808
        %v5912 = vunpack.c.0.s8 %v5911
        %v5913 = vlaneseq
        %v5914 = vshrl.u32 %v5913, 7
        %v5915 = vsub.s32 %v5912, %v5914
        %v5916 = vrot.slane %v5902, %v5915
        %v5917 = vcombine.high %v5909, %v5909
        %v5918 = vcombine.high %v5916, %v5916
        %v5919 = vcombine.high %v5455, %v5455
        %v5921 = vunpack.c.l.s4 1983009808
        %v5922 = vunpack.c.0.s8 %v5921
        %v5923 = vlaneseq
        %v5924 = vshrl.u32 %v5923, 7
        %v5925 = vsub.s32 %v5922, %v5924
        %v5926 = vrot.slane %v5455, %v5925
        %v5928 = vunpack.c.l.s4 1983009808
        %v5929 = vunpack.c.0.s8 %v5928
        %v5930 = vlaneseq
        %v5931 = vshrl.u32 %v5930, 7
        %v5932 = vsub.s32 %v5929, %v5931
        %v5933 = vrot.slane %v5919, %v5932
        %v5934 = vcombine.high %v5926, %v5926
        %v5935 = vcombine.high %v5933, %v5933
        %v5936 = vcombine.high %v5456, %v5456
        %v5938 = vunpack.c.l.s4 1983009808
        %v5939 = vunpack.c.0.s8 %v5938
        %v5940 = vlaneseq
        %v5941 = vshrl.u32 %v5940, 7
        %v5942 = vsub.s32 %v5939, %v5941
        %v5943 = vrot.slane %v5456, %v5942
        %v5945 = vunpack.c.l.s4 1983009808
        %v5946 = vunpack.c.0.s8 %v5945
        %v5947 = vlaneseq
        %v5948 = vshrl.u32 %v5947, 7
        %v5949 = vsub.s32 %v5946, %v5948
        %v5950 = vrot.slane %v5936, %v5949
        %v5951 = vcombine.high %v5943, %v5943
        %v5952 = vcombine.high %v5950, %v5950
        %v5953 = vcombine.high %v5457, %v5457
        %v5955 = vunpack.c.l.s4 1983009808
        %v5956 = vunpack.c.0.s8 %v5955
        %v5957 = vlaneseq
        %v5958 = vshrl.u32 %v5957, 7
        %v5959 = vsub.s32 %v5956, %v5958
        %v5960 = vrot.slane %v5457, %v5959
        %v5962 = vunpack.c.l.s4 1983009808
        %v5963 = vunpack.c.0.s8 %v5962
        %v5964 = vlaneseq
        %v5965 = vshrl.u32 %v5964, 7
        %v5966 = vsub.s32 %v5963, %v5965
        %v5967 = vrot.slane %v5953, %v5966
        %v5968 = vcombine.high %v5960, %v5960
        %v5969 = vcombine.high %v5967, %v5967
        %v5970 = vcombine.high %v5458, %v5458
        %v5972 = vunpack.c.l.s4 1983009808
        %v5973 = vunpack.c.0.s8 %v5972
        %v5974 = vlaneseq
        %v5975 = vshrl.u32 %v5974, 7
        %v5976 = vsub.s32 %v5973, %v5975
        %v5977 = vrot.slane %v5458, %v5976
        %v5979 = vunpack.c.l.s4 1983009808
        %v5980 = vunpack.c.0.s8 %v5979
        %v5981 = vlaneseq
        %v5982 = vshrl.u32 %v5981, 7
        %v5983 = vsub.s32 %v5980, %v5982
        %v5984 = vrot.slane %v5970, %v5983
        %v5985 = vcombine.high %v5977, %v5977
        %v5986 = vcombine.high %v5984, %v5984
        %v5987 = vcombine.high %v5459, %v5459
        %v5989 = vunpack.c.l.s4 1983009808
        %v5990 = vunpack.c.0.s8 %v5989
        %v5991 = vlaneseq
        %v5992 = vshrl.u32 %v5991, 7
        %v5993 = vsub.s32 %v5990, %v5992
        %v5994 = vrot.slane %v5459, %v5993
        %v5996 = vunpack.c.l.s4 1983009808
        %v5997 = vunpack.c.0.s8 %v5996
        %v5998 = vlaneseq
        %v5999 = vshrl.u32 %v5998, 7
        %v6000 = vsub.s32 %v5997, %v5999
        %v6001 = vrot.slane %v5987, %v6000
        %v6002 = vcombine.high %v5994, %v5994
        %v6003 = vcombine.high %v6001, %v6001
        %v6004 = vcombine.high %v5460, %v5460
        %v6006 = vunpack.c.l.s4 1983009808
        %v6007 = vunpack.c.0.s8 %v6006
        %v6008 = vlaneseq
        %v6009 = vshrl.u32 %v6008, 7
        %v6010 = vsub.s32 %v6007, %v6009
        %v6011 = vrot.slane %v5460, %v6010
        %v6013 = vunpack.c.l.s4 1983009808
        %v6014 = vunpack.c.0.s8 %v6013
        %v6015 = vlaneseq
        %v6016 = vshrl.u32 %v6015, 7
        %v6017 = vsub.s32 %v6014, %v6016
        %v6018 = vrot.slane %v6004, %v6017
        %v6019 = vcombine.high %v6011, %v6011
        %v6020 = vcombine.high %v6018, %v6018
        %v6021 = vcombine.high %v5461, %v5461
        %v6023 = vunpack.c.l.s4 1983009808
        %v6024 = vunpack.c.0.s8 %v6023
        %v6025 = vlaneseq
        %v6026 = vshrl.u32 %v6025, 7
        %v6027 = vsub.s32 %v6024, %v6026
        %v6028 = vrot.slane %v5461, %v6027
        %v6030 = vunpack.c.l.s4 1983009808
        %v6031 = vunpack.c.0.s8 %v6030
        %v6032 = vlaneseq
        %v6033 = vshrl.u32 %v6032, 7
        %v6034 = vsub.s32 %v6031, %v6033
        %v6035 = vrot.slane %v6021, %v6034
        %v6036 = vcombine.high %v6028, %v6028
        %v6037 = vcombine.high %v6035, %v6035
        %v6166 = vsel %vm1365, %v5501, -inf
        %v6167 = vsel %vm1365, %v5535, -inf
        %v6168 = vmax.f32 %v6166, %v6167
        %v6169 = vrot.slane %v6168, 4
        %v6170 = vmax.f32 %v6168, %v6169
        %v6171 = vrot.slane %v6170, 2
        %v6172 = vmax.f32 %v6170, %v6171
        %v6173 = vrot.slane %v6172, 1
        %v6174 = vmax.f32 %v6172, %v6173
        %v6175 = vsel %vm1365, %v5509, -inf
        %v6176 = vsel %vm1365, %v5543, -inf
        %v6177 = vmax.f32 %v6175, %v6176
        %v6178 = vrot.slane %v6177, 4
        %v6179 = vmax.f32 %v6177, %v6178
        %v6180 = vrot.slane %v6179, 2
        %v6181 = vmax.f32 %v6179, %v6180
        %v6182 = vrot.slane %v6181, 1
        %v6183 = vmax.f32 %v6181, %v6182
        %v6184 = vsel %vm1365, %v5508, -inf
        %v6185 = vsel %vm1365, %v5542, -inf
        %v6186 = vmax.f32 %v6184, %v6185
        %v6187 = vrot.slane %v6186, 4
        %v6188 = vmax.f32 %v6186, %v6187
        %v6189 = vrot.slane %v6188, 2
        %v6190 = vmax.f32 %v6188, %v6189
        %v6191 = vrot.slane %v6190, 1
        %v6192 = vmax.f32 %v6190, %v6191
        %v6193 = vsel %vm1365, %v5510, -inf
        %v6194 = vsel %vm1365, %v5544, -inf
        %v6195 = vmax.f32 %v6193, %v6194
        %v6196 = vrot.slane %v6195, 4
        %v6197 = vmax.f32 %v6195, %v6196
        %v6198 = vrot.slane %v6197, 2
        %v6199 = vmax.f32 %v6197, %v6198
        %v6200 = vrot.slane %v6199, 1
        %v6201 = vmax.f32 %v6199, %v6200
        %v6202 = vsel %vm1365, %v5518, -inf
        %v6203 = vsel %vm1365, %v5552, -inf
        %v6204 = vmax.f32 %v6202, %v6203
        %v6205 = vrot.slane %v6204, 4
        %v6206 = vmax.f32 %v6204, %v6205
        %v6207 = vrot.slane %v6206, 2
        %v6208 = vmax.f32 %v6206, %v6207
        %v6209 = vrot.slane %v6208, 1
        %v6210 = vmax.f32 %v6208, %v6209
        %v6211 = vsel %vm1365, %v5526, -inf
        %v6212 = vsel %vm1365, %v5560, -inf
        %v6213 = vmax.f32 %v6211, %v6212
        %v6214 = vrot.slane %v6213, 4
        %v6215 = vmax.f32 %v6213, %v6214
        %v6216 = vrot.slane %v6215, 2
        %v6217 = vmax.f32 %v6215, %v6216
        %v6218 = vrot.slane %v6217, 1
        %v6219 = vmax.f32 %v6217, %v6218
        %v6220 = vsel %vm1365, %v5525, -inf
        %v6221 = vsel %vm1365, %v5559, -inf
        %v6222 = vmax.f32 %v6220, %v6221
        %v6223 = vrot.slane %v6222, 4
        %v6224 = vmax.f32 %v6222, %v6223
        %v6225 = vrot.slane %v6224, 2
        %v6226 = vmax.f32 %v6224, %v6225
        %v6227 = vrot.slane %v6226, 1
        %v6228 = vmax.f32 %v6226, %v6227
        %v6229 = vsel %vm1365, %v5527, -inf
        %v6230 = vsel %vm1365, %v5561, -inf
        %v6231 = vmax.f32 %v6229, %v6230
        %v6232 = vrot.slane %v6231, 4
        %v6233 = vmax.f32 %v6231, %v6232
        %v6234 = vrot.slane %v6233, 2
        %v6235 = vmax.f32 %v6233, %v6234
        %v6236 = vrot.slane %v6235, 1
        %v6237 = vmax.f32 %v6235, %v6236
        %v6238 = vsel %vm1365, %v5569, -inf
        %v6239 = vsel %vm1365, %v5603, -inf
        %v6240 = vmax.f32 %v6238, %v6239
        %v6241 = vrot.slane %v6240, 4
        %v6242 = vmax.f32 %v6240, %v6241
        %v6243 = vrot.slane %v6242, 2
        %v6244 = vmax.f32 %v6242, %v6243
        %v6245 = vrot.slane %v6244, 1
        %v6246 = vmax.f32 %v6244, %v6245
        %v6247 = vsel %vm1365, %v5577, -inf
        %v6248 = vsel %vm1365, %v5611, -inf
        %v6249 = vmax.f32 %v6247, %v6248
        %v6250 = vrot.slane %v6249, 4
        %v6251 = vmax.f32 %v6249, %v6250
        %v6252 = vrot.slane %v6251, 2
        %v6253 = vmax.f32 %v6251, %v6252
        %v6254 = vrot.slane %v6253, 1
        %v6255 = vmax.f32 %v6253, %v6254
        %v6256 = vsel %vm1365, %v5576, -inf
        %v6257 = vsel %vm1365, %v5610, -inf
        %v6258 = vmax.f32 %v6256, %v6257
        %v6259 = vrot.slane %v6258, 4
        %v6260 = vmax.f32 %v6258, %v6259
        %v6261 = vrot.slane %v6260, 2
        %v6262 = vmax.f32 %v6260, %v6261
        %v6263 = vrot.slane %v6262, 1
        %v6264 = vmax.f32 %v6262, %v6263
        %v6265 = vsel %vm1365, %v5578, -inf
        %v6266 = vsel %vm1365, %v5612, -inf
        %v6267 = vmax.f32 %v6265, %v6266
        %v6268 = vrot.slane %v6267, 4
        %v6269 = vmax.f32 %v6267, %v6268
        %v6270 = vrot.slane %v6269, 2
        %v6271 = vmax.f32 %v6269, %v6270
        %v6272 = vrot.slane %v6271, 1
        %v6273 = vmax.f32 %v6271, %v6272
        %v6274 = vsel %vm1365, %v5586, -inf
        %v6275 = vsel %vm1365, %v5620, -inf
        %v6276 = vmax.f32 %v6274, %v6275
        %v6277 = vrot.slane %v6276, 4
        %v6278 = vmax.f32 %v6276, %v6277
        %v6279 = vrot.slane %v6278, 2
        %v6280 = vmax.f32 %v6278, %v6279
        %v6281 = vrot.slane %v6280, 1
        %v6282 = vmax.f32 %v6280, %v6281
        %v6283 = vsel %vm1365, %v5594, -inf
        %v6284 = vsel %vm1365, %v5628, -inf
        %v6285 = vmax.f32 %v6283, %v6284
        %v6286 = vrot.slane %v6285, 4
        %v6287 = vmax.f32 %v6285, %v6286
        %v6288 = vrot.slane %v6287, 2
        %v6289 = vmax.f32 %v6287, %v6288
        %v6290 = vrot.slane %v6289, 1
        %v6291 = vmax.f32 %v6289, %v6290
        %v6292 = vsel %vm1365, %v5593, -inf
        %v6293 = vsel %vm1365, %v5627, -inf
        %v6294 = vmax.f32 %v6292, %v6293
        %v6295 = vrot.slane %v6294, 4
        %v6296 = vmax.f32 %v6294, %v6295
        %v6297 = vrot.slane %v6296, 2
        %v6298 = vmax.f32 %v6296, %v6297
        %v6299 = vrot.slane %v6298, 1
        %v6300 = vmax.f32 %v6298, %v6299
        %v6301 = vsel %vm1365, %v5595, -inf
        %v6302 = vsel %vm1365, %v5629, -inf
        %v6303 = vmax.f32 %v6301, %v6302
        %v6304 = vrot.slane %v6303, 4
        %v6305 = vmax.f32 %v6303, %v6304
        %v6306 = vrot.slane %v6305, 2
        %v6307 = vmax.f32 %v6305, %v6306
        %v6308 = vrot.slane %v6307, 1
        %v6309 = vmax.f32 %v6307, %v6308
        %v6310 = vsel %vm1365, %v5637, -inf
        %v6311 = vsel %vm1365, %v5671, -inf
        %v6312 = vmax.f32 %v6310, %v6311
        %v6313 = vrot.slane %v6312, 4
        %v6314 = vmax.f32 %v6312, %v6313
        %v6315 = vrot.slane %v6314, 2
        %v6316 = vmax.f32 %v6314, %v6315
        %v6317 = vrot.slane %v6316, 1
        %v6318 = vmax.f32 %v6316, %v6317
        %v6319 = vsel %vm1365, %v5645, -inf
        %v6320 = vsel %vm1365, %v5679, -inf
        %v6321 = vmax.f32 %v6319, %v6320
        %v6322 = vrot.slane %v6321, 4
        %v6323 = vmax.f32 %v6321, %v6322
        %v6324 = vrot.slane %v6323, 2
        %v6325 = vmax.f32 %v6323, %v6324
        %v6326 = vrot.slane %v6325, 1
        %v6327 = vmax.f32 %v6325, %v6326
        %v6328 = vsel %vm1365, %v5644, -inf
        %v6329 = vsel %vm1365, %v5678, -inf
        %v6330 = vmax.f32 %v6328, %v6329
        %v6331 = vrot.slane %v6330, 4
        %v6332 = vmax.f32 %v6330, %v6331
        %v6333 = vrot.slane %v6332, 2
        %v6334 = vmax.f32 %v6332, %v6333
        %v6335 = vrot.slane %v6334, 1
        %v6336 = vmax.f32 %v6334, %v6335
        %v6337 = vsel %vm1365, %v5646, -inf
        %v6338 = vsel %vm1365, %v5680, -inf
        %v6339 = vmax.f32 %v6337, %v6338
        %v6340 = vrot.slane %v6339, 4
        %v6341 = vmax.f32 %v6339, %v6340
        %v6342 = vrot.slane %v6341, 2
        %v6343 = vmax.f32 %v6341, %v6342
        %v6344 = vrot.slane %v6343, 1
        %v6345 = vmax.f32 %v6343, %v6344
        %v6346 = vsel %vm1365, %v5654, -inf
        %v6347 = vsel %vm1365, %v5688, -inf
        %v6348 = vmax.f32 %v6346, %v6347
        %v6349 = vrot.slane %v6348, 4
        %v6350 = vmax.f32 %v6348, %v6349
        %v6351 = vrot.slane %v6350, 2
        %v6352 = vmax.f32 %v6350, %v6351
        %v6353 = vrot.slane %v6352, 1
        %v6354 = vmax.f32 %v6352, %v6353
        %v6355 = vsel %vm1365, %v5662, -inf
        %v6356 = vsel %vm1365, %v5696, -inf
        %v6357 = vmax.f32 %v6355, %v6356
        %v6358 = vrot.slane %v6357, 4
        %v6359 = vmax.f32 %v6357, %v6358
        %v6360 = vrot.slane %v6359, 2
        %v6361 = vmax.f32 %v6359, %v6360
        %v6362 = vrot.slane %v6361, 1
        %v6363 = vmax.f32 %v6361, %v6362
        %v6364 = vsel %vm1365, %v5661, -inf
        %v6365 = vsel %vm1365, %v5695, -inf
        %v6366 = vmax.f32 %v6364, %v6365
        %v6367 = vrot.slane %v6366, 4
        %v6368 = vmax.f32 %v6366, %v6367
        %v6369 = vrot.slane %v6368, 2
        %v6370 = vmax.f32 %v6368, %v6369
        %v6371 = vrot.slane %v6370, 1
        %v6372 = vmax.f32 %v6370, %v6371
        %v6373 = vsel %vm1365, %v5663, -inf
        %v6374 = vsel %vm1365, %v5697, -inf
        %v6375 = vmax.f32 %v6373, %v6374
        %v6376 = vrot.slane %v6375, 4
        %v6377 = vmax.f32 %v6375, %v6376
        %v6378 = vrot.slane %v6377, 2
        %v6379 = vmax.f32 %v6377, %v6378
        %v6380 = vrot.slane %v6379, 1
        %v6381 = vmax.f32 %v6379, %v6380
        %v6382 = vsel %vm1365, %v5705, -inf
        %v6383 = vsel %vm1365, %v5739, -inf
        %v6384 = vmax.f32 %v6382, %v6383
        %v6385 = vrot.slane %v6384, 4
        %v6386 = vmax.f32 %v6384, %v6385
        %v6387 = vrot.slane %v6386, 2
        %v6388 = vmax.f32 %v6386, %v6387
        %v6389 = vrot.slane %v6388, 1
        %v6390 = vmax.f32 %v6388, %v6389
        %v6391 = vsel %vm1365, %v5713, -inf
        %v6392 = vsel %vm1365, %v5747, -inf
        %v6393 = vmax.f32 %v6391, %v6392
        %v6394 = vrot.slane %v6393, 4
        %v6395 = vmax.f32 %v6393, %v6394
        %v6396 = vrot.slane %v6395, 2
        %v6397 = vmax.f32 %v6395, %v6396
        %v6398 = vrot.slane %v6397, 1
        %v6399 = vmax.f32 %v6397, %v6398
        %v6400 = vsel %vm1365, %v5712, -inf
        %v6401 = vsel %vm1365, %v5746, -inf
        %v6402 = vmax.f32 %v6400, %v6401
        %v6403 = vrot.slane %v6402, 4
        %v6404 = vmax.f32 %v6402, %v6403
        %v6405 = vrot.slane %v6404, 2
        %v6406 = vmax.f32 %v6404, %v6405
        %v6407 = vrot.slane %v6406, 1
        %v6408 = vmax.f32 %v6406, %v6407
        %v6409 = vsel %vm1365, %v5714, -inf
        %v6410 = vsel %vm1365, %v5748, -inf
        %v6411 = vmax.f32 %v6409, %v6410
        %v6412 = vrot.slane %v6411, 4
        %v6413 = vmax.f32 %v6411, %v6412
        %v6414 = vrot.slane %v6413, 2
        %v6415 = vmax.f32 %v6413, %v6414
        %v6416 = vrot.slane %v6415, 1
        %v6417 = vmax.f32 %v6415, %v6416
        %v6418 = vsel %vm1365, %v5722, -inf
        %v6419 = vsel %vm1365, %v5756, -inf
        %v6420 = vmax.f32 %v6418, %v6419
        %v6421 = vrot.slane %v6420, 4
        %v6422 = vmax.f32 %v6420, %v6421
        %v6423 = vrot.slane %v6422, 2
        %v6424 = vmax.f32 %v6422, %v6423
        %v6425 = vrot.slane %v6424, 1
        %v6426 = vmax.f32 %v6424, %v6425
        %v6427 = vsel %vm1365, %v5730, -inf
        %v6428 = vsel %vm1365, %v5764, -inf
        %v6429 = vmax.f32 %v6427, %v6428
        %v6430 = vrot.slane %v6429, 4
        %v6431 = vmax.f32 %v6429, %v6430
        %v6432 = vrot.slane %v6431, 2
        %v6433 = vmax.f32 %v6431, %v6432
        %v6434 = vrot.slane %v6433, 1
        %v6435 = vmax.f32 %v6433, %v6434
        %v6436 = vsel %vm1365, %v5729, -inf
        %v6437 = vsel %vm1365, %v5763, -inf
        %v6438 = vmax.f32 %v6436, %v6437
        %v6439 = vrot.slane %v6438, 4
        %v6440 = vmax.f32 %v6438, %v6439
        %v6441 = vrot.slane %v6440, 2
        %v6442 = vmax.f32 %v6440, %v6441
        %v6443 = vrot.slane %v6442, 1
        %v6444 = vmax.f32 %v6442, %v6443
        %v6445 = vsel %vm1365, %v5731, -inf
        %v6446 = vsel %vm1365, %v5765, -inf
        %v6447 = vmax.f32 %v6445, %v6446
        %v6448 = vrot.slane %v6447, 4
        %v6449 = vmax.f32 %v6447, %v6448
        %v6450 = vrot.slane %v6449, 2
        %v6451 = vmax.f32 %v6449, %v6450
        %v6452 = vrot.slane %v6451, 1
        %v6453 = vmax.f32 %v6451, %v6452
        %v6454 = vsel %vm1365, %v5773, -inf
        %v6455 = vsel %vm1365, %v5807, -inf
        %v6456 = vmax.f32 %v6454, %v6455
        %v6457 = vrot.slane %v6456, 4
        %v6458 = vmax.f32 %v6456, %v6457
        %v6459 = vrot.slane %v6458, 2
        %v6460 = vmax.f32 %v6458, %v6459
        %v6461 = vrot.slane %v6460, 1
        %v6462 = vmax.f32 %v6460, %v6461
        %v6463 = vsel %vm1365, %v5781, -inf
        %v6464 = vsel %vm1365, %v5815, -inf
        %v6465 = vmax.f32 %v6463, %v6464
        %v6466 = vrot.slane %v6465, 4
        %v6467 = vmax.f32 %v6465, %v6466
        %v6468 = vrot.slane %v6467, 2
        %v6469 = vmax.f32 %v6467, %v6468
        %v6470 = vrot.slane %v6469, 1
        %v6471 = vmax.f32 %v6469, %v6470
        %v6472 = vsel %vm1365, %v5780, -inf
        %v6473 = vsel %vm1365, %v5814, -inf
        %v6474 = vmax.f32 %v6472, %v6473
        %v6475 = vrot.slane %v6474, 4
        %v6476 = vmax.f32 %v6474, %v6475
        %v6477 = vrot.slane %v6476, 2
        %v6478 = vmax.f32 %v6476, %v6477
        %v6479 = vrot.slane %v6478, 1
        %v6480 = vmax.f32 %v6478, %v6479
        %v6481 = vsel %vm1365, %v5782, -inf
        %v6482 = vsel %vm1365, %v5816, -inf
        %v6483 = vmax.f32 %v6481, %v6482
        %v6484 = vrot.slane %v6483, 4
        %v6485 = vmax.f32 %v6483, %v6484
        %v6486 = vrot.slane %v6485, 2
        %v6487 = vmax.f32 %v6485, %v6486
        %v6488 = vrot.slane %v6487, 1
        %v6489 = vmax.f32 %v6487, %v6488
        %v6490 = vsel %vm1365, %v5790, -inf
        %v6491 = vsel %vm1365, %v5824, -inf
        %v6492 = vmax.f32 %v6490, %v6491
        %v6493 = vrot.slane %v6492, 4
        %v6494 = vmax.f32 %v6492, %v6493
        %v6495 = vrot.slane %v6494, 2
        %v6496 = vmax.f32 %v6494, %v6495
        %v6497 = vrot.slane %v6496, 1
        %v6498 = vmax.f32 %v6496, %v6497
        %v6499 = vsel %vm1365, %v5798, -inf
        %v6500 = vsel %vm1365, %v5832, -inf
        %v6501 = vmax.f32 %v6499, %v6500
        %v6502 = vrot.slane %v6501, 4
        %v6503 = vmax.f32 %v6501, %v6502
        %v6504 = vrot.slane %v6503, 2
        %v6505 = vmax.f32 %v6503, %v6504
        %v6506 = vrot.slane %v6505, 1
        %v6507 = vmax.f32 %v6505, %v6506
        %v6508 = vsel %vm1365, %v5797, -inf
        %v6509 = vsel %vm1365, %v5831, -inf
        %v6510 = vmax.f32 %v6508, %v6509
        %v6511 = vrot.slane %v6510, 4
        %v6512 = vmax.f32 %v6510, %v6511
        %v6513 = vrot.slane %v6512, 2
        %v6514 = vmax.f32 %v6512, %v6513
        %v6515 = vrot.slane %v6514, 1
        %v6516 = vmax.f32 %v6514, %v6515
        %v6517 = vsel %vm1365, %v5799, -inf
        %v6518 = vsel %vm1365, %v5833, -inf
        %v6519 = vmax.f32 %v6517, %v6518
        %v6520 = vrot.slane %v6519, 4
        %v6521 = vmax.f32 %v6519, %v6520
        %v6522 = vrot.slane %v6521, 2
        %v6523 = vmax.f32 %v6521, %v6522
        %v6524 = vrot.slane %v6523, 1
        %v6525 = vmax.f32 %v6523, %v6524
        %v6526 = vsel %vm1365, %v5841, -inf
        %v6527 = vsel %vm1365, %v5875, -inf
        %v6528 = vmax.f32 %v6526, %v6527
        %v6529 = vrot.slane %v6528, 4
        %v6530 = vmax.f32 %v6528, %v6529
        %v6531 = vrot.slane %v6530, 2
        %v6532 = vmax.f32 %v6530, %v6531
        %v6533 = vrot.slane %v6532, 1
        %v6534 = vmax.f32 %v6532, %v6533
        %v6535 = vsel %vm1365, %v5849, -inf
        %v6536 = vsel %vm1365, %v5883, -inf
        %v6537 = vmax.f32 %v6535, %v6536
        %v6538 = vrot.slane %v6537, 4
        %v6539 = vmax.f32 %v6537, %v6538
        %v6540 = vrot.slane %v6539, 2
        %v6541 = vmax.f32 %v6539, %v6540
        %v6542 = vrot.slane %v6541, 1
        %v6543 = vmax.f32 %v6541, %v6542
        %v6544 = vsel %vm1365, %v5848, -inf
        %v6545 = vsel %vm1365, %v5882, -inf
        %v6546 = vmax.f32 %v6544, %v6545
        %v6547 = vrot.slane %v6546, 4
        %v6548 = vmax.f32 %v6546, %v6547
        %v6549 = vrot.slane %v6548, 2
        %v6550 = vmax.f32 %v6548, %v6549
        %v6551 = vrot.slane %v6550, 1
        %v6552 = vmax.f32 %v6550, %v6551
        %v6553 = vsel %vm1365, %v5850, -inf
        %v6554 = vsel %vm1365, %v5884, -inf
        %v6555 = vmax.f32 %v6553, %v6554
        %v6556 = vrot.slane %v6555, 4
        %v6557 = vmax.f32 %v6555, %v6556
        %v6558 = vrot.slane %v6557, 2
        %v6559 = vmax.f32 %v6557, %v6558
        %v6560 = vrot.slane %v6559, 1
        %v6561 = vmax.f32 %v6559, %v6560
        %v6562 = vsel %vm1365, %v5858, -inf
        %v6563 = vsel %vm1365, %v5892, -inf
        %v6564 = vmax.f32 %v6562, %v6563
        %v6565 = vrot.slane %v6564, 4
        %v6566 = vmax.f32 %v6564, %v6565
        %v6567 = vrot.slane %v6566, 2
        %v6568 = vmax.f32 %v6566, %v6567
        %v6569 = vrot.slane %v6568, 1
        %v6570 = vmax.f32 %v6568, %v6569
        %v6571 = vsel %vm1365, %v5866, -inf
        %v6572 = vsel %vm1365, %v5900, -inf
        %v6573 = vmax.f32 %v6571, %v6572
        %v6574 = vrot.slane %v6573, 4
        %v6575 = vmax.f32 %v6573, %v6574
        %v6576 = vrot.slane %v6575, 2
        %v6577 = vmax.f32 %v6575, %v6576
        %v6578 = vrot.slane %v6577, 1
        %v6579 = vmax.f32 %v6577, %v6578
        %v6580 = vsel %vm1365, %v5865, -inf
        %v6581 = vsel %vm1365, %v5899, -inf
        %v6582 = vmax.f32 %v6580, %v6581
        %v6583 = vrot.slane %v6582, 4
        %v6584 = vmax.f32 %v6582, %v6583
        %v6585 = vrot.slane %v6584, 2
        %v6586 = vmax.f32 %v6584, %v6585
        %v6587 = vrot.slane %v6586, 1
        %v6588 = vmax.f32 %v6586, %v6587
        %v6589 = vsel %vm1365, %v5867, -inf
        %v6590 = vsel %vm1365, %v5901, -inf
        %v6591 = vmax.f32 %v6589, %v6590
        %v6592 = vrot.slane %v6591, 4
        %v6593 = vmax.f32 %v6591, %v6592
        %v6594 = vrot.slane %v6593, 2
        %v6595 = vmax.f32 %v6593, %v6594
        %v6596 = vrot.slane %v6595, 1
        %v6597 = vmax.f32 %v6595, %v6596
        %v6598 = vsel %vm1365, %v5909, -inf
        %v6599 = vsel %vm1365, %v5943, -inf
        %v6600 = vmax.f32 %v6598, %v6599
        %v6601 = vrot.slane %v6600, 4
        %v6602 = vmax.f32 %v6600, %v6601
        %v6603 = vrot.slane %v6602, 2
        %v6604 = vmax.f32 %v6602, %v6603
        %v6605 = vrot.slane %v6604, 1
        %v6606 = vmax.f32 %v6604, %v6605
        %v6607 = vsel %vm1365, %v5917, -inf
        %v6608 = vsel %vm1365, %v5951, -inf
        %v6609 = vmax.f32 %v6607, %v6608
        %v6610 = vrot.slane %v6609, 4
        %v6611 = vmax.f32 %v6609, %v6610
        %v6612 = vrot.slane %v6611, 2
        %v6613 = vmax.f32 %v6611, %v6612
        %v6614 = vrot.slane %v6613, 1
        %v6615 = vmax.f32 %v6613, %v6614
        %v6616 = vsel %vm1365, %v5916, -inf
        %v6617 = vsel %vm1365, %v5950, -inf
        %v6618 = vmax.f32 %v6616, %v6617
        %v6619 = vrot.slane %v6618, 4
        %v6620 = vmax.f32 %v6618, %v6619
        %v6621 = vrot.slane %v6620, 2
        %v6622 = vmax.f32 %v6620, %v6621
        %v6623 = vrot.slane %v6622, 1
        %v6624 = vmax.f32 %v6622, %v6623
        %v6625 = vsel %vm1365, %v5918, -inf
        %v6626 = vsel %vm1365, %v5952, -inf
        %v6627 = vmax.f32 %v6625, %v6626
        %v6628 = vrot.slane %v6627, 4
        %v6629 = vmax.f32 %v6627, %v6628
        %v6630 = vrot.slane %v6629, 2
        %v6631 = vmax.f32 %v6629, %v6630
        %v6632 = vrot.slane %v6631, 1
        %v6633 = vmax.f32 %v6631, %v6632
        %v6634 = vsel %vm1365, %v5926, -inf
        %v6635 = vsel %vm1365, %v5960, -inf
        %v6636 = vmax.f32 %v6634, %v6635
        %v6637 = vrot.slane %v6636, 4
        %v6638 = vmax.f32 %v6636, %v6637
        %v6639 = vrot.slane %v6638, 2
        %v6640 = vmax.f32 %v6638, %v6639
        %v6641 = vrot.slane %v6640, 1
        %v6642 = vmax.f32 %v6640, %v6641
        %v6643 = vsel %vm1365, %v5934, -inf
        %v6644 = vsel %vm1365, %v5968, -inf
        %v6645 = vmax.f32 %v6643, %v6644
        %v6646 = vrot.slane %v6645, 4
        %v6647 = vmax.f32 %v6645, %v6646
        %v6648 = vrot.slane %v6647, 2
        %v6649 = vmax.f32 %v6647, %v6648
        %v6650 = vrot.slane %v6649, 1
        %v6651 = vmax.f32 %v6649, %v6650
        %v6652 = vsel %vm1365, %v5933, -inf
        %v6653 = vsel %vm1365, %v5967, -inf
        %v6654 = vmax.f32 %v6652, %v6653
        %v6655 = vrot.slane %v6654, 4
        %v6656 = vmax.f32 %v6654, %v6655
        %v6657 = vrot.slane %v6656, 2
        %v6658 = vmax.f32 %v6656, %v6657
        %v6659 = vrot.slane %v6658, 1
        %v6660 = vmax.f32 %v6658, %v6659
        %v6661 = vsel %vm1365, %v5935, -inf
        %v6662 = vsel %vm1365, %v5969, -inf
        %v6663 = vmax.f32 %v6661, %v6662
        %v6664 = vrot.slane %v6663, 4
        %v6665 = vmax.f32 %v6663, %v6664
        %v6666 = vrot.slane %v6665, 2
        %v6667 = vmax.f32 %v6665, %v6666
        %v6668 = vrot.slane %v6667, 1
        %v6669 = vmax.f32 %v6667, %v6668
        %v6670 = vsel %vm1365, %v5977, -inf
        %v6671 = vsel %vm1365, %v6011, -inf
        %v6672 = vmax.f32 %v6670, %v6671
        %v6673 = vrot.slane %v6672, 4
        %v6674 = vmax.f32 %v6672, %v6673
        %v6675 = vrot.slane %v6674, 2
        %v6676 = vmax.f32 %v6674, %v6675
        %v6677 = vrot.slane %v6676, 1
        %v6678 = vmax.f32 %v6676, %v6677
        %v6679 = vsel %vm1365, %v5985, -inf
        %v6680 = vsel %vm1365, %v6019, -inf
        %v6681 = vmax.f32 %v6679, %v6680
        %v6682 = vrot.slane %v6681, 4
        %v6683 = vmax.f32 %v6681, %v6682
        %v6684 = vrot.slane %v6683, 2
        %v6685 = vmax.f32 %v6683, %v6684
        %v6686 = vrot.slane %v6685, 1
        %v6687 = vmax.f32 %v6685, %v6686
        %v6688 = vsel %vm1365, %v5984, -inf
        %v6689 = vsel %vm1365, %v6018, -inf
        %v6690 = vmax.f32 %v6688, %v6689
        %v6691 = vrot.slane %v6690, 4
        %v6692 = vmax.f32 %v6690, %v6691
        %v6693 = vrot.slane %v6692, 2
        %v6694 = vmax.f32 %v6692, %v6693
        %v6695 = vrot.slane %v6694, 1
        %v6696 = vmax.f32 %v6694, %v6695
        %v6697 = vsel %vm1365, %v5986, -inf
        %v6698 = vsel %vm1365, %v6020, -inf
        %v6699 = vmax.f32 %v6697, %v6698
        %v6700 = vrot.slane %v6699, 4
        %v6701 = vmax.f32 %v6699, %v6700
        %v6702 = vrot.slane %v6701, 2
        %v6703 = vmax.f32 %v6701, %v6702
        %v6704 = vrot.slane %v6703, 1
        %v6705 = vmax.f32 %v6703, %v6704
        %v6706 = vsel %vm1365, %v5994, -inf
        %v6707 = vsel %vm1365, %v6028, -inf
        %v6708 = vmax.f32 %v6706, %v6707
        %v6709 = vrot.slane %v6708, 4
        %v6710 = vmax.f32 %v6708, %v6709
        %v6711 = vrot.slane %v6710, 2
        %v6712 = vmax.f32 %v6710, %v6711
        %v6713 = vrot.slane %v6712, 1
        %v6714 = vmax.f32 %v6712, %v6713
        %v6715 = vsel %vm1365, %v6002, -inf
        %v6716 = vsel %vm1365, %v6036, -inf
        %v6717 = vmax.f32 %v6715, %v6716
        %v6718 = vrot.slane %v6717, 4
        %v6719 = vmax.f32 %v6717, %v6718
        %v6720 = vrot.slane %v6719, 2
        %v6721 = vmax.f32 %v6719, %v6720
        %v6722 = vrot.slane %v6721, 1
        %v6723 = vmax.f32 %v6721, %v6722
        %v6724 = vsel %vm1365, %v6001, -inf
        %v6725 = vsel %vm1365, %v6035, -inf
        %v6726 = vmax.f32 %v6724, %v6725
        %v6727 = vrot.slane %v6726, 4
        %v6728 = vmax.f32 %v6726, %v6727
        %v6729 = vrot.slane %v6728, 2
        %v6730 = vmax.f32 %v6728, %v6729
        %v6731 = vrot.slane %v6730, 1
        %v6732 = vmax.f32 %v6730, %v6731
        %v6733 = vsel %vm1365, %v6003, -inf
        %v6734 = vsel %vm1365, %v6037, -inf
        %v6735 = vmax.f32 %v6733, %v6734
        %v6736 = vrot.slane %v6735, 4
        %v6737 = vmax.f32 %v6735, %v6736
        %v6738 = vrot.slane %v6737, 2
        %v6739 = vmax.f32 %v6737, %v6738
        %v6740 = vrot.slane %v6739, 1
        %v6741 = vmax.f32 %v6739, %v6740
        %v6742 = vpack.c.bf16 %v6174, %v6174
        %v6743 = vpack.c.bf16 %v6183, %v6183
        %v6744 = vpack.c.bf16 %v6192, %v6192
        %v6745 = vpack.c.bf16 %v6201, %v6201
        %v6746 = vpack.c.bf16 %v6210, %v6210
        %v6747 = vpack.c.bf16 %v6219, %v6219
        %v6748 = vpack.c.bf16 %v6228, %v6228
        %v6749 = vpack.c.bf16 %v6237, %v6237
        %v6750 = vpack.c.bf16 %v6246, %v6246
        %v6751 = vpack.c.bf16 %v6255, %v6255
        %v6752 = vpack.c.bf16 %v6264, %v6264
        %v6753 = vpack.c.bf16 %v6273, %v6273
        %v6754 = vpack.c.bf16 %v6282, %v6282
        %v6755 = vpack.c.bf16 %v6291, %v6291
        %v6756 = vpack.c.bf16 %v6300, %v6300
        %v6757 = vpack.c.bf16 %v6309, %v6309
        %v6758 = vpack.c.bf16 %v6318, %v6318
        %v6759 = vpack.c.bf16 %v6327, %v6327
        %v6760 = vpack.c.bf16 %v6336, %v6336
        %v6761 = vpack.c.bf16 %v6345, %v6345
        %v6762 = vpack.c.bf16 %v6354, %v6354
        %v6763 = vpack.c.bf16 %v6363, %v6363
        %v6764 = vpack.c.bf16 %v6372, %v6372
        %v6765 = vpack.c.bf16 %v6381, %v6381
        %v6766 = vpack.c.bf16 %v6390, %v6390
        %v6767 = vpack.c.bf16 %v6399, %v6399
        %v6768 = vpack.c.bf16 %v6408, %v6408
        %v6769 = vpack.c.bf16 %v6417, %v6417
        %v6770 = vpack.c.bf16 %v6426, %v6426
        %v6771 = vpack.c.bf16 %v6435, %v6435
        %v6772 = vpack.c.bf16 %v6444, %v6444
        %v6773 = vpack.c.bf16 %v6453, %v6453
        %v6774 = vpack.c.bf16 %v6462, %v6462
        %v6775 = vpack.c.bf16 %v6471, %v6471
        %v6776 = vpack.c.bf16 %v6480, %v6480
        %v6777 = vpack.c.bf16 %v6489, %v6489
        %v6778 = vpack.c.bf16 %v6498, %v6498
        %v6779 = vpack.c.bf16 %v6507, %v6507
        %v6780 = vpack.c.bf16 %v6516, %v6516
        %v6781 = vpack.c.bf16 %v6525, %v6525
        %v6782 = vpack.c.bf16 %v6534, %v6534
        %v6783 = vpack.c.bf16 %v6543, %v6543
        %v6784 = vpack.c.bf16 %v6552, %v6552
        %v6785 = vpack.c.bf16 %v6561, %v6561
        %v6786 = vpack.c.bf16 %v6570, %v6570
        %v6787 = vpack.c.bf16 %v6579, %v6579
        %v6788 = vpack.c.bf16 %v6588, %v6588
        %v6789 = vpack.c.bf16 %v6597, %v6597
        %v6790 = vpack.c.bf16 %v6606, %v6606
        %v6791 = vpack.c.bf16 %v6615, %v6615
        %v6792 = vpack.c.bf16 %v6624, %v6624
        %v6793 = vpack.c.bf16 %v6633, %v6633
        %v6794 = vpack.c.bf16 %v6642, %v6642
        %v6795 = vpack.c.bf16 %v6651, %v6651
        %v6796 = vpack.c.bf16 %v6660, %v6660
        %v6797 = vpack.c.bf16 %v6669, %v6669
        %v6798 = vpack.c.bf16 %v6678, %v6678
        %v6799 = vpack.c.bf16 %v6687, %v6687
        %v6800 = vpack.c.bf16 %v6696, %v6696
        %v6801 = vpack.c.bf16 %v6705, %v6705
        %v6802 = vpack.c.bf16 %v6714, %v6714
        %v6803 = vpack.c.bf16 %v6723, %v6723
        %v6804 = vpack.c.bf16 %v6732, %v6732
        %v6805 = vpack.c.bf16 %v6741, %v6741
        %v6870 = vunpack.c.l.b16 %v6742
        %v6871 = vunpack.c.l.b16 %v6743
        %v6872 = vunpack.c.l.b16 %v6744
        %v6873 = vunpack.c.l.b16 %v6745
        %v6874 = vunpack.c.l.b16 %v6746
        %v6875 = vunpack.c.l.b16 %v6747
        %v6876 = vunpack.c.l.b16 %v6748
        %v6877 = vunpack.c.l.b16 %v6749
        %v6878 = vunpack.c.l.b16 %v6750
        %v6879 = vunpack.c.l.b16 %v6751
        %v6880 = vunpack.c.l.b16 %v6752
        %v6881 = vunpack.c.l.b16 %v6753
        %v6882 = vunpack.c.l.b16 %v6754
        %v6883 = vunpack.c.l.b16 %v6755
        %v6884 = vunpack.c.l.b16 %v6756
        %v6885 = vunpack.c.l.b16 %v6757
        %v6886 = vunpack.c.l.b16 %v6758
        %v6887 = vunpack.c.l.b16 %v6759
        %v6888 = vunpack.c.l.b16 %v6760
        %v6889 = vunpack.c.l.b16 %v6761
        %v6890 = vunpack.c.l.b16 %v6762
        %v6891 = vunpack.c.l.b16 %v6763
        %v6892 = vunpack.c.l.b16 %v6764
        %v6893 = vunpack.c.l.b16 %v6765
        %v6894 = vunpack.c.l.b16 %v6766
        %v6895 = vunpack.c.l.b16 %v6767
        %v6896 = vunpack.c.l.b16 %v6768
        %v6897 = vunpack.c.l.b16 %v6769
        %v6898 = vunpack.c.l.b16 %v6770
        %v6899 = vunpack.c.l.b16 %v6771
        %v6900 = vunpack.c.l.b16 %v6772
        %v6901 = vunpack.c.l.b16 %v6773
        %v6902 = vunpack.c.l.b16 %v6774
        %v6903 = vunpack.c.l.b16 %v6775
        %v6904 = vunpack.c.l.b16 %v6776
        %v6905 = vunpack.c.l.b16 %v6777
        %v6906 = vunpack.c.l.b16 %v6778
        %v6907 = vunpack.c.l.b16 %v6779
        %v6908 = vunpack.c.l.b16 %v6780
        %v6909 = vunpack.c.l.b16 %v6781
        %v6910 = vunpack.c.l.b16 %v6782
        %v6911 = vunpack.c.l.b16 %v6783
        %v6912 = vunpack.c.l.b16 %v6784
        %v6913 = vunpack.c.l.b16 %v6785
        %v6914 = vunpack.c.l.b16 %v6786
        %v6915 = vunpack.c.l.b16 %v6787
        %v6916 = vunpack.c.l.b16 %v6788
        %v6917 = vunpack.c.l.b16 %v6789
        %v6918 = vunpack.c.l.b16 %v6790
        %v6919 = vunpack.c.l.b16 %v6791
        %v6920 = vunpack.c.l.b16 %v6792
        %v6921 = vunpack.c.l.b16 %v6793
        %v6922 = vunpack.c.l.b16 %v6794
        %v6923 = vunpack.c.l.b16 %v6795
        %v6924 = vunpack.c.l.b16 %v6796
        %v6925 = vunpack.c.l.b16 %v6797
        %v6926 = vunpack.c.l.b16 %v6798
        %v6927 = vunpack.c.l.b16 %v6799
        %v6928 = vunpack.c.l.b16 %v6800
        %v6929 = vunpack.c.l.b16 %v6801
        %v6930 = vunpack.c.l.b16 %v6802
        %v6931 = vunpack.c.l.b16 %v6803
        %v6932 = vunpack.c.l.b16 %v6804
        %v6933 = vunpack.c.l.b16 %v6805
        %v6934 = vpack.c.b16 %v6870, %v6870
        %v6935 = vpack.c.b16 %v6871, %v6871
        %v6936 = vpack.c.b16 %v6872, %v6872
        %v6937 = vpack.c.b16 %v6873, %v6873
        %v6938 = vpack.c.b16 %v6874, %v6874
        %v6939 = vpack.c.b16 %v6875, %v6875
        %v6940 = vpack.c.b16 %v6876, %v6876
        %v6941 = vpack.c.b16 %v6877, %v6877
        %v6942 = vpack.c.b16 %v6878, %v6878
        %v6943 = vpack.c.b16 %v6879, %v6879
        %v6944 = vpack.c.b16 %v6880, %v6880
        %v6945 = vpack.c.b16 %v6881, %v6881
        %v6946 = vpack.c.b16 %v6882, %v6882
        %v6947 = vpack.c.b16 %v6883, %v6883
        %v6948 = vpack.c.b16 %v6884, %v6884
        %v6949 = vpack.c.b16 %v6885, %v6885
        %v6950 = vpack.c.b16 %v6886, %v6886
        %v6951 = vpack.c.b16 %v6887, %v6887
        %v6952 = vpack.c.b16 %v6888, %v6888
        %v6953 = vpack.c.b16 %v6889, %v6889
        %v6954 = vpack.c.b16 %v6890, %v6890
        %v6955 = vpack.c.b16 %v6891, %v6891
        %v6956 = vpack.c.b16 %v6892, %v6892
        %v6957 = vpack.c.b16 %v6893, %v6893
        %v6958 = vpack.c.b16 %v6894, %v6894
        %v6959 = vpack.c.b16 %v6895, %v6895
        %v6960 = vpack.c.b16 %v6896, %v6896
        %v6961 = vpack.c.b16 %v6897, %v6897
        %v6962 = vpack.c.b16 %v6898, %v6898
        %v6963 = vpack.c.b16 %v6899, %v6899
        %v6964 = vpack.c.b16 %v6900, %v6900
        %v6965 = vpack.c.b16 %v6901, %v6901
        %v6966 = vpack.c.b16 %v6902, %v6902
        %v6967 = vpack.c.b16 %v6903, %v6903
        %v6968 = vpack.c.b16 %v6904, %v6904
        %v6969 = vpack.c.b16 %v6905, %v6905
        %v6970 = vpack.c.b16 %v6906, %v6906
        %v6971 = vpack.c.b16 %v6907, %v6907
        %v6972 = vpack.c.b16 %v6908, %v6908
        %v6973 = vpack.c.b16 %v6909, %v6909
        %v6974 = vpack.c.b16 %v6910, %v6910
        %v6975 = vpack.c.b16 %v6911, %v6911
        %v6976 = vpack.c.b16 %v6912, %v6912
        %v6977 = vpack.c.b16 %v6913, %v6913
        %v6978 = vpack.c.b16 %v6914, %v6914
        %v6979 = vpack.c.b16 %v6915, %v6915
        %v6980 = vpack.c.b16 %v6916, %v6916
        %v6981 = vpack.c.b16 %v6917, %v6917
        %v6982 = vpack.c.b16 %v6918, %v6918
        %v6983 = vpack.c.b16 %v6919, %v6919
        %v6984 = vpack.c.b16 %v6920, %v6920
        %v6985 = vpack.c.b16 %v6921, %v6921
        %v6986 = vpack.c.b16 %v6922, %v6922
        %v6987 = vpack.c.b16 %v6923, %v6923
        %v6988 = vpack.c.b16 %v6924, %v6924
        %v6989 = vpack.c.b16 %v6925, %v6925
        %v6990 = vpack.c.b16 %v6926, %v6926
        %v6991 = vpack.c.b16 %v6927, %v6927
        %v6992 = vpack.c.b16 %v6928, %v6928
        %v6993 = vpack.c.b16 %v6929, %v6929
        %v6994 = vpack.c.b16 %v6930, %v6930
        %v6995 = vpack.c.b16 %v6931, %v6931
        %v6996 = vpack.c.b16 %v6932, %v6932
        %v6997 = vpack.c.b16 %v6933, %v6933
        %v6998 = vunpack.c.l.b16 %v6934
        %v6999 = vunpack.c.l.b16 %v6935
        %v7000 = vunpack.c.l.b16 %v6936
        %v7001 = vunpack.c.l.b16 %v6937
        %v7002 = vunpack.c.l.b16 %v6938
        %v7003 = vunpack.c.l.b16 %v6939
        %v7004 = vunpack.c.l.b16 %v6940
        %v7005 = vunpack.c.l.b16 %v6941
        %v7006 = vunpack.c.l.b16 %v6942
        %v7007 = vunpack.c.l.b16 %v6943
        %v7008 = vunpack.c.l.b16 %v6944
        %v7009 = vunpack.c.l.b16 %v6945
        %v7010 = vunpack.c.l.b16 %v6946
        %v7011 = vunpack.c.l.b16 %v6947
        %v7012 = vunpack.c.l.b16 %v6948
        %v7013 = vunpack.c.l.b16 %v6949
        %v7014 = vunpack.c.l.b16 %v6950
        %v7015 = vunpack.c.l.b16 %v6951
        %v7016 = vunpack.c.l.b16 %v6952
        %v7017 = vunpack.c.l.b16 %v6953
        %v7018 = vunpack.c.l.b16 %v6954
        %v7019 = vunpack.c.l.b16 %v6955
        %v7020 = vunpack.c.l.b16 %v6956
        %v7021 = vunpack.c.l.b16 %v6957
        %v7022 = vunpack.c.l.b16 %v6958
        %v7023 = vunpack.c.l.b16 %v6959
        %v7024 = vunpack.c.l.b16 %v6960
        %v7025 = vunpack.c.l.b16 %v6961
        %v7026 = vunpack.c.l.b16 %v6962
        %v7027 = vunpack.c.l.b16 %v6963
        %v7028 = vunpack.c.l.b16 %v6964
        %v7029 = vunpack.c.l.b16 %v6965
        %v7030 = vunpack.c.l.b16 %v6966
        %v7031 = vunpack.c.l.b16 %v6967
        %v7032 = vunpack.c.l.b16 %v6968
        %v7033 = vunpack.c.l.b16 %v6969
        %v7034 = vunpack.c.l.b16 %v6970
        %v7035 = vunpack.c.l.b16 %v6971
        %v7036 = vunpack.c.l.b16 %v6972
        %v7037 = vunpack.c.l.b16 %v6973
        %v7038 = vunpack.c.l.b16 %v6974
        %v7039 = vunpack.c.l.b16 %v6975
        %v7040 = vunpack.c.l.b16 %v6976
        %v7041 = vunpack.c.l.b16 %v6977
        %v7042 = vunpack.c.l.b16 %v6978
        %v7043 = vunpack.c.l.b16 %v6979
        %v7044 = vunpack.c.l.b16 %v6980
        %v7045 = vunpack.c.l.b16 %v6981
        %v7046 = vunpack.c.l.b16 %v6982
        %v7047 = vunpack.c.l.b16 %v6983
        %v7048 = vunpack.c.l.b16 %v6984
        %v7049 = vunpack.c.l.b16 %v6985
        %v7050 = vunpack.c.l.b16 %v6986
        %v7051 = vunpack.c.l.b16 %v6987
        %v7052 = vunpack.c.l.b16 %v6988
        %v7053 = vunpack.c.l.b16 %v6989
        %v7054 = vunpack.c.l.b16 %v6990
        %v7055 = vunpack.c.l.b16 %v6991
        %v7056 = vunpack.c.l.b16 %v6992
        %v7057 = vunpack.c.l.b16 %v6993
        %v7058 = vunpack.c.l.b16 %v6994
        %v7059 = vunpack.c.l.b16 %v6995
        %v7060 = vunpack.c.l.b16 %v6996
        %v7061 = vunpack.c.l.b16 %v6997
        %vm7062 = vcmask 1041409
        %v7063 = vsel %vm7062, %v6999, %v6998
        %vm7064 = vcmask 1042434
        %v7065 = vsel %vm7064, %v7000, %v7063
        %vm7066 = vcmask 1043459
        %v7067 = vsel %vm7066, %v7001, %v7065
        %vm7068 = vcmask 1044484
        %v7069 = vsel %vm7068, %v7002, %v7067
        %vm7070 = vcmask 1045509
        %v7071 = vsel %vm7070, %v7003, %v7069
        %vm7072 = vcmask 1046534
        %v7073 = vsel %vm7072, %v7004, %v7071
        %vm7074 = vcmask 1047559
        %v7075 = vsel %vm7074, %v7005, %v7073
        %v7076 = vsel %vm7062, %v7007, %v7006
        %v7077 = vsel %vm7064, %v7008, %v7076
        %v7078 = vsel %vm7066, %v7009, %v7077
        %v7079 = vsel %vm7068, %v7010, %v7078
        %v7080 = vsel %vm7070, %v7011, %v7079
        %v7081 = vsel %vm7072, %v7012, %v7080
        %v7082 = vsel %vm7074, %v7013, %v7081
        %v7083 = vsel %vm7062, %v7015, %v7014
        %v7084 = vsel %vm7064, %v7016, %v7083
        %v7085 = vsel %vm7066, %v7017, %v7084
        %v7086 = vsel %vm7068, %v7018, %v7085
        %v7087 = vsel %vm7070, %v7019, %v7086
        %v7088 = vsel %vm7072, %v7020, %v7087
        %v7089 = vsel %vm7074, %v7021, %v7088
        %v7090 = vsel %vm7062, %v7023, %v7022
        %v7091 = vsel %vm7064, %v7024, %v7090
        %v7092 = vsel %vm7066, %v7025, %v7091
        %v7093 = vsel %vm7068, %v7026, %v7092
        %v7094 = vsel %vm7070, %v7027, %v7093
        %v7095 = vsel %vm7072, %v7028, %v7094
        %v7096 = vsel %vm7074, %v7029, %v7095
        %v7097 = vsel %vm7062, %v7031, %v7030
        %v7098 = vsel %vm7064, %v7032, %v7097
        %v7099 = vsel %vm7066, %v7033, %v7098
        %v7100 = vsel %vm7068, %v7034, %v7099
        %v7101 = vsel %vm7070, %v7035, %v7100
        %v7102 = vsel %vm7072, %v7036, %v7101
        %v7103 = vsel %vm7074, %v7037, %v7102
        %v7104 = vsel %vm7062, %v7039, %v7038
        %v7105 = vsel %vm7064, %v7040, %v7104
        %v7106 = vsel %vm7066, %v7041, %v7105
        %v7107 = vsel %vm7068, %v7042, %v7106
        %v7108 = vsel %vm7070, %v7043, %v7107
        %v7109 = vsel %vm7072, %v7044, %v7108
        %v7110 = vsel %vm7074, %v7045, %v7109
        %v7111 = vsel %vm7062, %v7047, %v7046
        %v7112 = vsel %vm7064, %v7048, %v7111
        %v7113 = vsel %vm7066, %v7049, %v7112
        %v7114 = vsel %vm7068, %v7050, %v7113
        %v7115 = vsel %vm7070, %v7051, %v7114
        %v7116 = vsel %vm7072, %v7052, %v7115
        %v7117 = vsel %vm7074, %v7053, %v7116
        %v7118 = vsel %vm7062, %v7055, %v7054
        %v7119 = vsel %vm7064, %v7056, %v7118
        %v7120 = vsel %vm7066, %v7057, %v7119
        %v7121 = vsel %vm7068, %v7058, %v7120
        %v7122 = vsel %vm7070, %v7059, %v7121
        %v7123 = vsel %vm7072, %v7060, %v7122
        %v7124 = vsel %vm7074, %v7061, %v7123
        %v7125 = vpack.c.b16 %v7075, %v7075
        %v7126 = vpack.c.b16 %v7082, %v7082
        %v7127 = vpack.c.b16 %v7089, %v7089
        %v7128 = vpack.c.b16 %v7096, %v7096
        %v7129 = vpack.c.b16 %v7103, %v7103
        %v7130 = vpack.c.b16 %v7110, %v7110
        %v7131 = vpack.c.b16 %v7117, %v7117
        %v7132 = vpack.c.b16 %v7124, %v7124
        %7141 = vst [vmem:[%s232] sm:$0xf] %v7125
        %7142 = vst [vmem:[%s232 + $0x4] sm:$0xf] %v7126
        %7143 = vst [vmem:[%s232 + $0x8] sm:$0xf] %v7127
        %7144 = vst [vmem:[%s232 + $0xc] sm:$0xf] %v7128
        %7145 = vst [vmem:[%s232 + $0x10] sm:$0xf] %v7129
        %7146 = vst [vmem:[%s232 + $0x14] sm:$0xf] %v7130
        %7147 = vst [vmem:[%s232 + $0x18] sm:$0xf] %v7131
        %7148 = vst [vmem:[%s232 + $0x1c] sm:$0xf] %v7132
        %p7149 = scmp.lt.s32.totalorder %s20, 1
        %s7150 = scalar_select %p7149, %s20, 1
        %p7151 = scmp.lt.s32.totalorder %s21, 0
        %s7152 = scalar_select %p7151, %s21, 0
        %s7153 = smul.addr %s7150, 8
        %s7154 = sadd.s32 %s7152, %s7153
        %s7155 = smul.addr %s7154, 4
        %s7156 = scalar_lea.vmem %s3, %s7155
        // Predicated region
        $region45: #{forward.5} parent=31 // pred_check
          %p7157 = pneg %p126
        $region46: #{forward.5} parent=31 // pred_check_branch
          %7159 = sbr.rel (%p7157) target = $region48
        $region47: #{forward.5} parent=31 // pred_region
          _
        $region48: #{forward.5} parent=31 // pred_fallthru
          _
      $region32: #{forward.5} parent=5 // pred_fallthru
        _
      %p7160 = scmp.le.s32.totalorder 2, %s11
      // Predicated region
      $region49: #{forward.5} parent=5 // pred_check
        %p7161 = pneg %p7160
      $region50: #{forward.5} parent=5 // pred_check_branch
        %7163 = sbr.rel (%p7161) target = $region52
      $region51: #{forward.5} parent=5 // pred_region
        %s7164 = ssub.s32 %s11, 2
        // Predicated region
        $region53: #{forward.5} parent=51 // pred_check
          %p7165 = pneg %p132
        $region54: #{forward.5} parent=51 // pred_check_branch
          %7167 = sbr.rel (%p7165) target = $region56
        $region55: #{forward.5} parent=51 // pred_region
          %p7168 = scmp.lt.s32.totalorder %s22, 1
          %s7169 = scalar_select %p7168, %s22, 1
          %p7170 = scmp.lt.s32.totalorder %s23, 0
          %s7171 = scalar_select %p7170, %s23, 0
          %s7172 = smul.addr %s7169, 8
          %s7173 = sadd.s32 %s7171, %s7172
          %s7174 = smul.addr %s7173, 4
          %s7175 = scalar_lea.vmem %s3, %s7174
        $region56: #{forward.5} parent=51 // pred_fallthru
          _
      $region52: #{forward.5} parent=5 // pred_fallthru
        _
    $region6: #{forward.5} parent=1 // loop_footer
      %s15 = sadd.s32 1, %s11
    $region7: #{forward.5} parent=1 // loop_footer_branch
      %10 = sbr.rel target = $region3
    $region8: #{forward.5} parent=1 // loop_exit
      _
    %7176 = vsyncpa [#allocation4], 1
    %s7177 = scalar_lea.sflag [#allocation4], 1
    %7178 = vsyncpa %s7177, 1
    %7179 = vsyncpa [#allocation6], 1

</llo_original>
